<compile_context>
chip_gen: v6e
topology: v6e:2x2x1
jax: 0.10.0
libtpu: 0.0.40
codegen_flags: <defaults>
</compile_context>

<pallas_src>
import functools

import numpy as np
import jax
import jax.numpy as jnp
from jax import lax
from jax.experimental import pallas as pl
from jax.experimental.pallas import tpu as pltpu

INPUT = 6
HIDDEN = 25
GP = 128  # per-gate padded width = one lane tile -> gate slices are lane-aligned


def _lstm_kernel(x_ref, wih0_ref, b0_ref, bigw_ref, b1_ref, wl_ref, bl_ref,
                 y_ref, h1buf_ref, *, T, B):
    # x_ref:    (T*B, INPUT) bf16, time-major flattened (row = t*B + b)
    # wih0_ref: (INPUT, 4*GP) bf16    b0_ref: (1, 4*GP) f32
    # bigw_ref: (2*GP, 8*GP)  bf16    b1_ref: (1, 4*GP) f32
    # wl_ref:   (GP, GP)      bf16    bl_ref: (1, 1)    f32
    # y_ref:    (T*B, GP)     f32     h1buf_ref: (T*B, GP) bf16 VMEM scratch

    def cell(gates, c):
        # gate slices are whole 128-lane tiles -> pure vreg selects, no shuffles
        i = jax.nn.sigmoid(gates[:, 0 * GP:1 * GP])
        f = jax.nn.sigmoid(gates[:, 1 * GP:2 * GP])
        g = jnp.tanh(gates[:, 2 * GP:3 * GP])
        o = jax.nn.sigmoid(gates[:, 3 * GP:4 * GP])
        c_new = f * c + i * g
        h_new = o * jnp.tanh(c_new)
        return h_new, c_new

    # Batched layer-0 input projection for all timesteps (bias folded in): one matmul
    # instead of T tiny ones on the recurrent critical path.
    xproj0 = (jnp.dot(x_ref[...], wih0_ref[...],
                      preferred_element_type=jnp.float32)
              + b0_ref[...])                                    # (T*B, 4*GP) f32

    b1 = b1_ref[...]                                            # (1, 4*GP) f32, small

    zeros = jnp.zeros((B, GP), jnp.float32)

    # Prologue: h0(0) -- its recurrent term is zero because h0(-1) = 0.
    h0, c0 = cell(xproj0[0:B, :], zeros)
    h1_bf = jnp.zeros((B, GP), jnp.bfloat16)
    c1 = zeros

    # Lag-1 software pipeline over both layers, fully unrolled (T is small & static).
    # Each step = ONE fused (B, 2*GP) @ (2*GP, 8*GP) bf16 matmul + two independent
    # cells (layer-1 cell for t, layer-0 cell for t+1).
    # TODO(synk): on v5e, keeping the fused RHS resident across the unrolled loop via
    # pltpu.matmul_push_rhs / matmul_acc_lhs / matmul_pop would remove the per-step
    # weight reload from the serial chain; lower priority on v6e/v7x.
    for t in range(T):
        lhs = jnp.concatenate([h0.astype(jnp.bfloat16), h1_bf], axis=1)  # (B, 2*GP)
        # read the fused weight at the point of use (narrow live range, no hoist)
        rec = jnp.dot(lhs, bigw_ref[...],
                      preferred_element_type=jnp.float32)       # (B, 8*GP) f32

        # layer-1 cell for time t: rec[:, 4GP:] = h0(t)@wih1 + h1(t-1)@whh1
        h1, c1 = cell(rec[:, 4 * GP:8 * GP] + b1, c1)
        h1_bf = h1.astype(jnp.bfloat16)
        h1buf_ref[t * B:(t + 1) * B, :] = h1_bf                 # off-critical-path store

        # layer-0 cell for time t+1: rec[:, :4GP] = h0(t)@whh0
        if t + 1 < T:
            h0, c0 = cell(xproj0[(t + 1) * B:(t + 2) * B, :] + rec[:, 0:4 * GP], c0)

    # Final Linear(25 -> 1): one batched matmul, lane-dense (T*B, 128) output
    # (real column in lane 0; padded columns are zero weights -> wrapper slices lane 0).
    y_ref[...] = (jnp.dot(h1buf_ref[...], wl_ref[...],
                          preferred_element_type=jnp.float32)
                  + bl_ref[...])


# ---------------- host-side parameter prep (zero-padded, lane-aligned, bf16) --------

def _pad_gate_cols(w):
    """(rows, 4*HIDDEN) -> (rows, 4*GP): each gate block zero-padded HIDDEN -> GP."""
    rows = w.shape[0]
    out = jnp.zeros((rows, 4 * GP), jnp.float32)
    for k in range(4):
        out = out.at[:, k * GP:k * GP + HIDDEN].set(w[:, k * HIDDEN:(k + 1) * HIDDEN])
    return out


def _pad_rows(w, rows=GP):
    out = jnp.zeros((rows, w.shape[1]), jnp.float32)
    return out.at[:w.shape[0], :].set(w)


def _check_padding(bigw, b0, b1):
    """Guard the padding invariant: every padded gate lane / padded h row must be
    exactly zero.  This is what keeps padded lanes of h/c identically 0 through the
    recurrence (g = tanh(0) = 0 kills the i*g term and c starts at 0).  Only checked
    on concrete (non-traced) arrays."""
    try:
        bigw_n, b0_n, b1_n = np.asarray(bigw), np.asarray(b0), np.asarray(b1)
    except Exception:
        return  # traced under jit: skip the concrete-value check
    for blk in range(8):                                  # 8 gate blocks in bigw cols
        assert not bigw_n[:, blk * GP + HIDDEN:(blk + 1) * GP].any()
    for blk in range(4):
        assert not b0_n[:, blk * GP + HIDDEN:(blk + 1) * GP].any()
        assert not b1_n[:, blk * GP + HIDDEN:(blk + 1) * GP].any()
    assert not bigw_n[HIDDEN:GP, :].any()                 # padded h0 rows
    assert not bigw_n[GP + HIDDEN:2 * GP, :].any()        # padded h1 rows
    assert not bigw_n[GP:2 * GP, 0:4 * GP].any()          # block-triangular zero block


def _prepare_params(p):
    wih0 = _pad_gate_cols(p["wih0"])                      # (INPUT, 4*GP)
    whh0 = _pad_rows(_pad_gate_cols(p["whh0"]))           # (GP, 4*GP)
    wih1 = _pad_rows(_pad_gate_cols(p["wih1"]))           # (GP, 4*GP)
    whh1 = _pad_rows(_pad_gate_cols(p["whh1"]))           # (GP, 4*GP)
    b0 = _pad_gate_cols(p["b0"])                          # (1, 4*GP)
    b1 = _pad_gate_cols(p["b1"])                          # (1, 4*GP)

    # Fused block-triangular recurrent weight:
    #   [h0 | h1] @ [[whh0, wih1], [0, whh1]] = [h0@whh0 | h0@wih1 + h1@whh1]
    bigw = jnp.zeros((2 * GP, 8 * GP), jnp.float32)
    bigw = bigw.at[0:GP, 0:4 * GP].set(whh0)
    bigw = bigw.at[0:GP, 4 * GP:8 * GP].set(wih1)
    bigw = bigw.at[GP:2 * GP, 4 * GP:8 * GP].set(whh1)

    # Lane-dense final Linear: real output column in lane 0, zeros elsewhere.
    wl = jnp.zeros((GP, GP), jnp.float32).at[:HIDDEN, 0:1].set(p["wl"])

    _check_padding(bigw, b0, b1)

    bf = jnp.bfloat16
    return (wih0.astype(bf), b0, bigw.astype(bf), b1, wl.astype(bf), p["bl"])


def init_params(key):
    """PyTorch-style init: U(-1/sqrt(H), 1/sqrt(H)) for every tensor (unpadded)."""
    k = 1.0 / float(jnp.sqrt(jnp.float32(HIDDEN)))
    keys = jax.random.split(key, 10)

    def u(kk, shape):
        return jax.random.uniform(kk, shape, jnp.float32, -k, k)

    return dict(
        wih0=u(keys[0], (INPUT, 4 * HIDDEN)),
        whh0=u(keys[1], (HIDDEN, 4 * HIDDEN)),
        b0=u(keys[2], (1, 4 * HIDDEN)) + u(keys[3], (1, 4 * HIDDEN)),  # b_ih + b_hh
        wih1=u(keys[4], (HIDDEN, 4 * HIDDEN)),
        whh1=u(keys[5], (HIDDEN, 4 * HIDDEN)),
        b1=u(keys[6], (1, 4 * HIDDEN)) + u(keys[7], (1, 4 * HIDDEN)),
        wl=u(keys[8], (HIDDEN, 1)),
        bl=u(keys[9], (1, 1)),
    )


def lstm_forward(x, p):
    """x: (B, T, INPUT) float32 (batch-first, like the PyTorch module). Returns (B, T, 1)."""
    B, T, _ = x.shape
    # time-major, flattened to (T*B, INPUT); row index = t*B + b; bf16 matmul operand.
    x_flat = jnp.transpose(x, (1, 0, 2)).reshape(T * B, INPUT).astype(jnp.bfloat16)
    args = (x_flat,) + _prepare_params(p)

    vmem = pl.BlockSpec(memory_space=pltpu.MemorySpace.VMEM)
    # Single grid step; ~0.6 MB of bf16 weights stays VMEM-resident (far below limits).
    # TODO(synk): if B/T grow, add a ("parallel",) batch grid axis (v7x has 2 TCs) and
    # stream x in T-chunks via BlockSpecs, sizing tiles against v7x's 64 MiB VMEM.
    y_flat = pl.pallas_call(
        functools.partial(_lstm_kernel, T=T, B=B),
        out_shape=jax.ShapeDtypeStruct((T * B, GP), jnp.float32),
        in_specs=[vmem] * len(args),
        out_specs=vmem,
        scratch_shapes=[pltpu.VMEM((T * B, GP), jnp.bfloat16)],
    )(*args)
    # lane 0 holds the real Linear(25 -> 1) output column.
    return jnp.transpose(y_flat[:, 0:1].reshape(T, B, 1), (1, 0, 2))  # (B, T, 1)


def lstm_reference(x, p):
    """Pure-JAX f32 reference with identical math (sanity check), unpadded params."""
    B, T, _ = x.shape
    H = HIDDEN

    def cell(x_t, h, c, wih, whh, b):
        g = x_t @ wih + h @ whh + b
        i = jax.nn.sigmoid(g[:, 0:H])
        f = jax.nn.sigmoid(g[:, H:2 * H])
        gg = jnp.tanh(g[:, 2 * H:3 * H])
        o = jax.nn.sigmoid(g[:, 3 * H:4 * H])
        c = f * c + i * gg
        h = o * jnp.tanh(c)
        return h, c

    def run_layer(seq, wih, whh, b):  # seq: (T, B, F)
        def step(carry, x_t):
            h, c = carry
            h, c = cell(x_t, h, c, wih, whh, b)
            return (h, c), h
        z = jnp.zeros((B, H), jnp.float32)
        _, hs = lax.scan(step, (z, z), seq)
        return hs

    seq = jnp.transpose(x, (1, 0, 2))
    h0 = run_layer(seq, p["wih0"], p["whh0"], p["b0"])
    h1 = run_layer(h0, p["wih1"], p["whh1"], p["b1"])
    y = h1 @ p["wl"] + p["bl"]
    return jnp.transpose(y, (1, 0, 2))


if __name__ == "__main__":
    key = jax.random.PRNGKey(0)
    kx, kp = jax.random.split(key)

    B, T = 2, 8
    x = jax.random.normal(kx, (B, T, INPUT), jnp.float32)
    params = init_params(kp)

    y = lstm_forward(x, params)
    y = jax.block_until_ready(y)

    y_ref = lstm_reference(x, params)
    assert y.shape == (B, T, 1), y.shape
    # bf16 matmul operands in the kernel vs. pure-f32 reference: allow a few e-2 drift
    # over the 8-step double recurrence.
    err = float(jnp.max(jnp.abs(y - y_ref)))
    assert err < 5e-2, err

    print("KERNEL_OK")
</pallas_src>

<mosaic_0001>
module attributes {stable_mosaic.version = 11 : i64} {
  func.func @_lstm_kernel(%arg0: memref<16x6xbf16, #tpu.memory_space<vmem>>, %arg1: memref<6x512xbf16, #tpu.memory_space<vmem>>, %arg2: memref<1x512xf32, #tpu.memory_space<vmem>>, %arg3: memref<256x1024xbf16, #tpu.memory_space<vmem>>, %arg4: memref<1x512xf32, #tpu.memory_space<vmem>>, %arg5: memref<128x128xbf16, #tpu.memory_space<vmem>>, %arg6: memref<1x1xf32, #tpu.memory_space<vmem>>, %arg7: memref<16x128xf32, #tpu.memory_space<vmem>>, %arg8: memref<16x128xbf16, #tpu.memory_space<vmem>>) attributes {dimension_semantics = [], scalar_prefetch = 0 : i64, scratch_operands = 1 : i64, tpu.core_type = #tpu.core_type<tc>} {
    %c0 = arith.constant 0 : index
    %c0_0 = arith.constant 0 : index
    %0 = vector.load %arg0[%c0, %c0_0] : memref<16x6xbf16, #tpu.memory_space<vmem>>, vector<16x6xbf16>
    %c0_1 = arith.constant 0 : index
    %c0_2 = arith.constant 0 : index
    %1 = vector.load %arg1[%c0_1, %c0_2] : memref<6x512xbf16, #tpu.memory_space<vmem>>, vector<6x512xbf16>
    %cst = arith.constant dense<0.000000e+00> : vector<16x512xf32>
    %2 = tpu.matmul %0, %1, %cst {dimension_numbers = #tpu.dot_dimension_numbers<[1], [0], [0], [1], [0, 0, 1, 1], [], []>} : vector<16x6xbf16>, vector<6x512xbf16>, vector<16x512xf32> -> vector<16x512xf32>
    %c0_3 = arith.constant 0 : index
    %c0_4 = arith.constant 0 : index
    %3 = vector.load %arg2[%c0_3, %c0_4] : memref<1x512xf32, #tpu.memory_space<vmem>>, vector<1x512xf32>
    %4 = vector.broadcast %3 : vector<1x512xf32> to vector<16x512xf32>
    %5 = arith.addf %2, %4 : vector<16x512xf32>
    %c0_5 = arith.constant 0 : index
    %c0_6 = arith.constant 0 : index
    %6 = vector.load %arg4[%c0_5, %c0_6] : memref<1x512xf32, #tpu.memory_space<vmem>>, vector<1x512xf32>
    %cst_7 = arith.constant 0.000000e+00 : f32
    %7 = vector.broadcast %cst_7 : f32 to vector<2x128xf32>
    %8 = vector.extract_strided_slice %5 {offsets = [0, 0], sizes = [2, 512], strides = [1, 1]} : vector<16x512xf32> to vector<2x512xf32>
    %9 = vector.extract_strided_slice %8 {offsets = [0, 0], sizes = [2, 128], strides = [1, 1]} : vector<2x512xf32> to vector<2x128xf32>
    %10 = arith.negf %9 : vector<2x128xf32>
    %11 = math.exp %10 : vector<2x128xf32>
    %cst_8 = arith.constant 1.000000e+00 : f32
    %12 = vector.broadcast %cst_8 : f32 to vector<2x128xf32>
    %13 = arith.addf %12, %11 : vector<2x128xf32>
    %14 = arith.divf %12, %13 : vector<2x128xf32>
    %15 = vector.extract_strided_slice %8 {offsets = [0, 128], sizes = [2, 128], strides = [1, 1]} : vector<2x512xf32> to vector<2x128xf32>
    %16 = arith.negf %15 : vector<2x128xf32>
    %17 = math.exp %16 : vector<2x128xf32>
    %cst_9 = arith.constant 1.000000e+00 : f32
    %18 = vector.broadcast %cst_9 : f32 to vector<2x128xf32>
    %19 = arith.addf %18, %17 : vector<2x128xf32>
    %20 = arith.divf %18, %19 : vector<2x128xf32>
    %21 = vector.extract_strided_slice %8 {offsets = [0, 256], sizes = [2, 128], strides = [1, 1]} : vector<2x512xf32> to vector<2x128xf32>
    %22 = math.tanh %21 : vector<2x128xf32>
    %23 = vector.extract_strided_slice %8 {offsets = [0, 384], sizes = [2, 128], strides = [1, 1]} : vector<2x512xf32> to vector<2x128xf32>
    %24 = arith.negf %23 : vector<2x128xf32>
    %25 = math.exp %24 : vector<2x128xf32>
    %cst_10 = arith.constant 1.000000e+00 : f32
    %26 = vector.broadcast %cst_10 : f32 to vector<2x128xf32>
    %27 = arith.addf %26, %25 : vector<2x128xf32>
    %28 = arith.divf %26, %27 : vector<2x128xf32>
    %29 = arith.mulf %20, %7 : vector<2x128xf32>
    %30 = arith.mulf %14, %22 : vector<2x128xf32>
    %31 = arith.addf %29, %30 : vector<2x128xf32>
    %32 = math.tanh %31 : vector<2x128xf32>
    %33 = arith.mulf %28, %32 : vector<2x128xf32>
    %cst_11 = arith.constant 0.000000e+00 : bf16
    %34 = vector.broadcast %cst_11 : bf16 to vector<2x128xbf16>
    %35 = arith.truncf %33 : vector<2x128xf32> to vector<2x128xbf16>
    %36 = tpu.concatenate %35, %34 in 1 : vector<2x128xbf16>, vector<2x128xbf16> -> vector<2x256xbf16>
    %c0_12 = arith.constant 0 : index
    %c0_13 = arith.constant 0 : index
    %37 = vector.load %arg3[%c0_12, %c0_13] : memref<256x1024xbf16, #tpu.memory_space<vmem>>, vector<256x1024xbf16>
    %cst_14 = arith.constant dense<0.000000e+00> : vector<2x1024xf32>
    %38 = tpu.matmul %36, %37, %cst_14 {dimension_numbers = #tpu.dot_dimension_numbers<[1], [0], [0], [1], [0, 0, 1, 1], [], []>} : vector<2x256xbf16>, vector<256x1024xbf16>, vector<2x1024xf32> -> vector<2x1024xf32>
    %39 = vector.extract_strided_slice %38 {offsets = [0, 512], sizes = [2, 512], strides = [1, 1]} : vector<2x1024xf32> to vector<2x512xf32>
    %40 = vector.broadcast %6 : vector<1x512xf32> to vector<2x512xf32>
    %41 = arith.addf %39, %40 : vector<2x512xf32>
    %42 = vector.extract_strided_slice %41 {offsets = [0, 0], sizes = [2, 128], strides = [1, 1]} : vector<2x512xf32> to vector<2x128xf32>
    %43 = arith.negf %42 : vector<2x128xf32>
    %44 = math.exp %43 : vector<2x128xf32>
    %cst_15 = arith.constant 1.000000e+00 : f32
    %45 = vector.broadcast %cst_15 : f32 to vector<2x128xf32>
    %46 = arith.addf %45, %44 : vector<2x128xf32>
    %47 = arith.divf %45, %46 : vector<2x128xf32>
    %48 = vector.extract_strided_slice %41 {offsets = [0, 128], sizes = [2, 128], strides = [1, 1]} : vector<2x512xf32> to vector<2x128xf32>
    %49 = arith.negf %48 : vector<2x128xf32>
    %50 = math.exp %49 : vector<2x128xf32>
    %cst_16 = arith.constant 1.000000e+00 : f32
    %51 = vector.broadcast %cst_16 : f32 to vector<2x128xf32>
    %52 = arith.addf %51, %50 : vector<2x128xf32>
    %53 = arith.divf %51, %52 : vector<2x128xf32>
    %54 = vector.extract_strided_slice %41 {offsets = [0, 256], sizes = [2, 128], strides = [1, 1]} : vector<2x512xf32> to vector<2x128xf32>
    %55 = math.tanh %54 : vector<2x128xf32>
    %56 = vector.extract_strided_slice %41 {offsets = [0, 384], sizes = [2, 128], strides = [1, 1]} : vector<2x512xf32> to vector<2x128xf32>
    %57 = arith.negf %56 : vector<2x128xf32>
    %58 = math.exp %57 : vector<2x128xf32>
    %cst_17 = arith.constant 1.000000e+00 : f32
    %59 = vector.broadcast %cst_17 : f32 to vector<2x128xf32>
    %60 = arith.addf %59, %58 : vector<2x128xf32>
    %61 = arith.divf %59, %60 : vector<2x128xf32>
    %62 = arith.mulf %53, %7 : vector<2x128xf32>
    %63 = arith.mulf %47, %55 : vector<2x128xf32>
    %64 = arith.addf %62, %63 : vector<2x128xf32>
    %65 = math.tanh %64 : vector<2x128xf32>
    %66 = arith.mulf %61, %65 : vector<2x128xf32>
    %67 = arith.truncf %66 : vector<2x128xf32> to vector<2x128xbf16>
    %c0_18 = arith.constant 0 : index
    %c0_19 = arith.constant 0 : index
    %68 = vector.load %arg8[%c0_18, %c0_19] : memref<16x128xbf16, #tpu.memory_space<vmem>>, vector<2x128xbf16>
    tpu.vector_store %arg8[%c0_18, %c0_19], %67 {strides = array<i32>} : memref<16x128xbf16, #tpu.memory_space<vmem>>, vector<2x128xbf16>,
    %69 = vector.extract_strided_slice %5 {offsets = [2, 0], sizes = [2, 512], strides = [1, 1]} : vector<16x512xf32> to vector<2x512xf32>
    %70 = vector.extract_strided_slice %38 {offsets = [0, 0], sizes = [2, 512], strides = [1, 1]} : vector<2x1024xf32> to vector<2x512xf32>
    %71 = arith.addf %69, %70 : vector<2x512xf32>
    %72 = vector.extract_strided_slice %71 {offsets = [0, 0], sizes = [2, 128], strides = [1, 1]} : vector<2x512xf32> to vector<2x128xf32>
    %73 = arith.negf %72 : vector<2x128xf32>
    %74 = math.exp %73 : vector<2x128xf32>
    %cst_20 = arith.constant 1.000000e+00 : f32
    %75 = vector.broadcast %cst_20 : f32 to vector<2x128xf32>
    %76 = arith.addf %75, %74 : vector<2x128xf32>
    %77 = arith.divf %75, %76 : vector<2x128xf32>
    %78 = vector.extract_strided_slice %71 {offsets = [0, 128], sizes = [2, 128], strides = [1, 1]} : vector<2x512xf32> to vector<2x128xf32>
    %79 = arith.negf %78 : vector<2x128xf32>
    %80 = math.exp %79 : vector<2x128xf32>
    %cst_21 = arith.constant 1.000000e+00 : f32
    %81 = vector.broadcast %cst_21 : f32 to vector<2x128xf32>
    %82 = arith.addf %81, %80 : vector<2x128xf32>
    %83 = arith.divf %81, %82 : vector<2x128xf32>
    %84 = vector.extract_strided_slice %71 {offsets = [0, 256], sizes = [2, 128], strides = [1, 1]} : vector<2x512xf32> to vector<2x128xf32>
    %85 = math.tanh %84 : vector<2x128xf32>
    %86 = vector.extract_strided_slice %71 {offsets = [0, 384], sizes = [2, 128], strides = [1, 1]} : vector<2x512xf32> to vector<2x128xf32>
    %87 = arith.negf %86 : vector<2x128xf32>
    %88 = math.exp %87 : vector<2x128xf32>
    %cst_22 = arith.constant 1.000000e+00 : f32
    %89 = vector.broadcast %cst_22 : f32 to vector<2x128xf32>
    %90 = arith.addf %89, %88 : vector<2x128xf32>
    %91 = arith.divf %89, %90 : vector<2x128xf32>
    %92 = arith.mulf %83, %31 : vector<2x128xf32>
    %93 = arith.mulf %77, %85 : vector<2x128xf32>
    %94 = arith.addf %92, %93 : vector<2x128xf32>
    %95 = math.tanh %94 : vector<2x128xf32>
    %96 = arith.mulf %91, %95 : vector<2x128xf32>
    %97 = arith.truncf %96 : vector<2x128xf32> to vector<2x128xbf16>
    %98 = tpu.concatenate %97, %67 in 1 : vector<2x128xbf16>, vector<2x128xbf16> -> vector<2x256xbf16>
    %c0_23 = arith.constant 0 : index
    %c0_24 = arith.constant 0 : index
    %99 = vector.load %arg3[%c0_23, %c0_24] : memref<256x1024xbf16, #tpu.memory_space<vmem>>, vector<256x1024xbf16>
    %cst_25 = arith.constant dense<0.000000e+00> : vector<2x1024xf32>
    %100 = tpu.matmul %98, %99, %cst_25 {dimension_numbers = #tpu.dot_dimension_numbers<[1], [0], [0], [1], [0, 0, 1, 1], [], []>} : vector<2x256xbf16>, vector<256x1024xbf16>, vector<2x1024xf32> -> vector<2x1024xf32>
    %101 = vector.extract_strided_slice %100 {offsets = [0, 512], sizes = [2, 512], strides = [1, 1]} : vector<2x1024xf32> to vector<2x512xf32>
    %102 = vector.broadcast %6 : vector<1x512xf32> to vector<2x512xf32>
    %103 = arith.addf %101, %102 : vector<2x512xf32>
    %104 = vector.extract_strided_slice %103 {offsets = [0, 0], sizes = [2, 128], strides = [1, 1]} : vector<2x512xf32> to vector<2x128xf32>
    %105 = arith.negf %104 : vector<2x128xf32>
    %106 = math.exp %105 : vector<2x128xf32>
    %cst_26 = arith.constant 1.000000e+00 : f32
    %107 = vector.broadcast %cst_26 : f32 to vector<2x128xf32>
    %108 = arith.addf %107, %106 : vector<2x128xf32>
    %109 = arith.divf %107, %108 : vector<2x128xf32>
    %110 = vector.extract_strided_slice %103 {offsets = [0, 128], sizes = [2, 128], strides = [1, 1]} : vector<2x512xf32> to vector<2x128xf32>
    %111 = arith.negf %110 : vector<2x128xf32>
    %112 = math.exp %111 : vector<2x128xf32>
    %cst_27 = arith.constant 1.000000e+00 : f32
    %113 = vector.broadcast %cst_27 : f32 to vector<2x128xf32>
    %114 = arith.addf %113, %112 : vector<2x128xf32>
    %115 = arith.divf %113, %114 : vector<2x128xf32>
    %116 = vector.extract_strided_slice %103 {offsets = [0, 256], sizes = [2, 128], strides = [1, 1]} : vector<2x512xf32> to vector<2x128xf32>
    %117 = math.tanh %116 : vector<2x128xf32>
    %118 = vector.extract_strided_slice %103 {offsets = [0, 384], sizes = [2, 128], strides = [1, 1]} : vector<2x512xf32> to vector<2x128xf32>
    %119 = arith.negf %118 : vector<2x128xf32>
    %120 = math.exp %119 : vector<2x128xf32>
    %cst_28 = arith.constant 1.000000e+00 : f32
    %121 = vector.broadcast %cst_28 : f32 to vector<2x128xf32>
    %122 = arith.addf %121, %120 : vector<2x128xf32>
    %123 = arith.divf %121, %122 : vector<2x128xf32>
    %124 = arith.mulf %115, %64 : vector<2x128xf32>
    %125 = arith.mulf %109, %117 : vector<2x128xf32>
    %126 = arith.addf %124, %125 : vector<2x128xf32>
    %127 = math.tanh %126 : vector<2x128xf32>
    %128 = arith.mulf %123, %127 : vector<2x128xf32>
    %129 = arith.truncf %128 : vector<2x128xf32> to vector<2x128xbf16>
    %c2 = arith.constant 2 : index
    %c0_29 = arith.constant 0 : index
    %130 = vector.load %arg8[%c2, %c0_29] : memref<16x128xbf16, #tpu.memory_space<vmem>>, vector<2x128xbf16>
    tpu.vector_store %arg8[%c2, %c0_29], %129 {strides = array<i32>} : memref<16x128xbf16, #tpu.memory_space<vmem>>, vector<2x128xbf16>,
    %131 = vector.extract_strided_slice %5 {offsets = [4, 0], sizes = [2, 512], strides = [1, 1]} : vector<16x512xf32> to vector<2x512xf32>
    %132 = vector.extract_strided_slice %100 {offsets = [0, 0], sizes = [2, 512], strides = [1, 1]} : vector<2x1024xf32> to vector<2x512xf32>
    %133 = arith.addf %131, %132 : vector<2x512xf32>
    %134 = vector.extract_strided_slice %133 {offsets = [0, 0], sizes = [2, 128], strides = [1, 1]} : vector<2x512xf32> to vector<2x128xf32>
    %135 = arith.negf %134 : vector<2x128xf32>
    %136 = math.exp %135 : vector<2x128xf32>
    %cst_30 = arith.constant 1.000000e+00 : f32
    %137 = vector.broadcast %cst_30 : f32 to vector<2x128xf32>
    %138 = arith.addf %137, %136 : vector<2x128xf32>
    %139 = arith.divf %137, %138 : vector<2x128xf32>
    %140 = vector.extract_strided_slice %133 {offsets = [0, 128], sizes = [2, 128], strides = [1, 1]} : vector<2x512xf32> to vector<2x128xf32>
    %141 = arith.negf %140 : vector<2x128xf32>
    %142 = math.exp %141 : vector<2x128xf32>
    %cst_31 = arith.constant 1.000000e+00 : f32
    %143 = vector.broadcast %cst_31 : f32 to vector<2x128xf32>
    %144 = arith.addf %143, %142 : vector<2x128xf32>
    %145 = arith.divf %143, %144 : vector<2x128xf32>
    %146 = vector.extract_strided_slice %133 {offsets = [0, 256], sizes = [2, 128], strides = [1, 1]} : vector<2x512xf32> to vector<2x128xf32>
    %147 = math.tanh %146 : vector<2x128xf32>
    %148 = vector.extract_strided_slice %133 {offsets = [0, 384], sizes = [2, 128], strides = [1, 1]} : vector<2x512xf32> to vector<2x128xf32>
    %149 = arith.negf %148 : vector<2x128xf32>
    %150 = math.exp %149 : vector<2x128xf32>
    %cst_32 = arith.constant 1.000000e+00 : f32
    %151 = vector.broadcast %cst_32 : f32 to vector<2x128xf32>
    %152 = arith.addf %151, %150 : vector<2x128xf32>
    %153 = arith.divf %151, %152 : vector<2x128xf32>
    %154 = arith.mulf %145, %94 : vector<2x128xf32>
    %155 = arith.mulf %139, %147 : vector<2x128xf32>
    %156 = arith.addf %154, %155 : vector<2x128xf32>
    %157 = math.tanh %156 : vector<2x128xf32>
    %158 = arith.mulf %153, %157 : vector<2x128xf32>
    %159 = arith.truncf %158 : vector<2x128xf32> to vector<2x128xbf16>
    %160 = tpu.concatenate %159, %129 in 1 : vector<2x128xbf16>, vector<2x128xbf16> -> vector<2x256xbf16>
    %c0_33 = arith.constant 0 : index
    %c0_34 = arith.constant 0 : index
    %161 = vector.load %arg3[%c0_33, %c0_34] : memref<256x1024xbf16, #tpu.memory_space<vmem>>, vector<256x1024xbf16>
    %cst_35 = arith.constant dense<0.000000e+00> : vector<2x1024xf32>
    %162 = tpu.matmul %160, %161, %cst_35 {dimension_numbers = #tpu.dot_dimension_numbers<[1], [0], [0], [1], [0, 0, 1, 1], [], []>} : vector<2x256xbf16>, vector<256x1024xbf16>, vector<2x1024xf32> -> vector<2x1024xf32>
    %163 = vector.extract_strided_slice %162 {offsets = [0, 512], sizes = [2, 512], strides = [1, 1]} : vector<2x1024xf32> to vector<2x512xf32>
    %164 = vector.broadcast %6 : vector<1x512xf32> to vector<2x512xf32>
    %165 = arith.addf %163, %164 : vector<2x512xf32>
    %166 = vector.extract_strided_slice %165 {offsets = [0, 0], sizes = [2, 128], strides = [1, 1]} : vector<2x512xf32> to vector<2x128xf32>
    %167 = arith.negf %166 : vector<2x128xf32>
    %168 = math.exp %167 : vector<2x128xf32>
    %cst_36 = arith.constant 1.000000e+00 : f32
    %169 = vector.broadcast %cst_36 : f32 to vector<2x128xf32>
    %170 = arith.addf %169, %168 : vector<2x128xf32>
    %171 = arith.divf %169, %170 : vector<2x128xf32>
    %172 = vector.extract_strided_slice %165 {offsets = [0, 128], sizes = [2, 128], strides = [1, 1]} : vector<2x512xf32> to vector<2x128xf32>
    %173 = arith.negf %172 : vector<2x128xf32>
    %174 = math.exp %173 : vector<2x128xf32>
    %cst_37 = arith.constant 1.000000e+00 : f32
    %175 = vector.broadcast %cst_37 : f32 to vector<2x128xf32>
    %176 = arith.addf %175, %174 : vector<2x128xf32>
    %177 = arith.divf %175, %176 : vector<2x128xf32>
    %178 = vector.extract_strided_slice %165 {offsets = [0, 256], sizes = [2, 128], strides = [1, 1]} : vector<2x512xf32> to vector<2x128xf32>
    %179 = math.tanh %178 : vector<2x128xf32>
    %180 = vector.extract_strided_slice %165 {offsets = [0, 384], sizes = [2, 128], strides = [1, 1]} : vector<2x512xf32> to vector<2x128xf32>
    %181 = arith.negf %180 : vector<2x128xf32>
    %182 = math.exp %181 : vector<2x128xf32>
    %cst_38 = arith.constant 1.000000e+00 : f32
    %183 = vector.broadcast %cst_38 : f32 to vector<2x128xf32>
    %184 = arith.addf %183, %182 : vector<2x128xf32>
    %185 = arith.divf %183, %184 : vector<2x128xf32>
    %186 = arith.mulf %177, %126 : vector<2x128xf32>
    %187 = arith.mulf %171, %179 : vector<2x128xf32>
    %188 = arith.addf %186, %187 : vector<2x128xf32>
    %189 = math.tanh %188 : vector<2x128xf32>
    %190 = arith.mulf %185, %189 : vector<2x128xf32>
    %191 = arith.truncf %190 : vector<2x128xf32> to vector<2x128xbf16>
    %c4 = arith.constant 4 : index
    %c0_39 = arith.constant 0 : index
    %192 = vector.load %arg8[%c4, %c0_39] : memref<16x128xbf16, #tpu.memory_space<vmem>>, vector<2x128xbf16>
    tpu.vector_store %arg8[%c4, %c0_39], %191 {strides = array<i32>} : memref<16x128xbf16, #tpu.memory_space<vmem>>, vector<2x128xbf16>,
    %193 = vector.extract_strided_slice %5 {offsets = [6, 0], sizes = [2, 512], strides = [1, 1]} : vector<16x512xf32> to vector<2x512xf32>
    %194 = vector.extract_strided_slice %162 {offsets = [0, 0], sizes = [2, 512], strides = [1, 1]} : vector<2x1024xf32> to vector<2x512xf32>
    %195 = arith.addf %193, %194 : vector<2x512xf32>
    %196 = vector.extract_strided_slice %195 {offsets = [0, 0], sizes = [2, 128], strides = [1, 1]} : vector<2x512xf32> to vector<2x128xf32>
    %197 = arith.negf %196 : vector<2x128xf32>
    %198 = math.exp %197 : vector<2x128xf32>
    %cst_40 = arith.constant 1.000000e+00 : f32
    %199 = vector.broadcast %cst_40 : f32 to vector<2x128xf32>
    %200 = arith.addf %199, %198 : vector<2x128xf32>
    %201 = arith.divf %199, %200 : vector<2x128xf32>
    %202 = vector.extract_strided_slice %195 {offsets = [0, 128], sizes = [2, 128], strides = [1, 1]} : vector<2x512xf32> to vector<2x128xf32>
    %203 = arith.negf %202 : vector<2x128xf32>
    %204 = math.exp %203 : vector<2x128xf32>
    %cst_41 = arith.constant 1.000000e+00 : f32
    %205 = vector.broadcast %cst_41 : f32 to vector<2x128xf32>
    %206 = arith.addf %205, %204 : vector<2x128xf32>
    %207 = arith.divf %205, %206 : vector<2x128xf32>
    %208 = vector.extract_strided_slice %195 {offsets = [0, 256], sizes = [2, 128], strides = [1, 1]} : vector<2x512xf32> to vector<2x128xf32>
    %209 = math.tanh %208 : vector<2x128xf32>
    %210 = vector.extract_strided_slice %195 {offsets = [0, 384], sizes = [2, 128], strides = [1, 1]} : vector<2x512xf32> to vector<2x128xf32>
    %211 = arith.negf %210 : vector<2x128xf32>
    %212 = math.exp %211 : vector<2x128xf32>
    %cst_42 = arith.constant 1.000000e+00 : f32
    %213 = vector.broadcast %cst_42 : f32 to vector<2x128xf32>
    %214 = arith.addf %213, %212 : vector<2x128xf32>
    %215 = arith.divf %213, %214 : vector<2x128xf32>
    %216 = arith.mulf %207, %156 : vector<2x128xf32>
    %217 = arith.mulf %201, %209 : vector<2x128xf32>
    %218 = arith.addf %216, %217 : vector<2x128xf32>
    %219 = math.tanh %218 : vector<2x128xf32>
    %220 = arith.mulf %215, %219 : vector<2x128xf32>
    %221 = arith.truncf %220 : vector<2x128xf32> to vector<2x128xbf16>
    %222 = tpu.concatenate %221, %191 in 1 : vector<2x128xbf16>, vector<2x128xbf16> -> vector<2x256xbf16>
    %c0_43 = arith.constant 0 : index
    %c0_44 = arith.constant 0 : index
    %223 = vector.load %arg3[%c0_43, %c0_44] : memref<256x1024xbf16, #tpu.memory_space<vmem>>, vector<256x1024xbf16>
    %cst_45 = arith.constant dense<0.000000e+00> : vector<2x1024xf32>
    %224 = tpu.matmul %222, %223, %cst_45 {dimension_numbers = #tpu.dot_dimension_numbers<[1], [0], [0], [1], [0, 0, 1, 1], [], []>} : vector<2x256xbf16>, vector<256x1024xbf16>, vector<2x1024xf32> -> vector<2x1024xf32>
    %225 = vector.extract_strided_slice %224 {offsets = [0, 512], sizes = [2, 512], strides = [1, 1]} : vector<2x1024xf32> to vector<2x512xf32>
    %226 = vector.broadcast %6 : vector<1x512xf32> to vector<2x512xf32>
    %227 = arith.addf %225, %226 : vector<2x512xf32>
    %228 = vector.extract_strided_slice %227 {offsets = [0, 0], sizes = [2, 128], strides = [1, 1]} : vector<2x512xf32> to vector<2x128xf32>
    %229 = arith.negf %228 : vector<2x128xf32>
    %230 = math.exp %229 : vector<2x128xf32>
    %cst_46 = arith.constant 1.000000e+00 : f32
    %231 = vector.broadcast %cst_46 : f32 to vector<2x128xf32>
    %232 = arith.addf %231, %230 : vector<2x128xf32>
    %233 = arith.divf %231, %232 : vector<2x128xf32>
    %234 = vector.extract_strided_slice %227 {offsets = [0, 128], sizes = [2, 128], strides = [1, 1]} : vector<2x512xf32> to vector<2x128xf32>
    %235 = arith.negf %234 : vector<2x128xf32>
    %236 = math.exp %235 : vector<2x128xf32>
    %cst_47 = arith.constant 1.000000e+00 : f32
    %237 = vector.broadcast %cst_47 : f32 to vector<2x128xf32>
    %238 = arith.addf %237, %236 : vector<2x128xf32>
    %239 = arith.divf %237, %238 : vector<2x128xf32>
    %240 = vector.extract_strided_slice %227 {offsets = [0, 256], sizes = [2, 128], strides = [1, 1]} : vector<2x512xf32> to vector<2x128xf32>
    %241 = math.tanh %240 : vector<2x128xf32>
    %242 = vector.extract_strided_slice %227 {offsets = [0, 384], sizes = [2, 128], strides = [1, 1]} : vector<2x512xf32> to vector<2x128xf32>
    %243 = arith.negf %242 : vector<2x128xf32>
    %244 = math.exp %243 : vector<2x128xf32>
    %cst_48 = arith.constant 1.000000e+00 : f32
    %245 = vector.broadcast %cst_48 : f32 to vector<2x128xf32>
    %246 = arith.addf %245, %244 : vector<2x128xf32>
    %247 = arith.divf %245, %246 : vector<2x128xf32>
    %248 = arith.mulf %239, %188 : vector<2x128xf32>
    %249 = arith.mulf %233, %241 : vector<2x128xf32>
    %250 = arith.addf %248, %249 : vector<2x128xf32>
    %251 = math.tanh %250 : vector<2x128xf32>
    %252 = arith.mulf %247, %251 : vector<2x128xf32>
    %253 = arith.truncf %252 : vector<2x128xf32> to vector<2x128xbf16>
    %c6 = arith.constant 6 : index
    %c0_49 = arith.constant 0 : index
    %254 = vector.load %arg8[%c6, %c0_49] : memref<16x128xbf16, #tpu.memory_space<vmem>>, vector<2x128xbf16>
    tpu.vector_store %arg8[%c6, %c0_49], %253 {strides = array<i32>} : memref<16x128xbf16, #tpu.memory_space<vmem>>, vector<2x128xbf16>,
    %255 = vector.extract_strided_slice %5 {offsets = [8, 0], sizes = [2, 512], strides = [1, 1]} : vector<16x512xf32> to vector<2x512xf32>
    %256 = vector.extract_strided_slice %224 {offsets = [0, 0], sizes = [2, 512], strides = [1, 1]} : vector<2x1024xf32> to vector<2x512xf32>
    %257 = arith.addf %255, %256 : vector<2x512xf32>
    %258 = vector.extract_strided_slice %257 {offsets = [0, 0], sizes = [2, 128], strides = [1, 1]} : vector<2x512xf32> to vector<2x128xf32>
    %259 = arith.negf %258 : vector<2x128xf32>
    %260 = math.exp %259 : vector<2x128xf32>
    %cst_50 = arith.constant 1.000000e+00 : f32
    %261 = vector.broadcast %cst_50 : f32 to vector<2x128xf32>
    %262 = arith.addf %261, %260 : vector<2x128xf32>
    %263 = arith.divf %261, %262 : vector<2x128xf32>
    %264 = vector.extract_strided_slice %257 {offsets = [0, 128], sizes = [2, 128], strides = [1, 1]} : vector<2x512xf32> to vector<2x128xf32>
    %265 = arith.negf %264 : vector<2x128xf32>
    %266 = math.exp %265 : vector<2x128xf32>
    %cst_51 = arith.constant 1.000000e+00 : f32
    %267 = vector.broadcast %cst_51 : f32 to vector<2x128xf32>
    %268 = arith.addf %267, %266 : vector<2x128xf32>
    %269 = arith.divf %267, %268 : vector<2x128xf32>
    %270 = vector.extract_strided_slice %257 {offsets = [0, 256], sizes = [2, 128], strides = [1, 1]} : vector<2x512xf32> to vector<2x128xf32>
    %271 = math.tanh %270 : vector<2x128xf32>
    %272 = vector.extract_strided_slice %257 {offsets = [0, 384], sizes = [2, 128], strides = [1, 1]} : vector<2x512xf32> to vector<2x128xf32>
    %273 = arith.negf %272 : vector<2x128xf32>
    %274 = math.exp %273 : vector<2x128xf32>
    %cst_52 = arith.constant 1.000000e+00 : f32
    %275 = vector.broadcast %cst_52 : f32 to vector<2x128xf32>
    %276 = arith.addf %275, %274 : vector<2x128xf32>
    %277 = arith.divf %275, %276 : vector<2x128xf32>
    %278 = arith.mulf %269, %218 : vector<2x128xf32>
    %279 = arith.mulf %263, %271 : vector<2x128xf32>
    %280 = arith.addf %278, %279 : vector<2x128xf32>
    %281 = math.tanh %280 : vector<2x128xf32>
    %282 = arith.mulf %277, %281 : vector<2x128xf32>
    %283 = arith.truncf %282 : vector<2x128xf32> to vector<2x128xbf16>
    %284 = tpu.concatenate %283, %253 in 1 : vector<2x128xbf16>, vector<2x128xbf16> -> vector<2x256xbf16>
    %c0_53 = arith.constant 0 : index
    %c0_54 = arith.constant 0 : index
    %285 = vector.load %arg3[%c0_53, %c0_54] : memref<256x1024xbf16, #tpu.memory_space<vmem>>, vector<256x1024xbf16>
    %cst_55 = arith.constant dense<0.000000e+00> : vector<2x1024xf32>
    %286 = tpu.matmul %284, %285, %cst_55 {dimension_numbers = #tpu.dot_dimension_numbers<[1], [0], [0], [1], [0, 0, 1, 1], [], []>} : vector<2x256xbf16>, vector<256x1024xbf16>, vector<2x1024xf32> -> vector<2x1024xf32>
    %287 = vector.extract_strided_slice %286 {offsets = [0, 512], sizes = [2, 512], strides = [1, 1]} : vector<2x1024xf32> to vector<2x512xf32>
    %288 = vector.broadcast %6 : vector<1x512xf32> to vector<2x512xf32>
    %289 = arith.addf %287, %288 : vector<2x512xf32>
    %290 = vector.extract_strided_slice %289 {offsets = [0, 0], sizes = [2, 128], strides = [1, 1]} : vector<2x512xf32> to vector<2x128xf32>
    %291 = arith.negf %290 : vector<2x128xf32>
    %292 = math.exp %291 : vector<2x128xf32>
    %cst_56 = arith.constant 1.000000e+00 : f32
    %293 = vector.broadcast %cst_56 : f32 to vector<2x128xf32>
    %294 = arith.addf %293, %292 : vector<2x128xf32>
    %295 = arith.divf %293, %294 : vector<2x128xf32>
    %296 = vector.extract_strided_slice %289 {offsets = [0, 128], sizes = [2, 128], strides = [1, 1]} : vector<2x512xf32> to vector<2x128xf32>
    %297 = arith.negf %296 : vector<2x128xf32>
    %298 = math.exp %297 : vector<2x128xf32>
    %cst_57 = arith.constant 1.000000e+00 : f32
    %299 = vector.broadcast %cst_57 : f32 to vector<2x128xf32>
    %300 = arith.addf %299, %298 : vector<2x128xf32>
    %301 = arith.divf %299, %300 : vector<2x128xf32>
    %302 = vector.extract_strided_slice %289 {offsets = [0, 256], sizes = [2, 128], strides = [1, 1]} : vector<2x512xf32> to vector<2x128xf32>
    %303 = math.tanh %302 : vector<2x128xf32>
    %304 = vector.extract_strided_slice %289 {offsets = [0, 384], sizes = [2, 128], strides = [1, 1]} : vector<2x512xf32> to vector<2x128xf32>
    %305 = arith.negf %304 : vector<2x128xf32>
    %306 = math.exp %305 : vector<2x128xf32>
    %cst_58 = arith.constant 1.000000e+00 : f32
    %307 = vector.broadcast %cst_58 : f32 to vector<2x128xf32>
    %308 = arith.addf %307, %306 : vector<2x128xf32>
    %309 = arith.divf %307, %308 : vector<2x128xf32>
    %310 = arith.mulf %301, %250 : vector<2x128xf32>
    %311 = arith.mulf %295, %303 : vector<2x128xf32>
    %312 = arith.addf %310, %311 : vector<2x128xf32>
    %313 = math.tanh %312 : vector<2x128xf32>
    %314 = arith.mulf %309, %313 : vector<2x128xf32>
    %315 = arith.truncf %314 : vector<2x128xf32> to vector<2x128xbf16>
    %c8 = arith.constant 8 : index
    %c0_59 = arith.constant 0 : index
    %316 = vector.load %arg8[%c8, %c0_59] : memref<16x128xbf16, #tpu.memory_space<vmem>>, vector<2x128xbf16>
    tpu.vector_store %arg8[%c8, %c0_59], %315 {strides = array<i32>} : memref<16x128xbf16, #tpu.memory_space<vmem>>, vector<2x128xbf16>,
    %317 = vector.extract_strided_slice %5 {offsets = [10, 0], sizes = [2, 512], strides = [1, 1]} : vector<16x512xf32> to vector<2x512xf32>
    %318 = vector.extract_strided_slice %286 {offsets = [0, 0], sizes = [2, 512], strides = [1, 1]} : vector<2x1024xf32> to vector<2x512xf32>
    %319 = arith.addf %317, %318 : vector<2x512xf32>
    %320 = vector.extract_strided_slice %319 {offsets = [0, 0], sizes = [2, 128], strides = [1, 1]} : vector<2x512xf32> to vector<2x128xf32>
    %321 = arith.negf %320 : vector<2x128xf32>
    %322 = math.exp %321 : vector<2x128xf32>
    %cst_60 = arith.constant 1.000000e+00 : f32
    %323 = vector.broadcast %cst_60 : f32 to vector<2x128xf32>
    %324 = arith.addf %323, %322 : vector<2x128xf32>
    %325 = arith.divf %323, %324 : vector<2x128xf32>
    %326 = vector.extract_strided_slice %319 {offsets = [0, 128], sizes = [2, 128], strides = [1, 1]} : vector<2x512xf32> to vector<2x128xf32>
    %327 = arith.negf %326 : vector<2x128xf32>
    %328 = math.exp %327 : vector<2x128xf32>
    %cst_61 = arith.constant 1.000000e+00 : f32
    %329 = vector.broadcast %cst_61 : f32 to vector<2x128xf32>
    %330 = arith.addf %329, %328 : vector<2x128xf32>
    %331 = arith.divf %329, %330 : vector<2x128xf32>
    %332 = vector.extract_strided_slice %319 {offsets = [0, 256], sizes = [2, 128], strides = [1, 1]} : vector<2x512xf32> to vector<2x128xf32>
    %333 = math.tanh %332 : vector<2x128xf32>
    %334 = vector.extract_strided_slice %319 {offsets = [0, 384], sizes = [2, 128], strides = [1, 1]} : vector<2x512xf32> to vector<2x128xf32>
    %335 = arith.negf %334 : vector<2x128xf32>
    %336 = math.exp %335 : vector<2x128xf32>
    %cst_62 = arith.constant 1.000000e+00 : f32
    %337 = vector.broadcast %cst_62 : f32 to vector<2x128xf32>
    %338 = arith.addf %337, %336 : vector<2x128xf32>
    %339 = arith.divf %337, %338 : vector<2x128xf32>
    %340 = arith.mulf %331, %280 : vector<2x128xf32>
    %341 = arith.mulf %325, %333 : vector<2x128xf32>
    %342 = arith.addf %340, %341 : vector<2x128xf32>
    %343 = math.tanh %342 : vector<2x128xf32>
    %344 = arith.mulf %339, %343 : vector<2x128xf32>
    %345 = arith.truncf %344 : vector<2x128xf32> to vector<2x128xbf16>
    %346 = tpu.concatenate %345, %315 in 1 : vector<2x128xbf16>, vector<2x128xbf16> -> vector<2x256xbf16>
    %c0_63 = arith.constant 0 : index
    %c0_64 = arith.constant 0 : index
    %347 = vector.load %arg3[%c0_63, %c0_64] : memref<256x1024xbf16, #tpu.memory_space<vmem>>, vector<256x1024xbf16>
    %cst_65 = arith.constant dense<0.000000e+00> : vector<2x1024xf32>
    %348 = tpu.matmul %346, %347, %cst_65 {dimension_numbers = #tpu.dot_dimension_numbers<[1], [0], [0], [1], [0, 0, 1, 1], [], []>} : vector<2x256xbf16>, vector<256x1024xbf16>, vector<2x1024xf32> -> vector<2x1024xf32>
    %349 = vector.extract_strided_slice %348 {offsets = [0, 512], sizes = [2, 512], strides = [1, 1]} : vector<2x1024xf32> to vector<2x512xf32>
    %350 = vector.broadcast %6 : vector<1x512xf32> to vector<2x512xf32>
    %351 = arith.addf %349, %350 : vector<2x512xf32>
    %352 = vector.extract_strided_slice %351 {offsets = [0, 0], sizes = [2, 128], strides = [1, 1]} : vector<2x512xf32> to vector<2x128xf32>
    %353 = arith.negf %352 : vector<2x128xf32>
    %354 = math.exp %353 : vector<2x128xf32>
    %cst_66 = arith.constant 1.000000e+00 : f32
    %355 = vector.broadcast %cst_66 : f32 to vector<2x128xf32>
    %356 = arith.addf %355, %354 : vector<2x128xf32>
    %357 = arith.divf %355, %356 : vector<2x128xf32>
    %358 = vector.extract_strided_slice %351 {offsets = [0, 128], sizes = [2, 128], strides = [1, 1]} : vector<2x512xf32> to vector<2x128xf32>
    %359 = arith.negf %358 : vector<2x128xf32>
    %360 = math.exp %359 : vector<2x128xf32>
    %cst_67 = arith.constant 1.000000e+00 : f32
    %361 = vector.broadcast %cst_67 : f32 to vector<2x128xf32>
    %362 = arith.addf %361, %360 : vector<2x128xf32>
    %363 = arith.divf %361, %362 : vector<2x128xf32>
    %364 = vector.extract_strided_slice %351 {offsets = [0, 256], sizes = [2, 128], strides = [1, 1]} : vector<2x512xf32> to vector<2x128xf32>
    %365 = math.tanh %364 : vector<2x128xf32>
    %366 = vector.extract_strided_slice %351 {offsets = [0, 384], sizes = [2, 128], strides = [1, 1]} : vector<2x512xf32> to vector<2x128xf32>
    %367 = arith.negf %366 : vector<2x128xf32>
    %368 = math.exp %367 : vector<2x128xf32>
    %cst_68 = arith.constant 1.000000e+00 : f32
    %369 = vector.broadcast %cst_68 : f32 to vector<2x128xf32>
    %370 = arith.addf %369, %368 : vector<2x128xf32>
    %371 = arith.divf %369, %370 : vector<2x128xf32>
    %372 = arith.mulf %363, %312 : vector<2x128xf32>
    %373 = arith.mulf %357, %365 : vector<2x128xf32>
    %374 = arith.addf %372, %373 : vector<2x128xf32>
    %375 = math.tanh %374 : vector<2x128xf32>
    %376 = arith.mulf %371, %375 : vector<2x128xf32>
    %377 = arith.truncf %376 : vector<2x128xf32> to vector<2x128xbf16>
    %c10 = arith.constant 10 : index
    %c0_69 = arith.constant 0 : index
    %378 = vector.load %arg8[%c10, %c0_69] : memref<16x128xbf16, #tpu.memory_space<vmem>>, vector<2x128xbf16>
    tpu.vector_store %arg8[%c10, %c0_69], %377 {strides = array<i32>} : memref<16x128xbf16, #tpu.memory_space<vmem>>, vector<2x128xbf16>,
    %379 = vector.extract_strided_slice %5 {offsets = [12, 0], sizes = [2, 512], strides = [1, 1]} : vector<16x512xf32> to vector<2x512xf32>
    %380 = vector.extract_strided_slice %348 {offsets = [0, 0], sizes = [2, 512], strides = [1, 1]} : vector<2x1024xf32> to vector<2x512xf32>
    %381 = arith.addf %379, %380 : vector<2x512xf32>
    %382 = vector.extract_strided_slice %381 {offsets = [0, 0], sizes = [2, 128], strides = [1, 1]} : vector<2x512xf32> to vector<2x128xf32>
    %383 = arith.negf %382 : vector<2x128xf32>
    %384 = math.exp %383 : vector<2x128xf32>
    %cst_70 = arith.constant 1.000000e+00 : f32
    %385 = vector.broadcast %cst_70 : f32 to vector<2x128xf32>
    %386 = arith.addf %385, %384 : vector<2x128xf32>
    %387 = arith.divf %385, %386 : vector<2x128xf32>
    %388 = vector.extract_strided_slice %381 {offsets = [0, 128], sizes = [2, 128], strides = [1, 1]} : vector<2x512xf32> to vector<2x128xf32>
    %389 = arith.negf %388 : vector<2x128xf32>
    %390 = math.exp %389 : vector<2x128xf32>
    %cst_71 = arith.constant 1.000000e+00 : f32
    %391 = vector.broadcast %cst_71 : f32 to vector<2x128xf32>
    %392 = arith.addf %391, %390 : vector<2x128xf32>
    %393 = arith.divf %391, %392 : vector<2x128xf32>
    %394 = vector.extract_strided_slice %381 {offsets = [0, 256], sizes = [2, 128], strides = [1, 1]} : vector<2x512xf32> to vector<2x128xf32>
    %395 = math.tanh %394 : vector<2x128xf32>
    %396 = vector.extract_strided_slice %381 {offsets = [0, 384], sizes = [2, 128], strides = [1, 1]} : vector<2x512xf32> to vector<2x128xf32>
    %397 = arith.negf %396 : vector<2x128xf32>
    %398 = math.exp %397 : vector<2x128xf32>
    %cst_72 = arith.constant 1.000000e+00 : f32
    %399 = vector.broadcast %cst_72 : f32 to vector<2x128xf32>
    %400 = arith.addf %399, %398 : vector<2x128xf32>
    %401 = arith.divf %399, %400 : vector<2x128xf32>
    %402 = arith.mulf %393, %342 : vector<2x128xf32>
    %403 = arith.mulf %387, %395 : vector<2x128xf32>
    %404 = arith.addf %402, %403 : vector<2x128xf32>
    %405 = math.tanh %404 : vector<2x128xf32>
    %406 = arith.mulf %401, %405 : vector<2x128xf32>
    %407 = arith.truncf %406 : vector<2x128xf32> to vector<2x128xbf16>
    %408 = tpu.concatenate %407, %377 in 1 : vector<2x128xbf16>, vector<2x128xbf16> -> vector<2x256xbf16>
    %c0_73 = arith.constant 0 : index
    %c0_74 = arith.constant 0 : index
    %409 = vector.load %arg3[%c0_73, %c0_74] : memref<256x1024xbf16, #tpu.memory_space<vmem>>, vector<256x1024xbf16>
    %cst_75 = arith.constant dense<0.000000e+00> : vector<2x1024xf32>
    %410 = tpu.matmul %408, %409, %cst_75 {dimension_numbers = #tpu.dot_dimension_numbers<[1], [0], [0], [1], [0, 0, 1, 1], [], []>} : vector<2x256xbf16>, vector<256x1024xbf16>, vector<2x1024xf32> -> vector<2x1024xf32>
    %411 = vector.extract_strided_slice %410 {offsets = [0, 512], sizes = [2, 512], strides = [1, 1]} : vector<2x1024xf32> to vector<2x512xf32>
    %412 = vector.broadcast %6 : vector<1x512xf32> to vector<2x512xf32>
    %413 = arith.addf %411, %412 : vector<2x512xf32>
    %414 = vector.extract_strided_slice %413 {offsets = [0, 0], sizes = [2, 128], strides = [1, 1]} : vector<2x512xf32> to vector<2x128xf32>
    %415 = arith.negf %414 : vector<2x128xf32>
    %416 = math.exp %415 : vector<2x128xf32>
    %cst_76 = arith.constant 1.000000e+00 : f32
    %417 = vector.broadcast %cst_76 : f32 to vector<2x128xf32>
    %418 = arith.addf %417, %416 : vector<2x128xf32>
    %419 = arith.divf %417, %418 : vector<2x128xf32>
    %420 = vector.extract_strided_slice %413 {offsets = [0, 128], sizes = [2, 128], strides = [1, 1]} : vector<2x512xf32> to vector<2x128xf32>
    %421 = arith.negf %420 : vector<2x128xf32>
    %422 = math.exp %421 : vector<2x128xf32>
    %cst_77 = arith.constant 1.000000e+00 : f32
    %423 = vector.broadcast %cst_77 : f32 to vector<2x128xf32>
    %424 = arith.addf %423, %422 : vector<2x128xf32>
    %425 = arith.divf %423, %424 : vector<2x128xf32>
    %426 = vector.extract_strided_slice %413 {offsets = [0, 256], sizes = [2, 128], strides = [1, 1]} : vector<2x512xf32> to vector<2x128xf32>
    %427 = math.tanh %426 : vector<2x128xf32>
    %428 = vector.extract_strided_slice %413 {offsets = [0, 384], sizes = [2, 128], strides = [1, 1]} : vector<2x512xf32> to vector<2x128xf32>
    %429 = arith.negf %428 : vector<2x128xf32>
    %430 = math.exp %429 : vector<2x128xf32>
    %cst_78 = arith.constant 1.000000e+00 : f32
    %431 = vector.broadcast %cst_78 : f32 to vector<2x128xf32>
    %432 = arith.addf %431, %430 : vector<2x128xf32>
    %433 = arith.divf %431, %432 : vector<2x128xf32>
    %434 = arith.mulf %425, %374 : vector<2x128xf32>
    %435 = arith.mulf %419, %427 : vector<2x128xf32>
    %436 = arith.addf %434, %435 : vector<2x128xf32>
    %437 = math.tanh %436 : vector<2x128xf32>
    %438 = arith.mulf %433, %437 : vector<2x128xf32>
    %439 = arith.truncf %438 : vector<2x128xf32> to vector<2x128xbf16>
    %c12 = arith.constant 12 : index
    %c0_79 = arith.constant 0 : index
    %440 = vector.load %arg8[%c12, %c0_79] : memref<16x128xbf16, #tpu.memory_space<vmem>>, vector<2x128xbf16>
    tpu.vector_store %arg8[%c12, %c0_79], %439 {strides = array<i32>} : memref<16x128xbf16, #tpu.memory_space<vmem>>, vector<2x128xbf16>,
    %441 = vector.extract_strided_slice %5 {offsets = [14, 0], sizes = [2, 512], strides = [1, 1]} : vector<16x512xf32> to vector<2x512xf32>
    %442 = vector.extract_strided_slice %410 {offsets = [0, 0], sizes = [2, 512], strides = [1, 1]} : vector<2x1024xf32> to vector<2x512xf32>
    %443 = arith.addf %441, %442 : vector<2x512xf32>
    %444 = vector.extract_strided_slice %443 {offsets = [0, 0], sizes = [2, 128], strides = [1, 1]} : vector<2x512xf32> to vector<2x128xf32>
    %445 = arith.negf %444 : vector<2x128xf32>
    %446 = math.exp %445 : vector<2x128xf32>
    %cst_80 = arith.constant 1.000000e+00 : f32
    %447 = vector.broadcast %cst_80 : f32 to vector<2x128xf32>
    %448 = arith.addf %447, %446 : vector<2x128xf32>
    %449 = arith.divf %447, %448 : vector<2x128xf32>
    %450 = vector.extract_strided_slice %443 {offsets = [0, 128], sizes = [2, 128], strides = [1, 1]} : vector<2x512xf32> to vector<2x128xf32>
    %451 = arith.negf %450 : vector<2x128xf32>
    %452 = math.exp %451 : vector<2x128xf32>
    %cst_81 = arith.constant 1.000000e+00 : f32
    %453 = vector.broadcast %cst_81 : f32 to vector<2x128xf32>
    %454 = arith.addf %453, %452 : vector<2x128xf32>
    %455 = arith.divf %453, %454 : vector<2x128xf32>
    %456 = vector.extract_strided_slice %443 {offsets = [0, 256], sizes = [2, 128], strides = [1, 1]} : vector<2x512xf32> to vector<2x128xf32>
    %457 = math.tanh %456 : vector<2x128xf32>
    %458 = vector.extract_strided_slice %443 {offsets = [0, 384], sizes = [2, 128], strides = [1, 1]} : vector<2x512xf32> to vector<2x128xf32>
    %459 = arith.negf %458 : vector<2x128xf32>
    %460 = math.exp %459 : vector<2x128xf32>
    %cst_82 = arith.constant 1.000000e+00 : f32
    %461 = vector.broadcast %cst_82 : f32 to vector<2x128xf32>
    %462 = arith.addf %461, %460 : vector<2x128xf32>
    %463 = arith.divf %461, %462 : vector<2x128xf32>
    %464 = arith.mulf %455, %404 : vector<2x128xf32>
    %465 = arith.mulf %449, %457 : vector<2x128xf32>
    %466 = arith.addf %464, %465 : vector<2x128xf32>
    %467 = math.tanh %466 : vector<2x128xf32>
    %468 = arith.mulf %463, %467 : vector<2x128xf32>
    %469 = arith.truncf %468 : vector<2x128xf32> to vector<2x128xbf16>
    %470 = tpu.concatenate %469, %439 in 1 : vector<2x128xbf16>, vector<2x128xbf16> -> vector<2x256xbf16>
    %c0_83 = arith.constant 0 : index
    %c0_84 = arith.constant 0 : index
    %471 = vector.load %arg3[%c0_83, %c0_84] : memref<256x1024xbf16, #tpu.memory_space<vmem>>, vector<256x1024xbf16>
    %cst_85 = arith.constant dense<0.000000e+00> : vector<2x1024xf32>
    %472 = tpu.matmul %470, %471, %cst_85 {dimension_numbers = #tpu.dot_dimension_numbers<[1], [0], [0], [1], [0, 0, 1, 1], [], []>} : vector<2x256xbf16>, vector<256x1024xbf16>, vector<2x1024xf32> -> vector<2x1024xf32>
    %473 = vector.extract_strided_slice %472 {offsets = [0, 512], sizes = [2, 512], strides = [1, 1]} : vector<2x1024xf32> to vector<2x512xf32>
    %474 = vector.broadcast %6 : vector<1x512xf32> to vector<2x512xf32>
    %475 = arith.addf %473, %474 : vector<2x512xf32>
    %476 = vector.extract_strided_slice %475 {offsets = [0, 0], sizes = [2, 128], strides = [1, 1]} : vector<2x512xf32> to vector<2x128xf32>
    %477 = arith.negf %476 : vector<2x128xf32>
    %478 = math.exp %477 : vector<2x128xf32>
    %cst_86 = arith.constant 1.000000e+00 : f32
    %479 = vector.broadcast %cst_86 : f32 to vector<2x128xf32>
    %480 = arith.addf %479, %478 : vector<2x128xf32>
    %481 = arith.divf %479, %480 : vector<2x128xf32>
    %482 = vector.extract_strided_slice %475 {offsets = [0, 128], sizes = [2, 128], strides = [1, 1]} : vector<2x512xf32> to vector<2x128xf32>
    %483 = arith.negf %482 : vector<2x128xf32>
    %484 = math.exp %483 : vector<2x128xf32>
    %cst_87 = arith.constant 1.000000e+00 : f32
    %485 = vector.broadcast %cst_87 : f32 to vector<2x128xf32>
    %486 = arith.addf %485, %484 : vector<2x128xf32>
    %487 = arith.divf %485, %486 : vector<2x128xf32>
    %488 = vector.extract_strided_slice %475 {offsets = [0, 256], sizes = [2, 128], strides = [1, 1]} : vector<2x512xf32> to vector<2x128xf32>
    %489 = math.tanh %488 : vector<2x128xf32>
    %490 = vector.extract_strided_slice %475 {offsets = [0, 384], sizes = [2, 128], strides = [1, 1]} : vector<2x512xf32> to vector<2x128xf32>
    %491 = arith.negf %490 : vector<2x128xf32>
    %492 = math.exp %491 : vector<2x128xf32>
    %cst_88 = arith.constant 1.000000e+00 : f32
    %493 = vector.broadcast %cst_88 : f32 to vector<2x128xf32>
    %494 = arith.addf %493, %492 : vector<2x128xf32>
    %495 = arith.divf %493, %494 : vector<2x128xf32>
    %496 = arith.mulf %487, %436 : vector<2x128xf32>
    %497 = arith.mulf %481, %489 : vector<2x128xf32>
    %498 = arith.addf %496, %497 : vector<2x128xf32>
    %499 = math.tanh %498 : vector<2x128xf32>
    %500 = arith.mulf %495, %499 : vector<2x128xf32>
    %501 = arith.truncf %500 : vector<2x128xf32> to vector<2x128xbf16>
    %c14 = arith.constant 14 : index
    %c0_89 = arith.constant 0 : index
    %502 = vector.load %arg8[%c14, %c0_89] : memref<16x128xbf16, #tpu.memory_space<vmem>>, vector<2x128xbf16>
    tpu.vector_store %arg8[%c14, %c0_89], %501 {strides = array<i32>} : memref<16x128xbf16, #tpu.memory_space<vmem>>, vector<2x128xbf16>,
    %c0_90 = arith.constant 0 : index
    %c0_91 = arith.constant 0 : index
    %503 = vector.load %arg8[%c0_90, %c0_91] : memref<16x128xbf16, #tpu.memory_space<vmem>>, vector<16x128xbf16>
    %c0_92 = arith.constant 0 : index
    %c0_93 = arith.constant 0 : index
    %504 = vector.load %arg5[%c0_92, %c0_93] : memref<128x128xbf16, #tpu.memory_space<vmem>>, vector<128x128xbf16>
    %cst_94 = arith.constant dense<0.000000e+00> : vector<16x128xf32>
    %505 = tpu.matmul %503, %504, %cst_94 {dimension_numbers = #tpu.dot_dimension_numbers<[1], [0], [0], [1], [0, 0, 1, 1], [], []>} : vector<16x128xbf16>, vector<128x128xbf16>, vector<16x128xf32> -> vector<16x128xf32>
    %c0_95 = arith.constant 0 : index
    %c0_96 = arith.constant 0 : index
    %506 = vector.load %arg6[%c0_95, %c0_96] : memref<1x1xf32, #tpu.memory_space<vmem>>, vector<1x1xf32>
    %507 = vector.broadcast %506 : vector<1x1xf32> to vector<16x128xf32>
    %508 = arith.addf %505, %507 : vector<16x128xf32>
    %c0_97 = arith.constant 0 : index
    %c0_98 = arith.constant 0 : index
    %509 = vector.load %arg7[%c0_97, %c0_98] : memref<16x128xf32, #tpu.memory_space<vmem>>, vector<16x128xf32>
    tpu.vector_store %arg7[%c0_97, %c0_98], %508 {strides = array<i32>} : memref<16x128xf32, #tpu.memory_space<vmem>>, vector<16x128xf32>,
    return
  }
}

</mosaic_0001>

<llo_original>
// kernel: tpu_custom_call.1
$region0: #{tpu_custom_call.1}
  #allocation0 [shape = 'u32[]', space=smem, size = 0x4, offset = 0x4, fixed_abs, tag = 'smem constant byte address 0x4 - core index']
  #allocation1 [shape = 'u32[144,128]{1,0:T(1,128)}', space=vmem, size = 0x12000, scoped, tag = 'internal scratch']
  #allocation2 [shape = 'bf16[16,128]{1,0:T(8,128)(2,1)}', space=vmem, size = 0x1000, scoped, tag = 'scratch operand']
  #allocation3 [shape = 'f32[1,1]{1,0:T(1,128)S(1)}', space=vmem, size = 0x200, scoped, tag = 'scoped memory for tpu_custom_call.1']
  %s0 = inlined_call_operand.vmem [shape: bf16[16,6], index: 0, kind: input, shape index: {}]
  %s1 = inlined_call_operand.hbm [shape: bf16[6,512], index: 1, kind: input, shape index: {}]
  %s2 = inlined_call_operand.vmem [shape: f32[1,512], index: 2, kind: input, shape index: {}]
  %s3 = inlined_call_operand.hbm [shape: bf16[256,1024], index: 3, kind: input, shape index: {}]
  %s4 = inlined_call_operand.vmem [shape: f32[1,512], index: 4, kind: input, shape index: {}]
  %s5 = inlined_call_operand.hbm [shape: bf16[128,128], index: 5, kind: input, shape index: {}]
  %s6 = inlined_call_operand.<no memory space> [shape: f32[1,1], index: 6, kind: input, shape index: {}]
  %s7 = inlined_call_operand.hbm [shape: f32[16,128], index: 7, kind: output, shape index: {}]
  %s8 = sld [smem:[#allocation0]]
  $region50: #{tpu_custom_call.1} parent=0
    _
  %s10 = ssub.s32 1, %s8
  %s11 = scalar_select 0, %s10, %s8
  %v12 = vstv %s6
  %13 = vst [vmem:[#allocation3] sm:$0x1] %v12
  $region1: #{tpu_custom_call.1} parent=0
    #allocation4 [shape = 'u8[8192]{0}', space=vmem, size = 0x2000, scoped, tag = 'input window, operand 1, single buffered']
    #allocation5 [shape = 's32[1]{0}', space=sflag, size = 0x4, scoped, tag = 'scoped memory for tpu_custom_call.1']
    #allocation6 [shape = 's32[1]{0}', space=sflag, size = 0x4, scoped, tag = 'scoped memory for tpu_custom_call.1']
    #allocation7 [shape = 'u8[524288]{0}', space=vmem, size = 0x80000, scoped, tag = 'input window, operand 3, single buffered']
    #allocation8 [shape = 's32[1]{0}', space=sflag, size = 0x4, scoped, tag = 'scoped memory for tpu_custom_call.1']
    #allocation9 [shape = 'u8[32768]{0}', space=vmem, size = 0x8000, scoped, tag = 'input window, operand 5, single buffered']
    #allocation10 [shape = 'u8[8192]{0}', space=vmem, size = 0x2000, scoped, tag = 'output window, operand 0, single buffered']
    %14 = vsyncpa [#allocation5], 0
    %15 = vsyncpa [#allocation8], 0
    %16 = vsyncpa [#allocation6], 0
    // Predicated region
    $region2: #{tpu_custom_call.1} parent=1 // pred_check
      _
    $region3: #{tpu_custom_call.1} parent=1 // pred_check_branch
      %18 = sbr.rel (0) target = $region5
    $region4: #{tpu_custom_call.1} parent=1 // pred_region
      _
    $region5: #{tpu_custom_call.1} parent=1 // pred_fallthru
      _
    // Predicated region
    $region6: #{tpu_custom_call.1} parent=1 // pred_check
      _
    $region7: #{tpu_custom_call.1} parent=1 // pred_check_branch
      %20 = sbr.rel (0) target = $region9
    $region8: #{tpu_custom_call.1} parent=1 // pred_region
      %s22 = ssub.s32 256, 256
      %23 = vsyncadd [#allocation5], %s22
      %s25 = sshll.u32 [#allocation4], 4
      %s26 = int_to_ptr.vmem [resolvable:$true] %s25
      %28 = dma.hbm_to_vmem [thread:$0]  %s1, 256, %s26, [#allocation5]
    $region9: #{tpu_custom_call.1} parent=1 // pred_fallthru
      _
    // Predicated region
    $region10: #{tpu_custom_call.1} parent=1 // pred_check
      _
    $region11: #{tpu_custom_call.1} parent=1 // pred_check_branch
      %30 = sbr.rel (0) target = $region13
    $region12: #{tpu_custom_call.1} parent=1 // pred_region
      _
    $region13: #{tpu_custom_call.1} parent=1 // pred_fallthru
      _
    // Predicated region
    $region14: #{tpu_custom_call.1} parent=1 // pred_check
      _
    $region15: #{tpu_custom_call.1} parent=1 // pred_check_branch
      %32 = sbr.rel (0) target = $region17
    $region16: #{tpu_custom_call.1} parent=1 // pred_region
      %s34 = ssub.s32 16384, 16384
      %35 = vsyncadd [#allocation8], %s34
      %s36 = sshll.u32 [#allocation7], 4
      %s37 = int_to_ptr.vmem [resolvable:$true] %s36
      %42 = dma.hbm_to_vmem [thread:$0]  %s3, 16384, %s37, [#allocation8], 512, 512, 32
    $region17: #{tpu_custom_call.1} parent=1 // pred_fallthru
      _
    // Predicated region
    $region18: #{tpu_custom_call.1} parent=1 // pred_check
      _
    $region19: #{tpu_custom_call.1} parent=1 // pred_check_branch
      %44 = sbr.rel (0) target = $region21
    $region20: #{tpu_custom_call.1} parent=1 // pred_region
      _
    $region21: #{tpu_custom_call.1} parent=1 // pred_fallthru
      _
    // Predicated region
    $region22: #{tpu_custom_call.1} parent=1 // pred_check
      _
    $region23: #{tpu_custom_call.1} parent=1 // pred_check_branch
      %46 = sbr.rel (0) target = $region25
    $region24: #{tpu_custom_call.1} parent=1 // pred_region
      %s48 = ssub.s32 1024, 1024
      %49 = vsyncadd [#allocation8], %s48
      %s50 = sshll.u32 [#allocation9], 4
      %s51 = int_to_ptr.vmem [resolvable:$true] %s50
      %56 = dma.hbm_to_vmem [thread:$0]  %s5, 1024, %s51, [#allocation8], 64, 64, 4
    $region25: #{tpu_custom_call.1} parent=1 // pred_fallthru
      _
    // Predicated region
    $region26: #{tpu_custom_call.1} parent=1 // pred_check
      _
    $region27: #{tpu_custom_call.1} parent=1 // pred_check_branch
      %58 = sbr.rel (0) target = $region29
    $region28: #{tpu_custom_call.1} parent=1 // pred_region
      _
    $region29: #{tpu_custom_call.1} parent=1 // pred_fallthru
      _
    // Predicated region
    $region30: #{tpu_custom_call.1} parent=1 // pred_check
      _
    $region31: #{tpu_custom_call.1} parent=1 // pred_check_branch
      %60 = sbr.rel (0) target = $region33
    $region32: #{tpu_custom_call.1} parent=1 // pred_region
      %61 = dma.done [#allocation5], 256
    $region33: #{tpu_custom_call.1} parent=1 // pred_fallthru
      _
    // Predicated region
    $region34: #{tpu_custom_call.1} parent=1 // pred_check
      _
    $region35: #{tpu_custom_call.1} parent=1 // pred_check_branch
      %63 = sbr.rel (0) target = $region37
    $region36: #{tpu_custom_call.1} parent=1 // pred_region
      %64 = dma.done [#allocation8], 16384
    $region37: #{tpu_custom_call.1} parent=1 // pred_fallthru
      _
    // Predicated region
    $region38: #{tpu_custom_call.1} parent=1 // pred_check
      _
    $region39: #{tpu_custom_call.1} parent=1 // pred_check_branch
      %66 = sbr.rel (0) target = $region41
    $region40: #{tpu_custom_call.1} parent=1 // pred_region
      %67 = dma.done [#allocation8], 1024
    $region41: #{tpu_custom_call.1} parent=1 // pred_fallthru
      _
    %v69 = vld [vmem:[%s0] sm:$0xf]
    %v70 = vld [vmem:[%s0 + $0x4] sm:$0xf]
    %v71 = vld [vmem:[#allocation4] sm:$0x77]
    %v72 = vld [vmem:[#allocation4 + $0x8] sm:$0x77]
    %v73 = vld [vmem:[%s2] sm:$0xf]
    %v75 = vlaneseq
    %v76 = vshrl.u32 %v75, 7
    %v77 = vsub.s32 0, %v76
    %v78 = vrot.slane %v73, %v77
    %v79 = vlaneseq
    %v80 = vshrl.u32 %v79, 7
    %v81 = vsub.s32 1, %v80
    %v82 = vrot.slane %v73, %v81
    %v83 = vlaneseq
    %v84 = vshrl.u32 %v83, 7
    %v85 = vsub.s32 2, %v84
    %v86 = vrot.slane %v73, %v85
    %v87 = vlaneseq
    %v88 = vshrl.u32 %v87, 7
    %v89 = vsub.s32 3, %v88
    %v90 = vrot.slane %v73, %v89
    %v97 = vunpack.c.l.b16 %v69
    %v98 = vunpack.c.l.b16 %v70
    %v99 = vpack.c.b16 %v98, %v97
    %v102 = vunpack.c.l.b16 %v71
    %v103 = vunpack.c.h.b16 %v71
    %v104 = vunpack.c.l.b16 %v72
    %v105 = vunpack.c.h.b16 %v72
    %v106 = vpack.c.b16 %v102, %v102
    %v107 = vpack.c.b16 %v103, %v103
    %v108 = vpack.c.b16 %v104, %v104
    %v109 = vpack.c.b16 %v105, %v105
    %vm110 = vcmask 48128
    %v112 = vsel %vm110, %v99, 0
    %vm114 = vcmask 1042432
    %v116 = vsel %vm114, %v106, 0
    %v119 = vsel %vm114, %v107, 0
    %v122 = vsel %vm114, %v108, 0
    %v125 = vsel %vm114, %v109, 0
    %127 = vmatprep.subr.bf16.mxu0 0
    %128 = vmatpush1.bf16.msra.mxu0 0
    %129 = vmatprep.subr.bf16.mxu0 0
    %130 = vmatpush1.bf16.msra.mxu0 0
    %131 = vmatprep.subr.bf16.mxu0 0
    %132 = vmatpush1.bf16.msra.mxu0 0
    %133 = vmatprep.subr.bf16.mxu0 0
    %134 = vmatpush1.bf16.msra.mxu0 0
    %135 = vmatprep.subr.bf16.mxu0 0
    %136 = vmatpush1.bf16.msra.mxu0 0
    %137 = vmatprep.subr.bf16.mxu0 0
    %138 = vmatpush1.bf16.msra.mxu0 0
    %139 = vmatprep.subr.bf16.mxu0 0
    %140 = vmatpush1.bf16.msra.mxu0 0
    %141 = vmatprep.subr.bf16.mxu0 %v119
    %142 = vmatpush1.bf16.msra.mxu0 %v116
    %143 = vmatprep.subr.bf16.mxu0 0
    %144 = vmatpush2.bf16.msra.mxu0 0
    %145 = vmatprep.subr.bf16.mxu0 0
    %146 = vmatpush2.bf16.msra.mxu0 0
    %147 = vmatprep.subr.bf16.mxu0 0
    %148 = vmatpush2.bf16.msra.mxu0 0
    %149 = vmatprep.subr.bf16.mxu0 0
    %150 = vmatpush2.bf16.msra.mxu0 0
    %151 = vmatprep.subr.bf16.mxu0 0
    %152 = vmatpush2.bf16.msra.mxu0 0
    %153 = vmatprep.subr.bf16.mxu0 0
    %154 = vmatpush2.bf16.msra.mxu0 0
    %155 = vmatprep.subr.bf16.mxu0 0
    %156 = vmatpush2.bf16.msra.mxu0 0
    %157 = vmatprep.subr.bf16.mxu0 0
    %158 = vmatpush2.bf16.msra.mxu0 0
    %159 = vmatprep.mubr.bf16.mxu0 0
    %160 = vmatmul.mubr.bf16.gmra.mxu0 %v112
    %v161 = vpop.f32.mrf.mxu0
    %v162 = vadd.f32 %v78, %v161
    %v163 = vpop.f32.mrf.mxu0
    %v164 = vadd.f32 %v82, %v163
    %v165 = vpop.f32.mrf.mxu0
    %v166 = vadd.f32 %v78, %v165
    %v167 = vpop.f32.mrf.mxu0
    %v168 = vadd.f32 %v82, %v167
    %169 = vdwg.mxu0
    %170 = vmatprep.subr.bf16.mxu0 0
    %171 = vmatpush1.bf16.msra.mxu0 0
    %172 = vmatprep.subr.bf16.mxu0 0
    %173 = vmatpush1.bf16.msra.mxu0 0
    %174 = vmatprep.subr.bf16.mxu0 0
    %175 = vmatpush1.bf16.msra.mxu0 0
    %176 = vmatprep.subr.bf16.mxu0 0
    %177 = vmatpush1.bf16.msra.mxu0 0
    %178 = vmatprep.subr.bf16.mxu0 0
    %179 = vmatpush1.bf16.msra.mxu0 0
    %180 = vmatprep.subr.bf16.mxu0 0
    %181 = vmatpush1.bf16.msra.mxu0 0
    %182 = vmatprep.subr.bf16.mxu0 0
    %183 = vmatpush1.bf16.msra.mxu0 0
    %184 = vmatprep.subr.bf16.mxu0 %v125
    %185 = vmatpush1.bf16.msra.mxu0 %v122
    %186 = vmatprep.subr.bf16.mxu0 0
    %187 = vmatpush2.bf16.msra.mxu0 0
    %188 = vmatprep.subr.bf16.mxu0 0
    %189 = vmatpush2.bf16.msra.mxu0 0
    %190 = vmatprep.subr.bf16.mxu0 0
    %191 = vmatpush2.bf16.msra.mxu0 0
    %192 = vmatprep.subr.bf16.mxu0 0
    %193 = vmatpush2.bf16.msra.mxu0 0
    %194 = vmatprep.subr.bf16.mxu0 0
    %195 = vmatpush2.bf16.msra.mxu0 0
    %196 = vmatprep.subr.bf16.mxu0 0
    %197 = vmatpush2.bf16.msra.mxu0 0
    %198 = vmatprep.subr.bf16.mxu0 0
    %199 = vmatpush2.bf16.msra.mxu0 0
    %200 = vmatprep.subr.bf16.mxu0 0
    %201 = vmatpush2.bf16.msra.mxu0 0
    %202 = vmatprep.mubr.bf16.mxu0 0
    %203 = vmatmul.mubr.bf16.gmra.mxu0 %v112
    %v204 = vpop.f32.mrf.mxu0
    %v205 = vadd.f32 %v86, %v204
    %v206 = vpop.f32.mrf.mxu0
    %v207 = vadd.f32 %v90, %v206
    %v208 = vpop.f32.mrf.mxu0
    %v209 = vadd.f32 %v86, %v208
    %v210 = vpop.f32.mrf.mxu0
    %v211 = vadd.f32 %v90, %v210
    %212 = vdwg.mxu0
    %v213 = vld [vmem:[%s4] sm:$0xf]
    %v214 = vxor.u32 %v162, 2147483648
    %v215 = vmul.f32 %v214, 1.442695
    %v216 = vpow.pop %v215
    %v217 = vadd.f32 %v216, 1.0
    %v218 = vrcp.pop %v217
    %v219 = vmul.f32 1.0, %v218
    %v220 = vxor.u32 %v164, 2147483648
    %v221 = vmul.f32 %v220, 1.442695
    %v222 = vpow.pop %v221
    %v223 = vadd.f32 %v222, 1.0
    %v224 = vrcp.pop %v223
    %v225 = vmul.f32 1.0, %v224
    %v226 = vtanh.pop %v205
    %v227 = vxor.u32 %v207, 2147483648
    %v228 = vmul.f32 %v227, 1.442695
    %v229 = vpow.pop %v228
    %v230 = vadd.f32 %v229, 1.0
    %v231 = vrcp.pop %v230
    %v232 = vmul.f32 1.0, %v231
    %v233 = vmul.f32 %v225, 0.0
    %v234 = vmul.f32 %v219, %v226
    %v235 = vadd.f32 %v233, %v234
    %v236 = vtanh.pop %v235
    %v237 = vmul.f32 %v232, %v236
    %v238 = vpack.c.bf16 %v237, %v237
    %v239 = vld [vmem:[#allocation7] sm:$0xff]
    %v240 = vld [vmem:[#allocation7 + $0x8] sm:$0xff]
    %v241 = vld [vmem:[#allocation7 + $0x10] sm:$0xff]
    %v242 = vld [vmem:[#allocation7 + $0x18] sm:$0xff]
    %v243 = vld [vmem:[#allocation7 + $0x20] sm:$0xff]
    %v244 = vld [vmem:[#allocation7 + $0x28] sm:$0xff]
    %v245 = vld [vmem:[#allocation7 + $0x30] sm:$0xff]
    %v246 = vld [vmem:[#allocation7 + $0x38] sm:$0xff]
    %v247 = vld [vmem:[#allocation7 + $0x40] sm:$0xff]
    %v248 = vld [vmem:[#allocation7 + $0x48] sm:$0xff]
    %v249 = vld [vmem:[#allocation7 + $0x50] sm:$0xff]
    %v250 = vld [vmem:[#allocation7 + $0x58] sm:$0xff]
    %v251 = vld [vmem:[#allocation7 + $0x60] sm:$0xff]
    %v252 = vld [vmem:[#allocation7 + $0x68] sm:$0xff]
    %v253 = vld [vmem:[#allocation7 + $0x70] sm:$0xff]
    %v254 = vld [vmem:[#allocation7 + $0x78] sm:$0xff]
    %v255 = vld [vmem:[#allocation7 + $0x80] sm:$0xff]
    %v256 = vld [vmem:[#allocation7 + $0x88] sm:$0xff]
    %v257 = vld [vmem:[#allocation7 + $0x90] sm:$0xff]
    %v258 = vld [vmem:[#allocation7 + $0x98] sm:$0xff]
    %v259 = vld [vmem:[#allocation7 + $0xa0] sm:$0xff]
    %v260 = vld [vmem:[#allocation7 + $0xa8] sm:$0xff]
    %v261 = vld [vmem:[#allocation7 + $0xb0] sm:$0xff]
    %v262 = vld [vmem:[#allocation7 + $0xb8] sm:$0xff]
    %v263 = vld [vmem:[#allocation7 + $0xc0] sm:$0xff]
    %v264 = vld [vmem:[#allocation7 + $0xc8] sm:$0xff]
    %v265 = vld [vmem:[#allocation7 + $0xd0] sm:$0xff]
    %v266 = vld [vmem:[#allocation7 + $0xd8] sm:$0xff]
    %v267 = vld [vmem:[#allocation7 + $0xe0] sm:$0xff]
    %v268 = vld [vmem:[#allocation7 + $0xe8] sm:$0xff]
    %v269 = vld [vmem:[#allocation7 + $0xf0] sm:$0xff]
    %v270 = vld [vmem:[#allocation7 + $0xf8] sm:$0xff]
    %v271 = vld [vmem:[#allocation7 + $0x100] sm:$0xff]
    %v272 = vld [vmem:[#allocation7 + $0x108] sm:$0xff]
    %v273 = vld [vmem:[#allocation7 + $0x110] sm:$0xff]
    %v274 = vld [vmem:[#allocation7 + $0x118] sm:$0xff]
    %v275 = vld [vmem:[#allocation7 + $0x120] sm:$0xff]
    %v276 = vld [vmem:[#allocation7 + $0x128] sm:$0xff]
    %v277 = vld [vmem:[#allocation7 + $0x130] sm:$0xff]
    %v278 = vld [vmem:[#allocation7 + $0x138] sm:$0xff]
    %v279 = vld [vmem:[#allocation7 + $0x140] sm:$0xff]
    %v280 = vld [vmem:[#allocation7 + $0x148] sm:$0xff]
    %v281 = vld [vmem:[#allocation7 + $0x150] sm:$0xff]
    %v282 = vld [vmem:[#allocation7 + $0x158] sm:$0xff]
    %v283 = vld [vmem:[#allocation7 + $0x160] sm:$0xff]
    %v284 = vld [vmem:[#allocation7 + $0x168] sm:$0xff]
    %v285 = vld [vmem:[#allocation7 + $0x170] sm:$0xff]
    %v286 = vld [vmem:[#allocation7 + $0x178] sm:$0xff]
    %v287 = vld [vmem:[#allocation7 + $0x180] sm:$0xff]
    %v288 = vld [vmem:[#allocation7 + $0x188] sm:$0xff]
    %v289 = vld [vmem:[#allocation7 + $0x190] sm:$0xff]
    %v290 = vld [vmem:[#allocation7 + $0x198] sm:$0xff]
    %v291 = vld [vmem:[#allocation7 + $0x1a0] sm:$0xff]
    %v292 = vld [vmem:[#allocation7 + $0x1a8] sm:$0xff]
    %v293 = vld [vmem:[#allocation7 + $0x1b0] sm:$0xff]
    %v294 = vld [vmem:[#allocation7 + $0x1b8] sm:$0xff]
    %v295 = vld [vmem:[#allocation7 + $0x1c0] sm:$0xff]
    %v296 = vld [vmem:[#allocation7 + $0x1c8] sm:$0xff]
    %v297 = vld [vmem:[#allocation7 + $0x1d0] sm:$0xff]
    %v298 = vld [vmem:[#allocation7 + $0x1d8] sm:$0xff]
    %v299 = vld [vmem:[#allocation7 + $0x1e0] sm:$0xff]
    %v300 = vld [vmem:[#allocation7 + $0x1e8] sm:$0xff]
    %v301 = vld [vmem:[#allocation7 + $0x1f0] sm:$0xff]
    %v302 = vld [vmem:[#allocation7 + $0x1f8] sm:$0xff]
    %v303 = vld [vmem:[#allocation7 + $0x200] sm:$0xff]
    %v304 = vld [vmem:[#allocation7 + $0x208] sm:$0xff]
    %v305 = vld [vmem:[#allocation7 + $0x210] sm:$0xff]
    %v306 = vld [vmem:[#allocation7 + $0x218] sm:$0xff]
    %v307 = vld [vmem:[#allocation7 + $0x220] sm:$0xff]
    %v308 = vld [vmem:[#allocation7 + $0x228] sm:$0xff]
    %v309 = vld [vmem:[#allocation7 + $0x230] sm:$0xff]
    %v310 = vld [vmem:[#allocation7 + $0x238] sm:$0xff]
    %v311 = vld [vmem:[#allocation7 + $0x240] sm:$0xff]
    %v312 = vld [vmem:[#allocation7 + $0x248] sm:$0xff]
    %v313 = vld [vmem:[#allocation7 + $0x250] sm:$0xff]
    %v314 = vld [vmem:[#allocation7 + $0x258] sm:$0xff]
    %v315 = vld [vmem:[#allocation7 + $0x260] sm:$0xff]
    %v316 = vld [vmem:[#allocation7 + $0x268] sm:$0xff]
    %v317 = vld [vmem:[#allocation7 + $0x270] sm:$0xff]
    %v318 = vld [vmem:[#allocation7 + $0x278] sm:$0xff]
    %v319 = vld [vmem:[#allocation7 + $0x280] sm:$0xff]
    %v320 = vld [vmem:[#allocation7 + $0x288] sm:$0xff]
    %v321 = vld [vmem:[#allocation7 + $0x290] sm:$0xff]
    %v322 = vld [vmem:[#allocation7 + $0x298] sm:$0xff]
    %v323 = vld [vmem:[#allocation7 + $0x2a0] sm:$0xff]
    %v324 = vld [vmem:[#allocation7 + $0x2a8] sm:$0xff]
    %v325 = vld [vmem:[#allocation7 + $0x2b0] sm:$0xff]
    %v326 = vld [vmem:[#allocation7 + $0x2b8] sm:$0xff]
    %v327 = vld [vmem:[#allocation7 + $0x2c0] sm:$0xff]
    %v328 = vld [vmem:[#allocation7 + $0x2c8] sm:$0xff]
    %v329 = vld [vmem:[#allocation7 + $0x2d0] sm:$0xff]
    %v330 = vld [vmem:[#allocation7 + $0x2d8] sm:$0xff]
    %v331 = vld [vmem:[#allocation7 + $0x2e0] sm:$0xff]
    %v332 = vld [vmem:[#allocation7 + $0x2e8] sm:$0xff]
    %v333 = vld [vmem:[#allocation7 + $0x2f0] sm:$0xff]
    %v334 = vld [vmem:[#allocation7 + $0x2f8] sm:$0xff]
    %v335 = vld [vmem:[#allocation7 + $0x300] sm:$0xff]
    %v336 = vld [vmem:[#allocation7 + $0x308] sm:$0xff]
    %v337 = vld [vmem:[#allocation7 + $0x310] sm:$0xff]
    %v338 = vld [vmem:[#allocation7 + $0x318] sm:$0xff]
    %v339 = vld [vmem:[#allocation7 + $0x320] sm:$0xff]
    %v340 = vld [vmem:[#allocation7 + $0x328] sm:$0xff]
    %v341 = vld [vmem:[#allocation7 + $0x330] sm:$0xff]
    %v342 = vld [vmem:[#allocation7 + $0x338] sm:$0xff]
    %v343 = vld [vmem:[#allocation7 + $0x340] sm:$0xff]
    %v344 = vld [vmem:[#allocation7 + $0x348] sm:$0xff]
    %v345 = vld [vmem:[#allocation7 + $0x350] sm:$0xff]
    %v346 = vld [vmem:[#allocation7 + $0x358] sm:$0xff]
    %v347 = vld [vmem:[#allocation7 + $0x360] sm:$0xff]
    %v348 = vld [vmem:[#allocation7 + $0x368] sm:$0xff]
    %v349 = vld [vmem:[#allocation7 + $0x370] sm:$0xff]
    %v350 = vld [vmem:[#allocation7 + $0x378] sm:$0xff]
    %v351 = vld [vmem:[#allocation7 + $0x380] sm:$0xff]
    %v352 = vld [vmem:[#allocation7 + $0x388] sm:$0xff]
    %v353 = vld [vmem:[#allocation7 + $0x390] sm:$0xff]
    %v354 = vld [vmem:[#allocation7 + $0x398] sm:$0xff]
    %v355 = vld [vmem:[#allocation7 + $0x3a0] sm:$0xff]
    %v356 = vld [vmem:[#allocation7 + $0x3a8] sm:$0xff]
    %v357 = vld [vmem:[#allocation7 + $0x3b0] sm:$0xff]
    %v358 = vld [vmem:[#allocation7 + $0x3b8] sm:$0xff]
    %v359 = vld [vmem:[#allocation7 + $0x3c0] sm:$0xff]
    %v360 = vld [vmem:[#allocation7 + $0x3c8] sm:$0xff]
    %v361 = vld [vmem:[#allocation7 + $0x3d0] sm:$0xff]
    %v362 = vld [vmem:[#allocation7 + $0x3d8] sm:$0xff]
    %v363 = vld [vmem:[#allocation7 + $0x3e0] sm:$0xff]
    %v364 = vld [vmem:[#allocation7 + $0x3e8] sm:$0xff]
    %v365 = vld [vmem:[#allocation7 + $0x3f0] sm:$0xff]
    %v366 = vld [vmem:[#allocation7 + $0x3f8] sm:$0xff]
    %v495 = vunpack.c.l.b16 %v239
    %v496 = vunpack.c.h.b16 %v239
    %v497 = vunpack.c.l.b16 %v240
    %v498 = vunpack.c.h.b16 %v240
    %v499 = vunpack.c.l.b16 %v241
    %v500 = vunpack.c.h.b16 %v241
    %v501 = vunpack.c.l.b16 %v242
    %v502 = vunpack.c.h.b16 %v242
    %v503 = vunpack.c.l.b16 %v243
    %v504 = vunpack.c.h.b16 %v243
    %v505 = vunpack.c.l.b16 %v244
    %v506 = vunpack.c.h.b16 %v244
    %v507 = vunpack.c.l.b16 %v245
    %v508 = vunpack.c.h.b16 %v245
    %v509 = vunpack.c.l.b16 %v246
    %v510 = vunpack.c.h.b16 %v246
    %v511 = vunpack.c.l.b16 %v247
    %v512 = vunpack.c.h.b16 %v247
    %v513 = vunpack.c.l.b16 %v248
    %v514 = vunpack.c.h.b16 %v248
    %v515 = vunpack.c.l.b16 %v249
    %v516 = vunpack.c.h.b16 %v249
    %v517 = vunpack.c.l.b16 %v250
    %v518 = vunpack.c.h.b16 %v250
    %v519 = vunpack.c.l.b16 %v251
    %v520 = vunpack.c.h.b16 %v251
    %v521 = vunpack.c.l.b16 %v252
    %v522 = vunpack.c.h.b16 %v252
    %v523 = vunpack.c.l.b16 %v253
    %v524 = vunpack.c.h.b16 %v253
    %v525 = vunpack.c.l.b16 %v254
    %v526 = vunpack.c.h.b16 %v254
    %v527 = vunpack.c.l.b16 %v255
    %v528 = vunpack.c.h.b16 %v255
    %v529 = vunpack.c.l.b16 %v256
    %v530 = vunpack.c.h.b16 %v256
    %v531 = vunpack.c.l.b16 %v257
    %v532 = vunpack.c.h.b16 %v257
    %v533 = vunpack.c.l.b16 %v258
    %v534 = vunpack.c.h.b16 %v258
    %v535 = vunpack.c.l.b16 %v259
    %v536 = vunpack.c.h.b16 %v259
    %v537 = vunpack.c.l.b16 %v260
    %v538 = vunpack.c.h.b16 %v260
    %v539 = vunpack.c.l.b16 %v261
    %v540 = vunpack.c.h.b16 %v261
    %v541 = vunpack.c.l.b16 %v262
    %v542 = vunpack.c.h.b16 %v262
    %v543 = vunpack.c.l.b16 %v263
    %v544 = vunpack.c.h.b16 %v263
    %v545 = vunpack.c.l.b16 %v264
    %v546 = vunpack.c.h.b16 %v264
    %v547 = vunpack.c.l.b16 %v265
    %v548 = vunpack.c.h.b16 %v265
    %v549 = vunpack.c.l.b16 %v266
    %v550 = vunpack.c.h.b16 %v266
    %v551 = vunpack.c.l.b16 %v267
    %v552 = vunpack.c.h.b16 %v267
    %v553 = vunpack.c.l.b16 %v268
    %v554 = vunpack.c.h.b16 %v268
    %v555 = vunpack.c.l.b16 %v269
    %v556 = vunpack.c.h.b16 %v269
    %v557 = vunpack.c.l.b16 %v270
    %v558 = vunpack.c.h.b16 %v270
    %v559 = vunpack.c.l.b16 %v271
    %v560 = vunpack.c.h.b16 %v271
    %v561 = vunpack.c.l.b16 %v272
    %v562 = vunpack.c.h.b16 %v272
    %v563 = vunpack.c.l.b16 %v273
    %v564 = vunpack.c.h.b16 %v273
    %v565 = vunpack.c.l.b16 %v274
    %v566 = vunpack.c.h.b16 %v274
    %v567 = vunpack.c.l.b16 %v275
    %v568 = vunpack.c.h.b16 %v275
    %v569 = vunpack.c.l.b16 %v276
    %v570 = vunpack.c.h.b16 %v276
    %v571 = vunpack.c.l.b16 %v277
    %v572 = vunpack.c.h.b16 %v277
    %v573 = vunpack.c.l.b16 %v278
    %v574 = vunpack.c.h.b16 %v278
    %v575 = vunpack.c.l.b16 %v279
    %v576 = vunpack.c.h.b16 %v279
    %v577 = vunpack.c.l.b16 %v280
    %v578 = vunpack.c.h.b16 %v280
    %v579 = vunpack.c.l.b16 %v281
    %v580 = vunpack.c.h.b16 %v281
    %v581 = vunpack.c.l.b16 %v282
    %v582 = vunpack.c.h.b16 %v282
    %v583 = vunpack.c.l.b16 %v283
    %v584 = vunpack.c.h.b16 %v283
    %v585 = vunpack.c.l.b16 %v284
    %v586 = vunpack.c.h.b16 %v284
    %v587 = vunpack.c.l.b16 %v285
    %v588 = vunpack.c.h.b16 %v285
    %v589 = vunpack.c.l.b16 %v286
    %v590 = vunpack.c.h.b16 %v286
    %v591 = vunpack.c.l.b16 %v287
    %v592 = vunpack.c.h.b16 %v287
    %v593 = vunpack.c.l.b16 %v288
    %v594 = vunpack.c.h.b16 %v288
    %v595 = vunpack.c.l.b16 %v289
    %v596 = vunpack.c.h.b16 %v289
    %v597 = vunpack.c.l.b16 %v290
    %v598 = vunpack.c.h.b16 %v290
    %v599 = vunpack.c.l.b16 %v291
    %v600 = vunpack.c.h.b16 %v291
    %v601 = vunpack.c.l.b16 %v292
    %v602 = vunpack.c.h.b16 %v292
    %v603 = vunpack.c.l.b16 %v293
    %v604 = vunpack.c.h.b16 %v293
    %v605 = vunpack.c.l.b16 %v294
    %v606 = vunpack.c.h.b16 %v294
    %v607 = vunpack.c.l.b16 %v295
    %v608 = vunpack.c.h.b16 %v295
    %v609 = vunpack.c.l.b16 %v296
    %v610 = vunpack.c.h.b16 %v296
    %v611 = vunpack.c.l.b16 %v297
    %v612 = vunpack.c.h.b16 %v297
    %v613 = vunpack.c.l.b16 %v298
    %v614 = vunpack.c.h.b16 %v298
    %v615 = vunpack.c.l.b16 %v299
    %v616 = vunpack.c.h.b16 %v299
    %v617 = vunpack.c.l.b16 %v300
    %v618 = vunpack.c.h.b16 %v300
    %v619 = vunpack.c.l.b16 %v301
    %v620 = vunpack.c.h.b16 %v301
    %v621 = vunpack.c.l.b16 %v302
    %v622 = vunpack.c.h.b16 %v302
    %v623 = vunpack.c.l.b16 %v303
    %v624 = vunpack.c.h.b16 %v303
    %v625 = vunpack.c.l.b16 %v304
    %v626 = vunpack.c.h.b16 %v304
    %v627 = vunpack.c.l.b16 %v305
    %v628 = vunpack.c.h.b16 %v305
    %v629 = vunpack.c.l.b16 %v306
    %v630 = vunpack.c.h.b16 %v306
    %v631 = vunpack.c.l.b16 %v307
    %v632 = vunpack.c.h.b16 %v307
    %v633 = vunpack.c.l.b16 %v308
    %v634 = vunpack.c.h.b16 %v308
    %v635 = vunpack.c.l.b16 %v309
    %v636 = vunpack.c.h.b16 %v309
    %v637 = vunpack.c.l.b16 %v310
    %v638 = vunpack.c.h.b16 %v310
    %v639 = vunpack.c.l.b16 %v311
    %v640 = vunpack.c.h.b16 %v311
    %v641 = vunpack.c.l.b16 %v312
    %v642 = vunpack.c.h.b16 %v312
    %v643 = vunpack.c.l.b16 %v313
    %v644 = vunpack.c.h.b16 %v313
    %v645 = vunpack.c.l.b16 %v314
    %v646 = vunpack.c.h.b16 %v314
    %v647 = vunpack.c.l.b16 %v315
    %v648 = vunpack.c.h.b16 %v315
    %v649 = vunpack.c.l.b16 %v316
    %v650 = vunpack.c.h.b16 %v316
    %v651 = vunpack.c.l.b16 %v317
    %v652 = vunpack.c.h.b16 %v317
    %v653 = vunpack.c.l.b16 %v318
    %v654 = vunpack.c.h.b16 %v318
    %v655 = vunpack.c.l.b16 %v319
    %v656 = vunpack.c.h.b16 %v319
    %v657 = vunpack.c.l.b16 %v320
    %v658 = vunpack.c.h.b16 %v320
    %v659 = vunpack.c.l.b16 %v321
    %v660 = vunpack.c.h.b16 %v321
    %v661 = vunpack.c.l.b16 %v322
    %v662 = vunpack.c.h.b16 %v322
    %v663 = vunpack.c.l.b16 %v323
    %v664 = vunpack.c.h.b16 %v323
    %v665 = vunpack.c.l.b16 %v324
    %v666 = vunpack.c.h.b16 %v324
    %v667 = vunpack.c.l.b16 %v325
    %v668 = vunpack.c.h.b16 %v325
    %v669 = vunpack.c.l.b16 %v326
    %v670 = vunpack.c.h.b16 %v326
    %v671 = vunpack.c.l.b16 %v327
    %v672 = vunpack.c.h.b16 %v327
    %v673 = vunpack.c.l.b16 %v328
    %v674 = vunpack.c.h.b16 %v328
    %v675 = vunpack.c.l.b16 %v329
    %v676 = vunpack.c.h.b16 %v329
    %v677 = vunpack.c.l.b16 %v330
    %v678 = vunpack.c.h.b16 %v330
    %v679 = vunpack.c.l.b16 %v331
    %v680 = vunpack.c.h.b16 %v331
    %v681 = vunpack.c.l.b16 %v332
    %v682 = vunpack.c.h.b16 %v332
    %v683 = vunpack.c.l.b16 %v333
    %v684 = vunpack.c.h.b16 %v333
    %v685 = vunpack.c.l.b16 %v334
    %v686 = vunpack.c.h.b16 %v334
    %v687 = vunpack.c.l.b16 %v335
    %v688 = vunpack.c.h.b16 %v335
    %v689 = vunpack.c.l.b16 %v336
    %v690 = vunpack.c.h.b16 %v336
    %v691 = vunpack.c.l.b16 %v337
    %v692 = vunpack.c.h.b16 %v337
    %v693 = vunpack.c.l.b16 %v338
    %v694 = vunpack.c.h.b16 %v338
    %v695 = vunpack.c.l.b16 %v339
    %v696 = vunpack.c.h.b16 %v339
    %v697 = vunpack.c.l.b16 %v340
    %v698 = vunpack.c.h.b16 %v340
    %v699 = vunpack.c.l.b16 %v341
    %v700 = vunpack.c.h.b16 %v341
    %v701 = vunpack.c.l.b16 %v342
    %v702 = vunpack.c.h.b16 %v342
    %v703 = vunpack.c.l.b16 %v343
    %v704 = vunpack.c.h.b16 %v343
    %v705 = vunpack.c.l.b16 %v344
    %v706 = vunpack.c.h.b16 %v344
    %v707 = vunpack.c.l.b16 %v345
    %v708 = vunpack.c.h.b16 %v345
    %v709 = vunpack.c.l.b16 %v346
    %v710 = vunpack.c.h.b16 %v346
    %v711 = vunpack.c.l.b16 %v347
    %v712 = vunpack.c.h.b16 %v347
    %v713 = vunpack.c.l.b16 %v348
    %v714 = vunpack.c.h.b16 %v348
    %v715 = vunpack.c.l.b16 %v349
    %v716 = vunpack.c.h.b16 %v349
    %v717 = vunpack.c.l.b16 %v350
    %v718 = vunpack.c.h.b16 %v350
    %v719 = vunpack.c.l.b16 %v351
    %v720 = vunpack.c.h.b16 %v351
    %v721 = vunpack.c.l.b16 %v352
    %v722 = vunpack.c.h.b16 %v352
    %v723 = vunpack.c.l.b16 %v353
    %v724 = vunpack.c.h.b16 %v353
    %v725 = vunpack.c.l.b16 %v354
    %v726 = vunpack.c.h.b16 %v354
    %v727 = vunpack.c.l.b16 %v355
    %v728 = vunpack.c.h.b16 %v355
    %v729 = vunpack.c.l.b16 %v356
    %v730 = vunpack.c.h.b16 %v356
    %v731 = vunpack.c.l.b16 %v357
    %v732 = vunpack.c.h.b16 %v357
    %v733 = vunpack.c.l.b16 %v358
    %v734 = vunpack.c.h.b16 %v358
    %v735 = vunpack.c.l.b16 %v359
    %v736 = vunpack.c.h.b16 %v359
    %v737 = vunpack.c.l.b16 %v360
    %v738 = vunpack.c.h.b16 %v360
    %v739 = vunpack.c.l.b16 %v361
    %v740 = vunpack.c.h.b16 %v361
    %v741 = vunpack.c.l.b16 %v362
    %v742 = vunpack.c.h.b16 %v362
    %v743 = vunpack.c.l.b16 %v363
    %v744 = vunpack.c.h.b16 %v363
    %v745 = vunpack.c.l.b16 %v364
    %v746 = vunpack.c.h.b16 %v364
    %v747 = vunpack.c.l.b16 %v365
    %v748 = vunpack.c.h.b16 %v365
    %v749 = vunpack.c.l.b16 %v366
    %v750 = vunpack.c.h.b16 %v366
    %v751 = vpack.c.b16 %v503, %v495
    %v752 = vpack.c.b16 %v504, %v496
    %v753 = vpack.c.b16 %v505, %v497
    %v754 = vpack.c.b16 %v506, %v498
    %v755 = vpack.c.b16 %v507, %v499
    %v756 = vpack.c.b16 %v508, %v500
    %v757 = vpack.c.b16 %v509, %v501
    %v758 = vpack.c.b16 %v510, %v502
    %v759 = vpack.c.b16 %v519, %v511
    %v760 = vpack.c.b16 %v520, %v512
    %v761 = vpack.c.b16 %v521, %v513
    %v762 = vpack.c.b16 %v522, %v514
    %v763 = vpack.c.b16 %v523, %v515
    %v764 = vpack.c.b16 %v524, %v516
    %v765 = vpack.c.b16 %v525, %v517
    %v766 = vpack.c.b16 %v526, %v518
    %v767 = vpack.c.b16 %v535, %v527
    %v768 = vpack.c.b16 %v536, %v528
    %v769 = vpack.c.b16 %v537, %v529
    %v770 = vpack.c.b16 %v538, %v530
    %v771 = vpack.c.b16 %v539, %v531
    %v772 = vpack.c.b16 %v540, %v532
    %v773 = vpack.c.b16 %v541, %v533
    %v774 = vpack.c.b16 %v542, %v534
    %v775 = vpack.c.b16 %v551, %v543
    %v776 = vpack.c.b16 %v552, %v544
    %v777 = vpack.c.b16 %v553, %v545
    %v778 = vpack.c.b16 %v554, %v546
    %v779 = vpack.c.b16 %v555, %v547
    %v780 = vpack.c.b16 %v556, %v548
    %v781 = vpack.c.b16 %v557, %v549
    %v782 = vpack.c.b16 %v558, %v550
    %v783 = vpack.c.b16 %v567, %v559
    %v784 = vpack.c.b16 %v568, %v560
    %v785 = vpack.c.b16 %v569, %v561
    %v786 = vpack.c.b16 %v570, %v562
    %v787 = vpack.c.b16 %v571, %v563
    %v788 = vpack.c.b16 %v572, %v564
    %v789 = vpack.c.b16 %v573, %v565
    %v790 = vpack.c.b16 %v574, %v566
    %v791 = vpack.c.b16 %v583, %v575
    %v792 = vpack.c.b16 %v584, %v576
    %v793 = vpack.c.b16 %v585, %v577
    %v794 = vpack.c.b16 %v586, %v578
    %v795 = vpack.c.b16 %v587, %v579
    %v796 = vpack.c.b16 %v588, %v580
    %v797 = vpack.c.b16 %v589, %v581
    %v798 = vpack.c.b16 %v590, %v582
    %v799 = vpack.c.b16 %v599, %v591
    %v800 = vpack.c.b16 %v600, %v592
    %v801 = vpack.c.b16 %v601, %v593
    %v802 = vpack.c.b16 %v602, %v594
    %v803 = vpack.c.b16 %v603, %v595
    %v804 = vpack.c.b16 %v604, %v596
    %v805 = vpack.c.b16 %v605, %v597
    %v806 = vpack.c.b16 %v606, %v598
    %v807 = vpack.c.b16 %v615, %v607
    %v808 = vpack.c.b16 %v616, %v608
    %v809 = vpack.c.b16 %v617, %v609
    %v810 = vpack.c.b16 %v618, %v610
    %v811 = vpack.c.b16 %v619, %v611
    %v812 = vpack.c.b16 %v620, %v612
    %v813 = vpack.c.b16 %v621, %v613
    %v814 = vpack.c.b16 %v622, %v614
    %v815 = vpack.c.b16 %v631, %v623
    %v816 = vpack.c.b16 %v632, %v624
    %v817 = vpack.c.b16 %v633, %v625
    %v818 = vpack.c.b16 %v634, %v626
    %v819 = vpack.c.b16 %v635, %v627
    %v820 = vpack.c.b16 %v636, %v628
    %v821 = vpack.c.b16 %v637, %v629
    %v822 = vpack.c.b16 %v638, %v630
    %v823 = vpack.c.b16 %v647, %v639
    %v824 = vpack.c.b16 %v648, %v640
    %v825 = vpack.c.b16 %v649, %v641
    %v826 = vpack.c.b16 %v650, %v642
    %v827 = vpack.c.b16 %v651, %v643
    %v828 = vpack.c.b16 %v652, %v644
    %v829 = vpack.c.b16 %v653, %v645
    %v830 = vpack.c.b16 %v654, %v646
    %v831 = vpack.c.b16 %v663, %v655
    %v832 = vpack.c.b16 %v664, %v656
    %v833 = vpack.c.b16 %v665, %v657
    %v834 = vpack.c.b16 %v666, %v658
    %v835 = vpack.c.b16 %v667, %v659
    %v836 = vpack.c.b16 %v668, %v660
    %v837 = vpack.c.b16 %v669, %v661
    %v838 = vpack.c.b16 %v670, %v662
    %v839 = vpack.c.b16 %v679, %v671
    %v840 = vpack.c.b16 %v680, %v672
    %v841 = vpack.c.b16 %v681, %v673
    %v842 = vpack.c.b16 %v682, %v674
    %v843 = vpack.c.b16 %v683, %v675
    %v844 = vpack.c.b16 %v684, %v676
    %v845 = vpack.c.b16 %v685, %v677
    %v846 = vpack.c.b16 %v686, %v678
    %v847 = vpack.c.b16 %v695, %v687
    %v848 = vpack.c.b16 %v696, %v688
    %v849 = vpack.c.b16 %v697, %v689
    %v850 = vpack.c.b16 %v698, %v690
    %v851 = vpack.c.b16 %v699, %v691
    %v852 = vpack.c.b16 %v700, %v692
    %v853 = vpack.c.b16 %v701, %v693
    %v854 = vpack.c.b16 %v702, %v694
    %v855 = vpack.c.b16 %v711, %v703
    %v856 = vpack.c.b16 %v712, %v704
    %v857 = vpack.c.b16 %v713, %v705
    %v858 = vpack.c.b16 %v714, %v706
    %v859 = vpack.c.b16 %v715, %v707
    %v860 = vpack.c.b16 %v716, %v708
    %v861 = vpack.c.b16 %v717, %v709
    %v862 = vpack.c.b16 %v718, %v710
    %v863 = vpack.c.b16 %v727, %v719
    %v864 = vpack.c.b16 %v728, %v720
    %v865 = vpack.c.b16 %v729, %v721
    %v866 = vpack.c.b16 %v730, %v722
    %v867 = vpack.c.b16 %v731, %v723
    %v868 = vpack.c.b16 %v732, %v724
    %v869 = vpack.c.b16 %v733, %v725
    %v870 = vpack.c.b16 %v734, %v726
    %v871 = vpack.c.b16 %v743, %v735
    %v872 = vpack.c.b16 %v744, %v736
    %v873 = vpack.c.b16 %v745, %v737
    %v874 = vpack.c.b16 %v746, %v738
    %v875 = vpack.c.b16 %v747, %v739
    %v876 = vpack.c.b16 %v748, %v740
    %v877 = vpack.c.b16 %v749, %v741
    %v878 = vpack.c.b16 %v750, %v742
    %1007 = vmatprep.subr.bf16.mxu0 %v808
    %1008 = vmatpush1.bf16.msra.mxu0 %v807
    %1009 = vmatprep.subr.bf16.mxu0 %v800
    %1010 = vmatpush1.bf16.msra.mxu0 %v799
    %1011 = vmatprep.subr.bf16.mxu0 %v792
    %1012 = vmatpush1.bf16.msra.mxu0 %v791
    %1013 = vmatprep.subr.bf16.mxu0 %v784
    %1014 = vmatpush1.bf16.msra.mxu0 %v783
    %1015 = vmatprep.subr.bf16.mxu0 %v776
    %1016 = vmatpush1.bf16.msra.mxu0 %v775
    %1017 = vmatprep.subr.bf16.mxu0 %v768
    %1018 = vmatpush1.bf16.msra.mxu0 %v767
    %1019 = vmatprep.subr.bf16.mxu0 %v760
    %1020 = vmatpush1.bf16.msra.mxu0 %v759
    %1021 = vmatprep.subr.bf16.mxu0 %v752
    %1022 = vmatpush1.bf16.msra.mxu0 %v751
    %1023 = vmatprep.subr.bf16.mxu0 %v872
    %1024 = vmatpush2.bf16.msra.mxu0 %v871
    %1025 = vmatprep.subr.bf16.mxu0 %v864
    %1026 = vmatpush2.bf16.msra.mxu0 %v863
    %1027 = vmatprep.subr.bf16.mxu0 %v856
    %1028 = vmatpush2.bf16.msra.mxu0 %v855
    %1029 = vmatprep.subr.bf16.mxu0 %v848
    %1030 = vmatpush2.bf16.msra.mxu0 %v847
    %1031 = vmatprep.subr.bf16.mxu0 %v840
    %1032 = vmatpush2.bf16.msra.mxu0 %v839
    %1033 = vmatprep.subr.bf16.mxu0 %v832
    %1034 = vmatpush2.bf16.msra.mxu0 %v831
    %1035 = vmatprep.subr.bf16.mxu0 %v824
    %1036 = vmatpush2.bf16.msra.mxu0 %v823
    %1037 = vmatprep.subr.bf16.mxu0 %v816
    %1038 = vmatpush2.bf16.msra.mxu0 %v815
    %1039 = vmatprep.mubr.bf16.mxu0 0
    %1040 = vmatmul.mubr.bf16.gmra.mxu0 %v238
    %v1041 = vpop.f32.mrf.mxu0
    %v1042 = vadd.f32 0.0, %v1041
    %v1043 = vpop.f32.mrf.mxu0
    %v1044 = vadd.f32 0.0, %v1043
    %v1045 = vpop.f32.mrf.mxu0
    %v1046 = vpop.f32.mrf.mxu0
    %1047 = vdwg.mxu0
    %1048 = vmatprep.subr.bf16.mxu0 %v810
    %1049 = vmatpush1.bf16.msra.mxu0 %v809
    %1050 = vmatprep.subr.bf16.mxu0 %v802
    %1051 = vmatpush1.bf16.msra.mxu0 %v801
    %1052 = vmatprep.subr.bf16.mxu0 %v794
    %1053 = vmatpush1.bf16.msra.mxu0 %v793
    %1054 = vmatprep.subr.bf16.mxu0 %v786
    %1055 = vmatpush1.bf16.msra.mxu0 %v785
    %1056 = vmatprep.subr.bf16.mxu0 %v778
    %1057 = vmatpush1.bf16.msra.mxu0 %v777
    %1058 = vmatprep.subr.bf16.mxu0 %v770
    %1059 = vmatpush1.bf16.msra.mxu0 %v769
    %1060 = vmatprep.subr.bf16.mxu0 %v762
    %1061 = vmatpush1.bf16.msra.mxu0 %v761
    %1062 = vmatprep.subr.bf16.mxu0 %v754
    %1063 = vmatpush1.bf16.msra.mxu0 %v753
    %1064 = vmatprep.subr.bf16.mxu0 %v874
    %1065 = vmatpush2.bf16.msra.mxu0 %v873
    %1066 = vmatprep.subr.bf16.mxu0 %v866
    %1067 = vmatpush2.bf16.msra.mxu0 %v865
    %1068 = vmatprep.subr.bf16.mxu0 %v858
    %1069 = vmatpush2.bf16.msra.mxu0 %v857
    %1070 = vmatprep.subr.bf16.mxu0 %v850
    %1071 = vmatpush2.bf16.msra.mxu0 %v849
    %1072 = vmatprep.subr.bf16.mxu0 %v842
    %1073 = vmatpush2.bf16.msra.mxu0 %v841
    %1074 = vmatprep.subr.bf16.mxu0 %v834
    %1075 = vmatpush2.bf16.msra.mxu0 %v833
    %1076 = vmatprep.subr.bf16.mxu0 %v826
    %1077 = vmatpush2.bf16.msra.mxu0 %v825
    %1078 = vmatprep.subr.bf16.mxu0 %v818
    %1079 = vmatpush2.bf16.msra.mxu0 %v817
    %1080 = vmatprep.mubr.bf16.mxu0 0
    %1081 = vmatmul.mubr.bf16.gmra.mxu0 %v238
    %v1082 = vpop.f32.mrf.mxu0
    %v1083 = vadd.f32 0.0, %v1082
    %v1084 = vpop.f32.mrf.mxu0
    %v1085 = vadd.f32 0.0, %v1084
    %v1086 = vpop.f32.mrf.mxu0
    %v1087 = vpop.f32.mrf.mxu0
    %1088 = vdwg.mxu0
    %1089 = vmatprep.subr.bf16.mxu0 %v812
    %1090 = vmatpush1.bf16.msra.mxu0 %v811
    %1091 = vmatprep.subr.bf16.mxu0 %v804
    %1092 = vmatpush1.bf16.msra.mxu0 %v803
    %1093 = vmatprep.subr.bf16.mxu0 %v796
    %1094 = vmatpush1.bf16.msra.mxu0 %v795
    %1095 = vmatprep.subr.bf16.mxu0 %v788
    %1096 = vmatpush1.bf16.msra.mxu0 %v787
    %1097 = vmatprep.subr.bf16.mxu0 %v780
    %1098 = vmatpush1.bf16.msra.mxu0 %v779
    %1099 = vmatprep.subr.bf16.mxu0 %v772
    %1100 = vmatpush1.bf16.msra.mxu0 %v771
    %1101 = vmatprep.subr.bf16.mxu0 %v764
    %1102 = vmatpush1.bf16.msra.mxu0 %v763
    %1103 = vmatprep.subr.bf16.mxu0 %v756
    %1104 = vmatpush1.bf16.msra.mxu0 %v755
    %1105 = vmatprep.subr.bf16.mxu0 %v876
    %1106 = vmatpush2.bf16.msra.mxu0 %v875
    %1107 = vmatprep.subr.bf16.mxu0 %v868
    %1108 = vmatpush2.bf16.msra.mxu0 %v867
    %1109 = vmatprep.subr.bf16.mxu0 %v860
    %1110 = vmatpush2.bf16.msra.mxu0 %v859
    %1111 = vmatprep.subr.bf16.mxu0 %v852
    %1112 = vmatpush2.bf16.msra.mxu0 %v851
    %1113 = vmatprep.subr.bf16.mxu0 %v844
    %1114 = vmatpush2.bf16.msra.mxu0 %v843
    %1115 = vmatprep.subr.bf16.mxu0 %v836
    %1116 = vmatpush2.bf16.msra.mxu0 %v835
    %1117 = vmatprep.subr.bf16.mxu0 %v828
    %1118 = vmatpush2.bf16.msra.mxu0 %v827
    %1119 = vmatprep.subr.bf16.mxu0 %v820
    %1120 = vmatpush2.bf16.msra.mxu0 %v819
    %1121 = vmatprep.mubr.bf16.mxu0 0
    %1122 = vmatmul.mubr.bf16.gmra.mxu0 %v238
    %v1123 = vpop.f32.mrf.mxu0
    %v1124 = vadd.f32 0.0, %v1123
    %v1125 = vpop.f32.mrf.mxu0
    %v1126 = vadd.f32 0.0, %v1125
    %v1127 = vpop.f32.mrf.mxu0
    %v1128 = vpop.f32.mrf.mxu0
    %1129 = vdwg.mxu0
    %1130 = vmatprep.subr.bf16.mxu0 %v814
    %1131 = vmatpush1.bf16.msra.mxu0 %v813
    %1132 = vmatprep.subr.bf16.mxu0 %v806
    %1133 = vmatpush1.bf16.msra.mxu0 %v805
    %1134 = vmatprep.subr.bf16.mxu0 %v798
    %1135 = vmatpush1.bf16.msra.mxu0 %v797
    %1136 = vmatprep.subr.bf16.mxu0 %v790
    %1137 = vmatpush1.bf16.msra.mxu0 %v789
    %1138 = vmatprep.subr.bf16.mxu0 %v782
    %1139 = vmatpush1.bf16.msra.mxu0 %v781
    %1140 = vmatprep.subr.bf16.mxu0 %v774
    %1141 = vmatpush1.bf16.msra.mxu0 %v773
    %1142 = vmatprep.subr.bf16.mxu0 %v766
    %1143 = vmatpush1.bf16.msra.mxu0 %v765
    %1144 = vmatprep.subr.bf16.mxu0 %v758
    %1145 = vmatpush1.bf16.msra.mxu0 %v757
    %1146 = vmatprep.subr.bf16.mxu0 %v878
    %1147 = vmatpush2.bf16.msra.mxu0 %v877
    %1148 = vmatprep.subr.bf16.mxu0 %v870
    %1149 = vmatpush2.bf16.msra.mxu0 %v869
    %1150 = vmatprep.subr.bf16.mxu0 %v862
    %1151 = vmatpush2.bf16.msra.mxu0 %v861
    %1152 = vmatprep.subr.bf16.mxu0 %v854
    %1153 = vmatpush2.bf16.msra.mxu0 %v853
    %1154 = vmatprep.subr.bf16.mxu0 %v846
    %1155 = vmatpush2.bf16.msra.mxu0 %v845
    %1156 = vmatprep.subr.bf16.mxu0 %v838
    %1157 = vmatpush2.bf16.msra.mxu0 %v837
    %1158 = vmatprep.subr.bf16.mxu0 %v830
    %1159 = vmatpush2.bf16.msra.mxu0 %v829
    %1160 = vmatprep.subr.bf16.mxu0 %v822
    %1161 = vmatpush2.bf16.msra.mxu0 %v821
    %1162 = vmatprep.mubr.bf16.mxu0 0
    %1163 = vmatmul.mubr.bf16.gmra.mxu0 %v238
    %v1164 = vpop.f32.mrf.mxu0
    %v1165 = vadd.f32 0.0, %v1164
    %v1166 = vpop.f32.mrf.mxu0
    %v1167 = vadd.f32 0.0, %v1166
    %v1168 = vpop.f32.mrf.mxu0
    %v1169 = vpop.f32.mrf.mxu0
    %1170 = vdwg.mxu0
    %v1172 = vlaneseq
    %v1173 = vshrl.u32 %v1172, 7
    %v1174 = vsub.s32 0, %v1173
    %v1175 = vrot.slane %v213, %v1174
    %v1176 = vlaneseq
    %v1177 = vshrl.u32 %v1176, 7
    %v1178 = vsub.s32 1, %v1177
    %v1179 = vrot.slane %v213, %v1178
    %v1180 = vlaneseq
    %v1181 = vshrl.u32 %v1180, 7
    %v1182 = vsub.s32 2, %v1181
    %v1183 = vrot.slane %v213, %v1182
    %v1184 = vlaneseq
    %v1185 = vshrl.u32 %v1184, 7
    %v1186 = vsub.s32 3, %v1185
    %v1187 = vrot.slane %v213, %v1186
    %v1192 = vadd.f32 %v1124, %v1175
    %v1193 = vadd.f32 %v1126, %v1179
    %v1194 = vadd.f32 %v1165, %v1183
    %v1195 = vadd.f32 %v1167, %v1187
    %v1196 = vxor.u32 %v1192, 2147483648
    %v1197 = vmul.f32 %v1196, 1.442695
    %v1198 = vpow.pop %v1197
    %v1199 = vadd.f32 %v1198, 1.0
    %v1200 = vrcp.pop %v1199
    %v1201 = vmul.f32 1.0, %v1200
    %v1202 = vxor.u32 %v1193, 2147483648
    %v1203 = vmul.f32 %v1202, 1.442695
    %v1204 = vpow.pop %v1203
    %v1205 = vadd.f32 %v1204, 1.0
    %v1206 = vrcp.pop %v1205
    %v1207 = vmul.f32 1.0, %v1206
    %v1208 = vtanh.pop %v1194
    %v1209 = vxor.u32 %v1195, 2147483648
    %v1210 = vmul.f32 %v1209, 1.442695
    %v1211 = vpow.pop %v1210
    %v1212 = vadd.f32 %v1211, 1.0
    %v1213 = vrcp.pop %v1212
    %v1214 = vmul.f32 1.0, %v1213
    %v1215 = vmul.f32 %v1207, 0.0
    %v1216 = vmul.f32 %v1201, %v1208
    %v1217 = vadd.f32 %v1215, %v1216
    %v1218 = vtanh.pop %v1217
    %v1219 = vmul.f32 %v1214, %v1218
    %v1220 = vpack.c.bf16 %v1219, %v1219
    %1221 = vst [vmem:[#allocation2] sm:$0x1] %v1220
    %v1226 = vrot.slane %v1042, 6
    %v1227 = vrot.slane %v1044, 6
    %v1228 = vrot.slane %v1083, 6
    %v1229 = vrot.slane %v1085, 6
    %v1234 = vadd.f32 %v162, %v1226
    %v1235 = vadd.f32 %v164, %v1227
    %v1236 = vadd.f32 %v205, %v1228
    %v1237 = vadd.f32 %v207, %v1229
    %v1238 = vxor.u32 %v1234, 2147483648
    %v1239 = vmul.f32 %v1238, 1.442695
    %v1240 = vpow.pop %v1239
    %v1241 = vadd.f32 %v1240, 1.0
    %v1242 = vrcp.pop %v1241
    %v1243 = vmul.f32 1.0, %v1242
    %v1244 = vxor.u32 %v1235, 2147483648
    %v1245 = vmul.f32 %v1244, 1.442695
    %v1246 = vpow.pop %v1245
    %v1247 = vadd.f32 %v1246, 1.0
    %v1248 = vrcp.pop %v1247
    %v1249 = vmul.f32 1.0, %v1248
    %v1250 = vtanh.pop %v1236
    %v1251 = vxor.u32 %v1237, 2147483648
    %v1252 = vmul.f32 %v1251, 1.442695
    %v1253 = vpow.pop %v1252
    %v1254 = vadd.f32 %v1253, 1.0
    %v1255 = vrcp.pop %v1254
    %v1256 = vmul.f32 1.0, %v1255
    %v1258 = vrot.slane %v235, 6
    %v1260 = vmul.f32 %v1249, %v1258
    %v1261 = vmul.f32 %v1243, %v1250
    %v1262 = vadd.f32 %v1260, %v1261
    %v1263 = vtanh.pop %v1262
    %v1264 = vmul.f32 %v1256, %v1263
    %v1265 = vpack.c.bf16 %v1264, %v1264
    %v1267 = vrot.slane %v1220, 7
    %v1268 = vld [vmem:[#allocation7] sm:$0xff]
    %v1269 = vld [vmem:[#allocation7 + $0x8] sm:$0xff]
    %v1270 = vld [vmem:[#allocation7 + $0x10] sm:$0xff]
    %v1271 = vld [vmem:[#allocation7 + $0x18] sm:$0xff]
    %v1272 = vld [vmem:[#allocation7 + $0x20] sm:$0xff]
    %v1273 = vld [vmem:[#allocation7 + $0x28] sm:$0xff]
    %v1274 = vld [vmem:[#allocation7 + $0x30] sm:$0xff]
    %v1275 = vld [vmem:[#allocation7 + $0x38] sm:$0xff]
    %v1276 = vld [vmem:[#allocation7 + $0x40] sm:$0xff]
    %v1277 = vld [vmem:[#allocation7 + $0x48] sm:$0xff]
    %v1278 = vld [vmem:[#allocation7 + $0x50] sm:$0xff]
    %v1279 = vld [vmem:[#allocation7 + $0x58] sm:$0xff]
    %v1280 = vld [vmem:[#allocation7 + $0x60] sm:$0xff]
    %v1281 = vld [vmem:[#allocation7 + $0x68] sm:$0xff]
    %v1282 = vld [vmem:[#allocation7 + $0x70] sm:$0xff]
    %v1283 = vld [vmem:[#allocation7 + $0x78] sm:$0xff]
    %v1284 = vld [vmem:[#allocation7 + $0x80] sm:$0xff]
    %v1285 = vld [vmem:[#allocation7 + $0x88] sm:$0xff]
    %v1286 = vld [vmem:[#allocation7 + $0x90] sm:$0xff]
    %v1287 = vld [vmem:[#allocation7 + $0x98] sm:$0xff]
    %v1288 = vld [vmem:[#allocation7 + $0xa0] sm:$0xff]
    %v1289 = vld [vmem:[#allocation7 + $0xa8] sm:$0xff]
    %v1290 = vld [vmem:[#allocation7 + $0xb0] sm:$0xff]
    %v1291 = vld [vmem:[#allocation7 + $0xb8] sm:$0xff]
    %v1292 = vld [vmem:[#allocation7 + $0xc0] sm:$0xff]
    %v1293 = vld [vmem:[#allocation7 + $0xc8] sm:$0xff]
    %v1294 = vld [vmem:[#allocation7 + $0xd0] sm:$0xff]
    %v1295 = vld [vmem:[#allocation7 + $0xd8] sm:$0xff]
    %v1296 = vld [vmem:[#allocation7 + $0xe0] sm:$0xff]
    %v1297 = vld [vmem:[#allocation7 + $0xe8] sm:$0xff]
    %v1298 = vld [vmem:[#allocation7 + $0xf0] sm:$0xff]
    %v1299 = vld [vmem:[#allocation7 + $0xf8] sm:$0xff]
    %v1300 = vld [vmem:[#allocation7 + $0x100] sm:$0xff]
    %v1301 = vld [vmem:[#allocation7 + $0x108] sm:$0xff]
    %v1302 = vld [vmem:[#allocation7 + $0x110] sm:$0xff]
    %v1303 = vld [vmem:[#allocation7 + $0x118] sm:$0xff]
    %v1304 = vld [vmem:[#allocation7 + $0x120] sm:$0xff]
    %v1305 = vld [vmem:[#allocation7 + $0x128] sm:$0xff]
    %v1306 = vld [vmem:[#allocation7 + $0x130] sm:$0xff]
    %v1307 = vld [vmem:[#allocation7 + $0x138] sm:$0xff]
    %v1308 = vld [vmem:[#allocation7 + $0x140] sm:$0xff]
    %v1309 = vld [vmem:[#allocation7 + $0x148] sm:$0xff]
    %v1310 = vld [vmem:[#allocation7 + $0x150] sm:$0xff]
    %v1311 = vld [vmem:[#allocation7 + $0x158] sm:$0xff]
    %v1312 = vld [vmem:[#allocation7 + $0x160] sm:$0xff]
    %v1313 = vld [vmem:[#allocation7 + $0x168] sm:$0xff]
    %v1314 = vld [vmem:[#allocation7 + $0x170] sm:$0xff]
    %v1315 = vld [vmem:[#allocation7 + $0x178] sm:$0xff]
    %v1316 = vld [vmem:[#allocation7 + $0x180] sm:$0xff]
    %v1317 = vld [vmem:[#allocation7 + $0x188] sm:$0xff]
    %v1318 = vld [vmem:[#allocation7 + $0x190] sm:$0xff]
    %v1319 = vld [vmem:[#allocation7 + $0x198] sm:$0xff]
    %v1320 = vld [vmem:[#allocation7 + $0x1a0] sm:$0xff]
    %v1321 = vld [vmem:[#allocation7 + $0x1a8] sm:$0xff]
    %v1322 = vld [vmem:[#allocation7 + $0x1b0] sm:$0xff]
    %v1323 = vld [vmem:[#allocation7 + $0x1b8] sm:$0xff]
    %v1324 = vld [vmem:[#allocation7 + $0x1c0] sm:$0xff]
    %v1325 = vld [vmem:[#allocation7 + $0x1c8] sm:$0xff]
    %v1326 = vld [vmem:[#allocation7 + $0x1d0] sm:$0xff]
    %v1327 = vld [vmem:[#allocation7 + $0x1d8] sm:$0xff]
    %v1328 = vld [vmem:[#allocation7 + $0x1e0] sm:$0xff]
    %v1329 = vld [vmem:[#allocation7 + $0x1e8] sm:$0xff]
    %v1330 = vld [vmem:[#allocation7 + $0x1f0] sm:$0xff]
    %v1331 = vld [vmem:[#allocation7 + $0x1f8] sm:$0xff]
    %v1332 = vld [vmem:[#allocation7 + $0x200] sm:$0xff]
    %v1333 = vld [vmem:[#allocation7 + $0x208] sm:$0xff]
    %v1334 = vld [vmem:[#allocation7 + $0x210] sm:$0xff]
    %v1335 = vld [vmem:[#allocation7 + $0x218] sm:$0xff]
    %v1336 = vld [vmem:[#allocation7 + $0x220] sm:$0xff]
    %v1337 = vld [vmem:[#allocation7 + $0x228] sm:$0xff]
    %v1338 = vld [vmem:[#allocation7 + $0x230] sm:$0xff]
    %v1339 = vld [vmem:[#allocation7 + $0x238] sm:$0xff]
    %v1340 = vld [vmem:[#allocation7 + $0x240] sm:$0xff]
    %v1341 = vld [vmem:[#allocation7 + $0x248] sm:$0xff]
    %v1342 = vld [vmem:[#allocation7 + $0x250] sm:$0xff]
    %v1343 = vld [vmem:[#allocation7 + $0x258] sm:$0xff]
    %v1344 = vld [vmem:[#allocation7 + $0x260] sm:$0xff]
    %v1345 = vld [vmem:[#allocation7 + $0x268] sm:$0xff]
    %v1346 = vld [vmem:[#allocation7 + $0x270] sm:$0xff]
    %v1347 = vld [vmem:[#allocation7 + $0x278] sm:$0xff]
    %v1348 = vld [vmem:[#allocation7 + $0x280] sm:$0xff]
    %v1349 = vld [vmem:[#allocation7 + $0x288] sm:$0xff]
    %v1350 = vld [vmem:[#allocation7 + $0x290] sm:$0xff]
    %v1351 = vld [vmem:[#allocation7 + $0x298] sm:$0xff]
    %v1352 = vld [vmem:[#allocation7 + $0x2a0] sm:$0xff]
    %v1353 = vld [vmem:[#allocation7 + $0x2a8] sm:$0xff]
    %v1354 = vld [vmem:[#allocation7 + $0x2b0] sm:$0xff]
    %v1355 = vld [vmem:[#allocation7 + $0x2b8] sm:$0xff]
    %v1356 = vld [vmem:[#allocation7 + $0x2c0] sm:$0xff]
    %v1357 = vld [vmem:[#allocation7 + $0x2c8] sm:$0xff]
    %v1358 = vld [vmem:[#allocation7 + $0x2d0] sm:$0xff]
    %v1359 = vld [vmem:[#allocation7 + $0x2d8] sm:$0xff]
    %v1360 = vld [vmem:[#allocation7 + $0x2e0] sm:$0xff]
    %v1361 = vld [vmem:[#allocation7 + $0x2e8] sm:$0xff]
    %v1362 = vld [vmem:[#allocation7 + $0x2f0] sm:$0xff]
    %v1363 = vld [vmem:[#allocation7 + $0x2f8] sm:$0xff]
    %v1364 = vld [vmem:[#allocation7 + $0x300] sm:$0xff]
    %v1365 = vld [vmem:[#allocation7 + $0x308] sm:$0xff]
    %v1366 = vld [vmem:[#allocation7 + $0x310] sm:$0xff]
    %v1367 = vld [vmem:[#allocation7 + $0x318] sm:$0xff]
    %v1368 = vld [vmem:[#allocation7 + $0x320] sm:$0xff]
    %v1369 = vld [vmem:[#allocation7 + $0x328] sm:$0xff]
    %v1370 = vld [vmem:[#allocation7 + $0x330] sm:$0xff]
    %v1371 = vld [vmem:[#allocation7 + $0x338] sm:$0xff]
    %v1372 = vld [vmem:[#allocation7 + $0x340] sm:$0xff]
    %v1373 = vld [vmem:[#allocation7 + $0x348] sm:$0xff]
    %v1374 = vld [vmem:[#allocation7 + $0x350] sm:$0xff]
    %v1375 = vld [vmem:[#allocation7 + $0x358] sm:$0xff]
    %v1376 = vld [vmem:[#allocation7 + $0x360] sm:$0xff]
    %v1377 = vld [vmem:[#allocation7 + $0x368] sm:$0xff]
    %v1378 = vld [vmem:[#allocation7 + $0x370] sm:$0xff]
    %v1379 = vld [vmem:[#allocation7 + $0x378] sm:$0xff]
    %v1380 = vld [vmem:[#allocation7 + $0x380] sm:$0xff]
    %v1381 = vld [vmem:[#allocation7 + $0x388] sm:$0xff]
    %v1382 = vld [vmem:[#allocation7 + $0x390] sm:$0xff]
    %v1383 = vld [vmem:[#allocation7 + $0x398] sm:$0xff]
    %v1384 = vld [vmem:[#allocation7 + $0x3a0] sm:$0xff]
    %v1385 = vld [vmem:[#allocation7 + $0x3a8] sm:$0xff]
    %v1386 = vld [vmem:[#allocation7 + $0x3b0] sm:$0xff]
    %v1387 = vld [vmem:[#allocation7 + $0x3b8] sm:$0xff]
    %v1388 = vld [vmem:[#allocation7 + $0x3c0] sm:$0xff]
    %v1389 = vld [vmem:[#allocation7 + $0x3c8] sm:$0xff]
    %v1390 = vld [vmem:[#allocation7 + $0x3d0] sm:$0xff]
    %v1391 = vld [vmem:[#allocation7 + $0x3d8] sm:$0xff]
    %v1392 = vld [vmem:[#allocation7 + $0x3e0] sm:$0xff]
    %v1393 = vld [vmem:[#allocation7 + $0x3e8] sm:$0xff]
    %v1394 = vld [vmem:[#allocation7 + $0x3f0] sm:$0xff]
    %v1395 = vld [vmem:[#allocation7 + $0x3f8] sm:$0xff]
    %v1397 = vrot.slane %v1265, 1
    %v1398 = vrot.slane %v1267, 1
    %v1529 = vunpack.c.l.b16 %v1268
    %v1530 = vunpack.c.h.b16 %v1268
    %v1531 = vunpack.c.l.b16 %v1269
    %v1532 = vunpack.c.h.b16 %v1269
    %v1533 = vunpack.c.l.b16 %v1270
    %v1534 = vunpack.c.h.b16 %v1270
    %v1535 = vunpack.c.l.b16 %v1271
    %v1536 = vunpack.c.h.b16 %v1271
    %v1537 = vunpack.c.l.b16 %v1272
    %v1538 = vunpack.c.h.b16 %v1272
    %v1539 = vunpack.c.l.b16 %v1273
    %v1540 = vunpack.c.h.b16 %v1273
    %v1541 = vunpack.c.l.b16 %v1274
    %v1542 = vunpack.c.h.b16 %v1274
    %v1543 = vunpack.c.l.b16 %v1275
    %v1544 = vunpack.c.h.b16 %v1275
    %v1545 = vunpack.c.l.b16 %v1276
    %v1546 = vunpack.c.h.b16 %v1276
    %v1547 = vunpack.c.l.b16 %v1277
    %v1548 = vunpack.c.h.b16 %v1277
    %v1549 = vunpack.c.l.b16 %v1278
    %v1550 = vunpack.c.h.b16 %v1278
    %v1551 = vunpack.c.l.b16 %v1279
    %v1552 = vunpack.c.h.b16 %v1279
    %v1553 = vunpack.c.l.b16 %v1280
    %v1554 = vunpack.c.h.b16 %v1280
    %v1555 = vunpack.c.l.b16 %v1281
    %v1556 = vunpack.c.h.b16 %v1281
    %v1557 = vunpack.c.l.b16 %v1282
    %v1558 = vunpack.c.h.b16 %v1282
    %v1559 = vunpack.c.l.b16 %v1283
    %v1560 = vunpack.c.h.b16 %v1283
    %v1561 = vunpack.c.l.b16 %v1284
    %v1562 = vunpack.c.h.b16 %v1284
    %v1563 = vunpack.c.l.b16 %v1285
    %v1564 = vunpack.c.h.b16 %v1285
    %v1565 = vunpack.c.l.b16 %v1286
    %v1566 = vunpack.c.h.b16 %v1286
    %v1567 = vunpack.c.l.b16 %v1287
    %v1568 = vunpack.c.h.b16 %v1287
    %v1569 = vunpack.c.l.b16 %v1288
    %v1570 = vunpack.c.h.b16 %v1288
    %v1571 = vunpack.c.l.b16 %v1289
    %v1572 = vunpack.c.h.b16 %v1289
    %v1573 = vunpack.c.l.b16 %v1290
    %v1574 = vunpack.c.h.b16 %v1290
    %v1575 = vunpack.c.l.b16 %v1291
    %v1576 = vunpack.c.h.b16 %v1291
    %v1577 = vunpack.c.l.b16 %v1292
    %v1578 = vunpack.c.h.b16 %v1292
    %v1579 = vunpack.c.l.b16 %v1293
    %v1580 = vunpack.c.h.b16 %v1293
    %v1581 = vunpack.c.l.b16 %v1294
    %v1582 = vunpack.c.h.b16 %v1294
    %v1583 = vunpack.c.l.b16 %v1295
    %v1584 = vunpack.c.h.b16 %v1295
    %v1585 = vunpack.c.l.b16 %v1296
    %v1586 = vunpack.c.h.b16 %v1296
    %v1587 = vunpack.c.l.b16 %v1297
    %v1588 = vunpack.c.h.b16 %v1297
    %v1589 = vunpack.c.l.b16 %v1298
    %v1590 = vunpack.c.h.b16 %v1298
    %v1591 = vunpack.c.l.b16 %v1299
    %v1592 = vunpack.c.h.b16 %v1299
    %v1593 = vunpack.c.l.b16 %v1300
    %v1594 = vunpack.c.h.b16 %v1300
    %v1595 = vunpack.c.l.b16 %v1301
    %v1596 = vunpack.c.h.b16 %v1301
    %v1597 = vunpack.c.l.b16 %v1302
    %v1598 = vunpack.c.h.b16 %v1302
    %v1599 = vunpack.c.l.b16 %v1303
    %v1600 = vunpack.c.h.b16 %v1303
    %v1601 = vunpack.c.l.b16 %v1304
    %v1602 = vunpack.c.h.b16 %v1304
    %v1603 = vunpack.c.l.b16 %v1305
    %v1604 = vunpack.c.h.b16 %v1305
    %v1605 = vunpack.c.l.b16 %v1306
    %v1606 = vunpack.c.h.b16 %v1306
    %v1607 = vunpack.c.l.b16 %v1307
    %v1608 = vunpack.c.h.b16 %v1307
    %v1609 = vunpack.c.l.b16 %v1308
    %v1610 = vunpack.c.h.b16 %v1308
    %v1611 = vunpack.c.l.b16 %v1309
    %v1612 = vunpack.c.h.b16 %v1309
    %v1613 = vunpack.c.l.b16 %v1310
    %v1614 = vunpack.c.h.b16 %v1310
    %v1615 = vunpack.c.l.b16 %v1311
    %v1616 = vunpack.c.h.b16 %v1311
    %v1617 = vunpack.c.l.b16 %v1312
    %v1618 = vunpack.c.h.b16 %v1312
    %v1619 = vunpack.c.l.b16 %v1313
    %v1620 = vunpack.c.h.b16 %v1313
    %v1621 = vunpack.c.l.b16 %v1314
    %v1622 = vunpack.c.h.b16 %v1314
    %v1623 = vunpack.c.l.b16 %v1315
    %v1624 = vunpack.c.h.b16 %v1315
    %v1625 = vunpack.c.l.b16 %v1316
    %v1626 = vunpack.c.h.b16 %v1316
    %v1627 = vunpack.c.l.b16 %v1317
    %v1628 = vunpack.c.h.b16 %v1317
    %v1629 = vunpack.c.l.b16 %v1318
    %v1630 = vunpack.c.h.b16 %v1318
    %v1631 = vunpack.c.l.b16 %v1319
    %v1632 = vunpack.c.h.b16 %v1319
    %v1633 = vunpack.c.l.b16 %v1320
    %v1634 = vunpack.c.h.b16 %v1320
    %v1635 = vunpack.c.l.b16 %v1321
    %v1636 = vunpack.c.h.b16 %v1321
    %v1637 = vunpack.c.l.b16 %v1322
    %v1638 = vunpack.c.h.b16 %v1322
    %v1639 = vunpack.c.l.b16 %v1323
    %v1640 = vunpack.c.h.b16 %v1323
    %v1641 = vunpack.c.l.b16 %v1324
    %v1642 = vunpack.c.h.b16 %v1324
    %v1643 = vunpack.c.l.b16 %v1325
    %v1644 = vunpack.c.h.b16 %v1325
    %v1645 = vunpack.c.l.b16 %v1326
    %v1646 = vunpack.c.h.b16 %v1326
    %v1647 = vunpack.c.l.b16 %v1327
    %v1648 = vunpack.c.h.b16 %v1327
    %v1649 = vunpack.c.l.b16 %v1328
    %v1650 = vunpack.c.h.b16 %v1328
    %v1651 = vunpack.c.l.b16 %v1329
    %v1652 = vunpack.c.h.b16 %v1329
    %v1653 = vunpack.c.l.b16 %v1330
    %v1654 = vunpack.c.h.b16 %v1330
    %v1655 = vunpack.c.l.b16 %v1331
    %v1656 = vunpack.c.h.b16 %v1331
    %v1657 = vunpack.c.l.b16 %v1332
    %v1658 = vunpack.c.h.b16 %v1332
    %v1659 = vunpack.c.l.b16 %v1333
    %v1660 = vunpack.c.h.b16 %v1333
    %v1661 = vunpack.c.l.b16 %v1334
    %v1662 = vunpack.c.h.b16 %v1334
    %v1663 = vunpack.c.l.b16 %v1335
    %v1664 = vunpack.c.h.b16 %v1335
    %v1665 = vunpack.c.l.b16 %v1336
    %v1666 = vunpack.c.h.b16 %v1336
    %v1667 = vunpack.c.l.b16 %v1337
    %v1668 = vunpack.c.h.b16 %v1337
    %v1669 = vunpack.c.l.b16 %v1338
    %v1670 = vunpack.c.h.b16 %v1338
    %v1671 = vunpack.c.l.b16 %v1339
    %v1672 = vunpack.c.h.b16 %v1339
    %v1673 = vunpack.c.l.b16 %v1340
    %v1674 = vunpack.c.h.b16 %v1340
    %v1675 = vunpack.c.l.b16 %v1341
    %v1676 = vunpack.c.h.b16 %v1341
    %v1677 = vunpack.c.l.b16 %v1342
    %v1678 = vunpack.c.h.b16 %v1342
    %v1679 = vunpack.c.l.b16 %v1343
    %v1680 = vunpack.c.h.b16 %v1343
    %v1681 = vunpack.c.l.b16 %v1344
    %v1682 = vunpack.c.h.b16 %v1344
    %v1683 = vunpack.c.l.b16 %v1345
    %v1684 = vunpack.c.h.b16 %v1345
    %v1685 = vunpack.c.l.b16 %v1346
    %v1686 = vunpack.c.h.b16 %v1346
    %v1687 = vunpack.c.l.b16 %v1347
    %v1688 = vunpack.c.h.b16 %v1347
    %v1689 = vunpack.c.l.b16 %v1348
    %v1690 = vunpack.c.h.b16 %v1348
    %v1691 = vunpack.c.l.b16 %v1349
    %v1692 = vunpack.c.h.b16 %v1349
    %v1693 = vunpack.c.l.b16 %v1350
    %v1694 = vunpack.c.h.b16 %v1350
    %v1695 = vunpack.c.l.b16 %v1351
    %v1696 = vunpack.c.h.b16 %v1351
    %v1697 = vunpack.c.l.b16 %v1352
    %v1698 = vunpack.c.h.b16 %v1352
    %v1699 = vunpack.c.l.b16 %v1353
    %v1700 = vunpack.c.h.b16 %v1353
    %v1701 = vunpack.c.l.b16 %v1354
    %v1702 = vunpack.c.h.b16 %v1354
    %v1703 = vunpack.c.l.b16 %v1355
    %v1704 = vunpack.c.h.b16 %v1355
    %v1705 = vunpack.c.l.b16 %v1356
    %v1706 = vunpack.c.h.b16 %v1356
    %v1707 = vunpack.c.l.b16 %v1357
    %v1708 = vunpack.c.h.b16 %v1357
    %v1709 = vunpack.c.l.b16 %v1358
    %v1710 = vunpack.c.h.b16 %v1358
    %v1711 = vunpack.c.l.b16 %v1359
    %v1712 = vunpack.c.h.b16 %v1359
    %v1713 = vunpack.c.l.b16 %v1360
    %v1714 = vunpack.c.h.b16 %v1360
    %v1715 = vunpack.c.l.b16 %v1361
    %v1716 = vunpack.c.h.b16 %v1361
    %v1717 = vunpack.c.l.b16 %v1362
    %v1718 = vunpack.c.h.b16 %v1362
    %v1719 = vunpack.c.l.b16 %v1363
    %v1720 = vunpack.c.h.b16 %v1363
    %v1721 = vunpack.c.l.b16 %v1364
    %v1722 = vunpack.c.h.b16 %v1364
    %v1723 = vunpack.c.l.b16 %v1365
    %v1724 = vunpack.c.h.b16 %v1365
    %v1725 = vunpack.c.l.b16 %v1366
    %v1726 = vunpack.c.h.b16 %v1366
    %v1727 = vunpack.c.l.b16 %v1367
    %v1728 = vunpack.c.h.b16 %v1367
    %v1729 = vunpack.c.l.b16 %v1368
    %v1730 = vunpack.c.h.b16 %v1368
    %v1731 = vunpack.c.l.b16 %v1369
    %v1732 = vunpack.c.h.b16 %v1369
    %v1733 = vunpack.c.l.b16 %v1370
    %v1734 = vunpack.c.h.b16 %v1370
    %v1735 = vunpack.c.l.b16 %v1371
    %v1736 = vunpack.c.h.b16 %v1371
    %v1737 = vunpack.c.l.b16 %v1372
    %v1738 = vunpack.c.h.b16 %v1372
    %v1739 = vunpack.c.l.b16 %v1373
    %v1740 = vunpack.c.h.b16 %v1373
    %v1741 = vunpack.c.l.b16 %v1374
    %v1742 = vunpack.c.h.b16 %v1374
    %v1743 = vunpack.c.l.b16 %v1375
    %v1744 = vunpack.c.h.b16 %v1375
    %v1745 = vunpack.c.l.b16 %v1376
    %v1746 = vunpack.c.h.b16 %v1376
    %v1747 = vunpack.c.l.b16 %v1377
    %v1748 = vunpack.c.h.b16 %v1377
    %v1749 = vunpack.c.l.b16 %v1378
    %v1750 = vunpack.c.h.b16 %v1378
    %v1751 = vunpack.c.l.b16 %v1379
    %v1752 = vunpack.c.h.b16 %v1379
    %v1753 = vunpack.c.l.b16 %v1380
    %v1754 = vunpack.c.h.b16 %v1380
    %v1755 = vunpack.c.l.b16 %v1381
    %v1756 = vunpack.c.h.b16 %v1381
    %v1757 = vunpack.c.l.b16 %v1382
    %v1758 = vunpack.c.h.b16 %v1382
    %v1759 = vunpack.c.l.b16 %v1383
    %v1760 = vunpack.c.h.b16 %v1383
    %v1761 = vunpack.c.l.b16 %v1384
    %v1762 = vunpack.c.h.b16 %v1384
    %v1763 = vunpack.c.l.b16 %v1385
    %v1764 = vunpack.c.h.b16 %v1385
    %v1765 = vunpack.c.l.b16 %v1386
    %v1766 = vunpack.c.h.b16 %v1386
    %v1767 = vunpack.c.l.b16 %v1387
    %v1768 = vunpack.c.h.b16 %v1387
    %v1769 = vunpack.c.l.b16 %v1388
    %v1770 = vunpack.c.h.b16 %v1388
    %v1771 = vunpack.c.l.b16 %v1389
    %v1772 = vunpack.c.h.b16 %v1389
    %v1773 = vunpack.c.l.b16 %v1390
    %v1774 = vunpack.c.h.b16 %v1390
    %v1775 = vunpack.c.l.b16 %v1391
    %v1776 = vunpack.c.h.b16 %v1391
    %v1777 = vunpack.c.l.b16 %v1392
    %v1778 = vunpack.c.h.b16 %v1392
    %v1779 = vunpack.c.l.b16 %v1393
    %v1780 = vunpack.c.h.b16 %v1393
    %v1781 = vunpack.c.l.b16 %v1394
    %v1782 = vunpack.c.h.b16 %v1394
    %v1783 = vunpack.c.l.b16 %v1395
    %v1784 = vunpack.c.h.b16 %v1395
    %v1785 = vpack.c.b16 %v1537, %v1529
    %v1786 = vpack.c.b16 %v1538, %v1530
    %v1787 = vpack.c.b16 %v1539, %v1531
    %v1788 = vpack.c.b16 %v1540, %v1532
    %v1789 = vpack.c.b16 %v1541, %v1533
    %v1790 = vpack.c.b16 %v1542, %v1534
    %v1791 = vpack.c.b16 %v1543, %v1535
    %v1792 = vpack.c.b16 %v1544, %v1536
    %v1793 = vpack.c.b16 %v1553, %v1545
    %v1794 = vpack.c.b16 %v1554, %v1546
    %v1795 = vpack.c.b16 %v1555, %v1547
    %v1796 = vpack.c.b16 %v1556, %v1548
    %v1797 = vpack.c.b16 %v1557, %v1549
    %v1798 = vpack.c.b16 %v1558, %v1550
    %v1799 = vpack.c.b16 %v1559, %v1551
    %v1800 = vpack.c.b16 %v1560, %v1552
    %v1801 = vpack.c.b16 %v1569, %v1561
    %v1802 = vpack.c.b16 %v1570, %v1562
    %v1803 = vpack.c.b16 %v1571, %v1563
    %v1804 = vpack.c.b16 %v1572, %v1564
    %v1805 = vpack.c.b16 %v1573, %v1565
    %v1806 = vpack.c.b16 %v1574, %v1566
    %v1807 = vpack.c.b16 %v1575, %v1567
    %v1808 = vpack.c.b16 %v1576, %v1568
    %v1809 = vpack.c.b16 %v1585, %v1577
    %v1810 = vpack.c.b16 %v1586, %v1578
    %v1811 = vpack.c.b16 %v1587, %v1579
    %v1812 = vpack.c.b16 %v1588, %v1580
    %v1813 = vpack.c.b16 %v1589, %v1581
    %v1814 = vpack.c.b16 %v1590, %v1582
    %v1815 = vpack.c.b16 %v1591, %v1583
    %v1816 = vpack.c.b16 %v1592, %v1584
    %v1817 = vpack.c.b16 %v1601, %v1593
    %v1818 = vpack.c.b16 %v1602, %v1594
    %v1819 = vpack.c.b16 %v1603, %v1595
    %v1820 = vpack.c.b16 %v1604, %v1596
    %v1821 = vpack.c.b16 %v1605, %v1597
    %v1822 = vpack.c.b16 %v1606, %v1598
    %v1823 = vpack.c.b16 %v1607, %v1599
    %v1824 = vpack.c.b16 %v1608, %v1600
    %v1825 = vpack.c.b16 %v1617, %v1609
    %v1826 = vpack.c.b16 %v1618, %v1610
    %v1827 = vpack.c.b16 %v1619, %v1611
    %v1828 = vpack.c.b16 %v1620, %v1612
    %v1829 = vpack.c.b16 %v1621, %v1613
    %v1830 = vpack.c.b16 %v1622, %v1614
    %v1831 = vpack.c.b16 %v1623, %v1615
    %v1832 = vpack.c.b16 %v1624, %v1616
    %v1833 = vpack.c.b16 %v1633, %v1625
    %v1834 = vpack.c.b16 %v1634, %v1626
    %v1835 = vpack.c.b16 %v1635, %v1627
    %v1836 = vpack.c.b16 %v1636, %v1628
    %v1837 = vpack.c.b16 %v1637, %v1629
    %v1838 = vpack.c.b16 %v1638, %v1630
    %v1839 = vpack.c.b16 %v1639, %v1631
    %v1840 = vpack.c.b16 %v1640, %v1632
    %v1841 = vpack.c.b16 %v1649, %v1641
    %v1842 = vpack.c.b16 %v1650, %v1642
    %v1843 = vpack.c.b16 %v1651, %v1643
    %v1844 = vpack.c.b16 %v1652, %v1644
    %v1845 = vpack.c.b16 %v1653, %v1645
    %v1846 = vpack.c.b16 %v1654, %v1646
    %v1847 = vpack.c.b16 %v1655, %v1647
    %v1848 = vpack.c.b16 %v1656, %v1648
    %v1849 = vpack.c.b16 %v1665, %v1657
    %v1850 = vpack.c.b16 %v1666, %v1658
    %v1851 = vpack.c.b16 %v1667, %v1659
    %v1852 = vpack.c.b16 %v1668, %v1660
    %v1853 = vpack.c.b16 %v1669, %v1661
    %v1854 = vpack.c.b16 %v1670, %v1662
    %v1855 = vpack.c.b16 %v1671, %v1663
    %v1856 = vpack.c.b16 %v1672, %v1664
    %v1857 = vpack.c.b16 %v1681, %v1673
    %v1858 = vpack.c.b16 %v1682, %v1674
    %v1859 = vpack.c.b16 %v1683, %v1675
    %v1860 = vpack.c.b16 %v1684, %v1676
    %v1861 = vpack.c.b16 %v1685, %v1677
    %v1862 = vpack.c.b16 %v1686, %v1678
    %v1863 = vpack.c.b16 %v1687, %v1679
    %v1864 = vpack.c.b16 %v1688, %v1680
    %v1865 = vpack.c.b16 %v1697, %v1689
    %v1866 = vpack.c.b16 %v1698, %v1690
    %v1867 = vpack.c.b16 %v1699, %v1691
    %v1868 = vpack.c.b16 %v1700, %v1692
    %v1869 = vpack.c.b16 %v1701, %v1693
    %v1870 = vpack.c.b16 %v1702, %v1694
    %v1871 = vpack.c.b16 %v1703, %v1695
    %v1872 = vpack.c.b16 %v1704, %v1696
    %v1873 = vpack.c.b16 %v1713, %v1705
    %v1874 = vpack.c.b16 %v1714, %v1706
    %v1875 = vpack.c.b16 %v1715, %v1707
    %v1876 = vpack.c.b16 %v1716, %v1708
    %v1877 = vpack.c.b16 %v1717, %v1709
    %v1878 = vpack.c.b16 %v1718, %v1710
    %v1879 = vpack.c.b16 %v1719, %v1711
    %v1880 = vpack.c.b16 %v1720, %v1712
    %v1881 = vpack.c.b16 %v1729, %v1721
    %v1882 = vpack.c.b16 %v1730, %v1722
    %v1883 = vpack.c.b16 %v1731, %v1723
    %v1884 = vpack.c.b16 %v1732, %v1724
    %v1885 = vpack.c.b16 %v1733, %v1725
    %v1886 = vpack.c.b16 %v1734, %v1726
    %v1887 = vpack.c.b16 %v1735, %v1727
    %v1888 = vpack.c.b16 %v1736, %v1728
    %v1889 = vpack.c.b16 %v1745, %v1737
    %v1890 = vpack.c.b16 %v1746, %v1738
    %v1891 = vpack.c.b16 %v1747, %v1739
    %v1892 = vpack.c.b16 %v1748, %v1740
    %v1893 = vpack.c.b16 %v1749, %v1741
    %v1894 = vpack.c.b16 %v1750, %v1742
    %v1895 = vpack.c.b16 %v1751, %v1743
    %v1896 = vpack.c.b16 %v1752, %v1744
    %v1897 = vpack.c.b16 %v1761, %v1753
    %v1898 = vpack.c.b16 %v1762, %v1754
    %v1899 = vpack.c.b16 %v1763, %v1755
    %v1900 = vpack.c.b16 %v1764, %v1756
    %v1901 = vpack.c.b16 %v1765, %v1757
    %v1902 = vpack.c.b16 %v1766, %v1758
    %v1903 = vpack.c.b16 %v1767, %v1759
    %v1904 = vpack.c.b16 %v1768, %v1760
    %v1905 = vpack.c.b16 %v1777, %v1769
    %v1906 = vpack.c.b16 %v1778, %v1770
    %v1907 = vpack.c.b16 %v1779, %v1771
    %v1908 = vpack.c.b16 %v1780, %v1772
    %v1909 = vpack.c.b16 %v1781, %v1773
    %v1910 = vpack.c.b16 %v1782, %v1774
    %v1911 = vpack.c.b16 %v1783, %v1775
    %v1912 = vpack.c.b16 %v1784, %v1776
    %2041 = vmatprep.subr.bf16.mxu0 %v1842
    %2042 = vmatpush1.bf16.msra.mxu0 %v1841
    %2043 = vmatprep.subr.bf16.mxu0 %v1834
    %2044 = vmatpush1.bf16.msra.mxu0 %v1833
    %2045 = vmatprep.subr.bf16.mxu0 %v1826
    %2046 = vmatpush1.bf16.msra.mxu0 %v1825
    %2047 = vmatprep.subr.bf16.mxu0 %v1818
    %2048 = vmatpush1.bf16.msra.mxu0 %v1817
    %2049 = vmatprep.subr.bf16.mxu0 %v1810
    %2050 = vmatpush1.bf16.msra.mxu0 %v1809
    %2051 = vmatprep.subr.bf16.mxu0 %v1802
    %2052 = vmatpush1.bf16.msra.mxu0 %v1801
    %2053 = vmatprep.subr.bf16.mxu0 %v1794
    %2054 = vmatpush1.bf16.msra.mxu0 %v1793
    %2055 = vmatprep.subr.bf16.mxu0 %v1786
    %2056 = vmatpush1.bf16.msra.mxu0 %v1785
    %2057 = vmatprep.subr.bf16.mxu0 %v1906
    %2058 = vmatpush2.bf16.msra.mxu0 %v1905
    %2059 = vmatprep.subr.bf16.mxu0 %v1898
    %2060 = vmatpush2.bf16.msra.mxu0 %v1897
    %2061 = vmatprep.subr.bf16.mxu0 %v1890
    %2062 = vmatpush2.bf16.msra.mxu0 %v1889
    %2063 = vmatprep.subr.bf16.mxu0 %v1882
    %2064 = vmatpush2.bf16.msra.mxu0 %v1881
    %2065 = vmatprep.subr.bf16.mxu0 %v1874
    %2066 = vmatpush2.bf16.msra.mxu0 %v1873
    %2067 = vmatprep.subr.bf16.mxu0 %v1866
    %2068 = vmatpush2.bf16.msra.mxu0 %v1865
    %2069 = vmatprep.subr.bf16.mxu0 %v1858
    %2070 = vmatpush2.bf16.msra.mxu0 %v1857
    %2071 = vmatprep.subr.bf16.mxu0 %v1850
    %2072 = vmatpush2.bf16.msra.mxu0 %v1849
    %2073 = vmatprep.mubr.bf16.mxu0 %v1398
    %2074 = vmatmul.mubr.bf16.gmra.mxu0 %v1397
    %v2075 = vpop.f32.mrf.mxu0
    %v2076 = vadd.f32 0.0, %v2075
    %v2077 = vpop.f32.mrf.mxu0
    %v2078 = vadd.f32 0.0, %v2077
    %v2079 = vpop.f32.mrf.mxu0
    %v2080 = vpop.f32.mrf.mxu0
    %2081 = vdwg.mxu0
    %2082 = vmatprep.subr.bf16.mxu0 %v1844
    %2083 = vmatpush1.bf16.msra.mxu0 %v1843
    %2084 = vmatprep.subr.bf16.mxu0 %v1836
    %2085 = vmatpush1.bf16.msra.mxu0 %v1835
    %2086 = vmatprep.subr.bf16.mxu0 %v1828
    %2087 = vmatpush1.bf16.msra.mxu0 %v1827
    %2088 = vmatprep.subr.bf16.mxu0 %v1820
    %2089 = vmatpush1.bf16.msra.mxu0 %v1819
    %2090 = vmatprep.subr.bf16.mxu0 %v1812
    %2091 = vmatpush1.bf16.msra.mxu0 %v1811
    %2092 = vmatprep.subr.bf16.mxu0 %v1804
    %2093 = vmatpush1.bf16.msra.mxu0 %v1803
    %2094 = vmatprep.subr.bf16.mxu0 %v1796
    %2095 = vmatpush1.bf16.msra.mxu0 %v1795
    %2096 = vmatprep.subr.bf16.mxu0 %v1788
    %2097 = vmatpush1.bf16.msra.mxu0 %v1787
    %2098 = vmatprep.subr.bf16.mxu0 %v1908
    %2099 = vmatpush2.bf16.msra.mxu0 %v1907
    %2100 = vmatprep.subr.bf16.mxu0 %v1900
    %2101 = vmatpush2.bf16.msra.mxu0 %v1899
    %2102 = vmatprep.subr.bf16.mxu0 %v1892
    %2103 = vmatpush2.bf16.msra.mxu0 %v1891
    %2104 = vmatprep.subr.bf16.mxu0 %v1884
    %2105 = vmatpush2.bf16.msra.mxu0 %v1883
    %2106 = vmatprep.subr.bf16.mxu0 %v1876
    %2107 = vmatpush2.bf16.msra.mxu0 %v1875
    %2108 = vmatprep.subr.bf16.mxu0 %v1868
    %2109 = vmatpush2.bf16.msra.mxu0 %v1867
    %2110 = vmatprep.subr.bf16.mxu0 %v1860
    %2111 = vmatpush2.bf16.msra.mxu0 %v1859
    %2112 = vmatprep.subr.bf16.mxu0 %v1852
    %2113 = vmatpush2.bf16.msra.mxu0 %v1851
    %2114 = vmatprep.mubr.bf16.mxu0 %v1398
    %2115 = vmatmul.mubr.bf16.gmra.mxu0 %v1397
    %v2116 = vpop.f32.mrf.mxu0
    %v2117 = vadd.f32 0.0, %v2116
    %v2118 = vpop.f32.mrf.mxu0
    %v2119 = vadd.f32 0.0, %v2118
    %v2120 = vpop.f32.mrf.mxu0
    %v2121 = vpop.f32.mrf.mxu0
    %2122 = vdwg.mxu0
    %2123 = vmatprep.subr.bf16.mxu0 %v1846
    %2124 = vmatpush1.bf16.msra.mxu0 %v1845
    %2125 = vmatprep.subr.bf16.mxu0 %v1838
    %2126 = vmatpush1.bf16.msra.mxu0 %v1837
    %2127 = vmatprep.subr.bf16.mxu0 %v1830
    %2128 = vmatpush1.bf16.msra.mxu0 %v1829
    %2129 = vmatprep.subr.bf16.mxu0 %v1822
    %2130 = vmatpush1.bf16.msra.mxu0 %v1821
    %2131 = vmatprep.subr.bf16.mxu0 %v1814
    %2132 = vmatpush1.bf16.msra.mxu0 %v1813
    %2133 = vmatprep.subr.bf16.mxu0 %v1806
    %2134 = vmatpush1.bf16.msra.mxu0 %v1805
    %2135 = vmatprep.subr.bf16.mxu0 %v1798
    %2136 = vmatpush1.bf16.msra.mxu0 %v1797
    %2137 = vmatprep.subr.bf16.mxu0 %v1790
    %2138 = vmatpush1.bf16.msra.mxu0 %v1789
    %2139 = vmatprep.subr.bf16.mxu0 %v1910
    %2140 = vmatpush2.bf16.msra.mxu0 %v1909
    %2141 = vmatprep.subr.bf16.mxu0 %v1902
    %2142 = vmatpush2.bf16.msra.mxu0 %v1901
    %2143 = vmatprep.subr.bf16.mxu0 %v1894
    %2144 = vmatpush2.bf16.msra.mxu0 %v1893
    %2145 = vmatprep.subr.bf16.mxu0 %v1886
    %2146 = vmatpush2.bf16.msra.mxu0 %v1885
    %2147 = vmatprep.subr.bf16.mxu0 %v1878
    %2148 = vmatpush2.bf16.msra.mxu0 %v1877
    %2149 = vmatprep.subr.bf16.mxu0 %v1870
    %2150 = vmatpush2.bf16.msra.mxu0 %v1869
    %2151 = vmatprep.subr.bf16.mxu0 %v1862
    %2152 = vmatpush2.bf16.msra.mxu0 %v1861
    %2153 = vmatprep.subr.bf16.mxu0 %v1854
    %2154 = vmatpush2.bf16.msra.mxu0 %v1853
    %2155 = vmatprep.mubr.bf16.mxu0 %v1398
    %2156 = vmatmul.mubr.bf16.gmra.mxu0 %v1397
    %v2157 = vpop.f32.mrf.mxu0
    %v2158 = vadd.f32 0.0, %v2157
    %v2159 = vpop.f32.mrf.mxu0
    %v2160 = vadd.f32 0.0, %v2159
    %v2161 = vpop.f32.mrf.mxu0
    %v2162 = vpop.f32.mrf.mxu0
    %2163 = vdwg.mxu0
    %2164 = vmatprep.subr.bf16.mxu0 %v1848
    %2165 = vmatpush1.bf16.msra.mxu0 %v1847
    %2166 = vmatprep.subr.bf16.mxu0 %v1840
    %2167 = vmatpush1.bf16.msra.mxu0 %v1839
    %2168 = vmatprep.subr.bf16.mxu0 %v1832
    %2169 = vmatpush1.bf16.msra.mxu0 %v1831
    %2170 = vmatprep.subr.bf16.mxu0 %v1824
    %2171 = vmatpush1.bf16.msra.mxu0 %v1823
    %2172 = vmatprep.subr.bf16.mxu0 %v1816
    %2173 = vmatpush1.bf16.msra.mxu0 %v1815
    %2174 = vmatprep.subr.bf16.mxu0 %v1808
    %2175 = vmatpush1.bf16.msra.mxu0 %v1807
    %2176 = vmatprep.subr.bf16.mxu0 %v1800
    %2177 = vmatpush1.bf16.msra.mxu0 %v1799
    %2178 = vmatprep.subr.bf16.mxu0 %v1792
    %2179 = vmatpush1.bf16.msra.mxu0 %v1791
    %2180 = vmatprep.subr.bf16.mxu0 %v1912
    %2181 = vmatpush2.bf16.msra.mxu0 %v1911
    %2182 = vmatprep.subr.bf16.mxu0 %v1904
    %2183 = vmatpush2.bf16.msra.mxu0 %v1903
    %2184 = vmatprep.subr.bf16.mxu0 %v1896
    %2185 = vmatpush2.bf16.msra.mxu0 %v1895
    %2186 = vmatprep.subr.bf16.mxu0 %v1888
    %2187 = vmatpush2.bf16.msra.mxu0 %v1887
    %2188 = vmatprep.subr.bf16.mxu0 %v1880
    %2189 = vmatpush2.bf16.msra.mxu0 %v1879
    %2190 = vmatprep.subr.bf16.mxu0 %v1872
    %2191 = vmatpush2.bf16.msra.mxu0 %v1871
    %2192 = vmatprep.subr.bf16.mxu0 %v1864
    %2193 = vmatpush2.bf16.msra.mxu0 %v1863
    %2194 = vmatprep.subr.bf16.mxu0 %v1856
    %2195 = vmatpush2.bf16.msra.mxu0 %v1855
    %2196 = vmatprep.mubr.bf16.mxu0 %v1398
    %2197 = vmatmul.mubr.bf16.gmra.mxu0 %v1397
    %v2198 = vpop.f32.mrf.mxu0
    %v2199 = vadd.f32 0.0, %v2198
    %v2200 = vpop.f32.mrf.mxu0
    %v2201 = vadd.f32 0.0, %v2200
    %v2202 = vpop.f32.mrf.mxu0
    %v2203 = vpop.f32.mrf.mxu0
    %2204 = vdwg.mxu0
    %v2205 = vadd.f32 %v2158, %v1175
    %v2206 = vadd.f32 %v2160, %v1179
    %v2207 = vadd.f32 %v2199, %v1183
    %v2208 = vadd.f32 %v2201, %v1187
    %v2209 = vxor.u32 %v2205, 2147483648
    %v2210 = vmul.f32 %v2209, 1.442695
    %v2211 = vpow.pop %v2210
    %v2212 = vadd.f32 %v2211, 1.0
    %v2213 = vrcp.pop %v2212
    %v2214 = vmul.f32 1.0, %v2213
    %v2215 = vxor.u32 %v2206, 2147483648
    %v2216 = vmul.f32 %v2215, 1.442695
    %v2217 = vpow.pop %v2216
    %v2218 = vadd.f32 %v2217, 1.0
    %v2219 = vrcp.pop %v2218
    %v2220 = vmul.f32 1.0, %v2219
    %v2221 = vtanh.pop %v2207
    %v2222 = vxor.u32 %v2208, 2147483648
    %v2223 = vmul.f32 %v2222, 1.442695
    %v2224 = vpow.pop %v2223
    %v2225 = vadd.f32 %v2224, 1.0
    %v2226 = vrcp.pop %v2225
    %v2227 = vmul.f32 1.0, %v2226
    %v2228 = vmul.f32 %v2220, %v1217
    %v2229 = vmul.f32 %v2214, %v2221
    %v2230 = vadd.f32 %v2228, %v2229
    %v2231 = vtanh.pop %v2230
    %v2232 = vmul.f32 %v2227, %v2231
    %v2233 = vpack.c.bf16 %v2232, %v2232
    %v2235 = vunpack.c.l.b16 %v2233
    %v2236 = vpack.c.b16 %v2235, %v2235
    %v2237 = vrot.slane %v2236, 7
    %2239 = vst [vmem:[#allocation2] sm:$0x2] %v2237
    %v2244 = vrot.slane %v2076, 4
    %v2245 = vrot.slane %v2078, 4
    %v2246 = vrot.slane %v2117, 4
    %v2247 = vrot.slane %v2119, 4
    %v2252 = vadd.f32 %v162, %v2244
    %v2253 = vadd.f32 %v164, %v2245
    %v2254 = vadd.f32 %v205, %v2246
    %v2255 = vadd.f32 %v207, %v2247
    %v2256 = vxor.u32 %v2252, 2147483648
    %v2257 = vmul.f32 %v2256, 1.442695
    %v2258 = vpow.pop %v2257
    %v2259 = vadd.f32 %v2258, 1.0
    %v2260 = vrcp.pop %v2259
    %v2261 = vmul.f32 1.0, %v2260
    %v2262 = vxor.u32 %v2253, 2147483648
    %v2263 = vmul.f32 %v2262, 1.442695
    %v2264 = vpow.pop %v2263
    %v2265 = vadd.f32 %v2264, 1.0
    %v2266 = vrcp.pop %v2265
    %v2267 = vmul.f32 1.0, %v2266
    %v2268 = vtanh.pop %v2254
    %v2269 = vxor.u32 %v2255, 2147483648
    %v2270 = vmul.f32 %v2269, 1.442695
    %v2271 = vpow.pop %v2270
    %v2272 = vadd.f32 %v2271, 1.0
    %v2273 = vrcp.pop %v2272
    %v2274 = vmul.f32 1.0, %v2273
    %v2276 = vrot.slane %v1262, 6
    %v2278 = vmul.f32 %v2267, %v2276
    %v2279 = vmul.f32 %v2261, %v2268
    %v2280 = vadd.f32 %v2278, %v2279
    %v2281 = vtanh.pop %v2280
    %v2282 = vmul.f32 %v2274, %v2281
    %v2283 = vpack.c.bf16 %v2282, %v2282
    %v2284 = vrot.slane %v2233, 6
    %v2285 = vld [vmem:[#allocation7] sm:$0xff]
    %v2286 = vld [vmem:[#allocation7 + $0x8] sm:$0xff]
    %v2287 = vld [vmem:[#allocation7 + $0x10] sm:$0xff]
    %v2288 = vld [vmem:[#allocation7 + $0x18] sm:$0xff]
    %v2289 = vld [vmem:[#allocation7 + $0x20] sm:$0xff]
    %v2290 = vld [vmem:[#allocation7 + $0x28] sm:$0xff]
    %v2291 = vld [vmem:[#allocation7 + $0x30] sm:$0xff]
    %v2292 = vld [vmem:[#allocation7 + $0x38] sm:$0xff]
    %v2293 = vld [vmem:[#allocation7 + $0x40] sm:$0xff]
    %v2294 = vld [vmem:[#allocation7 + $0x48] sm:$0xff]
    %v2295 = vld [vmem:[#allocation7 + $0x50] sm:$0xff]
    %v2296 = vld [vmem:[#allocation7 + $0x58] sm:$0xff]
    %v2297 = vld [vmem:[#allocation7 + $0x60] sm:$0xff]
    %v2298 = vld [vmem:[#allocation7 + $0x68] sm:$0xff]
    %v2299 = vld [vmem:[#allocation7 + $0x70] sm:$0xff]
    %v2300 = vld [vmem:[#allocation7 + $0x78] sm:$0xff]
    %v2301 = vld [vmem:[#allocation7 + $0x80] sm:$0xff]
    %v2302 = vld [vmem:[#allocation7 + $0x88] sm:$0xff]
    %v2303 = vld [vmem:[#allocation7 + $0x90] sm:$0xff]
    %v2304 = vld [vmem:[#allocation7 + $0x98] sm:$0xff]
    %v2305 = vld [vmem:[#allocation7 + $0xa0] sm:$0xff]
    %v2306 = vld [vmem:[#allocation7 + $0xa8] sm:$0xff]
    %v2307 = vld [vmem:[#allocation7 + $0xb0] sm:$0xff]
    %v2308 = vld [vmem:[#allocation7 + $0xb8] sm:$0xff]
    %v2309 = vld [vmem:[#allocation7 + $0xc0] sm:$0xff]
    %v2310 = vld [vmem:[#allocation7 + $0xc8] sm:$0xff]
    %v2311 = vld [vmem:[#allocation7 + $0xd0] sm:$0xff]
    %v2312 = vld [vmem:[#allocation7 + $0xd8] sm:$0xff]
    %v2313 = vld [vmem:[#allocation7 + $0xe0] sm:$0xff]
    %v2314 = vld [vmem:[#allocation7 + $0xe8] sm:$0xff]
    %v2315 = vld [vmem:[#allocation7 + $0xf0] sm:$0xff]
    %v2316 = vld [vmem:[#allocation7 + $0xf8] sm:$0xff]
    %v2317 = vld [vmem:[#allocation7 + $0x100] sm:$0xff]
    %v2318 = vld [vmem:[#allocation7 + $0x108] sm:$0xff]
    %v2319 = vld [vmem:[#allocation7 + $0x110] sm:$0xff]
    %v2320 = vld [vmem:[#allocation7 + $0x118] sm:$0xff]
    %v2321 = vld [vmem:[#allocation7 + $0x120] sm:$0xff]
    %v2322 = vld [vmem:[#allocation7 + $0x128] sm:$0xff]
    %v2323 = vld [vmem:[#allocation7 + $0x130] sm:$0xff]
    %v2324 = vld [vmem:[#allocation7 + $0x138] sm:$0xff]
    %v2325 = vld [vmem:[#allocation7 + $0x140] sm:$0xff]
    %v2326 = vld [vmem:[#allocation7 + $0x148] sm:$0xff]
    %v2327 = vld [vmem:[#allocation7 + $0x150] sm:$0xff]
    %v2328 = vld [vmem:[#allocation7 + $0x158] sm:$0xff]
    %v2329 = vld [vmem:[#allocation7 + $0x160] sm:$0xff]
    %v2330 = vld [vmem:[#allocation7 + $0x168] sm:$0xff]
    %v2331 = vld [vmem:[#allocation7 + $0x170] sm:$0xff]
    %v2332 = vld [vmem:[#allocation7 + $0x178] sm:$0xff]
    %v2333 = vld [vmem:[#allocation7 + $0x180] sm:$0xff]
    %v2334 = vld [vmem:[#allocation7 + $0x188] sm:$0xff]
    %v2335 = vld [vmem:[#allocation7 + $0x190] sm:$0xff]
    %v2336 = vld [vmem:[#allocation7 + $0x198] sm:$0xff]
    %v2337 = vld [vmem:[#allocation7 + $0x1a0] sm:$0xff]
    %v2338 = vld [vmem:[#allocation7 + $0x1a8] sm:$0xff]
    %v2339 = vld [vmem:[#allocation7 + $0x1b0] sm:$0xff]
    %v2340 = vld [vmem:[#allocation7 + $0x1b8] sm:$0xff]
    %v2341 = vld [vmem:[#allocation7 + $0x1c0] sm:$0xff]
    %v2342 = vld [vmem:[#allocation7 + $0x1c8] sm:$0xff]
    %v2343 = vld [vmem:[#allocation7 + $0x1d0] sm:$0xff]
    %v2344 = vld [vmem:[#allocation7 + $0x1d8] sm:$0xff]
    %v2345 = vld [vmem:[#allocation7 + $0x1e0] sm:$0xff]
    %v2346 = vld [vmem:[#allocation7 + $0x1e8] sm:$0xff]
    %v2347 = vld [vmem:[#allocation7 + $0x1f0] sm:$0xff]
    %v2348 = vld [vmem:[#allocation7 + $0x1f8] sm:$0xff]
    %v2349 = vld [vmem:[#allocation7 + $0x200] sm:$0xff]
    %v2350 = vld [vmem:[#allocation7 + $0x208] sm:$0xff]
    %v2351 = vld [vmem:[#allocation7 + $0x210] sm:$0xff]
    %v2352 = vld [vmem:[#allocation7 + $0x218] sm:$0xff]
    %v2353 = vld [vmem:[#allocation7 + $0x220] sm:$0xff]
    %v2354 = vld [vmem:[#allocation7 + $0x228] sm:$0xff]
    %v2355 = vld [vmem:[#allocation7 + $0x230] sm:$0xff]
    %v2356 = vld [vmem:[#allocation7 + $0x238] sm:$0xff]
    %v2357 = vld [vmem:[#allocation7 + $0x240] sm:$0xff]
    %v2358 = vld [vmem:[#allocation7 + $0x248] sm:$0xff]
    %v2359 = vld [vmem:[#allocation7 + $0x250] sm:$0xff]
    %v2360 = vld [vmem:[#allocation7 + $0x258] sm:$0xff]
    %v2361 = vld [vmem:[#allocation7 + $0x260] sm:$0xff]
    %v2362 = vld [vmem:[#allocation7 + $0x268] sm:$0xff]
    %v2363 = vld [vmem:[#allocation7 + $0x270] sm:$0xff]
    %v2364 = vld [vmem:[#allocation7 + $0x278] sm:$0xff]
    %v2365 = vld [vmem:[#allocation7 + $0x280] sm:$0xff]
    %v2366 = vld [vmem:[#allocation7 + $0x288] sm:$0xff]
    %v2367 = vld [vmem:[#allocation7 + $0x290] sm:$0xff]
    %v2368 = vld [vmem:[#allocation7 + $0x298] sm:$0xff]
    %v2369 = vld [vmem:[#allocation7 + $0x2a0] sm:$0xff]
    %v2370 = vld [vmem:[#allocation7 + $0x2a8] sm:$0xff]
    %v2371 = vld [vmem:[#allocation7 + $0x2b0] sm:$0xff]
    %v2372 = vld [vmem:[#allocation7 + $0x2b8] sm:$0xff]
    %v2373 = vld [vmem:[#allocation7 + $0x2c0] sm:$0xff]
    %v2374 = vld [vmem:[#allocation7 + $0x2c8] sm:$0xff]
    %v2375 = vld [vmem:[#allocation7 + $0x2d0] sm:$0xff]
    %v2376 = vld [vmem:[#allocation7 + $0x2d8] sm:$0xff]
    %v2377 = vld [vmem:[#allocation7 + $0x2e0] sm:$0xff]
    %v2378 = vld [vmem:[#allocation7 + $0x2e8] sm:$0xff]
    %v2379 = vld [vmem:[#allocation7 + $0x2f0] sm:$0xff]
    %v2380 = vld [vmem:[#allocation7 + $0x2f8] sm:$0xff]
    %v2381 = vld [vmem:[#allocation7 + $0x300] sm:$0xff]
    %v2382 = vld [vmem:[#allocation7 + $0x308] sm:$0xff]
    %v2383 = vld [vmem:[#allocation7 + $0x310] sm:$0xff]
    %v2384 = vld [vmem:[#allocation7 + $0x318] sm:$0xff]
    %v2385 = vld [vmem:[#allocation7 + $0x320] sm:$0xff]
    %v2386 = vld [vmem:[#allocation7 + $0x328] sm:$0xff]
    %v2387 = vld [vmem:[#allocation7 + $0x330] sm:$0xff]
    %v2388 = vld [vmem:[#allocation7 + $0x338] sm:$0xff]
    %v2389 = vld [vmem:[#allocation7 + $0x340] sm:$0xff]
    %v2390 = vld [vmem:[#allocation7 + $0x348] sm:$0xff]
    %v2391 = vld [vmem:[#allocation7 + $0x350] sm:$0xff]
    %v2392 = vld [vmem:[#allocation7 + $0x358] sm:$0xff]
    %v2393 = vld [vmem:[#allocation7 + $0x360] sm:$0xff]
    %v2394 = vld [vmem:[#allocation7 + $0x368] sm:$0xff]
    %v2395 = vld [vmem:[#allocation7 + $0x370] sm:$0xff]
    %v2396 = vld [vmem:[#allocation7 + $0x378] sm:$0xff]
    %v2397 = vld [vmem:[#allocation7 + $0x380] sm:$0xff]
    %v2398 = vld [vmem:[#allocation7 + $0x388] sm:$0xff]
    %v2399 = vld [vmem:[#allocation7 + $0x390] sm:$0xff]
    %v2400 = vld [vmem:[#allocation7 + $0x398] sm:$0xff]
    %v2401 = vld [vmem:[#allocation7 + $0x3a0] sm:$0xff]
    %v2402 = vld [vmem:[#allocation7 + $0x3a8] sm:$0xff]
    %v2403 = vld [vmem:[#allocation7 + $0x3b0] sm:$0xff]
    %v2404 = vld [vmem:[#allocation7 + $0x3b8] sm:$0xff]
    %v2405 = vld [vmem:[#allocation7 + $0x3c0] sm:$0xff]
    %v2406 = vld [vmem:[#allocation7 + $0x3c8] sm:$0xff]
    %v2407 = vld [vmem:[#allocation7 + $0x3d0] sm:$0xff]
    %v2408 = vld [vmem:[#allocation7 + $0x3d8] sm:$0xff]
    %v2409 = vld [vmem:[#allocation7 + $0x3e0] sm:$0xff]
    %v2410 = vld [vmem:[#allocation7 + $0x3e8] sm:$0xff]
    %v2411 = vld [vmem:[#allocation7 + $0x3f0] sm:$0xff]
    %v2412 = vld [vmem:[#allocation7 + $0x3f8] sm:$0xff]
    %v2414 = vrot.slane %v2283, 2
    %v2415 = vrot.slane %v2284, 2
    %v2546 = vunpack.c.l.b16 %v2285
    %v2547 = vunpack.c.h.b16 %v2285
    %v2548 = vunpack.c.l.b16 %v2286
    %v2549 = vunpack.c.h.b16 %v2286
    %v2550 = vunpack.c.l.b16 %v2287
    %v2551 = vunpack.c.h.b16 %v2287
    %v2552 = vunpack.c.l.b16 %v2288
    %v2553 = vunpack.c.h.b16 %v2288
    %v2554 = vunpack.c.l.b16 %v2289
    %v2555 = vunpack.c.h.b16 %v2289
    %v2556 = vunpack.c.l.b16 %v2290
    %v2557 = vunpack.c.h.b16 %v2290
    %v2558 = vunpack.c.l.b16 %v2291
    %v2559 = vunpack.c.h.b16 %v2291
    %v2560 = vunpack.c.l.b16 %v2292
    %v2561 = vunpack.c.h.b16 %v2292
    %v2562 = vunpack.c.l.b16 %v2293
    %v2563 = vunpack.c.h.b16 %v2293
    %v2564 = vunpack.c.l.b16 %v2294
    %v2565 = vunpack.c.h.b16 %v2294
    %v2566 = vunpack.c.l.b16 %v2295
    %v2567 = vunpack.c.h.b16 %v2295
    %v2568 = vunpack.c.l.b16 %v2296
    %v2569 = vunpack.c.h.b16 %v2296
    %v2570 = vunpack.c.l.b16 %v2297
    %v2571 = vunpack.c.h.b16 %v2297
    %v2572 = vunpack.c.l.b16 %v2298
    %v2573 = vunpack.c.h.b16 %v2298
    %v2574 = vunpack.c.l.b16 %v2299
    %v2575 = vunpack.c.h.b16 %v2299
    %v2576 = vunpack.c.l.b16 %v2300
    %v2577 = vunpack.c.h.b16 %v2300
    %v2578 = vunpack.c.l.b16 %v2301
    %v2579 = vunpack.c.h.b16 %v2301
    %v2580 = vunpack.c.l.b16 %v2302
    %v2581 = vunpack.c.h.b16 %v2302
    %v2582 = vunpack.c.l.b16 %v2303
    %v2583 = vunpack.c.h.b16 %v2303
    %v2584 = vunpack.c.l.b16 %v2304
    %v2585 = vunpack.c.h.b16 %v2304
    %v2586 = vunpack.c.l.b16 %v2305
    %v2587 = vunpack.c.h.b16 %v2305
    %v2588 = vunpack.c.l.b16 %v2306
    %v2589 = vunpack.c.h.b16 %v2306
    %v2590 = vunpack.c.l.b16 %v2307
    %v2591 = vunpack.c.h.b16 %v2307
    %v2592 = vunpack.c.l.b16 %v2308
    %v2593 = vunpack.c.h.b16 %v2308
    %v2594 = vunpack.c.l.b16 %v2309
    %v2595 = vunpack.c.h.b16 %v2309
    %v2596 = vunpack.c.l.b16 %v2310
    %v2597 = vunpack.c.h.b16 %v2310
    %v2598 = vunpack.c.l.b16 %v2311
    %v2599 = vunpack.c.h.b16 %v2311
    %v2600 = vunpack.c.l.b16 %v2312
    %v2601 = vunpack.c.h.b16 %v2312
    %v2602 = vunpack.c.l.b16 %v2313
    %v2603 = vunpack.c.h.b16 %v2313
    %v2604 = vunpack.c.l.b16 %v2314
    %v2605 = vunpack.c.h.b16 %v2314
    %v2606 = vunpack.c.l.b16 %v2315
    %v2607 = vunpack.c.h.b16 %v2315
    %v2608 = vunpack.c.l.b16 %v2316
    %v2609 = vunpack.c.h.b16 %v2316
    %v2610 = vunpack.c.l.b16 %v2317
    %v2611 = vunpack.c.h.b16 %v2317
    %v2612 = vunpack.c.l.b16 %v2318
    %v2613 = vunpack.c.h.b16 %v2318
    %v2614 = vunpack.c.l.b16 %v2319
    %v2615 = vunpack.c.h.b16 %v2319
    %v2616 = vunpack.c.l.b16 %v2320
    %v2617 = vunpack.c.h.b16 %v2320
    %v2618 = vunpack.c.l.b16 %v2321
    %v2619 = vunpack.c.h.b16 %v2321
    %v2620 = vunpack.c.l.b16 %v2322
    %v2621 = vunpack.c.h.b16 %v2322
    %v2622 = vunpack.c.l.b16 %v2323
    %v2623 = vunpack.c.h.b16 %v2323
    %v2624 = vunpack.c.l.b16 %v2324
    %v2625 = vunpack.c.h.b16 %v2324
    %v2626 = vunpack.c.l.b16 %v2325
    %v2627 = vunpack.c.h.b16 %v2325
    %v2628 = vunpack.c.l.b16 %v2326
    %v2629 = vunpack.c.h.b16 %v2326
    %v2630 = vunpack.c.l.b16 %v2327
    %v2631 = vunpack.c.h.b16 %v2327
    %v2632 = vunpack.c.l.b16 %v2328
    %v2633 = vunpack.c.h.b16 %v2328
    %v2634 = vunpack.c.l.b16 %v2329
    %v2635 = vunpack.c.h.b16 %v2329
    %v2636 = vunpack.c.l.b16 %v2330
    %v2637 = vunpack.c.h.b16 %v2330
    %v2638 = vunpack.c.l.b16 %v2331
    %v2639 = vunpack.c.h.b16 %v2331
    %v2640 = vunpack.c.l.b16 %v2332
    %v2641 = vunpack.c.h.b16 %v2332
    %v2642 = vunpack.c.l.b16 %v2333
    %v2643 = vunpack.c.h.b16 %v2333
    %v2644 = vunpack.c.l.b16 %v2334
    %v2645 = vunpack.c.h.b16 %v2334
    %v2646 = vunpack.c.l.b16 %v2335
    %v2647 = vunpack.c.h.b16 %v2335
    %v2648 = vunpack.c.l.b16 %v2336
    %v2649 = vunpack.c.h.b16 %v2336
    %v2650 = vunpack.c.l.b16 %v2337
    %v2651 = vunpack.c.h.b16 %v2337
    %v2652 = vunpack.c.l.b16 %v2338
    %v2653 = vunpack.c.h.b16 %v2338
    %v2654 = vunpack.c.l.b16 %v2339
    %v2655 = vunpack.c.h.b16 %v2339
    %v2656 = vunpack.c.l.b16 %v2340
    %v2657 = vunpack.c.h.b16 %v2340
    %v2658 = vunpack.c.l.b16 %v2341
    %v2659 = vunpack.c.h.b16 %v2341
    %v2660 = vunpack.c.l.b16 %v2342
    %v2661 = vunpack.c.h.b16 %v2342
    %v2662 = vunpack.c.l.b16 %v2343
    %v2663 = vunpack.c.h.b16 %v2343
    %v2664 = vunpack.c.l.b16 %v2344
    %v2665 = vunpack.c.h.b16 %v2344
    %v2666 = vunpack.c.l.b16 %v2345
    %v2667 = vunpack.c.h.b16 %v2345
    %v2668 = vunpack.c.l.b16 %v2346
    %v2669 = vunpack.c.h.b16 %v2346
    %v2670 = vunpack.c.l.b16 %v2347
    %v2671 = vunpack.c.h.b16 %v2347
    %v2672 = vunpack.c.l.b16 %v2348
    %v2673 = vunpack.c.h.b16 %v2348
    %v2674 = vunpack.c.l.b16 %v2349
    %v2675 = vunpack.c.h.b16 %v2349
    %v2676 = vunpack.c.l.b16 %v2350
    %v2677 = vunpack.c.h.b16 %v2350
    %v2678 = vunpack.c.l.b16 %v2351
    %v2679 = vunpack.c.h.b16 %v2351
    %v2680 = vunpack.c.l.b16 %v2352
    %v2681 = vunpack.c.h.b16 %v2352
    %v2682 = vunpack.c.l.b16 %v2353
    %v2683 = vunpack.c.h.b16 %v2353
    %v2684 = vunpack.c.l.b16 %v2354
    %v2685 = vunpack.c.h.b16 %v2354
    %v2686 = vunpack.c.l.b16 %v2355
    %v2687 = vunpack.c.h.b16 %v2355
    %v2688 = vunpack.c.l.b16 %v2356
    %v2689 = vunpack.c.h.b16 %v2356
    %v2690 = vunpack.c.l.b16 %v2357
    %v2691 = vunpack.c.h.b16 %v2357
    %v2692 = vunpack.c.l.b16 %v2358
    %v2693 = vunpack.c.h.b16 %v2358
    %v2694 = vunpack.c.l.b16 %v2359
    %v2695 = vunpack.c.h.b16 %v2359
    %v2696 = vunpack.c.l.b16 %v2360
    %v2697 = vunpack.c.h.b16 %v2360
    %v2698 = vunpack.c.l.b16 %v2361
    %v2699 = vunpack.c.h.b16 %v2361
    %v2700 = vunpack.c.l.b16 %v2362
    %v2701 = vunpack.c.h.b16 %v2362
    %v2702 = vunpack.c.l.b16 %v2363
    %v2703 = vunpack.c.h.b16 %v2363
    %v2704 = vunpack.c.l.b16 %v2364
    %v2705 = vunpack.c.h.b16 %v2364
    %v2706 = vunpack.c.l.b16 %v2365
    %v2707 = vunpack.c.h.b16 %v2365
    %v2708 = vunpack.c.l.b16 %v2366
    %v2709 = vunpack.c.h.b16 %v2366
    %v2710 = vunpack.c.l.b16 %v2367
    %v2711 = vunpack.c.h.b16 %v2367
    %v2712 = vunpack.c.l.b16 %v2368
    %v2713 = vunpack.c.h.b16 %v2368
    %v2714 = vunpack.c.l.b16 %v2369
    %v2715 = vunpack.c.h.b16 %v2369
    %v2716 = vunpack.c.l.b16 %v2370
    %v2717 = vunpack.c.h.b16 %v2370
    %v2718 = vunpack.c.l.b16 %v2371
    %v2719 = vunpack.c.h.b16 %v2371
    %v2720 = vunpack.c.l.b16 %v2372
    %v2721 = vunpack.c.h.b16 %v2372
    %v2722 = vunpack.c.l.b16 %v2373
    %v2723 = vunpack.c.h.b16 %v2373
    %v2724 = vunpack.c.l.b16 %v2374
    %v2725 = vunpack.c.h.b16 %v2374
    %v2726 = vunpack.c.l.b16 %v2375
    %v2727 = vunpack.c.h.b16 %v2375
    %v2728 = vunpack.c.l.b16 %v2376
    %v2729 = vunpack.c.h.b16 %v2376
    %v2730 = vunpack.c.l.b16 %v2377
    %v2731 = vunpack.c.h.b16 %v2377
    %v2732 = vunpack.c.l.b16 %v2378
    %v2733 = vunpack.c.h.b16 %v2378
    %v2734 = vunpack.c.l.b16 %v2379
    %v2735 = vunpack.c.h.b16 %v2379
    %v2736 = vunpack.c.l.b16 %v2380
    %v2737 = vunpack.c.h.b16 %v2380
    %v2738 = vunpack.c.l.b16 %v2381
    %v2739 = vunpack.c.h.b16 %v2381
    %v2740 = vunpack.c.l.b16 %v2382
    %v2741 = vunpack.c.h.b16 %v2382
    %v2742 = vunpack.c.l.b16 %v2383
    %v2743 = vunpack.c.h.b16 %v2383
    %v2744 = vunpack.c.l.b16 %v2384
    %v2745 = vunpack.c.h.b16 %v2384
    %v2746 = vunpack.c.l.b16 %v2385
    %v2747 = vunpack.c.h.b16 %v2385
    %v2748 = vunpack.c.l.b16 %v2386
    %v2749 = vunpack.c.h.b16 %v2386
    %v2750 = vunpack.c.l.b16 %v2387
    %v2751 = vunpack.c.h.b16 %v2387
    %v2752 = vunpack.c.l.b16 %v2388
    %v2753 = vunpack.c.h.b16 %v2388
    %v2754 = vunpack.c.l.b16 %v2389
    %v2755 = vunpack.c.h.b16 %v2389
    %v2756 = vunpack.c.l.b16 %v2390
    %v2757 = vunpack.c.h.b16 %v2390
    %v2758 = vunpack.c.l.b16 %v2391
    %v2759 = vunpack.c.h.b16 %v2391
    %v2760 = vunpack.c.l.b16 %v2392
    %v2761 = vunpack.c.h.b16 %v2392
    %v2762 = vunpack.c.l.b16 %v2393
    %v2763 = vunpack.c.h.b16 %v2393
    %v2764 = vunpack.c.l.b16 %v2394
    %v2765 = vunpack.c.h.b16 %v2394
    %v2766 = vunpack.c.l.b16 %v2395
    %v2767 = vunpack.c.h.b16 %v2395
    %v2768 = vunpack.c.l.b16 %v2396
    %v2769 = vunpack.c.h.b16 %v2396
    %v2770 = vunpack.c.l.b16 %v2397
    %v2771 = vunpack.c.h.b16 %v2397
    %v2772 = vunpack.c.l.b16 %v2398
    %v2773 = vunpack.c.h.b16 %v2398
    %v2774 = vunpack.c.l.b16 %v2399
    %v2775 = vunpack.c.h.b16 %v2399
    %v2776 = vunpack.c.l.b16 %v2400
    %v2777 = vunpack.c.h.b16 %v2400
    %v2778 = vunpack.c.l.b16 %v2401
    %v2779 = vunpack.c.h.b16 %v2401
    %v2780 = vunpack.c.l.b16 %v2402
    %v2781 = vunpack.c.h.b16 %v2402
    %v2782 = vunpack.c.l.b16 %v2403
    %v2783 = vunpack.c.h.b16 %v2403
    %v2784 = vunpack.c.l.b16 %v2404
    %v2785 = vunpack.c.h.b16 %v2404
    %v2786 = vunpack.c.l.b16 %v2405
    %v2787 = vunpack.c.h.b16 %v2405
    %v2788 = vunpack.c.l.b16 %v2406
    %v2789 = vunpack.c.h.b16 %v2406
    %v2790 = vunpack.c.l.b16 %v2407
    %v2791 = vunpack.c.h.b16 %v2407
    %v2792 = vunpack.c.l.b16 %v2408
    %v2793 = vunpack.c.h.b16 %v2408
    %v2794 = vunpack.c.l.b16 %v2409
    %v2795 = vunpack.c.h.b16 %v2409
    %v2796 = vunpack.c.l.b16 %v2410
    %v2797 = vunpack.c.h.b16 %v2410
    %v2798 = vunpack.c.l.b16 %v2411
    %v2799 = vunpack.c.h.b16 %v2411
    %v2800 = vunpack.c.l.b16 %v2412
    %v2801 = vunpack.c.h.b16 %v2412
    %v2802 = vpack.c.b16 %v2554, %v2546
    %v2803 = vpack.c.b16 %v2555, %v2547
    %v2804 = vpack.c.b16 %v2556, %v2548
    %v2805 = vpack.c.b16 %v2557, %v2549
    %v2806 = vpack.c.b16 %v2558, %v2550
    %v2807 = vpack.c.b16 %v2559, %v2551
    %v2808 = vpack.c.b16 %v2560, %v2552
    %v2809 = vpack.c.b16 %v2561, %v2553
    %v2810 = vpack.c.b16 %v2570, %v2562
    %v2811 = vpack.c.b16 %v2571, %v2563
    %v2812 = vpack.c.b16 %v2572, %v2564
    %v2813 = vpack.c.b16 %v2573, %v2565
    %v2814 = vpack.c.b16 %v2574, %v2566
    %v2815 = vpack.c.b16 %v2575, %v2567
    %v2816 = vpack.c.b16 %v2576, %v2568
    %v2817 = vpack.c.b16 %v2577, %v2569
    %v2818 = vpack.c.b16 %v2586, %v2578
    %v2819 = vpack.c.b16 %v2587, %v2579
    %v2820 = vpack.c.b16 %v2588, %v2580
    %v2821 = vpack.c.b16 %v2589, %v2581
    %v2822 = vpack.c.b16 %v2590, %v2582
    %v2823 = vpack.c.b16 %v2591, %v2583
    %v2824 = vpack.c.b16 %v2592, %v2584
    %v2825 = vpack.c.b16 %v2593, %v2585
    %v2826 = vpack.c.b16 %v2602, %v2594
    %v2827 = vpack.c.b16 %v2603, %v2595
    %v2828 = vpack.c.b16 %v2604, %v2596
    %v2829 = vpack.c.b16 %v2605, %v2597
    %v2830 = vpack.c.b16 %v2606, %v2598
    %v2831 = vpack.c.b16 %v2607, %v2599
    %v2832 = vpack.c.b16 %v2608, %v2600
    %v2833 = vpack.c.b16 %v2609, %v2601
    %v2834 = vpack.c.b16 %v2618, %v2610
    %v2835 = vpack.c.b16 %v2619, %v2611
    %v2836 = vpack.c.b16 %v2620, %v2612
    %v2837 = vpack.c.b16 %v2621, %v2613
    %v2838 = vpack.c.b16 %v2622, %v2614
    %v2839 = vpack.c.b16 %v2623, %v2615
    %v2840 = vpack.c.b16 %v2624, %v2616
    %v2841 = vpack.c.b16 %v2625, %v2617
    %v2842 = vpack.c.b16 %v2634, %v2626
    %v2843 = vpack.c.b16 %v2635, %v2627
    %v2844 = vpack.c.b16 %v2636, %v2628
    %v2845 = vpack.c.b16 %v2637, %v2629
    %v2846 = vpack.c.b16 %v2638, %v2630
    %v2847 = vpack.c.b16 %v2639, %v2631
    %v2848 = vpack.c.b16 %v2640, %v2632
    %v2849 = vpack.c.b16 %v2641, %v2633
    %v2850 = vpack.c.b16 %v2650, %v2642
    %v2851 = vpack.c.b16 %v2651, %v2643
    %v2852 = vpack.c.b16 %v2652, %v2644
    %v2853 = vpack.c.b16 %v2653, %v2645
    %v2854 = vpack.c.b16 %v2654, %v2646
    %v2855 = vpack.c.b16 %v2655, %v2647
    %v2856 = vpack.c.b16 %v2656, %v2648
    %v2857 = vpack.c.b16 %v2657, %v2649
    %v2858 = vpack.c.b16 %v2666, %v2658
    %v2859 = vpack.c.b16 %v2667, %v2659
    %v2860 = vpack.c.b16 %v2668, %v2660
    %v2861 = vpack.c.b16 %v2669, %v2661
    %v2862 = vpack.c.b16 %v2670, %v2662
    %v2863 = vpack.c.b16 %v2671, %v2663
    %v2864 = vpack.c.b16 %v2672, %v2664
    %v2865 = vpack.c.b16 %v2673, %v2665
    %v2866 = vpack.c.b16 %v2682, %v2674
    %v2867 = vpack.c.b16 %v2683, %v2675
    %v2868 = vpack.c.b16 %v2684, %v2676
    %v2869 = vpack.c.b16 %v2685, %v2677
    %v2870 = vpack.c.b16 %v2686, %v2678
    %v2871 = vpack.c.b16 %v2687, %v2679
    %v2872 = vpack.c.b16 %v2688, %v2680
    %v2873 = vpack.c.b16 %v2689, %v2681
    %v2874 = vpack.c.b16 %v2698, %v2690
    %v2875 = vpack.c.b16 %v2699, %v2691
    %v2876 = vpack.c.b16 %v2700, %v2692
    %v2877 = vpack.c.b16 %v2701, %v2693
    %v2878 = vpack.c.b16 %v2702, %v2694
    %v2879 = vpack.c.b16 %v2703, %v2695
    %v2880 = vpack.c.b16 %v2704, %v2696
    %v2881 = vpack.c.b16 %v2705, %v2697
    %v2882 = vpack.c.b16 %v2714, %v2706
    %v2883 = vpack.c.b16 %v2715, %v2707
    %v2884 = vpack.c.b16 %v2716, %v2708
    %v2885 = vpack.c.b16 %v2717, %v2709
    %v2886 = vpack.c.b16 %v2718, %v2710
    %v2887 = vpack.c.b16 %v2719, %v2711
    %v2888 = vpack.c.b16 %v2720, %v2712
    %v2889 = vpack.c.b16 %v2721, %v2713
    %v2890 = vpack.c.b16 %v2730, %v2722
    %v2891 = vpack.c.b16 %v2731, %v2723
    %v2892 = vpack.c.b16 %v2732, %v2724
    %v2893 = vpack.c.b16 %v2733, %v2725
    %v2894 = vpack.c.b16 %v2734, %v2726
    %v2895 = vpack.c.b16 %v2735, %v2727
    %v2896 = vpack.c.b16 %v2736, %v2728
    %v2897 = vpack.c.b16 %v2737, %v2729
    %v2898 = vpack.c.b16 %v2746, %v2738
    %v2899 = vpack.c.b16 %v2747, %v2739
    %v2900 = vpack.c.b16 %v2748, %v2740
    %v2901 = vpack.c.b16 %v2749, %v2741
    %v2902 = vpack.c.b16 %v2750, %v2742
    %v2903 = vpack.c.b16 %v2751, %v2743
    %v2904 = vpack.c.b16 %v2752, %v2744
    %v2905 = vpack.c.b16 %v2753, %v2745
    %v2906 = vpack.c.b16 %v2762, %v2754
    %v2907 = vpack.c.b16 %v2763, %v2755
    %v2908 = vpack.c.b16 %v2764, %v2756
    %v2909 = vpack.c.b16 %v2765, %v2757
    %v2910 = vpack.c.b16 %v2766, %v2758
    %v2911 = vpack.c.b16 %v2767, %v2759
    %v2912 = vpack.c.b16 %v2768, %v2760
    %v2913 = vpack.c.b16 %v2769, %v2761
    %v2914 = vpack.c.b16 %v2778, %v2770
    %v2915 = vpack.c.b16 %v2779, %v2771
    %v2916 = vpack.c.b16 %v2780, %v2772
    %v2917 = vpack.c.b16 %v2781, %v2773
    %v2918 = vpack.c.b16 %v2782, %v2774
    %v2919 = vpack.c.b16 %v2783, %v2775
    %v2920 = vpack.c.b16 %v2784, %v2776
    %v2921 = vpack.c.b16 %v2785, %v2777
    %v2922 = vpack.c.b16 %v2794, %v2786
    %v2923 = vpack.c.b16 %v2795, %v2787
    %v2924 = vpack.c.b16 %v2796, %v2788
    %v2925 = vpack.c.b16 %v2797, %v2789
    %v2926 = vpack.c.b16 %v2798, %v2790
    %v2927 = vpack.c.b16 %v2799, %v2791
    %v2928 = vpack.c.b16 %v2800, %v2792
    %v2929 = vpack.c.b16 %v2801, %v2793
    %3058 = vmatprep.subr.bf16.mxu0 %v2859
    %3059 = vmatpush1.bf16.msra.mxu0 %v2858
    %3060 = vmatprep.subr.bf16.mxu0 %v2851
    %3061 = vmatpush1.bf16.msra.mxu0 %v2850
    %3062 = vmatprep.subr.bf16.mxu0 %v2843
    %3063 = vmatpush1.bf16.msra.mxu0 %v2842
    %3064 = vmatprep.subr.bf16.mxu0 %v2835
    %3065 = vmatpush1.bf16.msra.mxu0 %v2834
    %3066 = vmatprep.subr.bf16.mxu0 %v2827
    %3067 = vmatpush1.bf16.msra.mxu0 %v2826
    %3068 = vmatprep.subr.bf16.mxu0 %v2819
    %3069 = vmatpush1.bf16.msra.mxu0 %v2818
    %3070 = vmatprep.subr.bf16.mxu0 %v2811
    %3071 = vmatpush1.bf16.msra.mxu0 %v2810
    %3072 = vmatprep.subr.bf16.mxu0 %v2803
    %3073 = vmatpush1.bf16.msra.mxu0 %v2802
    %3074 = vmatprep.subr.bf16.mxu0 %v2923
    %3075 = vmatpush2.bf16.msra.mxu0 %v2922
    %3076 = vmatprep.subr.bf16.mxu0 %v2915
    %3077 = vmatpush2.bf16.msra.mxu0 %v2914
    %3078 = vmatprep.subr.bf16.mxu0 %v2907
    %3079 = vmatpush2.bf16.msra.mxu0 %v2906
    %3080 = vmatprep.subr.bf16.mxu0 %v2899
    %3081 = vmatpush2.bf16.msra.mxu0 %v2898
    %3082 = vmatprep.subr.bf16.mxu0 %v2891
    %3083 = vmatpush2.bf16.msra.mxu0 %v2890
    %3084 = vmatprep.subr.bf16.mxu0 %v2883
    %3085 = vmatpush2.bf16.msra.mxu0 %v2882
    %3086 = vmatprep.subr.bf16.mxu0 %v2875
    %3087 = vmatpush2.bf16.msra.mxu0 %v2874
    %3088 = vmatprep.subr.bf16.mxu0 %v2867
    %3089 = vmatpush2.bf16.msra.mxu0 %v2866
    %3090 = vmatprep.mubr.bf16.mxu0 %v2415
    %3091 = vmatmul.mubr.bf16.gmra.mxu0 %v2414
    %v3092 = vpop.f32.mrf.mxu0
    %v3093 = vadd.f32 0.0, %v3092
    %v3094 = vpop.f32.mrf.mxu0
    %v3095 = vadd.f32 0.0, %v3094
    %v3096 = vpop.f32.mrf.mxu0
    %v3097 = vpop.f32.mrf.mxu0
    %3098 = vdwg.mxu0
    %3099 = vmatprep.subr.bf16.mxu0 %v2861
    %3100 = vmatpush1.bf16.msra.mxu0 %v2860
    %3101 = vmatprep.subr.bf16.mxu0 %v2853
    %3102 = vmatpush1.bf16.msra.mxu0 %v2852
    %3103 = vmatprep.subr.bf16.mxu0 %v2845
    %3104 = vmatpush1.bf16.msra.mxu0 %v2844
    %3105 = vmatprep.subr.bf16.mxu0 %v2837
    %3106 = vmatpush1.bf16.msra.mxu0 %v2836
    %3107 = vmatprep.subr.bf16.mxu0 %v2829
    %3108 = vmatpush1.bf16.msra.mxu0 %v2828
    %3109 = vmatprep.subr.bf16.mxu0 %v2821
    %3110 = vmatpush1.bf16.msra.mxu0 %v2820
    %3111 = vmatprep.subr.bf16.mxu0 %v2813
    %3112 = vmatpush1.bf16.msra.mxu0 %v2812
    %3113 = vmatprep.subr.bf16.mxu0 %v2805
    %3114 = vmatpush1.bf16.msra.mxu0 %v2804
    %3115 = vmatprep.subr.bf16.mxu0 %v2925
    %3116 = vmatpush2.bf16.msra.mxu0 %v2924
    %3117 = vmatprep.subr.bf16.mxu0 %v2917
    %3118 = vmatpush2.bf16.msra.mxu0 %v2916
    %3119 = vmatprep.subr.bf16.mxu0 %v2909
    %3120 = vmatpush2.bf16.msra.mxu0 %v2908
    %3121 = vmatprep.subr.bf16.mxu0 %v2901
    %3122 = vmatpush2.bf16.msra.mxu0 %v2900
    %3123 = vmatprep.subr.bf16.mxu0 %v2893
    %3124 = vmatpush2.bf16.msra.mxu0 %v2892
    %3125 = vmatprep.subr.bf16.mxu0 %v2885
    %3126 = vmatpush2.bf16.msra.mxu0 %v2884
    %3127 = vmatprep.subr.bf16.mxu0 %v2877
    %3128 = vmatpush2.bf16.msra.mxu0 %v2876
    %3129 = vmatprep.subr.bf16.mxu0 %v2869
    %3130 = vmatpush2.bf16.msra.mxu0 %v2868
    %3131 = vmatprep.mubr.bf16.mxu0 %v2415
    %3132 = vmatmul.mubr.bf16.gmra.mxu0 %v2414
    %v3133 = vpop.f32.mrf.mxu0
    %v3134 = vadd.f32 0.0, %v3133
    %v3135 = vpop.f32.mrf.mxu0
    %v3136 = vadd.f32 0.0, %v3135
    %v3137 = vpop.f32.mrf.mxu0
    %v3138 = vpop.f32.mrf.mxu0
    %3139 = vdwg.mxu0
    %3140 = vmatprep.subr.bf16.mxu0 %v2863
    %3141 = vmatpush1.bf16.msra.mxu0 %v2862
    %3142 = vmatprep.subr.bf16.mxu0 %v2855
    %3143 = vmatpush1.bf16.msra.mxu0 %v2854
    %3144 = vmatprep.subr.bf16.mxu0 %v2847
    %3145 = vmatpush1.bf16.msra.mxu0 %v2846
    %3146 = vmatprep.subr.bf16.mxu0 %v2839
    %3147 = vmatpush1.bf16.msra.mxu0 %v2838
    %3148 = vmatprep.subr.bf16.mxu0 %v2831
    %3149 = vmatpush1.bf16.msra.mxu0 %v2830
    %3150 = vmatprep.subr.bf16.mxu0 %v2823
    %3151 = vmatpush1.bf16.msra.mxu0 %v2822
    %3152 = vmatprep.subr.bf16.mxu0 %v2815
    %3153 = vmatpush1.bf16.msra.mxu0 %v2814
    %3154 = vmatprep.subr.bf16.mxu0 %v2807
    %3155 = vmatpush1.bf16.msra.mxu0 %v2806
    %3156 = vmatprep.subr.bf16.mxu0 %v2927
    %3157 = vmatpush2.bf16.msra.mxu0 %v2926
    %3158 = vmatprep.subr.bf16.mxu0 %v2919
    %3159 = vmatpush2.bf16.msra.mxu0 %v2918
    %3160 = vmatprep.subr.bf16.mxu0 %v2911
    %3161 = vmatpush2.bf16.msra.mxu0 %v2910
    %3162 = vmatprep.subr.bf16.mxu0 %v2903
    %3163 = vmatpush2.bf16.msra.mxu0 %v2902
    %3164 = vmatprep.subr.bf16.mxu0 %v2895
    %3165 = vmatpush2.bf16.msra.mxu0 %v2894
    %3166 = vmatprep.subr.bf16.mxu0 %v2887
    %3167 = vmatpush2.bf16.msra.mxu0 %v2886
    %3168 = vmatprep.subr.bf16.mxu0 %v2879
    %3169 = vmatpush2.bf16.msra.mxu0 %v2878
    %3170 = vmatprep.subr.bf16.mxu0 %v2871
    %3171 = vmatpush2.bf16.msra.mxu0 %v2870
    %3172 = vmatprep.mubr.bf16.mxu0 %v2415
    %3173 = vmatmul.mubr.bf16.gmra.mxu0 %v2414
    %v3174 = vpop.f32.mrf.mxu0
    %v3175 = vadd.f32 0.0, %v3174
    %v3176 = vpop.f32.mrf.mxu0
    %v3177 = vadd.f32 0.0, %v3176
    %v3178 = vpop.f32.mrf.mxu0
    %v3179 = vpop.f32.mrf.mxu0
    %3180 = vdwg.mxu0
    %3181 = vmatprep.subr.bf16.mxu0 %v2865
    %3182 = vmatpush1.bf16.msra.mxu0 %v2864
    %3183 = vmatprep.subr.bf16.mxu0 %v2857
    %3184 = vmatpush1.bf16.msra.mxu0 %v2856
    %3185 = vmatprep.subr.bf16.mxu0 %v2849
    %3186 = vmatpush1.bf16.msra.mxu0 %v2848
    %3187 = vmatprep.subr.bf16.mxu0 %v2841
    %3188 = vmatpush1.bf16.msra.mxu0 %v2840
    %3189 = vmatprep.subr.bf16.mxu0 %v2833
    %3190 = vmatpush1.bf16.msra.mxu0 %v2832
    %3191 = vmatprep.subr.bf16.mxu0 %v2825
    %3192 = vmatpush1.bf16.msra.mxu0 %v2824
    %3193 = vmatprep.subr.bf16.mxu0 %v2817
    %3194 = vmatpush1.bf16.msra.mxu0 %v2816
    %3195 = vmatprep.subr.bf16.mxu0 %v2809
    %3196 = vmatpush1.bf16.msra.mxu0 %v2808
    %3197 = vmatprep.subr.bf16.mxu0 %v2929
    %3198 = vmatpush2.bf16.msra.mxu0 %v2928
    %3199 = vmatprep.subr.bf16.mxu0 %v2921
    %3200 = vmatpush2.bf16.msra.mxu0 %v2920
    %3201 = vmatprep.subr.bf16.mxu0 %v2913
    %3202 = vmatpush2.bf16.msra.mxu0 %v2912
    %3203 = vmatprep.subr.bf16.mxu0 %v2905
    %3204 = vmatpush2.bf16.msra.mxu0 %v2904
    %3205 = vmatprep.subr.bf16.mxu0 %v2897
    %3206 = vmatpush2.bf16.msra.mxu0 %v2896
    %3207 = vmatprep.subr.bf16.mxu0 %v2889
    %3208 = vmatpush2.bf16.msra.mxu0 %v2888
    %3209 = vmatprep.subr.bf16.mxu0 %v2881
    %3210 = vmatpush2.bf16.msra.mxu0 %v2880
    %3211 = vmatprep.subr.bf16.mxu0 %v2873
    %3212 = vmatpush2.bf16.msra.mxu0 %v2872
    %3213 = vmatprep.mubr.bf16.mxu0 %v2415
    %3214 = vmatmul.mubr.bf16.gmra.mxu0 %v2414
    %v3215 = vpop.f32.mrf.mxu0
    %v3216 = vadd.f32 0.0, %v3215
    %v3217 = vpop.f32.mrf.mxu0
    %v3218 = vadd.f32 0.0, %v3217
    %v3219 = vpop.f32.mrf.mxu0
    %v3220 = vpop.f32.mrf.mxu0
    %3221 = vdwg.mxu0
    %v3222 = vadd.f32 %v3175, %v1175
    %v3223 = vadd.f32 %v3177, %v1179
    %v3224 = vadd.f32 %v3216, %v1183
    %v3225 = vadd.f32 %v3218, %v1187
    %v3226 = vxor.u32 %v3222, 2147483648
    %v3227 = vmul.f32 %v3226, 1.442695
    %v3228 = vpow.pop %v3227
    %v3229 = vadd.f32 %v3228, 1.0
    %v3230 = vrcp.pop %v3229
    %v3231 = vmul.f32 1.0, %v3230
    %v3232 = vxor.u32 %v3223, 2147483648
    %v3233 = vmul.f32 %v3232, 1.442695
    %v3234 = vpow.pop %v3233
    %v3235 = vadd.f32 %v3234, 1.0
    %v3236 = vrcp.pop %v3235
    %v3237 = vmul.f32 1.0, %v3236
    %v3238 = vtanh.pop %v3224
    %v3239 = vxor.u32 %v3225, 2147483648
    %v3240 = vmul.f32 %v3239, 1.442695
    %v3241 = vpow.pop %v3240
    %v3242 = vadd.f32 %v3241, 1.0
    %v3243 = vrcp.pop %v3242
    %v3244 = vmul.f32 1.0, %v3243
    %v3245 = vmul.f32 %v3237, %v2230
    %v3246 = vmul.f32 %v3231, %v3238
    %v3247 = vadd.f32 %v3245, %v3246
    %v3248 = vtanh.pop %v3247
    %v3249 = vmul.f32 %v3244, %v3248
    %v3250 = vpack.c.bf16 %v3249, %v3249
    %v3252 = vunpack.c.l.b16 %v3250
    %v3253 = vpack.c.b16 %v3252, %v3252
    %v3254 = vrot.slane %v3253, 6
    %3256 = vst [vmem:[#allocation2] sm:$0x4] %v3254
    %v3261 = vrot.slane %v3093, 2
    %v3262 = vrot.slane %v3095, 2
    %v3263 = vrot.slane %v3134, 2
    %v3264 = vrot.slane %v3136, 2
    %v3269 = vadd.f32 %v162, %v3261
    %v3270 = vadd.f32 %v164, %v3262
    %v3271 = vadd.f32 %v205, %v3263
    %v3272 = vadd.f32 %v207, %v3264
    %v3273 = vxor.u32 %v3269, 2147483648
    %v3274 = vmul.f32 %v3273, 1.442695
    %v3275 = vpow.pop %v3274
    %v3276 = vadd.f32 %v3275, 1.0
    %v3277 = vrcp.pop %v3276
    %v3278 = vmul.f32 1.0, %v3277
    %v3279 = vxor.u32 %v3270, 2147483648
    %v3280 = vmul.f32 %v3279, 1.442695
    %v3281 = vpow.pop %v3280
    %v3282 = vadd.f32 %v3281, 1.0
    %v3283 = vrcp.pop %v3282
    %v3284 = vmul.f32 1.0, %v3283
    %v3285 = vtanh.pop %v3271
    %v3286 = vxor.u32 %v3272, 2147483648
    %v3287 = vmul.f32 %v3286, 1.442695
    %v3288 = vpow.pop %v3287
    %v3289 = vadd.f32 %v3288, 1.0
    %v3290 = vrcp.pop %v3289
    %v3291 = vmul.f32 1.0, %v3290
    %v3293 = vrot.slane %v2280, 6
    %v3295 = vmul.f32 %v3284, %v3293
    %v3296 = vmul.f32 %v3278, %v3285
    %v3297 = vadd.f32 %v3295, %v3296
    %v3298 = vtanh.pop %v3297
    %v3299 = vmul.f32 %v3291, %v3298
    %v3300 = vpack.c.bf16 %v3299, %v3299
    %v3301 = vrot.slane %v3250, 5
    %v3302 = vld [vmem:[#allocation7] sm:$0xff]
    %v3303 = vld [vmem:[#allocation7 + $0x8] sm:$0xff]
    %v3304 = vld [vmem:[#allocation7 + $0x10] sm:$0xff]
    %v3305 = vld [vmem:[#allocation7 + $0x18] sm:$0xff]
    %v3306 = vld [vmem:[#allocation7 + $0x20] sm:$0xff]
    %v3307 = vld [vmem:[#allocation7 + $0x28] sm:$0xff]
    %v3308 = vld [vmem:[#allocation7 + $0x30] sm:$0xff]
    %v3309 = vld [vmem:[#allocation7 + $0x38] sm:$0xff]
    %v3310 = vld [vmem:[#allocation7 + $0x40] sm:$0xff]
    %v3311 = vld [vmem:[#allocation7 + $0x48] sm:$0xff]
    %v3312 = vld [vmem:[#allocation7 + $0x50] sm:$0xff]
    %v3313 = vld [vmem:[#allocation7 + $0x58] sm:$0xff]
    %v3314 = vld [vmem:[#allocation7 + $0x60] sm:$0xff]
    %v3315 = vld [vmem:[#allocation7 + $0x68] sm:$0xff]
    %v3316 = vld [vmem:[#allocation7 + $0x70] sm:$0xff]
    %v3317 = vld [vmem:[#allocation7 + $0x78] sm:$0xff]
    %v3318 = vld [vmem:[#allocation7 + $0x80] sm:$0xff]
    %v3319 = vld [vmem:[#allocation7 + $0x88] sm:$0xff]
    %v3320 = vld [vmem:[#allocation7 + $0x90] sm:$0xff]
    %v3321 = vld [vmem:[#allocation7 + $0x98] sm:$0xff]
    %v3322 = vld [vmem:[#allocation7 + $0xa0] sm:$0xff]
    %v3323 = vld [vmem:[#allocation7 + $0xa8] sm:$0xff]
    %v3324 = vld [vmem:[#allocation7 + $0xb0] sm:$0xff]
    %v3325 = vld [vmem:[#allocation7 + $0xb8] sm:$0xff]
    %v3326 = vld [vmem:[#allocation7 + $0xc0] sm:$0xff]
    %v3327 = vld [vmem:[#allocation7 + $0xc8] sm:$0xff]
    %v3328 = vld [vmem:[#allocation7 + $0xd0] sm:$0xff]
    %v3329 = vld [vmem:[#allocation7 + $0xd8] sm:$0xff]
    %v3330 = vld [vmem:[#allocation7 + $0xe0] sm:$0xff]
    %v3331 = vld [vmem:[#allocation7 + $0xe8] sm:$0xff]
    %v3332 = vld [vmem:[#allocation7 + $0xf0] sm:$0xff]
    %v3333 = vld [vmem:[#allocation7 + $0xf8] sm:$0xff]
    %v3334 = vld [vmem:[#allocation7 + $0x100] sm:$0xff]
    %v3335 = vld [vmem:[#allocation7 + $0x108] sm:$0xff]
    %v3336 = vld [vmem:[#allocation7 + $0x110] sm:$0xff]
    %v3337 = vld [vmem:[#allocation7 + $0x118] sm:$0xff]
    %v3338 = vld [vmem:[#allocation7 + $0x120] sm:$0xff]
    %v3339 = vld [vmem:[#allocation7 + $0x128] sm:$0xff]
    %v3340 = vld [vmem:[#allocation7 + $0x130] sm:$0xff]
    %v3341 = vld [vmem:[#allocation7 + $0x138] sm:$0xff]
    %v3342 = vld [vmem:[#allocation7 + $0x140] sm:$0xff]
    %v3343 = vld [vmem:[#allocation7 + $0x148] sm:$0xff]
    %v3344 = vld [vmem:[#allocation7 + $0x150] sm:$0xff]
    %v3345 = vld [vmem:[#allocation7 + $0x158] sm:$0xff]
    %v3346 = vld [vmem:[#allocation7 + $0x160] sm:$0xff]
    %v3347 = vld [vmem:[#allocation7 + $0x168] sm:$0xff]
    %v3348 = vld [vmem:[#allocation7 + $0x170] sm:$0xff]
    %v3349 = vld [vmem:[#allocation7 + $0x178] sm:$0xff]
    %v3350 = vld [vmem:[#allocation7 + $0x180] sm:$0xff]
    %v3351 = vld [vmem:[#allocation7 + $0x188] sm:$0xff]
    %v3352 = vld [vmem:[#allocation7 + $0x190] sm:$0xff]
    %v3353 = vld [vmem:[#allocation7 + $0x198] sm:$0xff]
    %v3354 = vld [vmem:[#allocation7 + $0x1a0] sm:$0xff]
    %v3355 = vld [vmem:[#allocation7 + $0x1a8] sm:$0xff]
    %v3356 = vld [vmem:[#allocation7 + $0x1b0] sm:$0xff]
    %v3357 = vld [vmem:[#allocation7 + $0x1b8] sm:$0xff]
    %v3358 = vld [vmem:[#allocation7 + $0x1c0] sm:$0xff]
    %v3359 = vld [vmem:[#allocation7 + $0x1c8] sm:$0xff]
    %v3360 = vld [vmem:[#allocation7 + $0x1d0] sm:$0xff]
    %v3361 = vld [vmem:[#allocation7 + $0x1d8] sm:$0xff]
    %v3362 = vld [vmem:[#allocation7 + $0x1e0] sm:$0xff]
    %v3363 = vld [vmem:[#allocation7 + $0x1e8] sm:$0xff]
    %v3364 = vld [vmem:[#allocation7 + $0x1f0] sm:$0xff]
    %v3365 = vld [vmem:[#allocation7 + $0x1f8] sm:$0xff]
    %v3366 = vld [vmem:[#allocation7 + $0x200] sm:$0xff]
    %v3367 = vld [vmem:[#allocation7 + $0x208] sm:$0xff]
    %v3368 = vld [vmem:[#allocation7 + $0x210] sm:$0xff]
    %v3369 = vld [vmem:[#allocation7 + $0x218] sm:$0xff]
    %v3370 = vld [vmem:[#allocation7 + $0x220] sm:$0xff]
    %v3371 = vld [vmem:[#allocation7 + $0x228] sm:$0xff]
    %v3372 = vld [vmem:[#allocation7 + $0x230] sm:$0xff]
    %v3373 = vld [vmem:[#allocation7 + $0x238] sm:$0xff]
    %v3374 = vld [vmem:[#allocation7 + $0x240] sm:$0xff]
    %v3375 = vld [vmem:[#allocation7 + $0x248] sm:$0xff]
    %v3376 = vld [vmem:[#allocation7 + $0x250] sm:$0xff]
    %v3377 = vld [vmem:[#allocation7 + $0x258] sm:$0xff]
    %v3378 = vld [vmem:[#allocation7 + $0x260] sm:$0xff]
    %v3379 = vld [vmem:[#allocation7 + $0x268] sm:$0xff]
    %v3380 = vld [vmem:[#allocation7 + $0x270] sm:$0xff]
    %v3381 = vld [vmem:[#allocation7 + $0x278] sm:$0xff]
    %v3382 = vld [vmem:[#allocation7 + $0x280] sm:$0xff]
    %v3383 = vld [vmem:[#allocation7 + $0x288] sm:$0xff]
    %v3384 = vld [vmem:[#allocation7 + $0x290] sm:$0xff]
    %v3385 = vld [vmem:[#allocation7 + $0x298] sm:$0xff]
    %v3386 = vld [vmem:[#allocation7 + $0x2a0] sm:$0xff]
    %v3387 = vld [vmem:[#allocation7 + $0x2a8] sm:$0xff]
    %v3388 = vld [vmem:[#allocation7 + $0x2b0] sm:$0xff]
    %v3389 = vld [vmem:[#allocation7 + $0x2b8] sm:$0xff]
    %v3390 = vld [vmem:[#allocation7 + $0x2c0] sm:$0xff]
    %v3391 = vld [vmem:[#allocation7 + $0x2c8] sm:$0xff]
    %v3392 = vld [vmem:[#allocation7 + $0x2d0] sm:$0xff]
    %v3393 = vld [vmem:[#allocation7 + $0x2d8] sm:$0xff]
    %v3394 = vld [vmem:[#allocation7 + $0x2e0] sm:$0xff]
    %v3395 = vld [vmem:[#allocation7 + $0x2e8] sm:$0xff]
    %v3396 = vld [vmem:[#allocation7 + $0x2f0] sm:$0xff]
    %v3397 = vld [vmem:[#allocation7 + $0x2f8] sm:$0xff]
    %v3398 = vld [vmem:[#allocation7 + $0x300] sm:$0xff]
    %v3399 = vld [vmem:[#allocation7 + $0x308] sm:$0xff]
    %v3400 = vld [vmem:[#allocation7 + $0x310] sm:$0xff]
    %v3401 = vld [vmem:[#allocation7 + $0x318] sm:$0xff]
    %v3402 = vld [vmem:[#allocation7 + $0x320] sm:$0xff]
    %v3403 = vld [vmem:[#allocation7 + $0x328] sm:$0xff]
    %v3404 = vld [vmem:[#allocation7 + $0x330] sm:$0xff]
    %v3405 = vld [vmem:[#allocation7 + $0x338] sm:$0xff]
    %v3406 = vld [vmem:[#allocation7 + $0x340] sm:$0xff]
    %v3407 = vld [vmem:[#allocation7 + $0x348] sm:$0xff]
    %v3408 = vld [vmem:[#allocation7 + $0x350] sm:$0xff]
    %v3409 = vld [vmem:[#allocation7 + $0x358] sm:$0xff]
    %v3410 = vld [vmem:[#allocation7 + $0x360] sm:$0xff]
    %v3411 = vld [vmem:[#allocation7 + $0x368] sm:$0xff]
    %v3412 = vld [vmem:[#allocation7 + $0x370] sm:$0xff]
    %v3413 = vld [vmem:[#allocation7 + $0x378] sm:$0xff]
    %v3414 = vld [vmem:[#allocation7 + $0x380] sm:$0xff]
    %v3415 = vld [vmem:[#allocation7 + $0x388] sm:$0xff]
    %v3416 = vld [vmem:[#allocation7 + $0x390] sm:$0xff]
    %v3417 = vld [vmem:[#allocation7 + $0x398] sm:$0xff]
    %v3418 = vld [vmem:[#allocation7 + $0x3a0] sm:$0xff]
    %v3419 = vld [vmem:[#allocation7 + $0x3a8] sm:$0xff]
    %v3420 = vld [vmem:[#allocation7 + $0x3b0] sm:$0xff]
    %v3421 = vld [vmem:[#allocation7 + $0x3b8] sm:$0xff]
    %v3422 = vld [vmem:[#allocation7 + $0x3c0] sm:$0xff]
    %v3423 = vld [vmem:[#allocation7 + $0x3c8] sm:$0xff]
    %v3424 = vld [vmem:[#allocation7 + $0x3d0] sm:$0xff]
    %v3425 = vld [vmem:[#allocation7 + $0x3d8] sm:$0xff]
    %v3426 = vld [vmem:[#allocation7 + $0x3e0] sm:$0xff]
    %v3427 = vld [vmem:[#allocation7 + $0x3e8] sm:$0xff]
    %v3428 = vld [vmem:[#allocation7 + $0x3f0] sm:$0xff]
    %v3429 = vld [vmem:[#allocation7 + $0x3f8] sm:$0xff]
    %v3431 = vrot.slane %v3300, 3
    %v3432 = vrot.slane %v3301, 3
    %v3563 = vunpack.c.l.b16 %v3302
    %v3564 = vunpack.c.h.b16 %v3302
    %v3565 = vunpack.c.l.b16 %v3303
    %v3566 = vunpack.c.h.b16 %v3303
    %v3567 = vunpack.c.l.b16 %v3304
    %v3568 = vunpack.c.h.b16 %v3304
    %v3569 = vunpack.c.l.b16 %v3305
    %v3570 = vunpack.c.h.b16 %v3305
    %v3571 = vunpack.c.l.b16 %v3306
    %v3572 = vunpack.c.h.b16 %v3306
    %v3573 = vunpack.c.l.b16 %v3307
    %v3574 = vunpack.c.h.b16 %v3307
    %v3575 = vunpack.c.l.b16 %v3308
    %v3576 = vunpack.c.h.b16 %v3308
    %v3577 = vunpack.c.l.b16 %v3309
    %v3578 = vunpack.c.h.b16 %v3309
    %v3579 = vunpack.c.l.b16 %v3310
    %v3580 = vunpack.c.h.b16 %v3310
    %v3581 = vunpack.c.l.b16 %v3311
    %v3582 = vunpack.c.h.b16 %v3311
    %v3583 = vunpack.c.l.b16 %v3312
    %v3584 = vunpack.c.h.b16 %v3312
    %v3585 = vunpack.c.l.b16 %v3313
    %v3586 = vunpack.c.h.b16 %v3313
    %v3587 = vunpack.c.l.b16 %v3314
    %v3588 = vunpack.c.h.b16 %v3314
    %v3589 = vunpack.c.l.b16 %v3315
    %v3590 = vunpack.c.h.b16 %v3315
    %v3591 = vunpack.c.l.b16 %v3316
    %v3592 = vunpack.c.h.b16 %v3316
    %v3593 = vunpack.c.l.b16 %v3317
    %v3594 = vunpack.c.h.b16 %v3317
    %v3595 = vunpack.c.l.b16 %v3318
    %v3596 = vunpack.c.h.b16 %v3318
    %v3597 = vunpack.c.l.b16 %v3319
    %v3598 = vunpack.c.h.b16 %v3319
    %v3599 = vunpack.c.l.b16 %v3320
    %v3600 = vunpack.c.h.b16 %v3320
    %v3601 = vunpack.c.l.b16 %v3321
    %v3602 = vunpack.c.h.b16 %v3321
    %v3603 = vunpack.c.l.b16 %v3322
    %v3604 = vunpack.c.h.b16 %v3322
    %v3605 = vunpack.c.l.b16 %v3323
    %v3606 = vunpack.c.h.b16 %v3323
    %v3607 = vunpack.c.l.b16 %v3324
    %v3608 = vunpack.c.h.b16 %v3324
    %v3609 = vunpack.c.l.b16 %v3325
    %v3610 = vunpack.c.h.b16 %v3325
    %v3611 = vunpack.c.l.b16 %v3326
    %v3612 = vunpack.c.h.b16 %v3326
    %v3613 = vunpack.c.l.b16 %v3327
    %v3614 = vunpack.c.h.b16 %v3327
    %v3615 = vunpack.c.l.b16 %v3328
    %v3616 = vunpack.c.h.b16 %v3328
    %v3617 = vunpack.c.l.b16 %v3329
    %v3618 = vunpack.c.h.b16 %v3329
    %v3619 = vunpack.c.l.b16 %v3330
    %v3620 = vunpack.c.h.b16 %v3330
    %v3621 = vunpack.c.l.b16 %v3331
    %v3622 = vunpack.c.h.b16 %v3331
    %v3623 = vunpack.c.l.b16 %v3332
    %v3624 = vunpack.c.h.b16 %v3332
    %v3625 = vunpack.c.l.b16 %v3333
    %v3626 = vunpack.c.h.b16 %v3333
    %v3627 = vunpack.c.l.b16 %v3334
    %v3628 = vunpack.c.h.b16 %v3334
    %v3629 = vunpack.c.l.b16 %v3335
    %v3630 = vunpack.c.h.b16 %v3335
    %v3631 = vunpack.c.l.b16 %v3336
    %v3632 = vunpack.c.h.b16 %v3336
    %v3633 = vunpack.c.l.b16 %v3337
    %v3634 = vunpack.c.h.b16 %v3337
    %v3635 = vunpack.c.l.b16 %v3338
    %v3636 = vunpack.c.h.b16 %v3338
    %v3637 = vunpack.c.l.b16 %v3339
    %v3638 = vunpack.c.h.b16 %v3339
    %v3639 = vunpack.c.l.b16 %v3340
    %v3640 = vunpack.c.h.b16 %v3340
    %v3641 = vunpack.c.l.b16 %v3341
    %v3642 = vunpack.c.h.b16 %v3341
    %v3643 = vunpack.c.l.b16 %v3342
    %v3644 = vunpack.c.h.b16 %v3342
    %v3645 = vunpack.c.l.b16 %v3343
    %v3646 = vunpack.c.h.b16 %v3343
    %v3647 = vunpack.c.l.b16 %v3344
    %v3648 = vunpack.c.h.b16 %v3344
    %v3649 = vunpack.c.l.b16 %v3345
    %v3650 = vunpack.c.h.b16 %v3345
    %v3651 = vunpack.c.l.b16 %v3346
    %v3652 = vunpack.c.h.b16 %v3346
    %v3653 = vunpack.c.l.b16 %v3347
    %v3654 = vunpack.c.h.b16 %v3347
    %v3655 = vunpack.c.l.b16 %v3348
    %v3656 = vunpack.c.h.b16 %v3348
    %v3657 = vunpack.c.l.b16 %v3349
    %v3658 = vunpack.c.h.b16 %v3349
    %v3659 = vunpack.c.l.b16 %v3350
    %v3660 = vunpack.c.h.b16 %v3350
    %v3661 = vunpack.c.l.b16 %v3351
    %v3662 = vunpack.c.h.b16 %v3351
    %v3663 = vunpack.c.l.b16 %v3352
    %v3664 = vunpack.c.h.b16 %v3352
    %v3665 = vunpack.c.l.b16 %v3353
    %v3666 = vunpack.c.h.b16 %v3353
    %v3667 = vunpack.c.l.b16 %v3354
    %v3668 = vunpack.c.h.b16 %v3354
    %v3669 = vunpack.c.l.b16 %v3355
    %v3670 = vunpack.c.h.b16 %v3355
    %v3671 = vunpack.c.l.b16 %v3356
    %v3672 = vunpack.c.h.b16 %v3356
    %v3673 = vunpack.c.l.b16 %v3357
    %v3674 = vunpack.c.h.b16 %v3357
    %v3675 = vunpack.c.l.b16 %v3358
    %v3676 = vunpack.c.h.b16 %v3358
    %v3677 = vunpack.c.l.b16 %v3359
    %v3678 = vunpack.c.h.b16 %v3359
    %v3679 = vunpack.c.l.b16 %v3360
    %v3680 = vunpack.c.h.b16 %v3360
    %v3681 = vunpack.c.l.b16 %v3361
    %v3682 = vunpack.c.h.b16 %v3361
    %v3683 = vunpack.c.l.b16 %v3362
    %v3684 = vunpack.c.h.b16 %v3362
    %v3685 = vunpack.c.l.b16 %v3363
    %v3686 = vunpack.c.h.b16 %v3363
    %v3687 = vunpack.c.l.b16 %v3364
    %v3688 = vunpack.c.h.b16 %v3364
    %v3689 = vunpack.c.l.b16 %v3365
    %v3690 = vunpack.c.h.b16 %v3365
    %v3691 = vunpack.c.l.b16 %v3366
    %v3692 = vunpack.c.h.b16 %v3366
    %v3693 = vunpack.c.l.b16 %v3367
    %v3694 = vunpack.c.h.b16 %v3367
    %v3695 = vunpack.c.l.b16 %v3368
    %v3696 = vunpack.c.h.b16 %v3368
    %v3697 = vunpack.c.l.b16 %v3369
    %v3698 = vunpack.c.h.b16 %v3369
    %v3699 = vunpack.c.l.b16 %v3370
    %v3700 = vunpack.c.h.b16 %v3370
    %v3701 = vunpack.c.l.b16 %v3371
    %v3702 = vunpack.c.h.b16 %v3371
    %v3703 = vunpack.c.l.b16 %v3372
    %v3704 = vunpack.c.h.b16 %v3372
    %v3705 = vunpack.c.l.b16 %v3373
    %v3706 = vunpack.c.h.b16 %v3373
    %v3707 = vunpack.c.l.b16 %v3374
    %v3708 = vunpack.c.h.b16 %v3374
    %v3709 = vunpack.c.l.b16 %v3375
    %v3710 = vunpack.c.h.b16 %v3375
    %v3711 = vunpack.c.l.b16 %v3376
    %v3712 = vunpack.c.h.b16 %v3376
    %v3713 = vunpack.c.l.b16 %v3377
    %v3714 = vunpack.c.h.b16 %v3377
    %v3715 = vunpack.c.l.b16 %v3378
    %v3716 = vunpack.c.h.b16 %v3378
    %v3717 = vunpack.c.l.b16 %v3379
    %v3718 = vunpack.c.h.b16 %v3379
    %v3719 = vunpack.c.l.b16 %v3380
    %v3720 = vunpack.c.h.b16 %v3380
    %v3721 = vunpack.c.l.b16 %v3381
    %v3722 = vunpack.c.h.b16 %v3381
    %v3723 = vunpack.c.l.b16 %v3382
    %v3724 = vunpack.c.h.b16 %v3382
    %v3725 = vunpack.c.l.b16 %v3383
    %v3726 = vunpack.c.h.b16 %v3383
    %v3727 = vunpack.c.l.b16 %v3384
    %v3728 = vunpack.c.h.b16 %v3384
    %v3729 = vunpack.c.l.b16 %v3385
    %v3730 = vunpack.c.h.b16 %v3385
    %v3731 = vunpack.c.l.b16 %v3386
    %v3732 = vunpack.c.h.b16 %v3386
    %v3733 = vunpack.c.l.b16 %v3387
    %v3734 = vunpack.c.h.b16 %v3387
    %v3735 = vunpack.c.l.b16 %v3388
    %v3736 = vunpack.c.h.b16 %v3388
    %v3737 = vunpack.c.l.b16 %v3389
    %v3738 = vunpack.c.h.b16 %v3389
    %v3739 = vunpack.c.l.b16 %v3390
    %v3740 = vunpack.c.h.b16 %v3390
    %v3741 = vunpack.c.l.b16 %v3391
    %v3742 = vunpack.c.h.b16 %v3391
    %v3743 = vunpack.c.l.b16 %v3392
    %v3744 = vunpack.c.h.b16 %v3392
    %v3745 = vunpack.c.l.b16 %v3393
    %v3746 = vunpack.c.h.b16 %v3393
    %v3747 = vunpack.c.l.b16 %v3394
    %v3748 = vunpack.c.h.b16 %v3394
    %v3749 = vunpack.c.l.b16 %v3395
    %v3750 = vunpack.c.h.b16 %v3395
    %v3751 = vunpack.c.l.b16 %v3396
    %v3752 = vunpack.c.h.b16 %v3396
    %v3753 = vunpack.c.l.b16 %v3397
    %v3754 = vunpack.c.h.b16 %v3397
    %v3755 = vunpack.c.l.b16 %v3398
    %v3756 = vunpack.c.h.b16 %v3398
    %v3757 = vunpack.c.l.b16 %v3399
    %v3758 = vunpack.c.h.b16 %v3399
    %v3759 = vunpack.c.l.b16 %v3400
    %v3760 = vunpack.c.h.b16 %v3400
    %v3761 = vunpack.c.l.b16 %v3401
    %v3762 = vunpack.c.h.b16 %v3401
    %v3763 = vunpack.c.l.b16 %v3402
    %v3764 = vunpack.c.h.b16 %v3402
    %v3765 = vunpack.c.l.b16 %v3403
    %v3766 = vunpack.c.h.b16 %v3403
    %v3767 = vunpack.c.l.b16 %v3404
    %v3768 = vunpack.c.h.b16 %v3404
    %v3769 = vunpack.c.l.b16 %v3405
    %v3770 = vunpack.c.h.b16 %v3405
    %v3771 = vunpack.c.l.b16 %v3406
    %v3772 = vunpack.c.h.b16 %v3406
    %v3773 = vunpack.c.l.b16 %v3407
    %v3774 = vunpack.c.h.b16 %v3407
    %v3775 = vunpack.c.l.b16 %v3408
    %v3776 = vunpack.c.h.b16 %v3408
    %v3777 = vunpack.c.l.b16 %v3409
    %v3778 = vunpack.c.h.b16 %v3409
    %v3779 = vunpack.c.l.b16 %v3410
    %v3780 = vunpack.c.h.b16 %v3410
    %v3781 = vunpack.c.l.b16 %v3411
    %v3782 = vunpack.c.h.b16 %v3411
    %v3783 = vunpack.c.l.b16 %v3412
    %v3784 = vunpack.c.h.b16 %v3412
    %v3785 = vunpack.c.l.b16 %v3413
    %v3786 = vunpack.c.h.b16 %v3413
    %v3787 = vunpack.c.l.b16 %v3414
    %v3788 = vunpack.c.h.b16 %v3414
    %v3789 = vunpack.c.l.b16 %v3415
    %v3790 = vunpack.c.h.b16 %v3415
    %v3791 = vunpack.c.l.b16 %v3416
    %v3792 = vunpack.c.h.b16 %v3416
    %v3793 = vunpack.c.l.b16 %v3417
    %v3794 = vunpack.c.h.b16 %v3417
    %v3795 = vunpack.c.l.b16 %v3418
    %v3796 = vunpack.c.h.b16 %v3418
    %v3797 = vunpack.c.l.b16 %v3419
    %v3798 = vunpack.c.h.b16 %v3419
    %v3799 = vunpack.c.l.b16 %v3420
    %v3800 = vunpack.c.h.b16 %v3420
    %v3801 = vunpack.c.l.b16 %v3421
    %v3802 = vunpack.c.h.b16 %v3421
    %v3803 = vunpack.c.l.b16 %v3422
    %v3804 = vunpack.c.h.b16 %v3422
    %v3805 = vunpack.c.l.b16 %v3423
    %v3806 = vunpack.c.h.b16 %v3423
    %v3807 = vunpack.c.l.b16 %v3424
    %v3808 = vunpack.c.h.b16 %v3424
    %v3809 = vunpack.c.l.b16 %v3425
    %v3810 = vunpack.c.h.b16 %v3425
    %v3811 = vunpack.c.l.b16 %v3426
    %v3812 = vunpack.c.h.b16 %v3426
    %v3813 = vunpack.c.l.b16 %v3427
    %v3814 = vunpack.c.h.b16 %v3427
    %v3815 = vunpack.c.l.b16 %v3428
    %v3816 = vunpack.c.h.b16 %v3428
    %v3817 = vunpack.c.l.b16 %v3429
    %v3818 = vunpack.c.h.b16 %v3429
    %v3819 = vpack.c.b16 %v3571, %v3563
    %v3820 = vpack.c.b16 %v3572, %v3564
    %v3821 = vpack.c.b16 %v3573, %v3565
    %v3822 = vpack.c.b16 %v3574, %v3566
    %v3823 = vpack.c.b16 %v3575, %v3567
    %v3824 = vpack.c.b16 %v3576, %v3568
    %v3825 = vpack.c.b16 %v3577, %v3569
    %v3826 = vpack.c.b16 %v3578, %v3570
    %v3827 = vpack.c.b16 %v3587, %v3579
    %v3828 = vpack.c.b16 %v3588, %v3580
    %v3829 = vpack.c.b16 %v3589, %v3581
    %v3830 = vpack.c.b16 %v3590, %v3582
    %v3831 = vpack.c.b16 %v3591, %v3583
    %v3832 = vpack.c.b16 %v3592, %v3584
    %v3833 = vpack.c.b16 %v3593, %v3585
    %v3834 = vpack.c.b16 %v3594, %v3586
    %v3835 = vpack.c.b16 %v3603, %v3595
    %v3836 = vpack.c.b16 %v3604, %v3596
    %v3837 = vpack.c.b16 %v3605, %v3597
    %v3838 = vpack.c.b16 %v3606, %v3598
    %v3839 = vpack.c.b16 %v3607, %v3599
    %v3840 = vpack.c.b16 %v3608, %v3600
    %v3841 = vpack.c.b16 %v3609, %v3601
    %v3842 = vpack.c.b16 %v3610, %v3602
    %v3843 = vpack.c.b16 %v3619, %v3611
    %v3844 = vpack.c.b16 %v3620, %v3612
    %v3845 = vpack.c.b16 %v3621, %v3613
    %v3846 = vpack.c.b16 %v3622, %v3614
    %v3847 = vpack.c.b16 %v3623, %v3615
    %v3848 = vpack.c.b16 %v3624, %v3616
    %v3849 = vpack.c.b16 %v3625, %v3617
    %v3850 = vpack.c.b16 %v3626, %v3618
    %v3851 = vpack.c.b16 %v3635, %v3627
    %v3852 = vpack.c.b16 %v3636, %v3628
    %v3853 = vpack.c.b16 %v3637, %v3629
    %v3854 = vpack.c.b16 %v3638, %v3630
    %v3855 = vpack.c.b16 %v3639, %v3631
    %v3856 = vpack.c.b16 %v3640, %v3632
    %v3857 = vpack.c.b16 %v3641, %v3633
    %v3858 = vpack.c.b16 %v3642, %v3634
    %v3859 = vpack.c.b16 %v3651, %v3643
    %v3860 = vpack.c.b16 %v3652, %v3644
    %v3861 = vpack.c.b16 %v3653, %v3645
    %v3862 = vpack.c.b16 %v3654, %v3646
    %v3863 = vpack.c.b16 %v3655, %v3647
    %v3864 = vpack.c.b16 %v3656, %v3648
    %v3865 = vpack.c.b16 %v3657, %v3649
    %v3866 = vpack.c.b16 %v3658, %v3650
    %v3867 = vpack.c.b16 %v3667, %v3659
    %v3868 = vpack.c.b16 %v3668, %v3660
    %v3869 = vpack.c.b16 %v3669, %v3661
    %v3870 = vpack.c.b16 %v3670, %v3662
    %v3871 = vpack.c.b16 %v3671, %v3663
    %v3872 = vpack.c.b16 %v3672, %v3664
    %v3873 = vpack.c.b16 %v3673, %v3665
    %v3874 = vpack.c.b16 %v3674, %v3666
    %v3875 = vpack.c.b16 %v3683, %v3675
    %v3876 = vpack.c.b16 %v3684, %v3676
    %v3877 = vpack.c.b16 %v3685, %v3677
    %v3878 = vpack.c.b16 %v3686, %v3678
    %v3879 = vpack.c.b16 %v3687, %v3679
    %v3880 = vpack.c.b16 %v3688, %v3680
    %v3881 = vpack.c.b16 %v3689, %v3681
    %v3882 = vpack.c.b16 %v3690, %v3682
    %v3883 = vpack.c.b16 %v3699, %v3691
    %v3884 = vpack.c.b16 %v3700, %v3692
    %v3885 = vpack.c.b16 %v3701, %v3693
    %v3886 = vpack.c.b16 %v3702, %v3694
    %v3887 = vpack.c.b16 %v3703, %v3695
    %v3888 = vpack.c.b16 %v3704, %v3696
    %v3889 = vpack.c.b16 %v3705, %v3697
    %v3890 = vpack.c.b16 %v3706, %v3698
    %v3891 = vpack.c.b16 %v3715, %v3707
    %v3892 = vpack.c.b16 %v3716, %v3708
    %v3893 = vpack.c.b16 %v3717, %v3709
    %v3894 = vpack.c.b16 %v3718, %v3710
    %v3895 = vpack.c.b16 %v3719, %v3711
    %v3896 = vpack.c.b16 %v3720, %v3712
    %v3897 = vpack.c.b16 %v3721, %v3713
    %v3898 = vpack.c.b16 %v3722, %v3714
    %v3899 = vpack.c.b16 %v3731, %v3723
    %v3900 = vpack.c.b16 %v3732, %v3724
    %v3901 = vpack.c.b16 %v3733, %v3725
    %v3902 = vpack.c.b16 %v3734, %v3726
    %v3903 = vpack.c.b16 %v3735, %v3727
    %v3904 = vpack.c.b16 %v3736, %v3728
    %v3905 = vpack.c.b16 %v3737, %v3729
    %v3906 = vpack.c.b16 %v3738, %v3730
    %v3907 = vpack.c.b16 %v3747, %v3739
    %v3908 = vpack.c.b16 %v3748, %v3740
    %v3909 = vpack.c.b16 %v3749, %v3741
    %v3910 = vpack.c.b16 %v3750, %v3742
    %v3911 = vpack.c.b16 %v3751, %v3743
    %v3912 = vpack.c.b16 %v3752, %v3744
    %v3913 = vpack.c.b16 %v3753, %v3745
    %v3914 = vpack.c.b16 %v3754, %v3746
    %v3915 = vpack.c.b16 %v3763, %v3755
    %v3916 = vpack.c.b16 %v3764, %v3756
    %v3917 = vpack.c.b16 %v3765, %v3757
    %v3918 = vpack.c.b16 %v3766, %v3758
    %v3919 = vpack.c.b16 %v3767, %v3759
    %v3920 = vpack.c.b16 %v3768, %v3760
    %v3921 = vpack.c.b16 %v3769, %v3761
    %v3922 = vpack.c.b16 %v3770, %v3762
    %v3923 = vpack.c.b16 %v3779, %v3771
    %v3924 = vpack.c.b16 %v3780, %v3772
    %v3925 = vpack.c.b16 %v3781, %v3773
    %v3926 = vpack.c.b16 %v3782, %v3774
    %v3927 = vpack.c.b16 %v3783, %v3775
    %v3928 = vpack.c.b16 %v3784, %v3776
    %v3929 = vpack.c.b16 %v3785, %v3777
    %v3930 = vpack.c.b16 %v3786, %v3778
    %v3931 = vpack.c.b16 %v3795, %v3787
    %v3932 = vpack.c.b16 %v3796, %v3788
    %v3933 = vpack.c.b16 %v3797, %v3789
    %v3934 = vpack.c.b16 %v3798, %v3790
    %v3935 = vpack.c.b16 %v3799, %v3791
    %v3936 = vpack.c.b16 %v3800, %v3792
    %v3937 = vpack.c.b16 %v3801, %v3793
    %v3938 = vpack.c.b16 %v3802, %v3794
    %v3939 = vpack.c.b16 %v3811, %v3803
    %v3940 = vpack.c.b16 %v3812, %v3804
    %v3941 = vpack.c.b16 %v3813, %v3805
    %v3942 = vpack.c.b16 %v3814, %v3806
    %v3943 = vpack.c.b16 %v3815, %v3807
    %v3944 = vpack.c.b16 %v3816, %v3808
    %v3945 = vpack.c.b16 %v3817, %v3809
    %v3946 = vpack.c.b16 %v3818, %v3810
    %4075 = vmatprep.subr.bf16.mxu0 %v3876
    %4076 = vmatpush1.bf16.msra.mxu0 %v3875
    %4077 = vmatprep.subr.bf16.mxu0 %v3868
    %4078 = vmatpush1.bf16.msra.mxu0 %v3867
    %4079 = vmatprep.subr.bf16.mxu0 %v3860
    %4080 = vmatpush1.bf16.msra.mxu0 %v3859
    %4081 = vmatprep.subr.bf16.mxu0 %v3852
    %4082 = vmatpush1.bf16.msra.mxu0 %v3851
    %4083 = vmatprep.subr.bf16.mxu0 %v3844
    %4084 = vmatpush1.bf16.msra.mxu0 %v3843
    %4085 = vmatprep.subr.bf16.mxu0 %v3836
    %4086 = vmatpush1.bf16.msra.mxu0 %v3835
    %4087 = vmatprep.subr.bf16.mxu0 %v3828
    %4088 = vmatpush1.bf16.msra.mxu0 %v3827
    %4089 = vmatprep.subr.bf16.mxu0 %v3820
    %4090 = vmatpush1.bf16.msra.mxu0 %v3819
    %4091 = vmatprep.subr.bf16.mxu0 %v3940
    %4092 = vmatpush2.bf16.msra.mxu0 %v3939
    %4093 = vmatprep.subr.bf16.mxu0 %v3932
    %4094 = vmatpush2.bf16.msra.mxu0 %v3931
    %4095 = vmatprep.subr.bf16.mxu0 %v3924
    %4096 = vmatpush2.bf16.msra.mxu0 %v3923
    %4097 = vmatprep.subr.bf16.mxu0 %v3916
    %4098 = vmatpush2.bf16.msra.mxu0 %v3915
    %4099 = vmatprep.subr.bf16.mxu0 %v3908
    %4100 = vmatpush2.bf16.msra.mxu0 %v3907
    %4101 = vmatprep.subr.bf16.mxu0 %v3900
    %4102 = vmatpush2.bf16.msra.mxu0 %v3899
    %4103 = vmatprep.subr.bf16.mxu0 %v3892
    %4104 = vmatpush2.bf16.msra.mxu0 %v3891
    %4105 = vmatprep.subr.bf16.mxu0 %v3884
    %4106 = vmatpush2.bf16.msra.mxu0 %v3883
    %4107 = vmatprep.mubr.bf16.mxu0 %v3432
    %4108 = vmatmul.mubr.bf16.gmra.mxu0 %v3431
    %v4109 = vpop.f32.mrf.mxu0
    %v4110 = vadd.f32 0.0, %v4109
    %v4111 = vpop.f32.mrf.mxu0
    %v4112 = vadd.f32 0.0, %v4111
    %v4113 = vpop.f32.mrf.mxu0
    %v4114 = vpop.f32.mrf.mxu0
    %4115 = vdwg.mxu0
    %4116 = vmatprep.subr.bf16.mxu0 %v3878
    %4117 = vmatpush1.bf16.msra.mxu0 %v3877
    %4118 = vmatprep.subr.bf16.mxu0 %v3870
    %4119 = vmatpush1.bf16.msra.mxu0 %v3869
    %4120 = vmatprep.subr.bf16.mxu0 %v3862
    %4121 = vmatpush1.bf16.msra.mxu0 %v3861
    %4122 = vmatprep.subr.bf16.mxu0 %v3854
    %4123 = vmatpush1.bf16.msra.mxu0 %v3853
    %4124 = vmatprep.subr.bf16.mxu0 %v3846
    %4125 = vmatpush1.bf16.msra.mxu0 %v3845
    %4126 = vmatprep.subr.bf16.mxu0 %v3838
    %4127 = vmatpush1.bf16.msra.mxu0 %v3837
    %4128 = vmatprep.subr.bf16.mxu0 %v3830
    %4129 = vmatpush1.bf16.msra.mxu0 %v3829
    %4130 = vmatprep.subr.bf16.mxu0 %v3822
    %4131 = vmatpush1.bf16.msra.mxu0 %v3821
    %4132 = vmatprep.subr.bf16.mxu0 %v3942
    %4133 = vmatpush2.bf16.msra.mxu0 %v3941
    %4134 = vmatprep.subr.bf16.mxu0 %v3934
    %4135 = vmatpush2.bf16.msra.mxu0 %v3933
    %4136 = vmatprep.subr.bf16.mxu0 %v3926
    %4137 = vmatpush2.bf16.msra.mxu0 %v3925
    %4138 = vmatprep.subr.bf16.mxu0 %v3918
    %4139 = vmatpush2.bf16.msra.mxu0 %v3917
    %4140 = vmatprep.subr.bf16.mxu0 %v3910
    %4141 = vmatpush2.bf16.msra.mxu0 %v3909
    %4142 = vmatprep.subr.bf16.mxu0 %v3902
    %4143 = vmatpush2.bf16.msra.mxu0 %v3901
    %4144 = vmatprep.subr.bf16.mxu0 %v3894
    %4145 = vmatpush2.bf16.msra.mxu0 %v3893
    %4146 = vmatprep.subr.bf16.mxu0 %v3886
    %4147 = vmatpush2.bf16.msra.mxu0 %v3885
    %4148 = vmatprep.mubr.bf16.mxu0 %v3432
    %4149 = vmatmul.mubr.bf16.gmra.mxu0 %v3431
    %v4150 = vpop.f32.mrf.mxu0
    %v4151 = vadd.f32 0.0, %v4150
    %v4152 = vpop.f32.mrf.mxu0
    %v4153 = vadd.f32 0.0, %v4152
    %v4154 = vpop.f32.mrf.mxu0
    %v4155 = vpop.f32.mrf.mxu0
    %4156 = vdwg.mxu0
    %4157 = vmatprep.subr.bf16.mxu0 %v3880
    %4158 = vmatpush1.bf16.msra.mxu0 %v3879
    %4159 = vmatprep.subr.bf16.mxu0 %v3872
    %4160 = vmatpush1.bf16.msra.mxu0 %v3871
    %4161 = vmatprep.subr.bf16.mxu0 %v3864
    %4162 = vmatpush1.bf16.msra.mxu0 %v3863
    %4163 = vmatprep.subr.bf16.mxu0 %v3856
    %4164 = vmatpush1.bf16.msra.mxu0 %v3855
    %4165 = vmatprep.subr.bf16.mxu0 %v3848
    %4166 = vmatpush1.bf16.msra.mxu0 %v3847
    %4167 = vmatprep.subr.bf16.mxu0 %v3840
    %4168 = vmatpush1.bf16.msra.mxu0 %v3839
    %4169 = vmatprep.subr.bf16.mxu0 %v3832
    %4170 = vmatpush1.bf16.msra.mxu0 %v3831
    %4171 = vmatprep.subr.bf16.mxu0 %v3824
    %4172 = vmatpush1.bf16.msra.mxu0 %v3823
    %4173 = vmatprep.subr.bf16.mxu0 %v3944
    %4174 = vmatpush2.bf16.msra.mxu0 %v3943
    %4175 = vmatprep.subr.bf16.mxu0 %v3936
    %4176 = vmatpush2.bf16.msra.mxu0 %v3935
    %4177 = vmatprep.subr.bf16.mxu0 %v3928
    %4178 = vmatpush2.bf16.msra.mxu0 %v3927
    %4179 = vmatprep.subr.bf16.mxu0 %v3920
    %4180 = vmatpush2.bf16.msra.mxu0 %v3919
    %4181 = vmatprep.subr.bf16.mxu0 %v3912
    %4182 = vmatpush2.bf16.msra.mxu0 %v3911
    %4183 = vmatprep.subr.bf16.mxu0 %v3904
    %4184 = vmatpush2.bf16.msra.mxu0 %v3903
    %4185 = vmatprep.subr.bf16.mxu0 %v3896
    %4186 = vmatpush2.bf16.msra.mxu0 %v3895
    %4187 = vmatprep.subr.bf16.mxu0 %v3888
    %4188 = vmatpush2.bf16.msra.mxu0 %v3887
    %4189 = vmatprep.mubr.bf16.mxu0 %v3432
    %4190 = vmatmul.mubr.bf16.gmra.mxu0 %v3431
    %v4191 = vpop.f32.mrf.mxu0
    %v4192 = vadd.f32 0.0, %v4191
    %v4193 = vpop.f32.mrf.mxu0
    %v4194 = vadd.f32 0.0, %v4193
    %v4195 = vpop.f32.mrf.mxu0
    %v4196 = vpop.f32.mrf.mxu0
    %4197 = vdwg.mxu0
    %4198 = vmatprep.subr.bf16.mxu0 %v3882
    %4199 = vmatpush1.bf16.msra.mxu0 %v3881
    %4200 = vmatprep.subr.bf16.mxu0 %v3874
    %4201 = vmatpush1.bf16.msra.mxu0 %v3873
    %4202 = vmatprep.subr.bf16.mxu0 %v3866
    %4203 = vmatpush1.bf16.msra.mxu0 %v3865
    %4204 = vmatprep.subr.bf16.mxu0 %v3858
    %4205 = vmatpush1.bf16.msra.mxu0 %v3857
    %4206 = vmatprep.subr.bf16.mxu0 %v3850
    %4207 = vmatpush1.bf16.msra.mxu0 %v3849
    %4208 = vmatprep.subr.bf16.mxu0 %v3842
    %4209 = vmatpush1.bf16.msra.mxu0 %v3841
    %4210 = vmatprep.subr.bf16.mxu0 %v3834
    %4211 = vmatpush1.bf16.msra.mxu0 %v3833
    %4212 = vmatprep.subr.bf16.mxu0 %v3826
    %4213 = vmatpush1.bf16.msra.mxu0 %v3825
    %4214 = vmatprep.subr.bf16.mxu0 %v3946
    %4215 = vmatpush2.bf16.msra.mxu0 %v3945
    %4216 = vmatprep.subr.bf16.mxu0 %v3938
    %4217 = vmatpush2.bf16.msra.mxu0 %v3937
    %4218 = vmatprep.subr.bf16.mxu0 %v3930
    %4219 = vmatpush2.bf16.msra.mxu0 %v3929
    %4220 = vmatprep.subr.bf16.mxu0 %v3922
    %4221 = vmatpush2.bf16.msra.mxu0 %v3921
    %4222 = vmatprep.subr.bf16.mxu0 %v3914
    %4223 = vmatpush2.bf16.msra.mxu0 %v3913
    %4224 = vmatprep.subr.bf16.mxu0 %v3906
    %4225 = vmatpush2.bf16.msra.mxu0 %v3905
    %4226 = vmatprep.subr.bf16.mxu0 %v3898
    %4227 = vmatpush2.bf16.msra.mxu0 %v3897
    %4228 = vmatprep.subr.bf16.mxu0 %v3890
    %4229 = vmatpush2.bf16.msra.mxu0 %v3889
    %4230 = vmatprep.mubr.bf16.mxu0 %v3432
    %4231 = vmatmul.mubr.bf16.gmra.mxu0 %v3431
    %v4232 = vpop.f32.mrf.mxu0
    %v4233 = vadd.f32 0.0, %v4232
    %v4234 = vpop.f32.mrf.mxu0
    %v4235 = vadd.f32 0.0, %v4234
    %v4236 = vpop.f32.mrf.mxu0
    %v4237 = vpop.f32.mrf.mxu0
    %4238 = vdwg.mxu0
    %v4239 = vadd.f32 %v4192, %v1175
    %v4240 = vadd.f32 %v4194, %v1179
    %v4241 = vadd.f32 %v4233, %v1183
    %v4242 = vadd.f32 %v4235, %v1187
    %v4243 = vxor.u32 %v4239, 2147483648
    %v4244 = vmul.f32 %v4243, 1.442695
    %v4245 = vpow.pop %v4244
    %v4246 = vadd.f32 %v4245, 1.0
    %v4247 = vrcp.pop %v4246
    %v4248 = vmul.f32 1.0, %v4247
    %v4249 = vxor.u32 %v4240, 2147483648
    %v4250 = vmul.f32 %v4249, 1.442695
    %v4251 = vpow.pop %v4250
    %v4252 = vadd.f32 %v4251, 1.0
    %v4253 = vrcp.pop %v4252
    %v4254 = vmul.f32 1.0, %v4253
    %v4255 = vtanh.pop %v4241
    %v4256 = vxor.u32 %v4242, 2147483648
    %v4257 = vmul.f32 %v4256, 1.442695
    %v4258 = vpow.pop %v4257
    %v4259 = vadd.f32 %v4258, 1.0
    %v4260 = vrcp.pop %v4259
    %v4261 = vmul.f32 1.0, %v4260
    %v4262 = vmul.f32 %v4254, %v3247
    %v4263 = vmul.f32 %v4248, %v4255
    %v4264 = vadd.f32 %v4262, %v4263
    %v4265 = vtanh.pop %v4264
    %v4266 = vmul.f32 %v4261, %v4265
    %v4267 = vpack.c.bf16 %v4266, %v4266
    %v4269 = vunpack.c.l.b16 %v4267
    %v4270 = vpack.c.b16 %v4269, %v4269
    %v4271 = vrot.slane %v4270, 5
    %4273 = vst [vmem:[#allocation2] sm:$0x8] %v4271
    %v4274 = vadd.f32 %v166, %v4110
    %v4275 = vadd.f32 %v168, %v4112
    %v4276 = vadd.f32 %v209, %v4151
    %v4277 = vadd.f32 %v211, %v4153
    %v4278 = vxor.u32 %v4274, 2147483648
    %v4279 = vmul.f32 %v4278, 1.442695
    %v4280 = vpow.pop %v4279
    %v4281 = vadd.f32 %v4280, 1.0
    %v4282 = vrcp.pop %v4281
    %v4283 = vmul.f32 1.0, %v4282
    %v4284 = vxor.u32 %v4275, 2147483648
    %v4285 = vmul.f32 %v4284, 1.442695
    %v4286 = vpow.pop %v4285
    %v4287 = vadd.f32 %v4286, 1.0
    %v4288 = vrcp.pop %v4287
    %v4289 = vmul.f32 1.0, %v4288
    %v4290 = vtanh.pop %v4276
    %v4291 = vxor.u32 %v4277, 2147483648
    %v4292 = vmul.f32 %v4291, 1.442695
    %v4293 = vpow.pop %v4292
    %v4294 = vadd.f32 %v4293, 1.0
    %v4295 = vrcp.pop %v4294
    %v4296 = vmul.f32 1.0, %v4295
    %v4298 = vrot.slane %v3297, 6
    %v4300 = vmul.f32 %v4289, %v4298
    %v4301 = vmul.f32 %v4283, %v4290
    %v4302 = vadd.f32 %v4300, %v4301
    %v4303 = vtanh.pop %v4302
    %v4304 = vmul.f32 %v4296, %v4303
    %v4305 = vpack.c.bf16 %v4304, %v4304
    %v4306 = vld [vmem:[#allocation7] sm:$0xff]
    %v4307 = vld [vmem:[#allocation7 + $0x8] sm:$0xff]
    %v4308 = vld [vmem:[#allocation7 + $0x10] sm:$0xff]
    %v4309 = vld [vmem:[#allocation7 + $0x18] sm:$0xff]
    %v4310 = vld [vmem:[#allocation7 + $0x20] sm:$0xff]
    %v4311 = vld [vmem:[#allocation7 + $0x28] sm:$0xff]
    %v4312 = vld [vmem:[#allocation7 + $0x30] sm:$0xff]
    %v4313 = vld [vmem:[#allocation7 + $0x38] sm:$0xff]
    %v4314 = vld [vmem:[#allocation7 + $0x40] sm:$0xff]
    %v4315 = vld [vmem:[#allocation7 + $0x48] sm:$0xff]
    %v4316 = vld [vmem:[#allocation7 + $0x50] sm:$0xff]
    %v4317 = vld [vmem:[#allocation7 + $0x58] sm:$0xff]
    %v4318 = vld [vmem:[#allocation7 + $0x60] sm:$0xff]
    %v4319 = vld [vmem:[#allocation7 + $0x68] sm:$0xff]
    %v4320 = vld [vmem:[#allocation7 + $0x70] sm:$0xff]
    %v4321 = vld [vmem:[#allocation7 + $0x78] sm:$0xff]
    %v4322 = vld [vmem:[#allocation7 + $0x80] sm:$0xff]
    %v4323 = vld [vmem:[#allocation7 + $0x88] sm:$0xff]
    %v4324 = vld [vmem:[#allocation7 + $0x90] sm:$0xff]
    %v4325 = vld [vmem:[#allocation7 + $0x98] sm:$0xff]
    %v4326 = vld [vmem:[#allocation7 + $0xa0] sm:$0xff]
    %v4327 = vld [vmem:[#allocation7 + $0xa8] sm:$0xff]
    %v4328 = vld [vmem:[#allocation7 + $0xb0] sm:$0xff]
    %v4329 = vld [vmem:[#allocation7 + $0xb8] sm:$0xff]
    %v4330 = vld [vmem:[#allocation7 + $0xc0] sm:$0xff]
    %v4331 = vld [vmem:[#allocation7 + $0xc8] sm:$0xff]
    %v4332 = vld [vmem:[#allocation7 + $0xd0] sm:$0xff]
    %v4333 = vld [vmem:[#allocation7 + $0xd8] sm:$0xff]
    %v4334 = vld [vmem:[#allocation7 + $0xe0] sm:$0xff]
    %v4335 = vld [vmem:[#allocation7 + $0xe8] sm:$0xff]
    %v4336 = vld [vmem:[#allocation7 + $0xf0] sm:$0xff]
    %v4337 = vld [vmem:[#allocation7 + $0xf8] sm:$0xff]
    %v4338 = vld [vmem:[#allocation7 + $0x100] sm:$0xff]
    %v4339 = vld [vmem:[#allocation7 + $0x108] sm:$0xff]
    %v4340 = vld [vmem:[#allocation7 + $0x110] sm:$0xff]
    %v4341 = vld [vmem:[#allocation7 + $0x118] sm:$0xff]
    %v4342 = vld [vmem:[#allocation7 + $0x120] sm:$0xff]
    %v4343 = vld [vmem:[#allocation7 + $0x128] sm:$0xff]
    %v4344 = vld [vmem:[#allocation7 + $0x130] sm:$0xff]
    %v4345 = vld [vmem:[#allocation7 + $0x138] sm:$0xff]
    %v4346 = vld [vmem:[#allocation7 + $0x140] sm:$0xff]
    %v4347 = vld [vmem:[#allocation7 + $0x148] sm:$0xff]
    %v4348 = vld [vmem:[#allocation7 + $0x150] sm:$0xff]
    %v4349 = vld [vmem:[#allocation7 + $0x158] sm:$0xff]
    %v4350 = vld [vmem:[#allocation7 + $0x160] sm:$0xff]
    %v4351 = vld [vmem:[#allocation7 + $0x168] sm:$0xff]
    %v4352 = vld [vmem:[#allocation7 + $0x170] sm:$0xff]
    %v4353 = vld [vmem:[#allocation7 + $0x178] sm:$0xff]
    %v4354 = vld [vmem:[#allocation7 + $0x180] sm:$0xff]
    %v4355 = vld [vmem:[#allocation7 + $0x188] sm:$0xff]
    %v4356 = vld [vmem:[#allocation7 + $0x190] sm:$0xff]
    %v4357 = vld [vmem:[#allocation7 + $0x198] sm:$0xff]
    %v4358 = vld [vmem:[#allocation7 + $0x1a0] sm:$0xff]
    %v4359 = vld [vmem:[#allocation7 + $0x1a8] sm:$0xff]
    %v4360 = vld [vmem:[#allocation7 + $0x1b0] sm:$0xff]
    %v4361 = vld [vmem:[#allocation7 + $0x1b8] sm:$0xff]
    %v4362 = vld [vmem:[#allocation7 + $0x1c0] sm:$0xff]
    %v4363 = vld [vmem:[#allocation7 + $0x1c8] sm:$0xff]
    %v4364 = vld [vmem:[#allocation7 + $0x1d0] sm:$0xff]
    %v4365 = vld [vmem:[#allocation7 + $0x1d8] sm:$0xff]
    %v4366 = vld [vmem:[#allocation7 + $0x1e0] sm:$0xff]
    %v4367 = vld [vmem:[#allocation7 + $0x1e8] sm:$0xff]
    %v4368 = vld [vmem:[#allocation7 + $0x1f0] sm:$0xff]
    %v4369 = vld [vmem:[#allocation7 + $0x1f8] sm:$0xff]
    %v4370 = vld [vmem:[#allocation7 + $0x200] sm:$0xff]
    %v4371 = vld [vmem:[#allocation7 + $0x208] sm:$0xff]
    %v4372 = vld [vmem:[#allocation7 + $0x210] sm:$0xff]
    %v4373 = vld [vmem:[#allocation7 + $0x218] sm:$0xff]
    %v4374 = vld [vmem:[#allocation7 + $0x220] sm:$0xff]
    %v4375 = vld [vmem:[#allocation7 + $0x228] sm:$0xff]
    %v4376 = vld [vmem:[#allocation7 + $0x230] sm:$0xff]
    %v4377 = vld [vmem:[#allocation7 + $0x238] sm:$0xff]
    %v4378 = vld [vmem:[#allocation7 + $0x240] sm:$0xff]
    %v4379 = vld [vmem:[#allocation7 + $0x248] sm:$0xff]
    %v4380 = vld [vmem:[#allocation7 + $0x250] sm:$0xff]
    %v4381 = vld [vmem:[#allocation7 + $0x258] sm:$0xff]
    %v4382 = vld [vmem:[#allocation7 + $0x260] sm:$0xff]
    %v4383 = vld [vmem:[#allocation7 + $0x268] sm:$0xff]
    %v4384 = vld [vmem:[#allocation7 + $0x270] sm:$0xff]
    %v4385 = vld [vmem:[#allocation7 + $0x278] sm:$0xff]
    %v4386 = vld [vmem:[#allocation7 + $0x280] sm:$0xff]
    %v4387 = vld [vmem:[#allocation7 + $0x288] sm:$0xff]
    %v4388 = vld [vmem:[#allocation7 + $0x290] sm:$0xff]
    %v4389 = vld [vmem:[#allocation7 + $0x298] sm:$0xff]
    %v4390 = vld [vmem:[#allocation7 + $0x2a0] sm:$0xff]
    %v4391 = vld [vmem:[#allocation7 + $0x2a8] sm:$0xff]
    %v4392 = vld [vmem:[#allocation7 + $0x2b0] sm:$0xff]
    %v4393 = vld [vmem:[#allocation7 + $0x2b8] sm:$0xff]
    %v4394 = vld [vmem:[#allocation7 + $0x2c0] sm:$0xff]
    %v4395 = vld [vmem:[#allocation7 + $0x2c8] sm:$0xff]
    %v4396 = vld [vmem:[#allocation7 + $0x2d0] sm:$0xff]
    %v4397 = vld [vmem:[#allocation7 + $0x2d8] sm:$0xff]
    %v4398 = vld [vmem:[#allocation7 + $0x2e0] sm:$0xff]
    %v4399 = vld [vmem:[#allocation7 + $0x2e8] sm:$0xff]
    %v4400 = vld [vmem:[#allocation7 + $0x2f0] sm:$0xff]
    %v4401 = vld [vmem:[#allocation7 + $0x2f8] sm:$0xff]
    %v4402 = vld [vmem:[#allocation7 + $0x300] sm:$0xff]
    %v4403 = vld [vmem:[#allocation7 + $0x308] sm:$0xff]
    %v4404 = vld [vmem:[#allocation7 + $0x310] sm:$0xff]
    %v4405 = vld [vmem:[#allocation7 + $0x318] sm:$0xff]
    %v4406 = vld [vmem:[#allocation7 + $0x320] sm:$0xff]
    %v4407 = vld [vmem:[#allocation7 + $0x328] sm:$0xff]
    %v4408 = vld [vmem:[#allocation7 + $0x330] sm:$0xff]
    %v4409 = vld [vmem:[#allocation7 + $0x338] sm:$0xff]
    %v4410 = vld [vmem:[#allocation7 + $0x340] sm:$0xff]
    %v4411 = vld [vmem:[#allocation7 + $0x348] sm:$0xff]
    %v4412 = vld [vmem:[#allocation7 + $0x350] sm:$0xff]
    %v4413 = vld [vmem:[#allocation7 + $0x358] sm:$0xff]
    %v4414 = vld [vmem:[#allocation7 + $0x360] sm:$0xff]
    %v4415 = vld [vmem:[#allocation7 + $0x368] sm:$0xff]
    %v4416 = vld [vmem:[#allocation7 + $0x370] sm:$0xff]
    %v4417 = vld [vmem:[#allocation7 + $0x378] sm:$0xff]
    %v4418 = vld [vmem:[#allocation7 + $0x380] sm:$0xff]
    %v4419 = vld [vmem:[#allocation7 + $0x388] sm:$0xff]
    %v4420 = vld [vmem:[#allocation7 + $0x390] sm:$0xff]
    %v4421 = vld [vmem:[#allocation7 + $0x398] sm:$0xff]
    %v4422 = vld [vmem:[#allocation7 + $0x3a0] sm:$0xff]
    %v4423 = vld [vmem:[#allocation7 + $0x3a8] sm:$0xff]
    %v4424 = vld [vmem:[#allocation7 + $0x3b0] sm:$0xff]
    %v4425 = vld [vmem:[#allocation7 + $0x3b8] sm:$0xff]
    %v4426 = vld [vmem:[#allocation7 + $0x3c0] sm:$0xff]
    %v4427 = vld [vmem:[#allocation7 + $0x3c8] sm:$0xff]
    %v4428 = vld [vmem:[#allocation7 + $0x3d0] sm:$0xff]
    %v4429 = vld [vmem:[#allocation7 + $0x3d8] sm:$0xff]
    %v4430 = vld [vmem:[#allocation7 + $0x3e0] sm:$0xff]
    %v4431 = vld [vmem:[#allocation7 + $0x3e8] sm:$0xff]
    %v4432 = vld [vmem:[#allocation7 + $0x3f0] sm:$0xff]
    %v4433 = vld [vmem:[#allocation7 + $0x3f8] sm:$0xff]
    %v4562 = vunpack.c.l.b16 %v4306
    %v4563 = vunpack.c.h.b16 %v4306
    %v4564 = vunpack.c.l.b16 %v4307
    %v4565 = vunpack.c.h.b16 %v4307
    %v4566 = vunpack.c.l.b16 %v4308
    %v4567 = vunpack.c.h.b16 %v4308
    %v4568 = vunpack.c.l.b16 %v4309
    %v4569 = vunpack.c.h.b16 %v4309
    %v4570 = vunpack.c.l.b16 %v4310
    %v4571 = vunpack.c.h.b16 %v4310
    %v4572 = vunpack.c.l.b16 %v4311
    %v4573 = vunpack.c.h.b16 %v4311
    %v4574 = vunpack.c.l.b16 %v4312
    %v4575 = vunpack.c.h.b16 %v4312
    %v4576 = vunpack.c.l.b16 %v4313
    %v4577 = vunpack.c.h.b16 %v4313
    %v4578 = vunpack.c.l.b16 %v4314
    %v4579 = vunpack.c.h.b16 %v4314
    %v4580 = vunpack.c.l.b16 %v4315
    %v4581 = vunpack.c.h.b16 %v4315
    %v4582 = vunpack.c.l.b16 %v4316
    %v4583 = vunpack.c.h.b16 %v4316
    %v4584 = vunpack.c.l.b16 %v4317
    %v4585 = vunpack.c.h.b16 %v4317
    %v4586 = vunpack.c.l.b16 %v4318
    %v4587 = vunpack.c.h.b16 %v4318
    %v4588 = vunpack.c.l.b16 %v4319
    %v4589 = vunpack.c.h.b16 %v4319
    %v4590 = vunpack.c.l.b16 %v4320
    %v4591 = vunpack.c.h.b16 %v4320
    %v4592 = vunpack.c.l.b16 %v4321
    %v4593 = vunpack.c.h.b16 %v4321
    %v4594 = vunpack.c.l.b16 %v4322
    %v4595 = vunpack.c.h.b16 %v4322
    %v4596 = vunpack.c.l.b16 %v4323
    %v4597 = vunpack.c.h.b16 %v4323
    %v4598 = vunpack.c.l.b16 %v4324
    %v4599 = vunpack.c.h.b16 %v4324
    %v4600 = vunpack.c.l.b16 %v4325
    %v4601 = vunpack.c.h.b16 %v4325
    %v4602 = vunpack.c.l.b16 %v4326
    %v4603 = vunpack.c.h.b16 %v4326
    %v4604 = vunpack.c.l.b16 %v4327
    %v4605 = vunpack.c.h.b16 %v4327
    %v4606 = vunpack.c.l.b16 %v4328
    %v4607 = vunpack.c.h.b16 %v4328
    %v4608 = vunpack.c.l.b16 %v4329
    %v4609 = vunpack.c.h.b16 %v4329
    %v4610 = vunpack.c.l.b16 %v4330
    %v4611 = vunpack.c.h.b16 %v4330
    %v4612 = vunpack.c.l.b16 %v4331
    %v4613 = vunpack.c.h.b16 %v4331
    %v4614 = vunpack.c.l.b16 %v4332
    %v4615 = vunpack.c.h.b16 %v4332
    %v4616 = vunpack.c.l.b16 %v4333
    %v4617 = vunpack.c.h.b16 %v4333
    %v4618 = vunpack.c.l.b16 %v4334
    %v4619 = vunpack.c.h.b16 %v4334
    %v4620 = vunpack.c.l.b16 %v4335
    %v4621 = vunpack.c.h.b16 %v4335
    %v4622 = vunpack.c.l.b16 %v4336
    %v4623 = vunpack.c.h.b16 %v4336
    %v4624 = vunpack.c.l.b16 %v4337
    %v4625 = vunpack.c.h.b16 %v4337
    %v4626 = vunpack.c.l.b16 %v4338
    %v4627 = vunpack.c.h.b16 %v4338
    %v4628 = vunpack.c.l.b16 %v4339
    %v4629 = vunpack.c.h.b16 %v4339
    %v4630 = vunpack.c.l.b16 %v4340
    %v4631 = vunpack.c.h.b16 %v4340
    %v4632 = vunpack.c.l.b16 %v4341
    %v4633 = vunpack.c.h.b16 %v4341
    %v4634 = vunpack.c.l.b16 %v4342
    %v4635 = vunpack.c.h.b16 %v4342
    %v4636 = vunpack.c.l.b16 %v4343
    %v4637 = vunpack.c.h.b16 %v4343
    %v4638 = vunpack.c.l.b16 %v4344
    %v4639 = vunpack.c.h.b16 %v4344
    %v4640 = vunpack.c.l.b16 %v4345
    %v4641 = vunpack.c.h.b16 %v4345
    %v4642 = vunpack.c.l.b16 %v4346
    %v4643 = vunpack.c.h.b16 %v4346
    %v4644 = vunpack.c.l.b16 %v4347
    %v4645 = vunpack.c.h.b16 %v4347
    %v4646 = vunpack.c.l.b16 %v4348
    %v4647 = vunpack.c.h.b16 %v4348
    %v4648 = vunpack.c.l.b16 %v4349
    %v4649 = vunpack.c.h.b16 %v4349
    %v4650 = vunpack.c.l.b16 %v4350
    %v4651 = vunpack.c.h.b16 %v4350
    %v4652 = vunpack.c.l.b16 %v4351
    %v4653 = vunpack.c.h.b16 %v4351
    %v4654 = vunpack.c.l.b16 %v4352
    %v4655 = vunpack.c.h.b16 %v4352
    %v4656 = vunpack.c.l.b16 %v4353
    %v4657 = vunpack.c.h.b16 %v4353
    %v4658 = vunpack.c.l.b16 %v4354
    %v4659 = vunpack.c.h.b16 %v4354
    %v4660 = vunpack.c.l.b16 %v4355
    %v4661 = vunpack.c.h.b16 %v4355
    %v4662 = vunpack.c.l.b16 %v4356
    %v4663 = vunpack.c.h.b16 %v4356
    %v4664 = vunpack.c.l.b16 %v4357
    %v4665 = vunpack.c.h.b16 %v4357
    %v4666 = vunpack.c.l.b16 %v4358
    %v4667 = vunpack.c.h.b16 %v4358
    %v4668 = vunpack.c.l.b16 %v4359
    %v4669 = vunpack.c.h.b16 %v4359
    %v4670 = vunpack.c.l.b16 %v4360
    %v4671 = vunpack.c.h.b16 %v4360
    %v4672 = vunpack.c.l.b16 %v4361
    %v4673 = vunpack.c.h.b16 %v4361
    %v4674 = vunpack.c.l.b16 %v4362
    %v4675 = vunpack.c.h.b16 %v4362
    %v4676 = vunpack.c.l.b16 %v4363
    %v4677 = vunpack.c.h.b16 %v4363
    %v4678 = vunpack.c.l.b16 %v4364
    %v4679 = vunpack.c.h.b16 %v4364
    %v4680 = vunpack.c.l.b16 %v4365
    %v4681 = vunpack.c.h.b16 %v4365
    %v4682 = vunpack.c.l.b16 %v4366
    %v4683 = vunpack.c.h.b16 %v4366
    %v4684 = vunpack.c.l.b16 %v4367
    %v4685 = vunpack.c.h.b16 %v4367
    %v4686 = vunpack.c.l.b16 %v4368
    %v4687 = vunpack.c.h.b16 %v4368
    %v4688 = vunpack.c.l.b16 %v4369
    %v4689 = vunpack.c.h.b16 %v4369
    %v4690 = vunpack.c.l.b16 %v4370
    %v4691 = vunpack.c.h.b16 %v4370
    %v4692 = vunpack.c.l.b16 %v4371
    %v4693 = vunpack.c.h.b16 %v4371
    %v4694 = vunpack.c.l.b16 %v4372
    %v4695 = vunpack.c.h.b16 %v4372
    %v4696 = vunpack.c.l.b16 %v4373
    %v4697 = vunpack.c.h.b16 %v4373
    %v4698 = vunpack.c.l.b16 %v4374
    %v4699 = vunpack.c.h.b16 %v4374
    %v4700 = vunpack.c.l.b16 %v4375
    %v4701 = vunpack.c.h.b16 %v4375
    %v4702 = vunpack.c.l.b16 %v4376
    %v4703 = vunpack.c.h.b16 %v4376
    %v4704 = vunpack.c.l.b16 %v4377
    %v4705 = vunpack.c.h.b16 %v4377
    %v4706 = vunpack.c.l.b16 %v4378
    %v4707 = vunpack.c.h.b16 %v4378
    %v4708 = vunpack.c.l.b16 %v4379
    %v4709 = vunpack.c.h.b16 %v4379
    %v4710 = vunpack.c.l.b16 %v4380
    %v4711 = vunpack.c.h.b16 %v4380
    %v4712 = vunpack.c.l.b16 %v4381
    %v4713 = vunpack.c.h.b16 %v4381
    %v4714 = vunpack.c.l.b16 %v4382
    %v4715 = vunpack.c.h.b16 %v4382
    %v4716 = vunpack.c.l.b16 %v4383
    %v4717 = vunpack.c.h.b16 %v4383
    %v4718 = vunpack.c.l.b16 %v4384
    %v4719 = vunpack.c.h.b16 %v4384
    %v4720 = vunpack.c.l.b16 %v4385
    %v4721 = vunpack.c.h.b16 %v4385
    %v4722 = vunpack.c.l.b16 %v4386
    %v4723 = vunpack.c.h.b16 %v4386
    %v4724 = vunpack.c.l.b16 %v4387
    %v4725 = vunpack.c.h.b16 %v4387
    %v4726 = vunpack.c.l.b16 %v4388
    %v4727 = vunpack.c.h.b16 %v4388
    %v4728 = vunpack.c.l.b16 %v4389
    %v4729 = vunpack.c.h.b16 %v4389
    %v4730 = vunpack.c.l.b16 %v4390
    %v4731 = vunpack.c.h.b16 %v4390
    %v4732 = vunpack.c.l.b16 %v4391
    %v4733 = vunpack.c.h.b16 %v4391
    %v4734 = vunpack.c.l.b16 %v4392
    %v4735 = vunpack.c.h.b16 %v4392
    %v4736 = vunpack.c.l.b16 %v4393
    %v4737 = vunpack.c.h.b16 %v4393
    %v4738 = vunpack.c.l.b16 %v4394
    %v4739 = vunpack.c.h.b16 %v4394
    %v4740 = vunpack.c.l.b16 %v4395
    %v4741 = vunpack.c.h.b16 %v4395
    %v4742 = vunpack.c.l.b16 %v4396
    %v4743 = vunpack.c.h.b16 %v4396
    %v4744 = vunpack.c.l.b16 %v4397
    %v4745 = vunpack.c.h.b16 %v4397
    %v4746 = vunpack.c.l.b16 %v4398
    %v4747 = vunpack.c.h.b16 %v4398
    %v4748 = vunpack.c.l.b16 %v4399
    %v4749 = vunpack.c.h.b16 %v4399
    %v4750 = vunpack.c.l.b16 %v4400
    %v4751 = vunpack.c.h.b16 %v4400
    %v4752 = vunpack.c.l.b16 %v4401
    %v4753 = vunpack.c.h.b16 %v4401
    %v4754 = vunpack.c.l.b16 %v4402
    %v4755 = vunpack.c.h.b16 %v4402
    %v4756 = vunpack.c.l.b16 %v4403
    %v4757 = vunpack.c.h.b16 %v4403
    %v4758 = vunpack.c.l.b16 %v4404
    %v4759 = vunpack.c.h.b16 %v4404
    %v4760 = vunpack.c.l.b16 %v4405
    %v4761 = vunpack.c.h.b16 %v4405
    %v4762 = vunpack.c.l.b16 %v4406
    %v4763 = vunpack.c.h.b16 %v4406
    %v4764 = vunpack.c.l.b16 %v4407
    %v4765 = vunpack.c.h.b16 %v4407
    %v4766 = vunpack.c.l.b16 %v4408
    %v4767 = vunpack.c.h.b16 %v4408
    %v4768 = vunpack.c.l.b16 %v4409
    %v4769 = vunpack.c.h.b16 %v4409
    %v4770 = vunpack.c.l.b16 %v4410
    %v4771 = vunpack.c.h.b16 %v4410
    %v4772 = vunpack.c.l.b16 %v4411
    %v4773 = vunpack.c.h.b16 %v4411
    %v4774 = vunpack.c.l.b16 %v4412
    %v4775 = vunpack.c.h.b16 %v4412
    %v4776 = vunpack.c.l.b16 %v4413
    %v4777 = vunpack.c.h.b16 %v4413
    %v4778 = vunpack.c.l.b16 %v4414
    %v4779 = vunpack.c.h.b16 %v4414
    %v4780 = vunpack.c.l.b16 %v4415
    %v4781 = vunpack.c.h.b16 %v4415
    %v4782 = vunpack.c.l.b16 %v4416
    %v4783 = vunpack.c.h.b16 %v4416
    %v4784 = vunpack.c.l.b16 %v4417
    %v4785 = vunpack.c.h.b16 %v4417
    %v4786 = vunpack.c.l.b16 %v4418
    %v4787 = vunpack.c.h.b16 %v4418
    %v4788 = vunpack.c.l.b16 %v4419
    %v4789 = vunpack.c.h.b16 %v4419
    %v4790 = vunpack.c.l.b16 %v4420
    %v4791 = vunpack.c.h.b16 %v4420
    %v4792 = vunpack.c.l.b16 %v4421
    %v4793 = vunpack.c.h.b16 %v4421
    %v4794 = vunpack.c.l.b16 %v4422
    %v4795 = vunpack.c.h.b16 %v4422
    %v4796 = vunpack.c.l.b16 %v4423
    %v4797 = vunpack.c.h.b16 %v4423
    %v4798 = vunpack.c.l.b16 %v4424
    %v4799 = vunpack.c.h.b16 %v4424
    %v4800 = vunpack.c.l.b16 %v4425
    %v4801 = vunpack.c.h.b16 %v4425
    %v4802 = vunpack.c.l.b16 %v4426
    %v4803 = vunpack.c.h.b16 %v4426
    %v4804 = vunpack.c.l.b16 %v4427
    %v4805 = vunpack.c.h.b16 %v4427
    %v4806 = vunpack.c.l.b16 %v4428
    %v4807 = vunpack.c.h.b16 %v4428
    %v4808 = vunpack.c.l.b16 %v4429
    %v4809 = vunpack.c.h.b16 %v4429
    %v4810 = vunpack.c.l.b16 %v4430
    %v4811 = vunpack.c.h.b16 %v4430
    %v4812 = vunpack.c.l.b16 %v4431
    %v4813 = vunpack.c.h.b16 %v4431
    %v4814 = vunpack.c.l.b16 %v4432
    %v4815 = vunpack.c.h.b16 %v4432
    %v4816 = vunpack.c.l.b16 %v4433
    %v4817 = vunpack.c.h.b16 %v4433
    %v4818 = vpack.c.b16 %v4570, %v4562
    %v4819 = vpack.c.b16 %v4571, %v4563
    %v4820 = vpack.c.b16 %v4572, %v4564
    %v4821 = vpack.c.b16 %v4573, %v4565
    %v4822 = vpack.c.b16 %v4574, %v4566
    %v4823 = vpack.c.b16 %v4575, %v4567
    %v4824 = vpack.c.b16 %v4576, %v4568
    %v4825 = vpack.c.b16 %v4577, %v4569
    %v4826 = vpack.c.b16 %v4586, %v4578
    %v4827 = vpack.c.b16 %v4587, %v4579
    %v4828 = vpack.c.b16 %v4588, %v4580
    %v4829 = vpack.c.b16 %v4589, %v4581
    %v4830 = vpack.c.b16 %v4590, %v4582
    %v4831 = vpack.c.b16 %v4591, %v4583
    %v4832 = vpack.c.b16 %v4592, %v4584
    %v4833 = vpack.c.b16 %v4593, %v4585
    %v4834 = vpack.c.b16 %v4602, %v4594
    %v4835 = vpack.c.b16 %v4603, %v4595
    %v4836 = vpack.c.b16 %v4604, %v4596
    %v4837 = vpack.c.b16 %v4605, %v4597
    %v4838 = vpack.c.b16 %v4606, %v4598
    %v4839 = vpack.c.b16 %v4607, %v4599
    %v4840 = vpack.c.b16 %v4608, %v4600
    %v4841 = vpack.c.b16 %v4609, %v4601
    %v4842 = vpack.c.b16 %v4618, %v4610
    %v4843 = vpack.c.b16 %v4619, %v4611
    %v4844 = vpack.c.b16 %v4620, %v4612
    %v4845 = vpack.c.b16 %v4621, %v4613
    %v4846 = vpack.c.b16 %v4622, %v4614
    %v4847 = vpack.c.b16 %v4623, %v4615
    %v4848 = vpack.c.b16 %v4624, %v4616
    %v4849 = vpack.c.b16 %v4625, %v4617
    %v4850 = vpack.c.b16 %v4634, %v4626
    %v4851 = vpack.c.b16 %v4635, %v4627
    %v4852 = vpack.c.b16 %v4636, %v4628
    %v4853 = vpack.c.b16 %v4637, %v4629
    %v4854 = vpack.c.b16 %v4638, %v4630
    %v4855 = vpack.c.b16 %v4639, %v4631
    %v4856 = vpack.c.b16 %v4640, %v4632
    %v4857 = vpack.c.b16 %v4641, %v4633
    %v4858 = vpack.c.b16 %v4650, %v4642
    %v4859 = vpack.c.b16 %v4651, %v4643
    %v4860 = vpack.c.b16 %v4652, %v4644
    %v4861 = vpack.c.b16 %v4653, %v4645
    %v4862 = vpack.c.b16 %v4654, %v4646
    %v4863 = vpack.c.b16 %v4655, %v4647
    %v4864 = vpack.c.b16 %v4656, %v4648
    %v4865 = vpack.c.b16 %v4657, %v4649
    %v4866 = vpack.c.b16 %v4666, %v4658
    %v4867 = vpack.c.b16 %v4667, %v4659
    %v4868 = vpack.c.b16 %v4668, %v4660
    %v4869 = vpack.c.b16 %v4669, %v4661
    %v4870 = vpack.c.b16 %v4670, %v4662
    %v4871 = vpack.c.b16 %v4671, %v4663
    %v4872 = vpack.c.b16 %v4672, %v4664
    %v4873 = vpack.c.b16 %v4673, %v4665
    %v4874 = vpack.c.b16 %v4682, %v4674
    %v4875 = vpack.c.b16 %v4683, %v4675
    %v4876 = vpack.c.b16 %v4684, %v4676
    %v4877 = vpack.c.b16 %v4685, %v4677
    %v4878 = vpack.c.b16 %v4686, %v4678
    %v4879 = vpack.c.b16 %v4687, %v4679
    %v4880 = vpack.c.b16 %v4688, %v4680
    %v4881 = vpack.c.b16 %v4689, %v4681
    %v4882 = vpack.c.b16 %v4698, %v4690
    %v4883 = vpack.c.b16 %v4699, %v4691
    %v4884 = vpack.c.b16 %v4700, %v4692
    %v4885 = vpack.c.b16 %v4701, %v4693
    %v4886 = vpack.c.b16 %v4702, %v4694
    %v4887 = vpack.c.b16 %v4703, %v4695
    %v4888 = vpack.c.b16 %v4704, %v4696
    %v4889 = vpack.c.b16 %v4705, %v4697
    %v4890 = vpack.c.b16 %v4714, %v4706
    %v4891 = vpack.c.b16 %v4715, %v4707
    %v4892 = vpack.c.b16 %v4716, %v4708
    %v4893 = vpack.c.b16 %v4717, %v4709
    %v4894 = vpack.c.b16 %v4718, %v4710
    %v4895 = vpack.c.b16 %v4719, %v4711
    %v4896 = vpack.c.b16 %v4720, %v4712
    %v4897 = vpack.c.b16 %v4721, %v4713
    %v4898 = vpack.c.b16 %v4730, %v4722
    %v4899 = vpack.c.b16 %v4731, %v4723
    %v4900 = vpack.c.b16 %v4732, %v4724
    %v4901 = vpack.c.b16 %v4733, %v4725
    %v4902 = vpack.c.b16 %v4734, %v4726
    %v4903 = vpack.c.b16 %v4735, %v4727
    %v4904 = vpack.c.b16 %v4736, %v4728
    %v4905 = vpack.c.b16 %v4737, %v4729
    %v4906 = vpack.c.b16 %v4746, %v4738
    %v4907 = vpack.c.b16 %v4747, %v4739
    %v4908 = vpack.c.b16 %v4748, %v4740
    %v4909 = vpack.c.b16 %v4749, %v4741
    %v4910 = vpack.c.b16 %v4750, %v4742
    %v4911 = vpack.c.b16 %v4751, %v4743
    %v4912 = vpack.c.b16 %v4752, %v4744
    %v4913 = vpack.c.b16 %v4753, %v4745
    %v4914 = vpack.c.b16 %v4762, %v4754
    %v4915 = vpack.c.b16 %v4763, %v4755
    %v4916 = vpack.c.b16 %v4764, %v4756
    %v4917 = vpack.c.b16 %v4765, %v4757
    %v4918 = vpack.c.b16 %v4766, %v4758
    %v4919 = vpack.c.b16 %v4767, %v4759
    %v4920 = vpack.c.b16 %v4768, %v4760
    %v4921 = vpack.c.b16 %v4769, %v4761
    %v4922 = vpack.c.b16 %v4778, %v4770
    %v4923 = vpack.c.b16 %v4779, %v4771
    %v4924 = vpack.c.b16 %v4780, %v4772
    %v4925 = vpack.c.b16 %v4781, %v4773
    %v4926 = vpack.c.b16 %v4782, %v4774
    %v4927 = vpack.c.b16 %v4783, %v4775
    %v4928 = vpack.c.b16 %v4784, %v4776
    %v4929 = vpack.c.b16 %v4785, %v4777
    %v4930 = vpack.c.b16 %v4794, %v4786
    %v4931 = vpack.c.b16 %v4795, %v4787
    %v4932 = vpack.c.b16 %v4796, %v4788
    %v4933 = vpack.c.b16 %v4797, %v4789
    %v4934 = vpack.c.b16 %v4798, %v4790
    %v4935 = vpack.c.b16 %v4799, %v4791
    %v4936 = vpack.c.b16 %v4800, %v4792
    %v4937 = vpack.c.b16 %v4801, %v4793
    %v4938 = vpack.c.b16 %v4810, %v4802
    %v4939 = vpack.c.b16 %v4811, %v4803
    %v4940 = vpack.c.b16 %v4812, %v4804
    %v4941 = vpack.c.b16 %v4813, %v4805
    %v4942 = vpack.c.b16 %v4814, %v4806
    %v4943 = vpack.c.b16 %v4815, %v4807
    %v4944 = vpack.c.b16 %v4816, %v4808
    %v4945 = vpack.c.b16 %v4817, %v4809
    %5074 = vmatprep.subr.bf16.mxu0 %v4875
    %5075 = vmatpush1.bf16.msra.mxu0 %v4874
    %5076 = vmatprep.subr.bf16.mxu0 %v4867
    %5077 = vmatpush1.bf16.msra.mxu0 %v4866
    %5078 = vmatprep.subr.bf16.mxu0 %v4859
    %5079 = vmatpush1.bf16.msra.mxu0 %v4858
    %5080 = vmatprep.subr.bf16.mxu0 %v4851
    %5081 = vmatpush1.bf16.msra.mxu0 %v4850
    %5082 = vmatprep.subr.bf16.mxu0 %v4843
    %5083 = vmatpush1.bf16.msra.mxu0 %v4842
    %5084 = vmatprep.subr.bf16.mxu0 %v4835
    %5085 = vmatpush1.bf16.msra.mxu0 %v4834
    %5086 = vmatprep.subr.bf16.mxu0 %v4827
    %5087 = vmatpush1.bf16.msra.mxu0 %v4826
    %5088 = vmatprep.subr.bf16.mxu0 %v4819
    %5089 = vmatpush1.bf16.msra.mxu0 %v4818
    %5090 = vmatprep.subr.bf16.mxu0 %v4939
    %5091 = vmatpush2.bf16.msra.mxu0 %v4938
    %5092 = vmatprep.subr.bf16.mxu0 %v4931
    %5093 = vmatpush2.bf16.msra.mxu0 %v4930
    %5094 = vmatprep.subr.bf16.mxu0 %v4923
    %5095 = vmatpush2.bf16.msra.mxu0 %v4922
    %5096 = vmatprep.subr.bf16.mxu0 %v4915
    %5097 = vmatpush2.bf16.msra.mxu0 %v4914
    %5098 = vmatprep.subr.bf16.mxu0 %v4907
    %5099 = vmatpush2.bf16.msra.mxu0 %v4906
    %5100 = vmatprep.subr.bf16.mxu0 %v4899
    %5101 = vmatpush2.bf16.msra.mxu0 %v4898
    %5102 = vmatprep.subr.bf16.mxu0 %v4891
    %5103 = vmatpush2.bf16.msra.mxu0 %v4890
    %5104 = vmatprep.subr.bf16.mxu0 %v4883
    %5105 = vmatpush2.bf16.msra.mxu0 %v4882
    %5106 = vmatprep.mubr.bf16.mxu0 %v4267
    %5107 = vmatmul.mubr.bf16.gmra.mxu0 %v4305
    %v5108 = vpop.f32.mrf.mxu0
    %v5109 = vadd.f32 0.0, %v5108
    %v5110 = vpop.f32.mrf.mxu0
    %v5111 = vadd.f32 0.0, %v5110
    %v5112 = vpop.f32.mrf.mxu0
    %v5113 = vpop.f32.mrf.mxu0
    %5114 = vdwg.mxu0
    %5115 = vmatprep.subr.bf16.mxu0 %v4877
    %5116 = vmatpush1.bf16.msra.mxu0 %v4876
    %5117 = vmatprep.subr.bf16.mxu0 %v4869
    %5118 = vmatpush1.bf16.msra.mxu0 %v4868
    %5119 = vmatprep.subr.bf16.mxu0 %v4861
    %5120 = vmatpush1.bf16.msra.mxu0 %v4860
    %5121 = vmatprep.subr.bf16.mxu0 %v4853
    %5122 = vmatpush1.bf16.msra.mxu0 %v4852
    %5123 = vmatprep.subr.bf16.mxu0 %v4845
    %5124 = vmatpush1.bf16.msra.mxu0 %v4844
    %5125 = vmatprep.subr.bf16.mxu0 %v4837
    %5126 = vmatpush1.bf16.msra.mxu0 %v4836
    %5127 = vmatprep.subr.bf16.mxu0 %v4829
    %5128 = vmatpush1.bf16.msra.mxu0 %v4828
    %5129 = vmatprep.subr.bf16.mxu0 %v4821
    %5130 = vmatpush1.bf16.msra.mxu0 %v4820
    %5131 = vmatprep.subr.bf16.mxu0 %v4941
    %5132 = vmatpush2.bf16.msra.mxu0 %v4940
    %5133 = vmatprep.subr.bf16.mxu0 %v4933
    %5134 = vmatpush2.bf16.msra.mxu0 %v4932
    %5135 = vmatprep.subr.bf16.mxu0 %v4925
    %5136 = vmatpush2.bf16.msra.mxu0 %v4924
    %5137 = vmatprep.subr.bf16.mxu0 %v4917
    %5138 = vmatpush2.bf16.msra.mxu0 %v4916
    %5139 = vmatprep.subr.bf16.mxu0 %v4909
    %5140 = vmatpush2.bf16.msra.mxu0 %v4908
    %5141 = vmatprep.subr.bf16.mxu0 %v4901
    %5142 = vmatpush2.bf16.msra.mxu0 %v4900
    %5143 = vmatprep.subr.bf16.mxu0 %v4893
    %5144 = vmatpush2.bf16.msra.mxu0 %v4892
    %5145 = vmatprep.subr.bf16.mxu0 %v4885
    %5146 = vmatpush2.bf16.msra.mxu0 %v4884
    %5147 = vmatprep.mubr.bf16.mxu0 %v4267
    %5148 = vmatmul.mubr.bf16.gmra.mxu0 %v4305
    %v5149 = vpop.f32.mrf.mxu0
    %v5150 = vadd.f32 0.0, %v5149
    %v5151 = vpop.f32.mrf.mxu0
    %v5152 = vadd.f32 0.0, %v5151
    %v5153 = vpop.f32.mrf.mxu0
    %v5154 = vpop.f32.mrf.mxu0
    %5155 = vdwg.mxu0
    %5156 = vmatprep.subr.bf16.mxu0 %v4879
    %5157 = vmatpush1.bf16.msra.mxu0 %v4878
    %5158 = vmatprep.subr.bf16.mxu0 %v4871
    %5159 = vmatpush1.bf16.msra.mxu0 %v4870
    %5160 = vmatprep.subr.bf16.mxu0 %v4863
    %5161 = vmatpush1.bf16.msra.mxu0 %v4862
    %5162 = vmatprep.subr.bf16.mxu0 %v4855
    %5163 = vmatpush1.bf16.msra.mxu0 %v4854
    %5164 = vmatprep.subr.bf16.mxu0 %v4847
    %5165 = vmatpush1.bf16.msra.mxu0 %v4846
    %5166 = vmatprep.subr.bf16.mxu0 %v4839
    %5167 = vmatpush1.bf16.msra.mxu0 %v4838
    %5168 = vmatprep.subr.bf16.mxu0 %v4831
    %5169 = vmatpush1.bf16.msra.mxu0 %v4830
    %5170 = vmatprep.subr.bf16.mxu0 %v4823
    %5171 = vmatpush1.bf16.msra.mxu0 %v4822
    %5172 = vmatprep.subr.bf16.mxu0 %v4943
    %5173 = vmatpush2.bf16.msra.mxu0 %v4942
    %5174 = vmatprep.subr.bf16.mxu0 %v4935
    %5175 = vmatpush2.bf16.msra.mxu0 %v4934
    %5176 = vmatprep.subr.bf16.mxu0 %v4927
    %5177 = vmatpush2.bf16.msra.mxu0 %v4926
    %5178 = vmatprep.subr.bf16.mxu0 %v4919
    %5179 = vmatpush2.bf16.msra.mxu0 %v4918
    %5180 = vmatprep.subr.bf16.mxu0 %v4911
    %5181 = vmatpush2.bf16.msra.mxu0 %v4910
    %5182 = vmatprep.subr.bf16.mxu0 %v4903
    %5183 = vmatpush2.bf16.msra.mxu0 %v4902
    %5184 = vmatprep.subr.bf16.mxu0 %v4895
    %5185 = vmatpush2.bf16.msra.mxu0 %v4894
    %5186 = vmatprep.subr.bf16.mxu0 %v4887
    %5187 = vmatpush2.bf16.msra.mxu0 %v4886
    %5188 = vmatprep.mubr.bf16.mxu0 %v4267
    %5189 = vmatmul.mubr.bf16.gmra.mxu0 %v4305
    %v5190 = vpop.f32.mrf.mxu0
    %v5191 = vadd.f32 0.0, %v5190
    %v5192 = vpop.f32.mrf.mxu0
    %v5193 = vadd.f32 0.0, %v5192
    %v5194 = vpop.f32.mrf.mxu0
    %v5195 = vpop.f32.mrf.mxu0
    %5196 = vdwg.mxu0
    %5197 = vmatprep.subr.bf16.mxu0 %v4881
    %5198 = vmatpush1.bf16.msra.mxu0 %v4880
    %5199 = vmatprep.subr.bf16.mxu0 %v4873
    %5200 = vmatpush1.bf16.msra.mxu0 %v4872
    %5201 = vmatprep.subr.bf16.mxu0 %v4865
    %5202 = vmatpush1.bf16.msra.mxu0 %v4864
    %5203 = vmatprep.subr.bf16.mxu0 %v4857
    %5204 = vmatpush1.bf16.msra.mxu0 %v4856
    %5205 = vmatprep.subr.bf16.mxu0 %v4849
    %5206 = vmatpush1.bf16.msra.mxu0 %v4848
    %5207 = vmatprep.subr.bf16.mxu0 %v4841
    %5208 = vmatpush1.bf16.msra.mxu0 %v4840
    %5209 = vmatprep.subr.bf16.mxu0 %v4833
    %5210 = vmatpush1.bf16.msra.mxu0 %v4832
    %5211 = vmatprep.subr.bf16.mxu0 %v4825
    %5212 = vmatpush1.bf16.msra.mxu0 %v4824
    %5213 = vmatprep.subr.bf16.mxu0 %v4945
    %5214 = vmatpush2.bf16.msra.mxu0 %v4944
    %5215 = vmatprep.subr.bf16.mxu0 %v4937
    %5216 = vmatpush2.bf16.msra.mxu0 %v4936
    %5217 = vmatprep.subr.bf16.mxu0 %v4929
    %5218 = vmatpush2.bf16.msra.mxu0 %v4928
    %5219 = vmatprep.subr.bf16.mxu0 %v4921
    %5220 = vmatpush2.bf16.msra.mxu0 %v4920
    %5221 = vmatprep.subr.bf16.mxu0 %v4913
    %5222 = vmatpush2.bf16.msra.mxu0 %v4912
    %5223 = vmatprep.subr.bf16.mxu0 %v4905
    %5224 = vmatpush2.bf16.msra.mxu0 %v4904
    %5225 = vmatprep.subr.bf16.mxu0 %v4897
    %5226 = vmatpush2.bf16.msra.mxu0 %v4896
    %5227 = vmatprep.subr.bf16.mxu0 %v4889
    %5228 = vmatpush2.bf16.msra.mxu0 %v4888
    %5229 = vmatprep.mubr.bf16.mxu0 %v4267
    %5230 = vmatmul.mubr.bf16.gmra.mxu0 %v4305
    %v5231 = vpop.f32.mrf.mxu0
    %v5232 = vadd.f32 0.0, %v5231
    %v5233 = vpop.f32.mrf.mxu0
    %v5234 = vadd.f32 0.0, %v5233
    %v5235 = vpop.f32.mrf.mxu0
    %v5236 = vpop.f32.mrf.mxu0
    %5237 = vdwg.mxu0
    %v5238 = vadd.f32 %v5191, %v1175
    %v5239 = vadd.f32 %v5193, %v1179
    %v5240 = vadd.f32 %v5232, %v1183
    %v5241 = vadd.f32 %v5234, %v1187
    %v5242 = vxor.u32 %v5238, 2147483648
    %v5243 = vmul.f32 %v5242, 1.442695
    %v5244 = vpow.pop %v5243
    %v5245 = vadd.f32 %v5244, 1.0
    %v5246 = vrcp.pop %v5245
    %v5247 = vmul.f32 1.0, %v5246
    %v5248 = vxor.u32 %v5239, 2147483648
    %v5249 = vmul.f32 %v5248, 1.442695
    %v5250 = vpow.pop %v5249
    %v5251 = vadd.f32 %v5250, 1.0
    %v5252 = vrcp.pop %v5251
    %v5253 = vmul.f32 1.0, %v5252
    %v5254 = vtanh.pop %v5240
    %v5255 = vxor.u32 %v5241, 2147483648
    %v5256 = vmul.f32 %v5255, 1.442695
    %v5257 = vpow.pop %v5256
    %v5258 = vadd.f32 %v5257, 1.0
    %v5259 = vrcp.pop %v5258
    %v5260 = vmul.f32 1.0, %v5259
    %v5261 = vmul.f32 %v5253, %v4264
    %v5262 = vmul.f32 %v5247, %v5254
    %v5263 = vadd.f32 %v5261, %v5262
    %v5264 = vtanh.pop %v5263
    %v5265 = vmul.f32 %v5260, %v5264
    %v5266 = vpack.c.bf16 %v5265, %v5265
    %5267 = vst [vmem:[#allocation2 + $0x4] sm:$0x1] %v5266
    %v5272 = vrot.slane %v5109, 6
    %v5273 = vrot.slane %v5111, 6
    %v5274 = vrot.slane %v5150, 6
    %v5275 = vrot.slane %v5152, 6
    %v5280 = vadd.f32 %v166, %v5272
    %v5281 = vadd.f32 %v168, %v5273
    %v5282 = vadd.f32 %v209, %v5274
    %v5283 = vadd.f32 %v211, %v5275
    %v5284 = vxor.u32 %v5280, 2147483648
    %v5285 = vmul.f32 %v5284, 1.442695
    %v5286 = vpow.pop %v5285
    %v5287 = vadd.f32 %v5286, 1.0
    %v5288 = vrcp.pop %v5287
    %v5289 = vmul.f32 1.0, %v5288
    %v5290 = vxor.u32 %v5281, 2147483648
    %v5291 = vmul.f32 %v5290, 1.442695
    %v5292 = vpow.pop %v5291
    %v5293 = vadd.f32 %v5292, 1.0
    %v5294 = vrcp.pop %v5293
    %v5295 = vmul.f32 1.0, %v5294
    %v5296 = vtanh.pop %v5282
    %v5297 = vxor.u32 %v5283, 2147483648
    %v5298 = vmul.f32 %v5297, 1.442695
    %v5299 = vpow.pop %v5298
    %v5300 = vadd.f32 %v5299, 1.0
    %v5301 = vrcp.pop %v5300
    %v5302 = vmul.f32 1.0, %v5301
    %v5304 = vrot.slane %v4302, 6
    %v5306 = vmul.f32 %v5295, %v5304
    %v5307 = vmul.f32 %v5289, %v5296
    %v5308 = vadd.f32 %v5306, %v5307
    %v5309 = vtanh.pop %v5308
    %v5310 = vmul.f32 %v5302, %v5309
    %v5311 = vpack.c.bf16 %v5310, %v5310
    %v5313 = vrot.slane %v5266, 7
    %v5314 = vld [vmem:[#allocation7] sm:$0xff]
    %v5315 = vld [vmem:[#allocation7 + $0x8] sm:$0xff]
    %v5316 = vld [vmem:[#allocation7 + $0x10] sm:$0xff]
    %v5317 = vld [vmem:[#allocation7 + $0x18] sm:$0xff]
    %v5318 = vld [vmem:[#allocation7 + $0x20] sm:$0xff]
    %v5319 = vld [vmem:[#allocation7 + $0x28] sm:$0xff]
    %v5320 = vld [vmem:[#allocation7 + $0x30] sm:$0xff]
    %v5321 = vld [vmem:[#allocation7 + $0x38] sm:$0xff]
    %v5322 = vld [vmem:[#allocation7 + $0x40] sm:$0xff]
    %v5323 = vld [vmem:[#allocation7 + $0x48] sm:$0xff]
    %v5324 = vld [vmem:[#allocation7 + $0x50] sm:$0xff]
    %v5325 = vld [vmem:[#allocation7 + $0x58] sm:$0xff]
    %v5326 = vld [vmem:[#allocation7 + $0x60] sm:$0xff]
    %v5327 = vld [vmem:[#allocation7 + $0x68] sm:$0xff]
    %v5328 = vld [vmem:[#allocation7 + $0x70] sm:$0xff]
    %v5329 = vld [vmem:[#allocation7 + $0x78] sm:$0xff]
    %v5330 = vld [vmem:[#allocation7 + $0x80] sm:$0xff]
    %v5331 = vld [vmem:[#allocation7 + $0x88] sm:$0xff]
    %v5332 = vld [vmem:[#allocation7 + $0x90] sm:$0xff]
    %v5333 = vld [vmem:[#allocation7 + $0x98] sm:$0xff]
    %v5334 = vld [vmem:[#allocation7 + $0xa0] sm:$0xff]
    %v5335 = vld [vmem:[#allocation7 + $0xa8] sm:$0xff]
    %v5336 = vld [vmem:[#allocation7 + $0xb0] sm:$0xff]
    %v5337 = vld [vmem:[#allocation7 + $0xb8] sm:$0xff]
    %v5338 = vld [vmem:[#allocation7 + $0xc0] sm:$0xff]
    %v5339 = vld [vmem:[#allocation7 + $0xc8] sm:$0xff]
    %v5340 = vld [vmem:[#allocation7 + $0xd0] sm:$0xff]
    %v5341 = vld [vmem:[#allocation7 + $0xd8] sm:$0xff]
    %v5342 = vld [vmem:[#allocation7 + $0xe0] sm:$0xff]
    %v5343 = vld [vmem:[#allocation7 + $0xe8] sm:$0xff]
    %v5344 = vld [vmem:[#allocation7 + $0xf0] sm:$0xff]
    %v5345 = vld [vmem:[#allocation7 + $0xf8] sm:$0xff]
    %v5346 = vld [vmem:[#allocation7 + $0x100] sm:$0xff]
    %v5347 = vld [vmem:[#allocation7 + $0x108] sm:$0xff]
    %v5348 = vld [vmem:[#allocation7 + $0x110] sm:$0xff]
    %v5349 = vld [vmem:[#allocation7 + $0x118] sm:$0xff]
    %v5350 = vld [vmem:[#allocation7 + $0x120] sm:$0xff]
    %v5351 = vld [vmem:[#allocation7 + $0x128] sm:$0xff]
    %v5352 = vld [vmem:[#allocation7 + $0x130] sm:$0xff]
    %v5353 = vld [vmem:[#allocation7 + $0x138] sm:$0xff]
    %v5354 = vld [vmem:[#allocation7 + $0x140] sm:$0xff]
    %v5355 = vld [vmem:[#allocation7 + $0x148] sm:$0xff]
    %v5356 = vld [vmem:[#allocation7 + $0x150] sm:$0xff]
    %v5357 = vld [vmem:[#allocation7 + $0x158] sm:$0xff]
    %v5358 = vld [vmem:[#allocation7 + $0x160] sm:$0xff]
    %v5359 = vld [vmem:[#allocation7 + $0x168] sm:$0xff]
    %v5360 = vld [vmem:[#allocation7 + $0x170] sm:$0xff]
    %v5361 = vld [vmem:[#allocation7 + $0x178] sm:$0xff]
    %v5362 = vld [vmem:[#allocation7 + $0x180] sm:$0xff]
    %v5363 = vld [vmem:[#allocation7 + $0x188] sm:$0xff]
    %v5364 = vld [vmem:[#allocation7 + $0x190] sm:$0xff]
    %v5365 = vld [vmem:[#allocation7 + $0x198] sm:$0xff]
    %v5366 = vld [vmem:[#allocation7 + $0x1a0] sm:$0xff]
    %v5367 = vld [vmem:[#allocation7 + $0x1a8] sm:$0xff]
    %v5368 = vld [vmem:[#allocation7 + $0x1b0] sm:$0xff]
    %v5369 = vld [vmem:[#allocation7 + $0x1b8] sm:$0xff]
    %v5370 = vld [vmem:[#allocation7 + $0x1c0] sm:$0xff]
    %v5371 = vld [vmem:[#allocation7 + $0x1c8] sm:$0xff]
    %v5372 = vld [vmem:[#allocation7 + $0x1d0] sm:$0xff]
    %v5373 = vld [vmem:[#allocation7 + $0x1d8] sm:$0xff]
    %v5374 = vld [vmem:[#allocation7 + $0x1e0] sm:$0xff]
    %v5375 = vld [vmem:[#allocation7 + $0x1e8] sm:$0xff]
    %v5376 = vld [vmem:[#allocation7 + $0x1f0] sm:$0xff]
    %v5377 = vld [vmem:[#allocation7 + $0x1f8] sm:$0xff]
    %v5378 = vld [vmem:[#allocation7 + $0x200] sm:$0xff]
    %v5379 = vld [vmem:[#allocation7 + $0x208] sm:$0xff]
    %v5380 = vld [vmem:[#allocation7 + $0x210] sm:$0xff]
    %v5381 = vld [vmem:[#allocation7 + $0x218] sm:$0xff]
    %v5382 = vld [vmem:[#allocation7 + $0x220] sm:$0xff]
    %v5383 = vld [vmem:[#allocation7 + $0x228] sm:$0xff]
    %v5384 = vld [vmem:[#allocation7 + $0x230] sm:$0xff]
    %v5385 = vld [vmem:[#allocation7 + $0x238] sm:$0xff]
    %v5386 = vld [vmem:[#allocation7 + $0x240] sm:$0xff]
    %v5387 = vld [vmem:[#allocation7 + $0x248] sm:$0xff]
    %v5388 = vld [vmem:[#allocation7 + $0x250] sm:$0xff]
    %v5389 = vld [vmem:[#allocation7 + $0x258] sm:$0xff]
    %v5390 = vld [vmem:[#allocation7 + $0x260] sm:$0xff]
    %v5391 = vld [vmem:[#allocation7 + $0x268] sm:$0xff]
    %v5392 = vld [vmem:[#allocation7 + $0x270] sm:$0xff]
    %v5393 = vld [vmem:[#allocation7 + $0x278] sm:$0xff]
    %v5394 = vld [vmem:[#allocation7 + $0x280] sm:$0xff]
    %v5395 = vld [vmem:[#allocation7 + $0x288] sm:$0xff]
    %v5396 = vld [vmem:[#allocation7 + $0x290] sm:$0xff]
    %v5397 = vld [vmem:[#allocation7 + $0x298] sm:$0xff]
    %v5398 = vld [vmem:[#allocation7 + $0x2a0] sm:$0xff]
    %v5399 = vld [vmem:[#allocation7 + $0x2a8] sm:$0xff]
    %v5400 = vld [vmem:[#allocation7 + $0x2b0] sm:$0xff]
    %v5401 = vld [vmem:[#allocation7 + $0x2b8] sm:$0xff]
    %v5402 = vld [vmem:[#allocation7 + $0x2c0] sm:$0xff]
    %v5403 = vld [vmem:[#allocation7 + $0x2c8] sm:$0xff]
    %v5404 = vld [vmem:[#allocation7 + $0x2d0] sm:$0xff]
    %v5405 = vld [vmem:[#allocation7 + $0x2d8] sm:$0xff]
    %v5406 = vld [vmem:[#allocation7 + $0x2e0] sm:$0xff]
    %v5407 = vld [vmem:[#allocation7 + $0x2e8] sm:$0xff]
    %v5408 = vld [vmem:[#allocation7 + $0x2f0] sm:$0xff]
    %v5409 = vld [vmem:[#allocation7 + $0x2f8] sm:$0xff]
    %v5410 = vld [vmem:[#allocation7 + $0x300] sm:$0xff]
    %v5411 = vld [vmem:[#allocation7 + $0x308] sm:$0xff]
    %v5412 = vld [vmem:[#allocation7 + $0x310] sm:$0xff]
    %v5413 = vld [vmem:[#allocation7 + $0x318] sm:$0xff]
    %v5414 = vld [vmem:[#allocation7 + $0x320] sm:$0xff]
    %v5415 = vld [vmem:[#allocation7 + $0x328] sm:$0xff]
    %v5416 = vld [vmem:[#allocation7 + $0x330] sm:$0xff]
    %v5417 = vld [vmem:[#allocation7 + $0x338] sm:$0xff]
    %v5418 = vld [vmem:[#allocation7 + $0x340] sm:$0xff]
    %v5419 = vld [vmem:[#allocation7 + $0x348] sm:$0xff]
    %v5420 = vld [vmem:[#allocation7 + $0x350] sm:$0xff]
    %v5421 = vld [vmem:[#allocation7 + $0x358] sm:$0xff]
    %v5422 = vld [vmem:[#allocation7 + $0x360] sm:$0xff]
    %v5423 = vld [vmem:[#allocation7 + $0x368] sm:$0xff]
    %v5424 = vld [vmem:[#allocation7 + $0x370] sm:$0xff]
    %v5425 = vld [vmem:[#allocation7 + $0x378] sm:$0xff]
    %v5426 = vld [vmem:[#allocation7 + $0x380] sm:$0xff]
    %v5427 = vld [vmem:[#allocation7 + $0x388] sm:$0xff]
    %v5428 = vld [vmem:[#allocation7 + $0x390] sm:$0xff]
    %v5429 = vld [vmem:[#allocation7 + $0x398] sm:$0xff]
    %v5430 = vld [vmem:[#allocation7 + $0x3a0] sm:$0xff]
    %v5431 = vld [vmem:[#allocation7 + $0x3a8] sm:$0xff]
    %v5432 = vld [vmem:[#allocation7 + $0x3b0] sm:$0xff]
    %v5433 = vld [vmem:[#allocation7 + $0x3b8] sm:$0xff]
    %v5434 = vld [vmem:[#allocation7 + $0x3c0] sm:$0xff]
    %v5435 = vld [vmem:[#allocation7 + $0x3c8] sm:$0xff]
    %v5436 = vld [vmem:[#allocation7 + $0x3d0] sm:$0xff]
    %v5437 = vld [vmem:[#allocation7 + $0x3d8] sm:$0xff]
    %v5438 = vld [vmem:[#allocation7 + $0x3e0] sm:$0xff]
    %v5439 = vld [vmem:[#allocation7 + $0x3e8] sm:$0xff]
    %v5440 = vld [vmem:[#allocation7 + $0x3f0] sm:$0xff]
    %v5441 = vld [vmem:[#allocation7 + $0x3f8] sm:$0xff]
    %v5443 = vrot.slane %v5311, 1
    %v5444 = vrot.slane %v5313, 1
    %v5575 = vunpack.c.l.b16 %v5314
    %v5576 = vunpack.c.h.b16 %v5314
    %v5577 = vunpack.c.l.b16 %v5315
    %v5578 = vunpack.c.h.b16 %v5315
    %v5579 = vunpack.c.l.b16 %v5316
    %v5580 = vunpack.c.h.b16 %v5316
    %v5581 = vunpack.c.l.b16 %v5317
    %v5582 = vunpack.c.h.b16 %v5317
    %v5583 = vunpack.c.l.b16 %v5318
    %v5584 = vunpack.c.h.b16 %v5318
    %v5585 = vunpack.c.l.b16 %v5319
    %v5586 = vunpack.c.h.b16 %v5319
    %v5587 = vunpack.c.l.b16 %v5320
    %v5588 = vunpack.c.h.b16 %v5320
    %v5589 = vunpack.c.l.b16 %v5321
    %v5590 = vunpack.c.h.b16 %v5321
    %v5591 = vunpack.c.l.b16 %v5322
    %v5592 = vunpack.c.h.b16 %v5322
    %v5593 = vunpack.c.l.b16 %v5323
    %v5594 = vunpack.c.h.b16 %v5323
    %v5595 = vunpack.c.l.b16 %v5324
    %v5596 = vunpack.c.h.b16 %v5324
    %v5597 = vunpack.c.l.b16 %v5325
    %v5598 = vunpack.c.h.b16 %v5325
    %v5599 = vunpack.c.l.b16 %v5326
    %v5600 = vunpack.c.h.b16 %v5326
    %v5601 = vunpack.c.l.b16 %v5327
    %v5602 = vunpack.c.h.b16 %v5327
    %v5603 = vunpack.c.l.b16 %v5328
    %v5604 = vunpack.c.h.b16 %v5328
    %v5605 = vunpack.c.l.b16 %v5329
    %v5606 = vunpack.c.h.b16 %v5329
    %v5607 = vunpack.c.l.b16 %v5330
    %v5608 = vunpack.c.h.b16 %v5330
    %v5609 = vunpack.c.l.b16 %v5331
    %v5610 = vunpack.c.h.b16 %v5331
    %v5611 = vunpack.c.l.b16 %v5332
    %v5612 = vunpack.c.h.b16 %v5332
    %v5613 = vunpack.c.l.b16 %v5333
    %v5614 = vunpack.c.h.b16 %v5333
    %v5615 = vunpack.c.l.b16 %v5334
    %v5616 = vunpack.c.h.b16 %v5334
    %v5617 = vunpack.c.l.b16 %v5335
    %v5618 = vunpack.c.h.b16 %v5335
    %v5619 = vunpack.c.l.b16 %v5336
    %v5620 = vunpack.c.h.b16 %v5336
    %v5621 = vunpack.c.l.b16 %v5337
    %v5622 = vunpack.c.h.b16 %v5337
    %v5623 = vunpack.c.l.b16 %v5338
    %v5624 = vunpack.c.h.b16 %v5338
    %v5625 = vunpack.c.l.b16 %v5339
    %v5626 = vunpack.c.h.b16 %v5339
    %v5627 = vunpack.c.l.b16 %v5340
    %v5628 = vunpack.c.h.b16 %v5340
    %v5629 = vunpack.c.l.b16 %v5341
    %v5630 = vunpack.c.h.b16 %v5341
    %v5631 = vunpack.c.l.b16 %v5342
    %v5632 = vunpack.c.h.b16 %v5342
    %v5633 = vunpack.c.l.b16 %v5343
    %v5634 = vunpack.c.h.b16 %v5343
    %v5635 = vunpack.c.l.b16 %v5344
    %v5636 = vunpack.c.h.b16 %v5344
    %v5637 = vunpack.c.l.b16 %v5345
    %v5638 = vunpack.c.h.b16 %v5345
    %v5639 = vunpack.c.l.b16 %v5346
    %v5640 = vunpack.c.h.b16 %v5346
    %v5641 = vunpack.c.l.b16 %v5347
    %v5642 = vunpack.c.h.b16 %v5347
    %v5643 = vunpack.c.l.b16 %v5348
    %v5644 = vunpack.c.h.b16 %v5348
    %v5645 = vunpack.c.l.b16 %v5349
    %v5646 = vunpack.c.h.b16 %v5349
    %v5647 = vunpack.c.l.b16 %v5350
    %v5648 = vunpack.c.h.b16 %v5350
    %v5649 = vunpack.c.l.b16 %v5351
    %v5650 = vunpack.c.h.b16 %v5351
    %v5651 = vunpack.c.l.b16 %v5352
    %v5652 = vunpack.c.h.b16 %v5352
    %v5653 = vunpack.c.l.b16 %v5353
    %v5654 = vunpack.c.h.b16 %v5353
    %v5655 = vunpack.c.l.b16 %v5354
    %v5656 = vunpack.c.h.b16 %v5354
    %v5657 = vunpack.c.l.b16 %v5355
    %v5658 = vunpack.c.h.b16 %v5355
    %v5659 = vunpack.c.l.b16 %v5356
    %v5660 = vunpack.c.h.b16 %v5356
    %v5661 = vunpack.c.l.b16 %v5357
    %v5662 = vunpack.c.h.b16 %v5357
    %v5663 = vunpack.c.l.b16 %v5358
    %v5664 = vunpack.c.h.b16 %v5358
    %v5665 = vunpack.c.l.b16 %v5359
    %v5666 = vunpack.c.h.b16 %v5359
    %v5667 = vunpack.c.l.b16 %v5360
    %v5668 = vunpack.c.h.b16 %v5360
    %v5669 = vunpack.c.l.b16 %v5361
    %v5670 = vunpack.c.h.b16 %v5361
    %v5671 = vunpack.c.l.b16 %v5362
    %v5672 = vunpack.c.h.b16 %v5362
    %v5673 = vunpack.c.l.b16 %v5363
    %v5674 = vunpack.c.h.b16 %v5363
    %v5675 = vunpack.c.l.b16 %v5364
    %v5676 = vunpack.c.h.b16 %v5364
    %v5677 = vunpack.c.l.b16 %v5365
    %v5678 = vunpack.c.h.b16 %v5365
    %v5679 = vunpack.c.l.b16 %v5366
    %v5680 = vunpack.c.h.b16 %v5366
    %v5681 = vunpack.c.l.b16 %v5367
    %v5682 = vunpack.c.h.b16 %v5367
    %v5683 = vunpack.c.l.b16 %v5368
    %v5684 = vunpack.c.h.b16 %v5368
    %v5685 = vunpack.c.l.b16 %v5369
    %v5686 = vunpack.c.h.b16 %v5369
    %v5687 = vunpack.c.l.b16 %v5370
    %v5688 = vunpack.c.h.b16 %v5370
    %v5689 = vunpack.c.l.b16 %v5371
    %v5690 = vunpack.c.h.b16 %v5371
    %v5691 = vunpack.c.l.b16 %v5372
    %v5692 = vunpack.c.h.b16 %v5372
    %v5693 = vunpack.c.l.b16 %v5373
    %v5694 = vunpack.c.h.b16 %v5373
    %v5695 = vunpack.c.l.b16 %v5374
    %v5696 = vunpack.c.h.b16 %v5374
    %v5697 = vunpack.c.l.b16 %v5375
    %v5698 = vunpack.c.h.b16 %v5375
    %v5699 = vunpack.c.l.b16 %v5376
    %v5700 = vunpack.c.h.b16 %v5376
    %v5701 = vunpack.c.l.b16 %v5377
    %v5702 = vunpack.c.h.b16 %v5377
    %v5703 = vunpack.c.l.b16 %v5378
    %v5704 = vunpack.c.h.b16 %v5378
    %v5705 = vunpack.c.l.b16 %v5379
    %v5706 = vunpack.c.h.b16 %v5379
    %v5707 = vunpack.c.l.b16 %v5380
    %v5708 = vunpack.c.h.b16 %v5380
    %v5709 = vunpack.c.l.b16 %v5381
    %v5710 = vunpack.c.h.b16 %v5381
    %v5711 = vunpack.c.l.b16 %v5382
    %v5712 = vunpack.c.h.b16 %v5382
    %v5713 = vunpack.c.l.b16 %v5383
    %v5714 = vunpack.c.h.b16 %v5383
    %v5715 = vunpack.c.l.b16 %v5384
    %v5716 = vunpack.c.h.b16 %v5384
    %v5717 = vunpack.c.l.b16 %v5385
    %v5718 = vunpack.c.h.b16 %v5385
    %v5719 = vunpack.c.l.b16 %v5386
    %v5720 = vunpack.c.h.b16 %v5386
    %v5721 = vunpack.c.l.b16 %v5387
    %v5722 = vunpack.c.h.b16 %v5387
    %v5723 = vunpack.c.l.b16 %v5388
    %v5724 = vunpack.c.h.b16 %v5388
    %v5725 = vunpack.c.l.b16 %v5389
    %v5726 = vunpack.c.h.b16 %v5389
    %v5727 = vunpack.c.l.b16 %v5390
    %v5728 = vunpack.c.h.b16 %v5390
    %v5729 = vunpack.c.l.b16 %v5391
    %v5730 = vunpack.c.h.b16 %v5391
    %v5731 = vunpack.c.l.b16 %v5392
    %v5732 = vunpack.c.h.b16 %v5392
    %v5733 = vunpack.c.l.b16 %v5393
    %v5734 = vunpack.c.h.b16 %v5393
    %v5735 = vunpack.c.l.b16 %v5394
    %v5736 = vunpack.c.h.b16 %v5394
    %v5737 = vunpack.c.l.b16 %v5395
    %v5738 = vunpack.c.h.b16 %v5395
    %v5739 = vunpack.c.l.b16 %v5396
    %v5740 = vunpack.c.h.b16 %v5396
    %v5741 = vunpack.c.l.b16 %v5397
    %v5742 = vunpack.c.h.b16 %v5397
    %v5743 = vunpack.c.l.b16 %v5398
    %v5744 = vunpack.c.h.b16 %v5398
    %v5745 = vunpack.c.l.b16 %v5399
    %v5746 = vunpack.c.h.b16 %v5399
    %v5747 = vunpack.c.l.b16 %v5400
    %v5748 = vunpack.c.h.b16 %v5400
    %v5749 = vunpack.c.l.b16 %v5401
    %v5750 = vunpack.c.h.b16 %v5401
    %v5751 = vunpack.c.l.b16 %v5402
    %v5752 = vunpack.c.h.b16 %v5402
    %v5753 = vunpack.c.l.b16 %v5403
    %v5754 = vunpack.c.h.b16 %v5403
    %v5755 = vunpack.c.l.b16 %v5404
    %v5756 = vunpack.c.h.b16 %v5404
    %v5757 = vunpack.c.l.b16 %v5405
    %v5758 = vunpack.c.h.b16 %v5405
    %v5759 = vunpack.c.l.b16 %v5406
    %v5760 = vunpack.c.h.b16 %v5406
    %v5761 = vunpack.c.l.b16 %v5407
    %v5762 = vunpack.c.h.b16 %v5407
    %v5763 = vunpack.c.l.b16 %v5408
    %v5764 = vunpack.c.h.b16 %v5408
    %v5765 = vunpack.c.l.b16 %v5409
    %v5766 = vunpack.c.h.b16 %v5409
    %v5767 = vunpack.c.l.b16 %v5410
    %v5768 = vunpack.c.h.b16 %v5410
    %v5769 = vunpack.c.l.b16 %v5411
    %v5770 = vunpack.c.h.b16 %v5411
    %v5771 = vunpack.c.l.b16 %v5412
    %v5772 = vunpack.c.h.b16 %v5412
    %v5773 = vunpack.c.l.b16 %v5413
    %v5774 = vunpack.c.h.b16 %v5413
    %v5775 = vunpack.c.l.b16 %v5414
    %v5776 = vunpack.c.h.b16 %v5414
    %v5777 = vunpack.c.l.b16 %v5415
    %v5778 = vunpack.c.h.b16 %v5415
    %v5779 = vunpack.c.l.b16 %v5416
    %v5780 = vunpack.c.h.b16 %v5416
    %v5781 = vunpack.c.l.b16 %v5417
    %v5782 = vunpack.c.h.b16 %v5417
    %v5783 = vunpack.c.l.b16 %v5418
    %v5784 = vunpack.c.h.b16 %v5418
    %v5785 = vunpack.c.l.b16 %v5419
    %v5786 = vunpack.c.h.b16 %v5419
    %v5787 = vunpack.c.l.b16 %v5420
    %v5788 = vunpack.c.h.b16 %v5420
    %v5789 = vunpack.c.l.b16 %v5421
    %v5790 = vunpack.c.h.b16 %v5421
    %v5791 = vunpack.c.l.b16 %v5422
    %v5792 = vunpack.c.h.b16 %v5422
    %v5793 = vunpack.c.l.b16 %v5423
    %v5794 = vunpack.c.h.b16 %v5423
    %v5795 = vunpack.c.l.b16 %v5424
    %v5796 = vunpack.c.h.b16 %v5424
    %v5797 = vunpack.c.l.b16 %v5425
    %v5798 = vunpack.c.h.b16 %v5425
    %v5799 = vunpack.c.l.b16 %v5426
    %v5800 = vunpack.c.h.b16 %v5426
    %v5801 = vunpack.c.l.b16 %v5427
    %v5802 = vunpack.c.h.b16 %v5427
    %v5803 = vunpack.c.l.b16 %v5428
    %v5804 = vunpack.c.h.b16 %v5428
    %v5805 = vunpack.c.l.b16 %v5429
    %v5806 = vunpack.c.h.b16 %v5429
    %v5807 = vunpack.c.l.b16 %v5430
    %v5808 = vunpack.c.h.b16 %v5430
    %v5809 = vunpack.c.l.b16 %v5431
    %v5810 = vunpack.c.h.b16 %v5431
    %v5811 = vunpack.c.l.b16 %v5432
    %v5812 = vunpack.c.h.b16 %v5432
    %v5813 = vunpack.c.l.b16 %v5433
    %v5814 = vunpack.c.h.b16 %v5433
    %v5815 = vunpack.c.l.b16 %v5434
    %v5816 = vunpack.c.h.b16 %v5434
    %v5817 = vunpack.c.l.b16 %v5435
    %v5818 = vunpack.c.h.b16 %v5435
    %v5819 = vunpack.c.l.b16 %v5436
    %v5820 = vunpack.c.h.b16 %v5436
    %v5821 = vunpack.c.l.b16 %v5437
    %v5822 = vunpack.c.h.b16 %v5437
    %v5823 = vunpack.c.l.b16 %v5438
    %v5824 = vunpack.c.h.b16 %v5438
    %v5825 = vunpack.c.l.b16 %v5439
    %v5826 = vunpack.c.h.b16 %v5439
    %v5827 = vunpack.c.l.b16 %v5440
    %v5828 = vunpack.c.h.b16 %v5440
    %v5829 = vunpack.c.l.b16 %v5441
    %v5830 = vunpack.c.h.b16 %v5441
    %v5831 = vpack.c.b16 %v5583, %v5575
    %v5832 = vpack.c.b16 %v5584, %v5576
    %v5833 = vpack.c.b16 %v5585, %v5577
    %v5834 = vpack.c.b16 %v5586, %v5578
    %v5835 = vpack.c.b16 %v5587, %v5579
    %v5836 = vpack.c.b16 %v5588, %v5580
    %v5837 = vpack.c.b16 %v5589, %v5581
    %v5838 = vpack.c.b16 %v5590, %v5582
    %v5839 = vpack.c.b16 %v5599, %v5591
    %v5840 = vpack.c.b16 %v5600, %v5592
    %v5841 = vpack.c.b16 %v5601, %v5593
    %v5842 = vpack.c.b16 %v5602, %v5594
    %v5843 = vpack.c.b16 %v5603, %v5595
    %v5844 = vpack.c.b16 %v5604, %v5596
    %v5845 = vpack.c.b16 %v5605, %v5597
    %v5846 = vpack.c.b16 %v5606, %v5598
    %v5847 = vpack.c.b16 %v5615, %v5607
    %v5848 = vpack.c.b16 %v5616, %v5608
    %v5849 = vpack.c.b16 %v5617, %v5609
    %v5850 = vpack.c.b16 %v5618, %v5610
    %v5851 = vpack.c.b16 %v5619, %v5611
    %v5852 = vpack.c.b16 %v5620, %v5612
    %v5853 = vpack.c.b16 %v5621, %v5613
    %v5854 = vpack.c.b16 %v5622, %v5614
    %v5855 = vpack.c.b16 %v5631, %v5623
    %v5856 = vpack.c.b16 %v5632, %v5624
    %v5857 = vpack.c.b16 %v5633, %v5625
    %v5858 = vpack.c.b16 %v5634, %v5626
    %v5859 = vpack.c.b16 %v5635, %v5627
    %v5860 = vpack.c.b16 %v5636, %v5628
    %v5861 = vpack.c.b16 %v5637, %v5629
    %v5862 = vpack.c.b16 %v5638, %v5630
    %v5863 = vpack.c.b16 %v5647, %v5639
    %v5864 = vpack.c.b16 %v5648, %v5640
    %v5865 = vpack.c.b16 %v5649, %v5641
    %v5866 = vpack.c.b16 %v5650, %v5642
    %v5867 = vpack.c.b16 %v5651, %v5643
    %v5868 = vpack.c.b16 %v5652, %v5644
    %v5869 = vpack.c.b16 %v5653, %v5645
    %v5870 = vpack.c.b16 %v5654, %v5646
    %v5871 = vpack.c.b16 %v5663, %v5655
    %v5872 = vpack.c.b16 %v5664, %v5656
    %v5873 = vpack.c.b16 %v5665, %v5657
    %v5874 = vpack.c.b16 %v5666, %v5658
    %v5875 = vpack.c.b16 %v5667, %v5659
    %v5876 = vpack.c.b16 %v5668, %v5660
    %v5877 = vpack.c.b16 %v5669, %v5661
    %v5878 = vpack.c.b16 %v5670, %v5662
    %v5879 = vpack.c.b16 %v5679, %v5671
    %v5880 = vpack.c.b16 %v5680, %v5672
    %v5881 = vpack.c.b16 %v5681, %v5673
    %v5882 = vpack.c.b16 %v5682, %v5674
    %v5883 = vpack.c.b16 %v5683, %v5675
    %v5884 = vpack.c.b16 %v5684, %v5676
    %v5885 = vpack.c.b16 %v5685, %v5677
    %v5886 = vpack.c.b16 %v5686, %v5678
    %v5887 = vpack.c.b16 %v5695, %v5687
    %v5888 = vpack.c.b16 %v5696, %v5688
    %v5889 = vpack.c.b16 %v5697, %v5689
    %v5890 = vpack.c.b16 %v5698, %v5690
    %v5891 = vpack.c.b16 %v5699, %v5691
    %v5892 = vpack.c.b16 %v5700, %v5692
    %v5893 = vpack.c.b16 %v5701, %v5693
    %v5894 = vpack.c.b16 %v5702, %v5694
    %v5895 = vpack.c.b16 %v5711, %v5703
    %v5896 = vpack.c.b16 %v5712, %v5704
    %v5897 = vpack.c.b16 %v5713, %v5705
    %v5898 = vpack.c.b16 %v5714, %v5706
    %v5899 = vpack.c.b16 %v5715, %v5707
    %v5900 = vpack.c.b16 %v5716, %v5708
    %v5901 = vpack.c.b16 %v5717, %v5709
    %v5902 = vpack.c.b16 %v5718, %v5710
    %v5903 = vpack.c.b16 %v5727, %v5719
    %v5904 = vpack.c.b16 %v5728, %v5720
    %v5905 = vpack.c.b16 %v5729, %v5721
    %v5906 = vpack.c.b16 %v5730, %v5722
    %v5907 = vpack.c.b16 %v5731, %v5723
    %v5908 = vpack.c.b16 %v5732, %v5724
    %v5909 = vpack.c.b16 %v5733, %v5725
    %v5910 = vpack.c.b16 %v5734, %v5726
    %v5911 = vpack.c.b16 %v5743, %v5735
    %v5912 = vpack.c.b16 %v5744, %v5736
    %v5913 = vpack.c.b16 %v5745, %v5737
    %v5914 = vpack.c.b16 %v5746, %v5738
    %v5915 = vpack.c.b16 %v5747, %v5739
    %v5916 = vpack.c.b16 %v5748, %v5740
    %v5917 = vpack.c.b16 %v5749, %v5741
    %v5918 = vpack.c.b16 %v5750, %v5742
    %v5919 = vpack.c.b16 %v5759, %v5751
    %v5920 = vpack.c.b16 %v5760, %v5752
    %v5921 = vpack.c.b16 %v5761, %v5753
    %v5922 = vpack.c.b16 %v5762, %v5754
    %v5923 = vpack.c.b16 %v5763, %v5755
    %v5924 = vpack.c.b16 %v5764, %v5756
    %v5925 = vpack.c.b16 %v5765, %v5757
    %v5926 = vpack.c.b16 %v5766, %v5758
    %v5927 = vpack.c.b16 %v5775, %v5767
    %v5928 = vpack.c.b16 %v5776, %v5768
    %v5929 = vpack.c.b16 %v5777, %v5769
    %v5930 = vpack.c.b16 %v5778, %v5770
    %v5931 = vpack.c.b16 %v5779, %v5771
    %v5932 = vpack.c.b16 %v5780, %v5772
    %v5933 = vpack.c.b16 %v5781, %v5773
    %v5934 = vpack.c.b16 %v5782, %v5774
    %v5935 = vpack.c.b16 %v5791, %v5783
    %v5936 = vpack.c.b16 %v5792, %v5784
    %v5937 = vpack.c.b16 %v5793, %v5785
    %v5938 = vpack.c.b16 %v5794, %v5786
    %v5939 = vpack.c.b16 %v5795, %v5787
    %v5940 = vpack.c.b16 %v5796, %v5788
    %v5941 = vpack.c.b16 %v5797, %v5789
    %v5942 = vpack.c.b16 %v5798, %v5790
    %v5943 = vpack.c.b16 %v5807, %v5799
    %v5944 = vpack.c.b16 %v5808, %v5800
    %v5945 = vpack.c.b16 %v5809, %v5801
    %v5946 = vpack.c.b16 %v5810, %v5802
    %v5947 = vpack.c.b16 %v5811, %v5803
    %v5948 = vpack.c.b16 %v5812, %v5804
    %v5949 = vpack.c.b16 %v5813, %v5805
    %v5950 = vpack.c.b16 %v5814, %v5806
    %v5951 = vpack.c.b16 %v5823, %v5815
    %v5952 = vpack.c.b16 %v5824, %v5816
    %v5953 = vpack.c.b16 %v5825, %v5817
    %v5954 = vpack.c.b16 %v5826, %v5818
    %v5955 = vpack.c.b16 %v5827, %v5819
    %v5956 = vpack.c.b16 %v5828, %v5820
    %v5957 = vpack.c.b16 %v5829, %v5821
    %v5958 = vpack.c.b16 %v5830, %v5822
    %6087 = vmatprep.subr.bf16.mxu0 %v5888
    %6088 = vmatpush1.bf16.msra.mxu0 %v5887
    %6089 = vmatprep.subr.bf16.mxu0 %v5880
    %6090 = vmatpush1.bf16.msra.mxu0 %v5879
    %6091 = vmatprep.subr.bf16.mxu0 %v5872
    %6092 = vmatpush1.bf16.msra.mxu0 %v5871
    %6093 = vmatprep.subr.bf16.mxu0 %v5864
    %6094 = vmatpush1.bf16.msra.mxu0 %v5863
    %6095 = vmatprep.subr.bf16.mxu0 %v5856
    %6096 = vmatpush1.bf16.msra.mxu0 %v5855
    %6097 = vmatprep.subr.bf16.mxu0 %v5848
    %6098 = vmatpush1.bf16.msra.mxu0 %v5847
    %6099 = vmatprep.subr.bf16.mxu0 %v5840
    %6100 = vmatpush1.bf16.msra.mxu0 %v5839
    %6101 = vmatprep.subr.bf16.mxu0 %v5832
    %6102 = vmatpush1.bf16.msra.mxu0 %v5831
    %6103 = vmatprep.subr.bf16.mxu0 %v5952
    %6104 = vmatpush2.bf16.msra.mxu0 %v5951
    %6105 = vmatprep.subr.bf16.mxu0 %v5944
    %6106 = vmatpush2.bf16.msra.mxu0 %v5943
    %6107 = vmatprep.subr.bf16.mxu0 %v5936
    %6108 = vmatpush2.bf16.msra.mxu0 %v5935
    %6109 = vmatprep.subr.bf16.mxu0 %v5928
    %6110 = vmatpush2.bf16.msra.mxu0 %v5927
    %6111 = vmatprep.subr.bf16.mxu0 %v5920
    %6112 = vmatpush2.bf16.msra.mxu0 %v5919
    %6113 = vmatprep.subr.bf16.mxu0 %v5912
    %6114 = vmatpush2.bf16.msra.mxu0 %v5911
    %6115 = vmatprep.subr.bf16.mxu0 %v5904
    %6116 = vmatpush2.bf16.msra.mxu0 %v5903
    %6117 = vmatprep.subr.bf16.mxu0 %v5896
    %6118 = vmatpush2.bf16.msra.mxu0 %v5895
    %6119 = vmatprep.mubr.bf16.mxu0 %v5444
    %6120 = vmatmul.mubr.bf16.gmra.mxu0 %v5443
    %v6121 = vpop.f32.mrf.mxu0
    %v6122 = vadd.f32 0.0, %v6121
    %v6123 = vpop.f32.mrf.mxu0
    %v6124 = vadd.f32 0.0, %v6123
    %v6125 = vpop.f32.mrf.mxu0
    %v6126 = vpop.f32.mrf.mxu0
    %6127 = vdwg.mxu0
    %6128 = vmatprep.subr.bf16.mxu0 %v5890
    %6129 = vmatpush1.bf16.msra.mxu0 %v5889
    %6130 = vmatprep.subr.bf16.mxu0 %v5882
    %6131 = vmatpush1.bf16.msra.mxu0 %v5881
    %6132 = vmatprep.subr.bf16.mxu0 %v5874
    %6133 = vmatpush1.bf16.msra.mxu0 %v5873
    %6134 = vmatprep.subr.bf16.mxu0 %v5866
    %6135 = vmatpush1.bf16.msra.mxu0 %v5865
    %6136 = vmatprep.subr.bf16.mxu0 %v5858
    %6137 = vmatpush1.bf16.msra.mxu0 %v5857
    %6138 = vmatprep.subr.bf16.mxu0 %v5850
    %6139 = vmatpush1.bf16.msra.mxu0 %v5849
    %6140 = vmatprep.subr.bf16.mxu0 %v5842
    %6141 = vmatpush1.bf16.msra.mxu0 %v5841
    %6142 = vmatprep.subr.bf16.mxu0 %v5834
    %6143 = vmatpush1.bf16.msra.mxu0 %v5833
    %6144 = vmatprep.subr.bf16.mxu0 %v5954
    %6145 = vmatpush2.bf16.msra.mxu0 %v5953
    %6146 = vmatprep.subr.bf16.mxu0 %v5946
    %6147 = vmatpush2.bf16.msra.mxu0 %v5945
    %6148 = vmatprep.subr.bf16.mxu0 %v5938
    %6149 = vmatpush2.bf16.msra.mxu0 %v5937
    %6150 = vmatprep.subr.bf16.mxu0 %v5930
    %6151 = vmatpush2.bf16.msra.mxu0 %v5929
    %6152 = vmatprep.subr.bf16.mxu0 %v5922
    %6153 = vmatpush2.bf16.msra.mxu0 %v5921
    %6154 = vmatprep.subr.bf16.mxu0 %v5914
    %6155 = vmatpush2.bf16.msra.mxu0 %v5913
    %6156 = vmatprep.subr.bf16.mxu0 %v5906
    %6157 = vmatpush2.bf16.msra.mxu0 %v5905
    %6158 = vmatprep.subr.bf16.mxu0 %v5898
    %6159 = vmatpush2.bf16.msra.mxu0 %v5897
    %6160 = vmatprep.mubr.bf16.mxu0 %v5444
    %6161 = vmatmul.mubr.bf16.gmra.mxu0 %v5443
    %v6162 = vpop.f32.mrf.mxu0
    %v6163 = vadd.f32 0.0, %v6162
    %v6164 = vpop.f32.mrf.mxu0
    %v6165 = vadd.f32 0.0, %v6164
    %v6166 = vpop.f32.mrf.mxu0
    %v6167 = vpop.f32.mrf.mxu0
    %6168 = vdwg.mxu0
    %6169 = vmatprep.subr.bf16.mxu0 %v5892
    %6170 = vmatpush1.bf16.msra.mxu0 %v5891
    %6171 = vmatprep.subr.bf16.mxu0 %v5884
    %6172 = vmatpush1.bf16.msra.mxu0 %v5883
    %6173 = vmatprep.subr.bf16.mxu0 %v5876
    %6174 = vmatpush1.bf16.msra.mxu0 %v5875
    %6175 = vmatprep.subr.bf16.mxu0 %v5868
    %6176 = vmatpush1.bf16.msra.mxu0 %v5867
    %6177 = vmatprep.subr.bf16.mxu0 %v5860
    %6178 = vmatpush1.bf16.msra.mxu0 %v5859
    %6179 = vmatprep.subr.bf16.mxu0 %v5852
    %6180 = vmatpush1.bf16.msra.mxu0 %v5851
    %6181 = vmatprep.subr.bf16.mxu0 %v5844
    %6182 = vmatpush1.bf16.msra.mxu0 %v5843
    %6183 = vmatprep.subr.bf16.mxu0 %v5836
    %6184 = vmatpush1.bf16.msra.mxu0 %v5835
    %6185 = vmatprep.subr.bf16.mxu0 %v5956
    %6186 = vmatpush2.bf16.msra.mxu0 %v5955
    %6187 = vmatprep.subr.bf16.mxu0 %v5948
    %6188 = vmatpush2.bf16.msra.mxu0 %v5947
    %6189 = vmatprep.subr.bf16.mxu0 %v5940
    %6190 = vmatpush2.bf16.msra.mxu0 %v5939
    %6191 = vmatprep.subr.bf16.mxu0 %v5932
    %6192 = vmatpush2.bf16.msra.mxu0 %v5931
    %6193 = vmatprep.subr.bf16.mxu0 %v5924
    %6194 = vmatpush2.bf16.msra.mxu0 %v5923
    %6195 = vmatprep.subr.bf16.mxu0 %v5916
    %6196 = vmatpush2.bf16.msra.mxu0 %v5915
    %6197 = vmatprep.subr.bf16.mxu0 %v5908
    %6198 = vmatpush2.bf16.msra.mxu0 %v5907
    %6199 = vmatprep.subr.bf16.mxu0 %v5900
    %6200 = vmatpush2.bf16.msra.mxu0 %v5899
    %6201 = vmatprep.mubr.bf16.mxu0 %v5444
    %6202 = vmatmul.mubr.bf16.gmra.mxu0 %v5443
    %v6203 = vpop.f32.mrf.mxu0
    %v6204 = vadd.f32 0.0, %v6203
    %v6205 = vpop.f32.mrf.mxu0
    %v6206 = vadd.f32 0.0, %v6205
    %v6207 = vpop.f32.mrf.mxu0
    %v6208 = vpop.f32.mrf.mxu0
    %6209 = vdwg.mxu0
    %6210 = vmatprep.subr.bf16.mxu0 %v5894
    %6211 = vmatpush1.bf16.msra.mxu0 %v5893
    %6212 = vmatprep.subr.bf16.mxu0 %v5886
    %6213 = vmatpush1.bf16.msra.mxu0 %v5885
    %6214 = vmatprep.subr.bf16.mxu0 %v5878
    %6215 = vmatpush1.bf16.msra.mxu0 %v5877
    %6216 = vmatprep.subr.bf16.mxu0 %v5870
    %6217 = vmatpush1.bf16.msra.mxu0 %v5869
    %6218 = vmatprep.subr.bf16.mxu0 %v5862
    %6219 = vmatpush1.bf16.msra.mxu0 %v5861
    %6220 = vmatprep.subr.bf16.mxu0 %v5854
    %6221 = vmatpush1.bf16.msra.mxu0 %v5853
    %6222 = vmatprep.subr.bf16.mxu0 %v5846
    %6223 = vmatpush1.bf16.msra.mxu0 %v5845
    %6224 = vmatprep.subr.bf16.mxu0 %v5838
    %6225 = vmatpush1.bf16.msra.mxu0 %v5837
    %6226 = vmatprep.subr.bf16.mxu0 %v5958
    %6227 = vmatpush2.bf16.msra.mxu0 %v5957
    %6228 = vmatprep.subr.bf16.mxu0 %v5950
    %6229 = vmatpush2.bf16.msra.mxu0 %v5949
    %6230 = vmatprep.subr.bf16.mxu0 %v5942
    %6231 = vmatpush2.bf16.msra.mxu0 %v5941
    %6232 = vmatprep.subr.bf16.mxu0 %v5934
    %6233 = vmatpush2.bf16.msra.mxu0 %v5933
    %6234 = vmatprep.subr.bf16.mxu0 %v5926
    %6235 = vmatpush2.bf16.msra.mxu0 %v5925
    %6236 = vmatprep.subr.bf16.mxu0 %v5918
    %6237 = vmatpush2.bf16.msra.mxu0 %v5917
    %6238 = vmatprep.subr.bf16.mxu0 %v5910
    %6239 = vmatpush2.bf16.msra.mxu0 %v5909
    %6240 = vmatprep.subr.bf16.mxu0 %v5902
    %6241 = vmatpush2.bf16.msra.mxu0 %v5901
    %6242 = vmatprep.mubr.bf16.mxu0 %v5444
    %6243 = vmatmul.mubr.bf16.gmra.mxu0 %v5443
    %v6244 = vpop.f32.mrf.mxu0
    %v6245 = vadd.f32 0.0, %v6244
    %v6246 = vpop.f32.mrf.mxu0
    %v6247 = vadd.f32 0.0, %v6246
    %v6248 = vpop.f32.mrf.mxu0
    %v6249 = vpop.f32.mrf.mxu0
    %6250 = vdwg.mxu0
    %v6251 = vadd.f32 %v6204, %v1175
    %v6252 = vadd.f32 %v6206, %v1179
    %v6253 = vadd.f32 %v6245, %v1183
    %v6254 = vadd.f32 %v6247, %v1187
    %v6255 = vxor.u32 %v6251, 2147483648
    %v6256 = vmul.f32 %v6255, 1.442695
    %v6257 = vpow.pop %v6256
    %v6258 = vadd.f32 %v6257, 1.0
    %v6259 = vrcp.pop %v6258
    %v6260 = vmul.f32 1.0, %v6259
    %v6261 = vxor.u32 %v6252, 2147483648
    %v6262 = vmul.f32 %v6261, 1.442695
    %v6263 = vpow.pop %v6262
    %v6264 = vadd.f32 %v6263, 1.0
    %v6265 = vrcp.pop %v6264
    %v6266 = vmul.f32 1.0, %v6265
    %v6267 = vtanh.pop %v6253
    %v6268 = vxor.u32 %v6254, 2147483648
    %v6269 = vmul.f32 %v6268, 1.442695
    %v6270 = vpow.pop %v6269
    %v6271 = vadd.f32 %v6270, 1.0
    %v6272 = vrcp.pop %v6271
    %v6273 = vmul.f32 1.0, %v6272
    %v6274 = vmul.f32 %v6266, %v5263
    %v6275 = vmul.f32 %v6260, %v6267
    %v6276 = vadd.f32 %v6274, %v6275
    %v6277 = vtanh.pop %v6276
    %v6278 = vmul.f32 %v6273, %v6277
    %v6279 = vpack.c.bf16 %v6278, %v6278
    %v6281 = vunpack.c.l.b16 %v6279
    %v6282 = vpack.c.b16 %v6281, %v6281
    %v6283 = vrot.slane %v6282, 7
    %6285 = vst [vmem:[#allocation2 + $0x4] sm:$0x2] %v6283
    %v6290 = vrot.slane %v6122, 4
    %v6291 = vrot.slane %v6124, 4
    %v6292 = vrot.slane %v6163, 4
    %v6293 = vrot.slane %v6165, 4
    %v6298 = vadd.f32 %v166, %v6290
    %v6299 = vadd.f32 %v168, %v6291
    %v6300 = vadd.f32 %v209, %v6292
    %v6301 = vadd.f32 %v211, %v6293
    %v6302 = vxor.u32 %v6298, 2147483648
    %v6303 = vmul.f32 %v6302, 1.442695
    %v6304 = vpow.pop %v6303
    %v6305 = vadd.f32 %v6304, 1.0
    %v6306 = vrcp.pop %v6305
    %v6307 = vmul.f32 1.0, %v6306
    %v6308 = vxor.u32 %v6299, 2147483648
    %v6309 = vmul.f32 %v6308, 1.442695
    %v6310 = vpow.pop %v6309
    %v6311 = vadd.f32 %v6310, 1.0
    %v6312 = vrcp.pop %v6311
    %v6313 = vmul.f32 1.0, %v6312
    %v6314 = vtanh.pop %v6300
    %v6315 = vxor.u32 %v6301, 2147483648
    %v6316 = vmul.f32 %v6315, 1.442695
    %v6317 = vpow.pop %v6316
    %v6318 = vadd.f32 %v6317, 1.0
    %v6319 = vrcp.pop %v6318
    %v6320 = vmul.f32 1.0, %v6319
    %v6322 = vrot.slane %v5308, 6
    %v6324 = vmul.f32 %v6313, %v6322
    %v6325 = vmul.f32 %v6307, %v6314
    %v6326 = vadd.f32 %v6324, %v6325
    %v6327 = vtanh.pop %v6326
    %v6328 = vmul.f32 %v6320, %v6327
    %v6329 = vpack.c.bf16 %v6328, %v6328
    %v6330 = vrot.slane %v6279, 6
    %v6331 = vld [vmem:[#allocation7] sm:$0xff]
    %v6332 = vld [vmem:[#allocation7 + $0x8] sm:$0xff]
    %v6333 = vld [vmem:[#allocation7 + $0x10] sm:$0xff]
    %v6334 = vld [vmem:[#allocation7 + $0x18] sm:$0xff]
    %v6335 = vld [vmem:[#allocation7 + $0x20] sm:$0xff]
    %v6336 = vld [vmem:[#allocation7 + $0x28] sm:$0xff]
    %v6337 = vld [vmem:[#allocation7 + $0x30] sm:$0xff]
    %v6338 = vld [vmem:[#allocation7 + $0x38] sm:$0xff]
    %v6339 = vld [vmem:[#allocation7 + $0x40] sm:$0xff]
    %v6340 = vld [vmem:[#allocation7 + $0x48] sm:$0xff]
    %v6341 = vld [vmem:[#allocation7 + $0x50] sm:$0xff]
    %v6342 = vld [vmem:[#allocation7 + $0x58] sm:$0xff]
    %v6343 = vld [vmem:[#allocation7 + $0x60] sm:$0xff]
    %v6344 = vld [vmem:[#allocation7 + $0x68] sm:$0xff]
    %v6345 = vld [vmem:[#allocation7 + $0x70] sm:$0xff]
    %v6346 = vld [vmem:[#allocation7 + $0x78] sm:$0xff]
    %v6347 = vld [vmem:[#allocation7 + $0x80] sm:$0xff]
    %v6348 = vld [vmem:[#allocation7 + $0x88] sm:$0xff]
    %v6349 = vld [vmem:[#allocation7 + $0x90] sm:$0xff]
    %v6350 = vld [vmem:[#allocation7 + $0x98] sm:$0xff]
    %v6351 = vld [vmem:[#allocation7 + $0xa0] sm:$0xff]
    %v6352 = vld [vmem:[#allocation7 + $0xa8] sm:$0xff]
    %v6353 = vld [vmem:[#allocation7 + $0xb0] sm:$0xff]
    %v6354 = vld [vmem:[#allocation7 + $0xb8] sm:$0xff]
    %v6355 = vld [vmem:[#allocation7 + $0xc0] sm:$0xff]
    %v6356 = vld [vmem:[#allocation7 + $0xc8] sm:$0xff]
    %v6357 = vld [vmem:[#allocation7 + $0xd0] sm:$0xff]
    %v6358 = vld [vmem:[#allocation7 + $0xd8] sm:$0xff]
    %v6359 = vld [vmem:[#allocation7 + $0xe0] sm:$0xff]
    %v6360 = vld [vmem:[#allocation7 + $0xe8] sm:$0xff]
    %v6361 = vld [vmem:[#allocation7 + $0xf0] sm:$0xff]
    %v6362 = vld [vmem:[#allocation7 + $0xf8] sm:$0xff]
    %v6363 = vld [vmem:[#allocation7 + $0x100] sm:$0xff]
    %v6364 = vld [vmem:[#allocation7 + $0x108] sm:$0xff]
    %v6365 = vld [vmem:[#allocation7 + $0x110] sm:$0xff]
    %v6366 = vld [vmem:[#allocation7 + $0x118] sm:$0xff]
    %v6367 = vld [vmem:[#allocation7 + $0x120] sm:$0xff]
    %v6368 = vld [vmem:[#allocation7 + $0x128] sm:$0xff]
    %v6369 = vld [vmem:[#allocation7 + $0x130] sm:$0xff]
    %v6370 = vld [vmem:[#allocation7 + $0x138] sm:$0xff]
    %v6371 = vld [vmem:[#allocation7 + $0x140] sm:$0xff]
    %v6372 = vld [vmem:[#allocation7 + $0x148] sm:$0xff]
    %v6373 = vld [vmem:[#allocation7 + $0x150] sm:$0xff]
    %v6374 = vld [vmem:[#allocation7 + $0x158] sm:$0xff]
    %v6375 = vld [vmem:[#allocation7 + $0x160] sm:$0xff]
    %v6376 = vld [vmem:[#allocation7 + $0x168] sm:$0xff]
    %v6377 = vld [vmem:[#allocation7 + $0x170] sm:$0xff]
    %v6378 = vld [vmem:[#allocation7 + $0x178] sm:$0xff]
    %v6379 = vld [vmem:[#allocation7 + $0x180] sm:$0xff]
    %v6380 = vld [vmem:[#allocation7 + $0x188] sm:$0xff]
    %v6381 = vld [vmem:[#allocation7 + $0x190] sm:$0xff]
    %v6382 = vld [vmem:[#allocation7 + $0x198] sm:$0xff]
    %v6383 = vld [vmem:[#allocation7 + $0x1a0] sm:$0xff]
    %v6384 = vld [vmem:[#allocation7 + $0x1a8] sm:$0xff]
    %v6385 = vld [vmem:[#allocation7 + $0x1b0] sm:$0xff]
    %v6386 = vld [vmem:[#allocation7 + $0x1b8] sm:$0xff]
    %v6387 = vld [vmem:[#allocation7 + $0x1c0] sm:$0xff]
    %v6388 = vld [vmem:[#allocation7 + $0x1c8] sm:$0xff]
    %v6389 = vld [vmem:[#allocation7 + $0x1d0] sm:$0xff]
    %v6390 = vld [vmem:[#allocation7 + $0x1d8] sm:$0xff]
    %v6391 = vld [vmem:[#allocation7 + $0x1e0] sm:$0xff]
    %v6392 = vld [vmem:[#allocation7 + $0x1e8] sm:$0xff]
    %v6393 = vld [vmem:[#allocation7 + $0x1f0] sm:$0xff]
    %v6394 = vld [vmem:[#allocation7 + $0x1f8] sm:$0xff]
    %v6395 = vld [vmem:[#allocation7 + $0x200] sm:$0xff]
    %v6396 = vld [vmem:[#allocation7 + $0x208] sm:$0xff]
    %v6397 = vld [vmem:[#allocation7 + $0x210] sm:$0xff]
    %v6398 = vld [vmem:[#allocation7 + $0x218] sm:$0xff]
    %v6399 = vld [vmem:[#allocation7 + $0x220] sm:$0xff]
    %v6400 = vld [vmem:[#allocation7 + $0x228] sm:$0xff]
    %v6401 = vld [vmem:[#allocation7 + $0x230] sm:$0xff]
    %v6402 = vld [vmem:[#allocation7 + $0x238] sm:$0xff]
    %v6403 = vld [vmem:[#allocation7 + $0x240] sm:$0xff]
    %v6404 = vld [vmem:[#allocation7 + $0x248] sm:$0xff]
    %v6405 = vld [vmem:[#allocation7 + $0x250] sm:$0xff]
    %v6406 = vld [vmem:[#allocation7 + $0x258] sm:$0xff]
    %v6407 = vld [vmem:[#allocation7 + $0x260] sm:$0xff]
    %v6408 = vld [vmem:[#allocation7 + $0x268] sm:$0xff]
    %v6409 = vld [vmem:[#allocation7 + $0x270] sm:$0xff]
    %v6410 = vld [vmem:[#allocation7 + $0x278] sm:$0xff]
    %v6411 = vld [vmem:[#allocation7 + $0x280] sm:$0xff]
    %v6412 = vld [vmem:[#allocation7 + $0x288] sm:$0xff]
    %v6413 = vld [vmem:[#allocation7 + $0x290] sm:$0xff]
    %v6414 = vld [vmem:[#allocation7 + $0x298] sm:$0xff]
    %v6415 = vld [vmem:[#allocation7 + $0x2a0] sm:$0xff]
    %v6416 = vld [vmem:[#allocation7 + $0x2a8] sm:$0xff]
    %v6417 = vld [vmem:[#allocation7 + $0x2b0] sm:$0xff]
    %v6418 = vld [vmem:[#allocation7 + $0x2b8] sm:$0xff]
    %v6419 = vld [vmem:[#allocation7 + $0x2c0] sm:$0xff]
    %v6420 = vld [vmem:[#allocation7 + $0x2c8] sm:$0xff]
    %v6421 = vld [vmem:[#allocation7 + $0x2d0] sm:$0xff]
    %v6422 = vld [vmem:[#allocation7 + $0x2d8] sm:$0xff]
    %v6423 = vld [vmem:[#allocation7 + $0x2e0] sm:$0xff]
    %v6424 = vld [vmem:[#allocation7 + $0x2e8] sm:$0xff]
    %v6425 = vld [vmem:[#allocation7 + $0x2f0] sm:$0xff]
    %v6426 = vld [vmem:[#allocation7 + $0x2f8] sm:$0xff]
    %v6427 = vld [vmem:[#allocation7 + $0x300] sm:$0xff]
    %v6428 = vld [vmem:[#allocation7 + $0x308] sm:$0xff]
    %v6429 = vld [vmem:[#allocation7 + $0x310] sm:$0xff]
    %v6430 = vld [vmem:[#allocation7 + $0x318] sm:$0xff]
    %v6431 = vld [vmem:[#allocation7 + $0x320] sm:$0xff]
    %v6432 = vld [vmem:[#allocation7 + $0x328] sm:$0xff]
    %v6433 = vld [vmem:[#allocation7 + $0x330] sm:$0xff]
    %v6434 = vld [vmem:[#allocation7 + $0x338] sm:$0xff]
    %v6435 = vld [vmem:[#allocation7 + $0x340] sm:$0xff]
    %v6436 = vld [vmem:[#allocation7 + $0x348] sm:$0xff]
    %v6437 = vld [vmem:[#allocation7 + $0x350] sm:$0xff]
    %v6438 = vld [vmem:[#allocation7 + $0x358] sm:$0xff]
    %v6439 = vld [vmem:[#allocation7 + $0x360] sm:$0xff]
    %v6440 = vld [vmem:[#allocation7 + $0x368] sm:$0xff]
    %v6441 = vld [vmem:[#allocation7 + $0x370] sm:$0xff]
    %v6442 = vld [vmem:[#allocation7 + $0x378] sm:$0xff]
    %v6443 = vld [vmem:[#allocation7 + $0x380] sm:$0xff]
    %v6444 = vld [vmem:[#allocation7 + $0x388] sm:$0xff]
    %v6445 = vld [vmem:[#allocation7 + $0x390] sm:$0xff]
    %v6446 = vld [vmem:[#allocation7 + $0x398] sm:$0xff]
    %v6447 = vld [vmem:[#allocation7 + $0x3a0] sm:$0xff]
    %v6448 = vld [vmem:[#allocation7 + $0x3a8] sm:$0xff]
    %v6449 = vld [vmem:[#allocation7 + $0x3b0] sm:$0xff]
    %v6450 = vld [vmem:[#allocation7 + $0x3b8] sm:$0xff]
    %v6451 = vld [vmem:[#allocation7 + $0x3c0] sm:$0xff]
    %v6452 = vld [vmem:[#allocation7 + $0x3c8] sm:$0xff]
    %v6453 = vld [vmem:[#allocation7 + $0x3d0] sm:$0xff]
    %v6454 = vld [vmem:[#allocation7 + $0x3d8] sm:$0xff]
    %v6455 = vld [vmem:[#allocation7 + $0x3e0] sm:$0xff]
    %v6456 = vld [vmem:[#allocation7 + $0x3e8] sm:$0xff]
    %v6457 = vld [vmem:[#allocation7 + $0x3f0] sm:$0xff]
    %v6458 = vld [vmem:[#allocation7 + $0x3f8] sm:$0xff]
    %v6460 = vrot.slane %v6329, 2
    %v6461 = vrot.slane %v6330, 2
    %v6592 = vunpack.c.l.b16 %v6331
    %v6593 = vunpack.c.h.b16 %v6331
    %v6594 = vunpack.c.l.b16 %v6332
    %v6595 = vunpack.c.h.b16 %v6332
    %v6596 = vunpack.c.l.b16 %v6333
    %v6597 = vunpack.c.h.b16 %v6333
    %v6598 = vunpack.c.l.b16 %v6334
    %v6599 = vunpack.c.h.b16 %v6334
    %v6600 = vunpack.c.l.b16 %v6335
    %v6601 = vunpack.c.h.b16 %v6335
    %v6602 = vunpack.c.l.b16 %v6336
    %v6603 = vunpack.c.h.b16 %v6336
    %v6604 = vunpack.c.l.b16 %v6337
    %v6605 = vunpack.c.h.b16 %v6337
    %v6606 = vunpack.c.l.b16 %v6338
    %v6607 = vunpack.c.h.b16 %v6338
    %v6608 = vunpack.c.l.b16 %v6339
    %v6609 = vunpack.c.h.b16 %v6339
    %v6610 = vunpack.c.l.b16 %v6340
    %v6611 = vunpack.c.h.b16 %v6340
    %v6612 = vunpack.c.l.b16 %v6341
    %v6613 = vunpack.c.h.b16 %v6341
    %v6614 = vunpack.c.l.b16 %v6342
    %v6615 = vunpack.c.h.b16 %v6342
    %v6616 = vunpack.c.l.b16 %v6343
    %v6617 = vunpack.c.h.b16 %v6343
    %v6618 = vunpack.c.l.b16 %v6344
    %v6619 = vunpack.c.h.b16 %v6344
    %v6620 = vunpack.c.l.b16 %v6345
    %v6621 = vunpack.c.h.b16 %v6345
    %v6622 = vunpack.c.l.b16 %v6346
    %v6623 = vunpack.c.h.b16 %v6346
    %v6624 = vunpack.c.l.b16 %v6347
    %v6625 = vunpack.c.h.b16 %v6347
    %v6626 = vunpack.c.l.b16 %v6348
    %v6627 = vunpack.c.h.b16 %v6348
    %v6628 = vunpack.c.l.b16 %v6349
    %v6629 = vunpack.c.h.b16 %v6349
    %v6630 = vunpack.c.l.b16 %v6350
    %v6631 = vunpack.c.h.b16 %v6350
    %v6632 = vunpack.c.l.b16 %v6351
    %v6633 = vunpack.c.h.b16 %v6351
    %v6634 = vunpack.c.l.b16 %v6352
    %v6635 = vunpack.c.h.b16 %v6352
    %v6636 = vunpack.c.l.b16 %v6353
    %v6637 = vunpack.c.h.b16 %v6353
    %v6638 = vunpack.c.l.b16 %v6354
    %v6639 = vunpack.c.h.b16 %v6354
    %v6640 = vunpack.c.l.b16 %v6355
    %v6641 = vunpack.c.h.b16 %v6355
    %v6642 = vunpack.c.l.b16 %v6356
    %v6643 = vunpack.c.h.b16 %v6356
    %v6644 = vunpack.c.l.b16 %v6357
    %v6645 = vunpack.c.h.b16 %v6357
    %v6646 = vunpack.c.l.b16 %v6358
    %v6647 = vunpack.c.h.b16 %v6358
    %v6648 = vunpack.c.l.b16 %v6359
    %v6649 = vunpack.c.h.b16 %v6359
    %v6650 = vunpack.c.l.b16 %v6360
    %v6651 = vunpack.c.h.b16 %v6360
    %v6652 = vunpack.c.l.b16 %v6361
    %v6653 = vunpack.c.h.b16 %v6361
    %v6654 = vunpack.c.l.b16 %v6362
    %v6655 = vunpack.c.h.b16 %v6362
    %v6656 = vunpack.c.l.b16 %v6363
    %v6657 = vunpack.c.h.b16 %v6363
    %v6658 = vunpack.c.l.b16 %v6364
    %v6659 = vunpack.c.h.b16 %v6364
    %v6660 = vunpack.c.l.b16 %v6365
    %v6661 = vunpack.c.h.b16 %v6365
    %v6662 = vunpack.c.l.b16 %v6366
    %v6663 = vunpack.c.h.b16 %v6366
    %v6664 = vunpack.c.l.b16 %v6367
    %v6665 = vunpack.c.h.b16 %v6367
    %v6666 = vunpack.c.l.b16 %v6368
    %v6667 = vunpack.c.h.b16 %v6368
    %v6668 = vunpack.c.l.b16 %v6369
    %v6669 = vunpack.c.h.b16 %v6369
    %v6670 = vunpack.c.l.b16 %v6370
    %v6671 = vunpack.c.h.b16 %v6370
    %v6672 = vunpack.c.l.b16 %v6371
    %v6673 = vunpack.c.h.b16 %v6371
    %v6674 = vunpack.c.l.b16 %v6372
    %v6675 = vunpack.c.h.b16 %v6372
    %v6676 = vunpack.c.l.b16 %v6373
    %v6677 = vunpack.c.h.b16 %v6373
    %v6678 = vunpack.c.l.b16 %v6374
    %v6679 = vunpack.c.h.b16 %v6374
    %v6680 = vunpack.c.l.b16 %v6375
    %v6681 = vunpack.c.h.b16 %v6375
    %v6682 = vunpack.c.l.b16 %v6376
    %v6683 = vunpack.c.h.b16 %v6376
    %v6684 = vunpack.c.l.b16 %v6377
    %v6685 = vunpack.c.h.b16 %v6377
    %v6686 = vunpack.c.l.b16 %v6378
    %v6687 = vunpack.c.h.b16 %v6378
    %v6688 = vunpack.c.l.b16 %v6379
    %v6689 = vunpack.c.h.b16 %v6379
    %v6690 = vunpack.c.l.b16 %v6380
    %v6691 = vunpack.c.h.b16 %v6380
    %v6692 = vunpack.c.l.b16 %v6381
    %v6693 = vunpack.c.h.b16 %v6381
    %v6694 = vunpack.c.l.b16 %v6382
    %v6695 = vunpack.c.h.b16 %v6382
    %v6696 = vunpack.c.l.b16 %v6383
    %v6697 = vunpack.c.h.b16 %v6383
    %v6698 = vunpack.c.l.b16 %v6384
    %v6699 = vunpack.c.h.b16 %v6384
    %v6700 = vunpack.c.l.b16 %v6385
    %v6701 = vunpack.c.h.b16 %v6385
    %v6702 = vunpack.c.l.b16 %v6386
    %v6703 = vunpack.c.h.b16 %v6386
    %v6704 = vunpack.c.l.b16 %v6387
    %v6705 = vunpack.c.h.b16 %v6387
    %v6706 = vunpack.c.l.b16 %v6388
    %v6707 = vunpack.c.h.b16 %v6388
    %v6708 = vunpack.c.l.b16 %v6389
    %v6709 = vunpack.c.h.b16 %v6389
    %v6710 = vunpack.c.l.b16 %v6390
    %v6711 = vunpack.c.h.b16 %v6390
    %v6712 = vunpack.c.l.b16 %v6391
    %v6713 = vunpack.c.h.b16 %v6391
    %v6714 = vunpack.c.l.b16 %v6392
    %v6715 = vunpack.c.h.b16 %v6392
    %v6716 = vunpack.c.l.b16 %v6393
    %v6717 = vunpack.c.h.b16 %v6393
    %v6718 = vunpack.c.l.b16 %v6394
    %v6719 = vunpack.c.h.b16 %v6394
    %v6720 = vunpack.c.l.b16 %v6395
    %v6721 = vunpack.c.h.b16 %v6395
    %v6722 = vunpack.c.l.b16 %v6396
    %v6723 = vunpack.c.h.b16 %v6396
    %v6724 = vunpack.c.l.b16 %v6397
    %v6725 = vunpack.c.h.b16 %v6397
    %v6726 = vunpack.c.l.b16 %v6398
    %v6727 = vunpack.c.h.b16 %v6398
    %v6728 = vunpack.c.l.b16 %v6399
    %v6729 = vunpack.c.h.b16 %v6399
    %v6730 = vunpack.c.l.b16 %v6400
    %v6731 = vunpack.c.h.b16 %v6400
    %v6732 = vunpack.c.l.b16 %v6401
    %v6733 = vunpack.c.h.b16 %v6401
    %v6734 = vunpack.c.l.b16 %v6402
    %v6735 = vunpack.c.h.b16 %v6402
    %v6736 = vunpack.c.l.b16 %v6403
    %v6737 = vunpack.c.h.b16 %v6403
    %v6738 = vunpack.c.l.b16 %v6404
    %v6739 = vunpack.c.h.b16 %v6404
    %v6740 = vunpack.c.l.b16 %v6405
    %v6741 = vunpack.c.h.b16 %v6405
    %v6742 = vunpack.c.l.b16 %v6406
    %v6743 = vunpack.c.h.b16 %v6406
    %v6744 = vunpack.c.l.b16 %v6407
    %v6745 = vunpack.c.h.b16 %v6407
    %v6746 = vunpack.c.l.b16 %v6408
    %v6747 = vunpack.c.h.b16 %v6408
    %v6748 = vunpack.c.l.b16 %v6409
    %v6749 = vunpack.c.h.b16 %v6409
    %v6750 = vunpack.c.l.b16 %v6410
    %v6751 = vunpack.c.h.b16 %v6410
    %v6752 = vunpack.c.l.b16 %v6411
    %v6753 = vunpack.c.h.b16 %v6411
    %v6754 = vunpack.c.l.b16 %v6412
    %v6755 = vunpack.c.h.b16 %v6412
    %v6756 = vunpack.c.l.b16 %v6413
    %v6757 = vunpack.c.h.b16 %v6413
    %v6758 = vunpack.c.l.b16 %v6414
    %v6759 = vunpack.c.h.b16 %v6414
    %v6760 = vunpack.c.l.b16 %v6415
    %v6761 = vunpack.c.h.b16 %v6415
    %v6762 = vunpack.c.l.b16 %v6416
    %v6763 = vunpack.c.h.b16 %v6416
    %v6764 = vunpack.c.l.b16 %v6417
    %v6765 = vunpack.c.h.b16 %v6417
    %v6766 = vunpack.c.l.b16 %v6418
    %v6767 = vunpack.c.h.b16 %v6418
    %v6768 = vunpack.c.l.b16 %v6419
    %v6769 = vunpack.c.h.b16 %v6419
    %v6770 = vunpack.c.l.b16 %v6420
    %v6771 = vunpack.c.h.b16 %v6420
    %v6772 = vunpack.c.l.b16 %v6421
    %v6773 = vunpack.c.h.b16 %v6421
    %v6774 = vunpack.c.l.b16 %v6422
    %v6775 = vunpack.c.h.b16 %v6422
    %v6776 = vunpack.c.l.b16 %v6423
    %v6777 = vunpack.c.h.b16 %v6423
    %v6778 = vunpack.c.l.b16 %v6424
    %v6779 = vunpack.c.h.b16 %v6424
    %v6780 = vunpack.c.l.b16 %v6425
    %v6781 = vunpack.c.h.b16 %v6425
    %v6782 = vunpack.c.l.b16 %v6426
    %v6783 = vunpack.c.h.b16 %v6426
    %v6784 = vunpack.c.l.b16 %v6427
    %v6785 = vunpack.c.h.b16 %v6427
    %v6786 = vunpack.c.l.b16 %v6428
    %v6787 = vunpack.c.h.b16 %v6428
    %v6788 = vunpack.c.l.b16 %v6429
    %v6789 = vunpack.c.h.b16 %v6429
    %v6790 = vunpack.c.l.b16 %v6430
    %v6791 = vunpack.c.h.b16 %v6430
    %v6792 = vunpack.c.l.b16 %v6431
    %v6793 = vunpack.c.h.b16 %v6431
    %v6794 = vunpack.c.l.b16 %v6432
    %v6795 = vunpack.c.h.b16 %v6432
    %v6796 = vunpack.c.l.b16 %v6433
    %v6797 = vunpack.c.h.b16 %v6433
    %v6798 = vunpack.c.l.b16 %v6434
    %v6799 = vunpack.c.h.b16 %v6434
    %v6800 = vunpack.c.l.b16 %v6435
    %v6801 = vunpack.c.h.b16 %v6435
    %v6802 = vunpack.c.l.b16 %v6436
    %v6803 = vunpack.c.h.b16 %v6436
    %v6804 = vunpack.c.l.b16 %v6437
    %v6805 = vunpack.c.h.b16 %v6437
    %v6806 = vunpack.c.l.b16 %v6438
    %v6807 = vunpack.c.h.b16 %v6438
    %v6808 = vunpack.c.l.b16 %v6439
    %v6809 = vunpack.c.h.b16 %v6439
    %v6810 = vunpack.c.l.b16 %v6440
    %v6811 = vunpack.c.h.b16 %v6440
    %v6812 = vunpack.c.l.b16 %v6441
    %v6813 = vunpack.c.h.b16 %v6441
    %v6814 = vunpack.c.l.b16 %v6442
    %v6815 = vunpack.c.h.b16 %v6442
    %v6816 = vunpack.c.l.b16 %v6443
    %v6817 = vunpack.c.h.b16 %v6443
    %v6818 = vunpack.c.l.b16 %v6444
    %v6819 = vunpack.c.h.b16 %v6444
    %v6820 = vunpack.c.l.b16 %v6445
    %v6821 = vunpack.c.h.b16 %v6445
    %v6822 = vunpack.c.l.b16 %v6446
    %v6823 = vunpack.c.h.b16 %v6446
    %v6824 = vunpack.c.l.b16 %v6447
    %v6825 = vunpack.c.h.b16 %v6447
    %v6826 = vunpack.c.l.b16 %v6448
    %v6827 = vunpack.c.h.b16 %v6448
    %v6828 = vunpack.c.l.b16 %v6449
    %v6829 = vunpack.c.h.b16 %v6449
    %v6830 = vunpack.c.l.b16 %v6450
    %v6831 = vunpack.c.h.b16 %v6450
    %v6832 = vunpack.c.l.b16 %v6451
    %v6833 = vunpack.c.h.b16 %v6451
    %v6834 = vunpack.c.l.b16 %v6452
    %v6835 = vunpack.c.h.b16 %v6452
    %v6836 = vunpack.c.l.b16 %v6453
    %v6837 = vunpack.c.h.b16 %v6453
    %v6838 = vunpack.c.l.b16 %v6454
    %v6839 = vunpack.c.h.b16 %v6454
    %v6840 = vunpack.c.l.b16 %v6455
    %v6841 = vunpack.c.h.b16 %v6455
    %v6842 = vunpack.c.l.b16 %v6456
    %v6843 = vunpack.c.h.b16 %v6456
    %v6844 = vunpack.c.l.b16 %v6457
    %v6845 = vunpack.c.h.b16 %v6457
    %v6846 = vunpack.c.l.b16 %v6458
    %v6847 = vunpack.c.h.b16 %v6458
    %v6848 = vpack.c.b16 %v6600, %v6592
    %v6849 = vpack.c.b16 %v6601, %v6593
    %v6850 = vpack.c.b16 %v6602, %v6594
    %v6851 = vpack.c.b16 %v6603, %v6595
    %v6852 = vpack.c.b16 %v6604, %v6596
    %v6853 = vpack.c.b16 %v6605, %v6597
    %v6854 = vpack.c.b16 %v6606, %v6598
    %v6855 = vpack.c.b16 %v6607, %v6599
    %v6856 = vpack.c.b16 %v6616, %v6608
    %v6857 = vpack.c.b16 %v6617, %v6609
    %v6858 = vpack.c.b16 %v6618, %v6610
    %v6859 = vpack.c.b16 %v6619, %v6611
    %v6860 = vpack.c.b16 %v6620, %v6612
    %v6861 = vpack.c.b16 %v6621, %v6613
    %v6862 = vpack.c.b16 %v6622, %v6614
    %v6863 = vpack.c.b16 %v6623, %v6615
    %v6864 = vpack.c.b16 %v6632, %v6624
    %v6865 = vpack.c.b16 %v6633, %v6625
    %v6866 = vpack.c.b16 %v6634, %v6626
    %v6867 = vpack.c.b16 %v6635, %v6627
    %v6868 = vpack.c.b16 %v6636, %v6628
    %v6869 = vpack.c.b16 %v6637, %v6629
    %v6870 = vpack.c.b16 %v6638, %v6630
    %v6871 = vpack.c.b16 %v6639, %v6631
    %v6872 = vpack.c.b16 %v6648, %v6640
    %v6873 = vpack.c.b16 %v6649, %v6641
    %v6874 = vpack.c.b16 %v6650, %v6642
    %v6875 = vpack.c.b16 %v6651, %v6643
    %v6876 = vpack.c.b16 %v6652, %v6644
    %v6877 = vpack.c.b16 %v6653, %v6645
    %v6878 = vpack.c.b16 %v6654, %v6646
    %v6879 = vpack.c.b16 %v6655, %v6647
    %v6880 = vpack.c.b16 %v6664, %v6656
    %v6881 = vpack.c.b16 %v6665, %v6657
    %v6882 = vpack.c.b16 %v6666, %v6658
    %v6883 = vpack.c.b16 %v6667, %v6659
    %v6884 = vpack.c.b16 %v6668, %v6660
    %v6885 = vpack.c.b16 %v6669, %v6661
    %v6886 = vpack.c.b16 %v6670, %v6662
    %v6887 = vpack.c.b16 %v6671, %v6663
    %v6888 = vpack.c.b16 %v6680, %v6672
    %v6889 = vpack.c.b16 %v6681, %v6673
    %v6890 = vpack.c.b16 %v6682, %v6674
    %v6891 = vpack.c.b16 %v6683, %v6675
    %v6892 = vpack.c.b16 %v6684, %v6676
    %v6893 = vpack.c.b16 %v6685, %v6677
    %v6894 = vpack.c.b16 %v6686, %v6678
    %v6895 = vpack.c.b16 %v6687, %v6679
    %v6896 = vpack.c.b16 %v6696, %v6688
    %v6897 = vpack.c.b16 %v6697, %v6689
    %v6898 = vpack.c.b16 %v6698, %v6690
    %v6899 = vpack.c.b16 %v6699, %v6691
    %v6900 = vpack.c.b16 %v6700, %v6692
    %v6901 = vpack.c.b16 %v6701, %v6693
    %v6902 = vpack.c.b16 %v6702, %v6694
    %v6903 = vpack.c.b16 %v6703, %v6695
    %v6904 = vpack.c.b16 %v6712, %v6704
    %v6905 = vpack.c.b16 %v6713, %v6705
    %v6906 = vpack.c.b16 %v6714, %v6706
    %v6907 = vpack.c.b16 %v6715, %v6707
    %v6908 = vpack.c.b16 %v6716, %v6708
    %v6909 = vpack.c.b16 %v6717, %v6709
    %v6910 = vpack.c.b16 %v6718, %v6710
    %v6911 = vpack.c.b16 %v6719, %v6711
    %v6912 = vpack.c.b16 %v6728, %v6720
    %v6913 = vpack.c.b16 %v6729, %v6721
    %v6914 = vpack.c.b16 %v6730, %v6722
    %v6915 = vpack.c.b16 %v6731, %v6723
    %v6916 = vpack.c.b16 %v6732, %v6724
    %v6917 = vpack.c.b16 %v6733, %v6725
    %v6918 = vpack.c.b16 %v6734, %v6726
    %v6919 = vpack.c.b16 %v6735, %v6727
    %v6920 = vpack.c.b16 %v6744, %v6736
    %v6921 = vpack.c.b16 %v6745, %v6737
    %v6922 = vpack.c.b16 %v6746, %v6738
    %v6923 = vpack.c.b16 %v6747, %v6739
    %v6924 = vpack.c.b16 %v6748, %v6740
    %v6925 = vpack.c.b16 %v6749, %v6741
    %v6926 = vpack.c.b16 %v6750, %v6742
    %v6927 = vpack.c.b16 %v6751, %v6743
    %v6928 = vpack.c.b16 %v6760, %v6752
    %v6929 = vpack.c.b16 %v6761, %v6753
    %v6930 = vpack.c.b16 %v6762, %v6754
    %v6931 = vpack.c.b16 %v6763, %v6755
    %v6932 = vpack.c.b16 %v6764, %v6756
    %v6933 = vpack.c.b16 %v6765, %v6757
    %v6934 = vpack.c.b16 %v6766, %v6758
    %v6935 = vpack.c.b16 %v6767, %v6759
    %v6936 = vpack.c.b16 %v6776, %v6768
    %v6937 = vpack.c.b16 %v6777, %v6769
    %v6938 = vpack.c.b16 %v6778, %v6770
    %v6939 = vpack.c.b16 %v6779, %v6771
    %v6940 = vpack.c.b16 %v6780, %v6772
    %v6941 = vpack.c.b16 %v6781, %v6773
    %v6942 = vpack.c.b16 %v6782, %v6774
    %v6943 = vpack.c.b16 %v6783, %v6775
    %v6944 = vpack.c.b16 %v6792, %v6784
    %v6945 = vpack.c.b16 %v6793, %v6785
    %v6946 = vpack.c.b16 %v6794, %v6786
    %v6947 = vpack.c.b16 %v6795, %v6787
    %v6948 = vpack.c.b16 %v6796, %v6788
    %v6949 = vpack.c.b16 %v6797, %v6789
    %v6950 = vpack.c.b16 %v6798, %v6790
    %v6951 = vpack.c.b16 %v6799, %v6791
    %v6952 = vpack.c.b16 %v6808, %v6800
    %v6953 = vpack.c.b16 %v6809, %v6801
    %v6954 = vpack.c.b16 %v6810, %v6802
    %v6955 = vpack.c.b16 %v6811, %v6803
    %v6956 = vpack.c.b16 %v6812, %v6804
    %v6957 = vpack.c.b16 %v6813, %v6805
    %v6958 = vpack.c.b16 %v6814, %v6806
    %v6959 = vpack.c.b16 %v6815, %v6807
    %v6960 = vpack.c.b16 %v6824, %v6816
    %v6961 = vpack.c.b16 %v6825, %v6817
    %v6962 = vpack.c.b16 %v6826, %v6818
    %v6963 = vpack.c.b16 %v6827, %v6819
    %v6964 = vpack.c.b16 %v6828, %v6820
    %v6965 = vpack.c.b16 %v6829, %v6821
    %v6966 = vpack.c.b16 %v6830, %v6822
    %v6967 = vpack.c.b16 %v6831, %v6823
    %v6968 = vpack.c.b16 %v6840, %v6832
    %v6969 = vpack.c.b16 %v6841, %v6833
    %v6970 = vpack.c.b16 %v6842, %v6834
    %v6971 = vpack.c.b16 %v6843, %v6835
    %v6972 = vpack.c.b16 %v6844, %v6836
    %v6973 = vpack.c.b16 %v6845, %v6837
    %v6974 = vpack.c.b16 %v6846, %v6838
    %v6975 = vpack.c.b16 %v6847, %v6839
    %7104 = vmatprep.subr.bf16.mxu0 %v6905
    %7105 = vmatpush1.bf16.msra.mxu0 %v6904
    %7106 = vmatprep.subr.bf16.mxu0 %v6897
    %7107 = vmatpush1.bf16.msra.mxu0 %v6896
    %7108 = vmatprep.subr.bf16.mxu0 %v6889
    %7109 = vmatpush1.bf16.msra.mxu0 %v6888
    %7110 = vmatprep.subr.bf16.mxu0 %v6881
    %7111 = vmatpush1.bf16.msra.mxu0 %v6880
    %7112 = vmatprep.subr.bf16.mxu0 %v6873
    %7113 = vmatpush1.bf16.msra.mxu0 %v6872
    %7114 = vmatprep.subr.bf16.mxu0 %v6865
    %7115 = vmatpush1.bf16.msra.mxu0 %v6864
    %7116 = vmatprep.subr.bf16.mxu0 %v6857
    %7117 = vmatpush1.bf16.msra.mxu0 %v6856
    %7118 = vmatprep.subr.bf16.mxu0 %v6849
    %7119 = vmatpush1.bf16.msra.mxu0 %v6848
    %7120 = vmatprep.subr.bf16.mxu0 %v6969
    %7121 = vmatpush2.bf16.msra.mxu0 %v6968
    %7122 = vmatprep.subr.bf16.mxu0 %v6961
    %7123 = vmatpush2.bf16.msra.mxu0 %v6960
    %7124 = vmatprep.subr.bf16.mxu0 %v6953
    %7125 = vmatpush2.bf16.msra.mxu0 %v6952
    %7126 = vmatprep.subr.bf16.mxu0 %v6945
    %7127 = vmatpush2.bf16.msra.mxu0 %v6944
    %7128 = vmatprep.subr.bf16.mxu0 %v6937
    %7129 = vmatpush2.bf16.msra.mxu0 %v6936
    %7130 = vmatprep.subr.bf16.mxu0 %v6929
    %7131 = vmatpush2.bf16.msra.mxu0 %v6928
    %7132 = vmatprep.subr.bf16.mxu0 %v6921
    %7133 = vmatpush2.bf16.msra.mxu0 %v6920
    %7134 = vmatprep.subr.bf16.mxu0 %v6913
    %7135 = vmatpush2.bf16.msra.mxu0 %v6912
    %7136 = vmatprep.mubr.bf16.mxu0 %v6461
    %7137 = vmatmul.mubr.bf16.gmra.mxu0 %v6460
    %v7138 = vpop.f32.mrf.mxu0
    %v7139 = vadd.f32 0.0, %v7138
    %v7140 = vpop.f32.mrf.mxu0
    %v7141 = vadd.f32 0.0, %v7140
    %v7142 = vpop.f32.mrf.mxu0
    %v7143 = vpop.f32.mrf.mxu0
    %7144 = vdwg.mxu0
    %7145 = vmatprep.subr.bf16.mxu0 %v6907
    %7146 = vmatpush1.bf16.msra.mxu0 %v6906
    %7147 = vmatprep.subr.bf16.mxu0 %v6899
    %7148 = vmatpush1.bf16.msra.mxu0 %v6898
    %7149 = vmatprep.subr.bf16.mxu0 %v6891
    %7150 = vmatpush1.bf16.msra.mxu0 %v6890
    %7151 = vmatprep.subr.bf16.mxu0 %v6883
    %7152 = vmatpush1.bf16.msra.mxu0 %v6882
    %7153 = vmatprep.subr.bf16.mxu0 %v6875
    %7154 = vmatpush1.bf16.msra.mxu0 %v6874
    %7155 = vmatprep.subr.bf16.mxu0 %v6867
    %7156 = vmatpush1.bf16.msra.mxu0 %v6866
    %7157 = vmatprep.subr.bf16.mxu0 %v6859
    %7158 = vmatpush1.bf16.msra.mxu0 %v6858
    %7159 = vmatprep.subr.bf16.mxu0 %v6851
    %7160 = vmatpush1.bf16.msra.mxu0 %v6850
    %7161 = vmatprep.subr.bf16.mxu0 %v6971
    %7162 = vmatpush2.bf16.msra.mxu0 %v6970
    %7163 = vmatprep.subr.bf16.mxu0 %v6963
    %7164 = vmatpush2.bf16.msra.mxu0 %v6962
    %7165 = vmatprep.subr.bf16.mxu0 %v6955
    %7166 = vmatpush2.bf16.msra.mxu0 %v6954
    %7167 = vmatprep.subr.bf16.mxu0 %v6947
    %7168 = vmatpush2.bf16.msra.mxu0 %v6946
    %7169 = vmatprep.subr.bf16.mxu0 %v6939
    %7170 = vmatpush2.bf16.msra.mxu0 %v6938
    %7171 = vmatprep.subr.bf16.mxu0 %v6931
    %7172 = vmatpush2.bf16.msra.mxu0 %v6930
    %7173 = vmatprep.subr.bf16.mxu0 %v6923
    %7174 = vmatpush2.bf16.msra.mxu0 %v6922
    %7175 = vmatprep.subr.bf16.mxu0 %v6915
    %7176 = vmatpush2.bf16.msra.mxu0 %v6914
    %7177 = vmatprep.mubr.bf16.mxu0 %v6461
    %7178 = vmatmul.mubr.bf16.gmra.mxu0 %v6460
    %v7179 = vpop.f32.mrf.mxu0
    %v7180 = vadd.f32 0.0, %v7179
    %v7181 = vpop.f32.mrf.mxu0
    %v7182 = vadd.f32 0.0, %v7181
    %v7183 = vpop.f32.mrf.mxu0
    %v7184 = vpop.f32.mrf.mxu0
    %7185 = vdwg.mxu0
    %7186 = vmatprep.subr.bf16.mxu0 %v6909
    %7187 = vmatpush1.bf16.msra.mxu0 %v6908
    %7188 = vmatprep.subr.bf16.mxu0 %v6901
    %7189 = vmatpush1.bf16.msra.mxu0 %v6900
    %7190 = vmatprep.subr.bf16.mxu0 %v6893
    %7191 = vmatpush1.bf16.msra.mxu0 %v6892
    %7192 = vmatprep.subr.bf16.mxu0 %v6885
    %7193 = vmatpush1.bf16.msra.mxu0 %v6884
    %7194 = vmatprep.subr.bf16.mxu0 %v6877
    %7195 = vmatpush1.bf16.msra.mxu0 %v6876
    %7196 = vmatprep.subr.bf16.mxu0 %v6869
    %7197 = vmatpush1.bf16.msra.mxu0 %v6868
    %7198 = vmatprep.subr.bf16.mxu0 %v6861
    %7199 = vmatpush1.bf16.msra.mxu0 %v6860
    %7200 = vmatprep.subr.bf16.mxu0 %v6853
    %7201 = vmatpush1.bf16.msra.mxu0 %v6852
    %7202 = vmatprep.subr.bf16.mxu0 %v6973
    %7203 = vmatpush2.bf16.msra.mxu0 %v6972
    %7204 = vmatprep.subr.bf16.mxu0 %v6965
    %7205 = vmatpush2.bf16.msra.mxu0 %v6964
    %7206 = vmatprep.subr.bf16.mxu0 %v6957
    %7207 = vmatpush2.bf16.msra.mxu0 %v6956
    %7208 = vmatprep.subr.bf16.mxu0 %v6949
    %7209 = vmatpush2.bf16.msra.mxu0 %v6948
    %7210 = vmatprep.subr.bf16.mxu0 %v6941
    %7211 = vmatpush2.bf16.msra.mxu0 %v6940
    %7212 = vmatprep.subr.bf16.mxu0 %v6933
    %7213 = vmatpush2.bf16.msra.mxu0 %v6932
    %7214 = vmatprep.subr.bf16.mxu0 %v6925
    %7215 = vmatpush2.bf16.msra.mxu0 %v6924
    %7216 = vmatprep.subr.bf16.mxu0 %v6917
    %7217 = vmatpush2.bf16.msra.mxu0 %v6916
    %7218 = vmatprep.mubr.bf16.mxu0 %v6461
    %7219 = vmatmul.mubr.bf16.gmra.mxu0 %v6460
    %v7220 = vpop.f32.mrf.mxu0
    %v7221 = vadd.f32 0.0, %v7220
    %v7222 = vpop.f32.mrf.mxu0
    %v7223 = vadd.f32 0.0, %v7222
    %v7224 = vpop.f32.mrf.mxu0
    %v7225 = vpop.f32.mrf.mxu0
    %7226 = vdwg.mxu0
    %7227 = vmatprep.subr.bf16.mxu0 %v6911
    %7228 = vmatpush1.bf16.msra.mxu0 %v6910
    %7229 = vmatprep.subr.bf16.mxu0 %v6903
    %7230 = vmatpush1.bf16.msra.mxu0 %v6902
    %7231 = vmatprep.subr.bf16.mxu0 %v6895
    %7232 = vmatpush1.bf16.msra.mxu0 %v6894
    %7233 = vmatprep.subr.bf16.mxu0 %v6887
    %7234 = vmatpush1.bf16.msra.mxu0 %v6886
    %7235 = vmatprep.subr.bf16.mxu0 %v6879
    %7236 = vmatpush1.bf16.msra.mxu0 %v6878
    %7237 = vmatprep.subr.bf16.mxu0 %v6871
    %7238 = vmatpush1.bf16.msra.mxu0 %v6870
    %7239 = vmatprep.subr.bf16.mxu0 %v6863
    %7240 = vmatpush1.bf16.msra.mxu0 %v6862
    %7241 = vmatprep.subr.bf16.mxu0 %v6855
    %7242 = vmatpush1.bf16.msra.mxu0 %v6854
    %7243 = vmatprep.subr.bf16.mxu0 %v6975
    %7244 = vmatpush2.bf16.msra.mxu0 %v6974
    %7245 = vmatprep.subr.bf16.mxu0 %v6967
    %7246 = vmatpush2.bf16.msra.mxu0 %v6966
    %7247 = vmatprep.subr.bf16.mxu0 %v6959
    %7248 = vmatpush2.bf16.msra.mxu0 %v6958
    %7249 = vmatprep.subr.bf16.mxu0 %v6951
    %7250 = vmatpush2.bf16.msra.mxu0 %v6950
    %7251 = vmatprep.subr.bf16.mxu0 %v6943
    %7252 = vmatpush2.bf16.msra.mxu0 %v6942
    %7253 = vmatprep.subr.bf16.mxu0 %v6935
    %7254 = vmatpush2.bf16.msra.mxu0 %v6934
    %7255 = vmatprep.subr.bf16.mxu0 %v6927
    %7256 = vmatpush2.bf16.msra.mxu0 %v6926
    %7257 = vmatprep.subr.bf16.mxu0 %v6919
    %7258 = vmatpush2.bf16.msra.mxu0 %v6918
    %7259 = vmatprep.mubr.bf16.mxu0 %v6461
    %7260 = vmatmul.mubr.bf16.gmra.mxu0 %v6460
    %v7261 = vpop.f32.mrf.mxu0
    %v7262 = vadd.f32 0.0, %v7261
    %v7263 = vpop.f32.mrf.mxu0
    %v7264 = vadd.f32 0.0, %v7263
    %v7265 = vpop.f32.mrf.mxu0
    %v7266 = vpop.f32.mrf.mxu0
    %7267 = vdwg.mxu0
    %v7268 = vadd.f32 %v7221, %v1175
    %v7269 = vadd.f32 %v7223, %v1179
    %v7270 = vadd.f32 %v7262, %v1183
    %v7271 = vadd.f32 %v7264, %v1187
    %v7272 = vxor.u32 %v7268, 2147483648
    %v7273 = vmul.f32 %v7272, 1.442695
    %v7274 = vpow.pop %v7273
    %v7275 = vadd.f32 %v7274, 1.0
    %v7276 = vrcp.pop %v7275
    %v7277 = vmul.f32 1.0, %v7276
    %v7278 = vxor.u32 %v7269, 2147483648
    %v7279 = vmul.f32 %v7278, 1.442695
    %v7280 = vpow.pop %v7279
    %v7281 = vadd.f32 %v7280, 1.0
    %v7282 = vrcp.pop %v7281
    %v7283 = vmul.f32 1.0, %v7282
    %v7284 = vtanh.pop %v7270
    %v7285 = vxor.u32 %v7271, 2147483648
    %v7286 = vmul.f32 %v7285, 1.442695
    %v7287 = vpow.pop %v7286
    %v7288 = vadd.f32 %v7287, 1.0
    %v7289 = vrcp.pop %v7288
    %v7290 = vmul.f32 1.0, %v7289
    %v7291 = vmul.f32 %v7283, %v6276
    %v7292 = vmul.f32 %v7277, %v7284
    %v7293 = vadd.f32 %v7291, %v7292
    %v7294 = vtanh.pop %v7293
    %v7295 = vmul.f32 %v7290, %v7294
    %v7296 = vpack.c.bf16 %v7295, %v7295
    %v7298 = vunpack.c.l.b16 %v7296
    %v7299 = vpack.c.b16 %v7298, %v7298
    %v7300 = vrot.slane %v7299, 6
    %7302 = vst [vmem:[#allocation2 + $0x4] sm:$0x4] %v7300
    %v7307 = vrot.slane %v7139, 2
    %v7308 = vrot.slane %v7141, 2
    %v7309 = vrot.slane %v7180, 2
    %v7310 = vrot.slane %v7182, 2
    %v7315 = vadd.f32 %v166, %v7307
    %v7316 = vadd.f32 %v168, %v7308
    %v7317 = vadd.f32 %v209, %v7309
    %v7318 = vadd.f32 %v211, %v7310
    %v7319 = vxor.u32 %v7315, 2147483648
    %v7320 = vmul.f32 %v7319, 1.442695
    %v7321 = vpow.pop %v7320
    %v7322 = vadd.f32 %v7321, 1.0
    %v7323 = vrcp.pop %v7322
    %v7324 = vmul.f32 1.0, %v7323
    %v7325 = vxor.u32 %v7316, 2147483648
    %v7326 = vmul.f32 %v7325, 1.442695
    %v7327 = vpow.pop %v7326
    %v7328 = vadd.f32 %v7327, 1.0
    %v7329 = vrcp.pop %v7328
    %v7330 = vmul.f32 1.0, %v7329
    %v7331 = vtanh.pop %v7317
    %v7332 = vxor.u32 %v7318, 2147483648
    %v7333 = vmul.f32 %v7332, 1.442695
    %v7334 = vpow.pop %v7333
    %v7335 = vadd.f32 %v7334, 1.0
    %v7336 = vrcp.pop %v7335
    %v7337 = vmul.f32 1.0, %v7336
    %v7339 = vrot.slane %v6326, 6
    %v7341 = vmul.f32 %v7330, %v7339
    %v7342 = vmul.f32 %v7324, %v7331
    %v7343 = vadd.f32 %v7341, %v7342
    %v7344 = vtanh.pop %v7343
    %v7345 = vmul.f32 %v7337, %v7344
    %v7346 = vpack.c.bf16 %v7345, %v7345
    %v7347 = vrot.slane %v7296, 5
    %v7348 = vld [vmem:[#allocation7 + $0x10] sm:$0xff]
    %v7349 = vld [vmem:[#allocation7 + $0x18] sm:$0xff]
    %v7350 = vld [vmem:[#allocation7 + $0x30] sm:$0xff]
    %v7351 = vld [vmem:[#allocation7 + $0x38] sm:$0xff]
    %v7352 = vld [vmem:[#allocation7 + $0x50] sm:$0xff]
    %v7353 = vld [vmem:[#allocation7 + $0x58] sm:$0xff]
    %v7354 = vld [vmem:[#allocation7 + $0x70] sm:$0xff]
    %v7355 = vld [vmem:[#allocation7 + $0x78] sm:$0xff]
    %v7356 = vld [vmem:[#allocation7 + $0x90] sm:$0xff]
    %v7357 = vld [vmem:[#allocation7 + $0x98] sm:$0xff]
    %v7358 = vld [vmem:[#allocation7 + $0xb0] sm:$0xff]
    %v7359 = vld [vmem:[#allocation7 + $0xb8] sm:$0xff]
    %v7360 = vld [vmem:[#allocation7 + $0xd0] sm:$0xff]
    %v7361 = vld [vmem:[#allocation7 + $0xd8] sm:$0xff]
    %v7362 = vld [vmem:[#allocation7 + $0xf0] sm:$0xff]
    %v7363 = vld [vmem:[#allocation7 + $0xf8] sm:$0xff]
    %v7364 = vld [vmem:[#allocation7 + $0x110] sm:$0xff]
    %v7365 = vld [vmem:[#allocation7 + $0x118] sm:$0xff]
    %v7366 = vld [vmem:[#allocation7 + $0x130] sm:$0xff]
    %v7367 = vld [vmem:[#allocation7 + $0x138] sm:$0xff]
    %v7368 = vld [vmem:[#allocation7 + $0x150] sm:$0xff]
    %v7369 = vld [vmem:[#allocation7 + $0x158] sm:$0xff]
    %v7370 = vld [vmem:[#allocation7 + $0x170] sm:$0xff]
    %v7371 = vld [vmem:[#allocation7 + $0x178] sm:$0xff]
    %v7372 = vld [vmem:[#allocation7 + $0x190] sm:$0xff]
    %v7373 = vld [vmem:[#allocation7 + $0x198] sm:$0xff]
    %v7374 = vld [vmem:[#allocation7 + $0x1b0] sm:$0xff]
    %v7375 = vld [vmem:[#allocation7 + $0x1b8] sm:$0xff]
    %v7376 = vld [vmem:[#allocation7 + $0x1d0] sm:$0xff]
    %v7377 = vld [vmem:[#allocation7 + $0x1d8] sm:$0xff]
    %v7378 = vld [vmem:[#allocation7 + $0x1f0] sm:$0xff]
    %v7379 = vld [vmem:[#allocation7 + $0x1f8] sm:$0xff]
    %v7380 = vld [vmem:[#allocation7 + $0x210] sm:$0xff]
    %v7381 = vld [vmem:[#allocation7 + $0x218] sm:$0xff]
    %v7382 = vld [vmem:[#allocation7 + $0x230] sm:$0xff]
    %v7383 = vld [vmem:[#allocation7 + $0x238] sm:$0xff]
    %v7384 = vld [vmem:[#allocation7 + $0x250] sm:$0xff]
    %v7385 = vld [vmem:[#allocation7 + $0x258] sm:$0xff]
    %v7386 = vld [vmem:[#allocation7 + $0x270] sm:$0xff]
    %v7387 = vld [vmem:[#allocation7 + $0x278] sm:$0xff]
    %v7388 = vld [vmem:[#allocation7 + $0x290] sm:$0xff]
    %v7389 = vld [vmem:[#allocation7 + $0x298] sm:$0xff]
    %v7390 = vld [vmem:[#allocation7 + $0x2b0] sm:$0xff]
    %v7391 = vld [vmem:[#allocation7 + $0x2b8] sm:$0xff]
    %v7392 = vld [vmem:[#allocation7 + $0x2d0] sm:$0xff]
    %v7393 = vld [vmem:[#allocation7 + $0x2d8] sm:$0xff]
    %v7394 = vld [vmem:[#allocation7 + $0x2f0] sm:$0xff]
    %v7395 = vld [vmem:[#allocation7 + $0x2f8] sm:$0xff]
    %v7396 = vld [vmem:[#allocation7 + $0x310] sm:$0xff]
    %v7397 = vld [vmem:[#allocation7 + $0x318] sm:$0xff]
    %v7398 = vld [vmem:[#allocation7 + $0x330] sm:$0xff]
    %v7399 = vld [vmem:[#allocation7 + $0x338] sm:$0xff]
    %v7400 = vld [vmem:[#allocation7 + $0x350] sm:$0xff]
    %v7401 = vld [vmem:[#allocation7 + $0x358] sm:$0xff]
    %v7402 = vld [vmem:[#allocation7 + $0x370] sm:$0xff]
    %v7403 = vld [vmem:[#allocation7 + $0x378] sm:$0xff]
    %v7404 = vld [vmem:[#allocation7 + $0x390] sm:$0xff]
    %v7405 = vld [vmem:[#allocation7 + $0x398] sm:$0xff]
    %v7406 = vld [vmem:[#allocation7 + $0x3b0] sm:$0xff]
    %v7407 = vld [vmem:[#allocation7 + $0x3b8] sm:$0xff]
    %v7408 = vld [vmem:[#allocation7 + $0x3d0] sm:$0xff]
    %v7409 = vld [vmem:[#allocation7 + $0x3d8] sm:$0xff]
    %v7410 = vld [vmem:[#allocation7 + $0x3f0] sm:$0xff]
    %v7411 = vld [vmem:[#allocation7 + $0x3f8] sm:$0xff]
    %v7413 = vrot.slane %v7346, 3
    %v7414 = vrot.slane %v7347, 3
    %v7481 = vunpack.c.l.b16 %v7348
    %v7482 = vunpack.c.h.b16 %v7348
    %v7483 = vunpack.c.l.b16 %v7349
    %v7484 = vunpack.c.h.b16 %v7349
    %v7485 = vunpack.c.l.b16 %v7350
    %v7486 = vunpack.c.h.b16 %v7350
    %v7487 = vunpack.c.l.b16 %v7351
    %v7488 = vunpack.c.h.b16 %v7351
    %v7489 = vunpack.c.l.b16 %v7352
    %v7490 = vunpack.c.h.b16 %v7352
    %v7491 = vunpack.c.l.b16 %v7353
    %v7492 = vunpack.c.h.b16 %v7353
    %v7493 = vunpack.c.l.b16 %v7354
    %v7494 = vunpack.c.h.b16 %v7354
    %v7495 = vunpack.c.l.b16 %v7355
    %v7496 = vunpack.c.h.b16 %v7355
    %v7497 = vunpack.c.l.b16 %v7356
    %v7498 = vunpack.c.h.b16 %v7356
    %v7499 = vunpack.c.l.b16 %v7357
    %v7500 = vunpack.c.h.b16 %v7357
    %v7501 = vunpack.c.l.b16 %v7358
    %v7502 = vunpack.c.h.b16 %v7358
    %v7503 = vunpack.c.l.b16 %v7359
    %v7504 = vunpack.c.h.b16 %v7359
    %v7505 = vunpack.c.l.b16 %v7360
    %v7506 = vunpack.c.h.b16 %v7360
    %v7507 = vunpack.c.l.b16 %v7361
    %v7508 = vunpack.c.h.b16 %v7361
    %v7509 = vunpack.c.l.b16 %v7362
    %v7510 = vunpack.c.h.b16 %v7362
    %v7511 = vunpack.c.l.b16 %v7363
    %v7512 = vunpack.c.h.b16 %v7363
    %v7513 = vunpack.c.l.b16 %v7364
    %v7514 = vunpack.c.h.b16 %v7364
    %v7515 = vunpack.c.l.b16 %v7365
    %v7516 = vunpack.c.h.b16 %v7365
    %v7517 = vunpack.c.l.b16 %v7366
    %v7518 = vunpack.c.h.b16 %v7366
    %v7519 = vunpack.c.l.b16 %v7367
    %v7520 = vunpack.c.h.b16 %v7367
    %v7521 = vunpack.c.l.b16 %v7368
    %v7522 = vunpack.c.h.b16 %v7368
    %v7523 = vunpack.c.l.b16 %v7369
    %v7524 = vunpack.c.h.b16 %v7369
    %v7525 = vunpack.c.l.b16 %v7370
    %v7526 = vunpack.c.h.b16 %v7370
    %v7527 = vunpack.c.l.b16 %v7371
    %v7528 = vunpack.c.h.b16 %v7371
    %v7529 = vunpack.c.l.b16 %v7372
    %v7530 = vunpack.c.h.b16 %v7372
    %v7531 = vunpack.c.l.b16 %v7373
    %v7532 = vunpack.c.h.b16 %v7373
    %v7533 = vunpack.c.l.b16 %v7374
    %v7534 = vunpack.c.h.b16 %v7374
    %v7535 = vunpack.c.l.b16 %v7375
    %v7536 = vunpack.c.h.b16 %v7375
    %v7537 = vunpack.c.l.b16 %v7376
    %v7538 = vunpack.c.h.b16 %v7376
    %v7539 = vunpack.c.l.b16 %v7377
    %v7540 = vunpack.c.h.b16 %v7377
    %v7541 = vunpack.c.l.b16 %v7378
    %v7542 = vunpack.c.h.b16 %v7378
    %v7543 = vunpack.c.l.b16 %v7379
    %v7544 = vunpack.c.h.b16 %v7379
    %v7545 = vunpack.c.l.b16 %v7380
    %v7546 = vunpack.c.h.b16 %v7380
    %v7547 = vunpack.c.l.b16 %v7381
    %v7548 = vunpack.c.h.b16 %v7381
    %v7549 = vunpack.c.l.b16 %v7382
    %v7550 = vunpack.c.h.b16 %v7382
    %v7551 = vunpack.c.l.b16 %v7383
    %v7552 = vunpack.c.h.b16 %v7383
    %v7553 = vunpack.c.l.b16 %v7384
    %v7554 = vunpack.c.h.b16 %v7384
    %v7555 = vunpack.c.l.b16 %v7385
    %v7556 = vunpack.c.h.b16 %v7385
    %v7557 = vunpack.c.l.b16 %v7386
    %v7558 = vunpack.c.h.b16 %v7386
    %v7559 = vunpack.c.l.b16 %v7387
    %v7560 = vunpack.c.h.b16 %v7387
    %v7561 = vunpack.c.l.b16 %v7388
    %v7562 = vunpack.c.h.b16 %v7388
    %v7563 = vunpack.c.l.b16 %v7389
    %v7564 = vunpack.c.h.b16 %v7389
    %v7565 = vunpack.c.l.b16 %v7390
    %v7566 = vunpack.c.h.b16 %v7390
    %v7567 = vunpack.c.l.b16 %v7391
    %v7568 = vunpack.c.h.b16 %v7391
    %v7569 = vunpack.c.l.b16 %v7392
    %v7570 = vunpack.c.h.b16 %v7392
    %v7571 = vunpack.c.l.b16 %v7393
    %v7572 = vunpack.c.h.b16 %v7393
    %v7573 = vunpack.c.l.b16 %v7394
    %v7574 = vunpack.c.h.b16 %v7394
    %v7575 = vunpack.c.l.b16 %v7395
    %v7576 = vunpack.c.h.b16 %v7395
    %v7577 = vunpack.c.l.b16 %v7396
    %v7578 = vunpack.c.h.b16 %v7396
    %v7579 = vunpack.c.l.b16 %v7397
    %v7580 = vunpack.c.h.b16 %v7397
    %v7581 = vunpack.c.l.b16 %v7398
    %v7582 = vunpack.c.h.b16 %v7398
    %v7583 = vunpack.c.l.b16 %v7399
    %v7584 = vunpack.c.h.b16 %v7399
    %v7585 = vunpack.c.l.b16 %v7400
    %v7586 = vunpack.c.h.b16 %v7400
    %v7587 = vunpack.c.l.b16 %v7401
    %v7588 = vunpack.c.h.b16 %v7401
    %v7589 = vunpack.c.l.b16 %v7402
    %v7590 = vunpack.c.h.b16 %v7402
    %v7591 = vunpack.c.l.b16 %v7403
    %v7592 = vunpack.c.h.b16 %v7403
    %v7593 = vunpack.c.l.b16 %v7404
    %v7594 = vunpack.c.h.b16 %v7404
    %v7595 = vunpack.c.l.b16 %v7405
    %v7596 = vunpack.c.h.b16 %v7405
    %v7597 = vunpack.c.l.b16 %v7406
    %v7598 = vunpack.c.h.b16 %v7406
    %v7599 = vunpack.c.l.b16 %v7407
    %v7600 = vunpack.c.h.b16 %v7407
    %v7601 = vunpack.c.l.b16 %v7408
    %v7602 = vunpack.c.h.b16 %v7408
    %v7603 = vunpack.c.l.b16 %v7409
    %v7604 = vunpack.c.h.b16 %v7409
    %v7605 = vunpack.c.l.b16 %v7410
    %v7606 = vunpack.c.h.b16 %v7410
    %v7607 = vunpack.c.l.b16 %v7411
    %v7608 = vunpack.c.h.b16 %v7411
    %v7609 = vpack.c.b16 %v7485, %v7481
    %v7610 = vpack.c.b16 %v7486, %v7482
    %v7611 = vpack.c.b16 %v7487, %v7483
    %v7612 = vpack.c.b16 %v7488, %v7484
    %v7613 = vpack.c.b16 %v7493, %v7489
    %v7614 = vpack.c.b16 %v7494, %v7490
    %v7615 = vpack.c.b16 %v7495, %v7491
    %v7616 = vpack.c.b16 %v7496, %v7492
    %v7617 = vpack.c.b16 %v7501, %v7497
    %v7618 = vpack.c.b16 %v7502, %v7498
    %v7619 = vpack.c.b16 %v7503, %v7499
    %v7620 = vpack.c.b16 %v7504, %v7500
    %v7621 = vpack.c.b16 %v7509, %v7505
    %v7622 = vpack.c.b16 %v7510, %v7506
    %v7623 = vpack.c.b16 %v7511, %v7507
    %v7624 = vpack.c.b16 %v7512, %v7508
    %v7625 = vpack.c.b16 %v7517, %v7513
    %v7626 = vpack.c.b16 %v7518, %v7514
    %v7627 = vpack.c.b16 %v7519, %v7515
    %v7628 = vpack.c.b16 %v7520, %v7516
    %v7629 = vpack.c.b16 %v7525, %v7521
    %v7630 = vpack.c.b16 %v7526, %v7522
    %v7631 = vpack.c.b16 %v7527, %v7523
    %v7632 = vpack.c.b16 %v7528, %v7524
    %v7633 = vpack.c.b16 %v7533, %v7529
    %v7634 = vpack.c.b16 %v7534, %v7530
    %v7635 = vpack.c.b16 %v7535, %v7531
    %v7636 = vpack.c.b16 %v7536, %v7532
    %v7637 = vpack.c.b16 %v7541, %v7537
    %v7638 = vpack.c.b16 %v7542, %v7538
    %v7639 = vpack.c.b16 %v7543, %v7539
    %v7640 = vpack.c.b16 %v7544, %v7540
    %v7641 = vpack.c.b16 %v7549, %v7545
    %v7642 = vpack.c.b16 %v7550, %v7546
    %v7643 = vpack.c.b16 %v7551, %v7547
    %v7644 = vpack.c.b16 %v7552, %v7548
    %v7645 = vpack.c.b16 %v7557, %v7553
    %v7646 = vpack.c.b16 %v7558, %v7554
    %v7647 = vpack.c.b16 %v7559, %v7555
    %v7648 = vpack.c.b16 %v7560, %v7556
    %v7649 = vpack.c.b16 %v7565, %v7561
    %v7650 = vpack.c.b16 %v7566, %v7562
    %v7651 = vpack.c.b16 %v7567, %v7563
    %v7652 = vpack.c.b16 %v7568, %v7564
    %v7653 = vpack.c.b16 %v7573, %v7569
    %v7654 = vpack.c.b16 %v7574, %v7570
    %v7655 = vpack.c.b16 %v7575, %v7571
    %v7656 = vpack.c.b16 %v7576, %v7572
    %v7657 = vpack.c.b16 %v7581, %v7577
    %v7658 = vpack.c.b16 %v7582, %v7578
    %v7659 = vpack.c.b16 %v7583, %v7579
    %v7660 = vpack.c.b16 %v7584, %v7580
    %v7661 = vpack.c.b16 %v7589, %v7585
    %v7662 = vpack.c.b16 %v7590, %v7586
    %v7663 = vpack.c.b16 %v7591, %v7587
    %v7664 = vpack.c.b16 %v7592, %v7588
    %v7665 = vpack.c.b16 %v7597, %v7593
    %v7666 = vpack.c.b16 %v7598, %v7594
    %v7667 = vpack.c.b16 %v7599, %v7595
    %v7668 = vpack.c.b16 %v7600, %v7596
    %v7669 = vpack.c.b16 %v7605, %v7601
    %v7670 = vpack.c.b16 %v7606, %v7602
    %v7671 = vpack.c.b16 %v7607, %v7603
    %v7672 = vpack.c.b16 %v7608, %v7604
    %7737 = vmatprep.subr.bf16.mxu0 %v7638
    %7738 = vmatpush1.bf16.msra.mxu0 %v7637
    %7739 = vmatprep.subr.bf16.mxu0 %v7634
    %7740 = vmatpush1.bf16.msra.mxu0 %v7633
    %7741 = vmatprep.subr.bf16.mxu0 %v7630
    %7742 = vmatpush1.bf16.msra.mxu0 %v7629
    %7743 = vmatprep.subr.bf16.mxu0 %v7626
    %7744 = vmatpush1.bf16.msra.mxu0 %v7625
    %7745 = vmatprep.subr.bf16.mxu0 %v7622
    %7746 = vmatpush1.bf16.msra.mxu0 %v7621
    %7747 = vmatprep.subr.bf16.mxu0 %v7618
    %7748 = vmatpush1.bf16.msra.mxu0 %v7617
    %7749 = vmatprep.subr.bf16.mxu0 %v7614
    %7750 = vmatpush1.bf16.msra.mxu0 %v7613
    %7751 = vmatprep.subr.bf16.mxu0 %v7610
    %7752 = vmatpush1.bf16.msra.mxu0 %v7609
    %7753 = vmatprep.subr.bf16.mxu0 %v7670
    %7754 = vmatpush2.bf16.msra.mxu0 %v7669
    %7755 = vmatprep.subr.bf16.mxu0 %v7666
    %7756 = vmatpush2.bf16.msra.mxu0 %v7665
    %7757 = vmatprep.subr.bf16.mxu0 %v7662
    %7758 = vmatpush2.bf16.msra.mxu0 %v7661
    %7759 = vmatprep.subr.bf16.mxu0 %v7658
    %7760 = vmatpush2.bf16.msra.mxu0 %v7657
    %7761 = vmatprep.subr.bf16.mxu0 %v7654
    %7762 = vmatpush2.bf16.msra.mxu0 %v7653
    %7763 = vmatprep.subr.bf16.mxu0 %v7650
    %7764 = vmatpush2.bf16.msra.mxu0 %v7649
    %7765 = vmatprep.subr.bf16.mxu0 %v7646
    %7766 = vmatpush2.bf16.msra.mxu0 %v7645
    %7767 = vmatprep.subr.bf16.mxu0 %v7642
    %7768 = vmatpush2.bf16.msra.mxu0 %v7641
    %7769 = vmatprep.mubr.bf16.mxu0 %v7414
    %7770 = vmatmul.mubr.bf16.gmra.mxu0 %v7413
    %v7771 = vpop.f32.mrf.mxu0
    %v7772 = vadd.f32 0.0, %v7771
    %v7773 = vpop.f32.mrf.mxu0
    %v7774 = vadd.f32 0.0, %v7773
    %v7775 = vpop.f32.mrf.mxu0
    %v7776 = vpop.f32.mrf.mxu0
    %7777 = vdwg.mxu0
    %7778 = vmatprep.subr.bf16.mxu0 %v7640
    %7779 = vmatpush1.bf16.msra.mxu0 %v7639
    %7780 = vmatprep.subr.bf16.mxu0 %v7636
    %7781 = vmatpush1.bf16.msra.mxu0 %v7635
    %7782 = vmatprep.subr.bf16.mxu0 %v7632
    %7783 = vmatpush1.bf16.msra.mxu0 %v7631
    %7784 = vmatprep.subr.bf16.mxu0 %v7628
    %7785 = vmatpush1.bf16.msra.mxu0 %v7627
    %7786 = vmatprep.subr.bf16.mxu0 %v7624
    %7787 = vmatpush1.bf16.msra.mxu0 %v7623
    %7788 = vmatprep.subr.bf16.mxu0 %v7620
    %7789 = vmatpush1.bf16.msra.mxu0 %v7619
    %7790 = vmatprep.subr.bf16.mxu0 %v7616
    %7791 = vmatpush1.bf16.msra.mxu0 %v7615
    %7792 = vmatprep.subr.bf16.mxu0 %v7612
    %7793 = vmatpush1.bf16.msra.mxu0 %v7611
    %7794 = vmatprep.subr.bf16.mxu0 %v7672
    %7795 = vmatpush2.bf16.msra.mxu0 %v7671
    %7796 = vmatprep.subr.bf16.mxu0 %v7668
    %7797 = vmatpush2.bf16.msra.mxu0 %v7667
    %7798 = vmatprep.subr.bf16.mxu0 %v7664
    %7799 = vmatpush2.bf16.msra.mxu0 %v7663
    %7800 = vmatprep.subr.bf16.mxu0 %v7660
    %7801 = vmatpush2.bf16.msra.mxu0 %v7659
    %7802 = vmatprep.subr.bf16.mxu0 %v7656
    %7803 = vmatpush2.bf16.msra.mxu0 %v7655
    %7804 = vmatprep.subr.bf16.mxu0 %v7652
    %7805 = vmatpush2.bf16.msra.mxu0 %v7651
    %7806 = vmatprep.subr.bf16.mxu0 %v7648
    %7807 = vmatpush2.bf16.msra.mxu0 %v7647
    %7808 = vmatprep.subr.bf16.mxu0 %v7644
    %7809 = vmatpush2.bf16.msra.mxu0 %v7643
    %7810 = vmatprep.mubr.bf16.mxu0 %v7414
    %7811 = vmatmul.mubr.bf16.gmra.mxu0 %v7413
    %v7812 = vpop.f32.mrf.mxu0
    %v7813 = vadd.f32 0.0, %v7812
    %v7814 = vpop.f32.mrf.mxu0
    %v7815 = vadd.f32 0.0, %v7814
    %v7816 = vpop.f32.mrf.mxu0
    %v7817 = vpop.f32.mrf.mxu0
    %7818 = vdwg.mxu0
    %v7819 = vadd.f32 %v7772, %v1175
    %v7820 = vadd.f32 %v7774, %v1179
    %v7821 = vadd.f32 %v7813, %v1183
    %v7822 = vadd.f32 %v7815, %v1187
    %v7823 = vxor.u32 %v7819, 2147483648
    %v7824 = vmul.f32 %v7823, 1.442695
    %v7825 = vpow.pop %v7824
    %v7826 = vadd.f32 %v7825, 1.0
    %v7827 = vrcp.pop %v7826
    %v7828 = vmul.f32 1.0, %v7827
    %v7829 = vxor.u32 %v7820, 2147483648
    %v7830 = vmul.f32 %v7829, 1.442695
    %v7831 = vpow.pop %v7830
    %v7832 = vadd.f32 %v7831, 1.0
    %v7833 = vrcp.pop %v7832
    %v7834 = vmul.f32 1.0, %v7833
    %v7835 = vtanh.pop %v7821
    %v7836 = vxor.u32 %v7822, 2147483648
    %v7837 = vmul.f32 %v7836, 1.442695
    %v7838 = vpow.pop %v7837
    %v7839 = vadd.f32 %v7838, 1.0
    %v7840 = vrcp.pop %v7839
    %v7841 = vmul.f32 1.0, %v7840
    %v7842 = vmul.f32 %v7834, %v7293
    %v7843 = vmul.f32 %v7828, %v7835
    %v7844 = vadd.f32 %v7842, %v7843
    %v7845 = vtanh.pop %v7844
    %v7846 = vmul.f32 %v7841, %v7845
    %v7847 = vpack.c.bf16 %v7846, %v7846
    %v7849 = vunpack.c.l.b16 %v7847
    %v7850 = vpack.c.b16 %v7849, %v7849
    %v7851 = vrot.slane %v7850, 5
    %7853 = vst [vmem:[#allocation2 + $0x4] sm:$0x8] %v7851
    %v7854 = vld [vmem:[#allocation2] sm:$0xf]
    %v7855 = vld [vmem:[#allocation2 + $0x4] sm:$0xf]
    %v7856 = vld [vmem:[#allocation9] sm:$0xf]
    %v7857 = vld [vmem:[#allocation9 + $0x4] sm:$0xf]
    %v7858 = vld [vmem:[#allocation9 + $0x8] sm:$0xf]
    %v7859 = vld [vmem:[#allocation9 + $0xc] sm:$0xf]
    %v7860 = vld [vmem:[#allocation9 + $0x10] sm:$0xf]
    %v7861 = vld [vmem:[#allocation9 + $0x14] sm:$0xf]
    %v7862 = vld [vmem:[#allocation9 + $0x18] sm:$0xf]
    %v7863 = vld [vmem:[#allocation9 + $0x1c] sm:$0xf]
    %v7864 = vld [vmem:[#allocation9 + $0x20] sm:$0xf]
    %v7865 = vld [vmem:[#allocation9 + $0x24] sm:$0xf]
    %v7866 = vld [vmem:[#allocation9 + $0x28] sm:$0xf]
    %v7867 = vld [vmem:[#allocation9 + $0x2c] sm:$0xf]
    %v7868 = vld [vmem:[#allocation9 + $0x30] sm:$0xf]
    %v7869 = vld [vmem:[#allocation9 + $0x34] sm:$0xf]
    %v7870 = vld [vmem:[#allocation9 + $0x38] sm:$0xf]
    %v7871 = vld [vmem:[#allocation9 + $0x3c] sm:$0xf]
    %v7872 = vld [vmem:[#allocation3] sm:$0x1]
    %v7874 = vlaneseq
    %v7875 = vshrl.u32 %v7874, 7
    %v7876 = vsub.s32 0, %v7875
    %v7877 = vrot.slane %v7872, %v7876
    %7878 = vset.pattern.permute.xlu0 0
    %7879 = vperm.xlu0 %7878, %v7877
    %v7880 = vpop.permute.xlu0 %7879
    %v7884 = vunpack.c.l.b16 %v7854
    %v7885 = vunpack.c.l.b16 %v7855
    %v7886 = vpack.c.b16 %v7885, %v7884
    %v7904 = vunpack.c.l.b16 %v7856
    %v7905 = vunpack.c.l.b16 %v7857
    %v7906 = vunpack.c.l.b16 %v7858
    %v7907 = vunpack.c.l.b16 %v7859
    %v7908 = vunpack.c.l.b16 %v7860
    %v7909 = vunpack.c.l.b16 %v7861
    %v7910 = vunpack.c.l.b16 %v7862
    %v7911 = vunpack.c.l.b16 %v7863
    %v7912 = vunpack.c.l.b16 %v7864
    %v7913 = vunpack.c.l.b16 %v7865
    %v7914 = vunpack.c.l.b16 %v7866
    %v7915 = vunpack.c.l.b16 %v7867
    %v7916 = vunpack.c.l.b16 %v7868
    %v7917 = vunpack.c.l.b16 %v7869
    %v7918 = vunpack.c.l.b16 %v7870
    %v7919 = vunpack.c.l.b16 %v7871
    %v7920 = vpack.c.b16 %v7905, %v7904
    %v7921 = vpack.c.b16 %v7907, %v7906
    %v7922 = vpack.c.b16 %v7909, %v7908
    %v7923 = vpack.c.b16 %v7911, %v7910
    %v7924 = vpack.c.b16 %v7913, %v7912
    %v7925 = vpack.c.b16 %v7915, %v7914
    %v7926 = vpack.c.b16 %v7917, %v7916
    %v7927 = vpack.c.b16 %v7919, %v7918
    %7936 = vmatprep.subr.bf16.mxu0 0
    %7937 = vmatpush1.bf16.msra.mxu0 %v7927
    %7938 = vmatprep.subr.bf16.mxu0 0
    %7939 = vmatpush1.bf16.msra.mxu0 %v7926
    %7940 = vmatprep.subr.bf16.mxu0 0
    %7941 = vmatpush1.bf16.msra.mxu0 %v7925
    %7942 = vmatprep.subr.bf16.mxu0 0
    %7943 = vmatpush1.bf16.msra.mxu0 %v7924
    %7944 = vmatprep.subr.bf16.mxu0 0
    %7945 = vmatpush1.bf16.msra.mxu0 %v7923
    %7946 = vmatprep.subr.bf16.mxu0 0
    %7947 = vmatpush1.bf16.msra.mxu0 %v7922
    %7948 = vmatprep.subr.bf16.mxu0 0
    %7949 = vmatpush1.bf16.msra.mxu0 %v7921
    %7950 = vmatprep.subr.bf16.mxu0 0
    %7951 = vmatpush1.bf16.msra.mxu0 %v7920
    %7952 = vmatprep.subr.bf16.mxu0 0
    %7953 = vmatpush2.bf16.msra.mxu0 0
    %7954 = vmatprep.subr.bf16.mxu0 0
    %7955 = vmatpush2.bf16.msra.mxu0 0
    %7956 = vmatprep.subr.bf16.mxu0 0
    %7957 = vmatpush2.bf16.msra.mxu0 0
    %7958 = vmatprep.subr.bf16.mxu0 0
    %7959 = vmatpush2.bf16.msra.mxu0 0
    %7960 = vmatprep.subr.bf16.mxu0 0
    %7961 = vmatpush2.bf16.msra.mxu0 0
    %7962 = vmatprep.subr.bf16.mxu0 0
    %7963 = vmatpush2.bf16.msra.mxu0 0
    %7964 = vmatprep.subr.bf16.mxu0 0
    %7965 = vmatpush2.bf16.msra.mxu0 0
    %7966 = vmatprep.subr.bf16.mxu0 0
    %7967 = vmatpush2.bf16.msra.mxu0 0
    %7968 = vmatprep.mubr.bf16.mxu0 0
    %7969 = vmatmul.mubr.bf16.gmra.mxu0 %v7886
    %v7970 = vpop.f32.mrf.mxu0
    %v7971 = vadd.f32 %v7880, %v7970
    %v7972 = vpop.f32.mrf.mxu0
    %v7973 = vpop.f32.mrf.mxu0
    %v7974 = vadd.f32 %v7880, %v7973
    %v7975 = vpop.f32.mrf.mxu0
    %7976 = vdwg.mxu0
    %7977 = vst [vmem:[#allocation10] sm:$0xff] %v7971
    %7978 = vst [vmem:[#allocation10 + $0x8] sm:$0xff] %v7974
    // Predicated region
    $region42: #{tpu_custom_call.1} parent=1 // pred_check
      _
    $region43: #{tpu_custom_call.1} parent=1 // pred_check_branch
      %7980 = sbr.rel (0) target = $region45
    $region44: #{tpu_custom_call.1} parent=1 // pred_region
      %s7982 = ssub.s32 256, 256
      %7983 = vsyncadd [#allocation6], %s7982
      %s7984 = sshll.u32 [#allocation10], 4
      %s7985 = int_to_ptr.vmem [resolvable:$true] %s7984
      %7990 = dma.vmem_to_hbm [thread:$0]  %s7985, 256, %s7, [#allocation6], 128, 128, 8
    $region45: #{tpu_custom_call.1} parent=1 // pred_fallthru
      _
    // Predicated region
    $region46: #{tpu_custom_call.1} parent=1 // pred_check
      _
    $region47: #{tpu_custom_call.1} parent=1 // pred_check_branch
      %7992 = sbr.rel (0) target = $region49
    $region48: #{tpu_custom_call.1} parent=1 // pred_region
      %7993 = dma.done [#allocation6], 256
    $region49: #{tpu_custom_call.1} parent=1 // pred_fallthru
      _
    %7994 = vsyncpa [#allocation5], 1
    %7995 = vsyncpa [#allocation8], 1
    %7996 = vsyncpa [#allocation6], 1

</llo_original>
